<compile_context>
chip_gen: v6e
topology: v6e:2x2x1
jax: 0.10.0
libtpu: 0.0.40
codegen_flags: <defaults>
</compile_context>

<pallas_src>
import functools
import math

import jax
import jax.numpy as jnp
from jax import lax
from jax.experimental import pallas as pl
from jax.experimental.pallas import tpu as pltpu

NEG_INF = -1e9


# --------------------------------------------------------------------------
# In-kernel helpers (traced inside Pallas kernels)
# --------------------------------------------------------------------------

def _ln_f32(x, g, b, eps):
    """LayerNorm over the last axis, all math in f32."""
    mu = jnp.mean(x, axis=-1, keepdims=True)
    var = jnp.mean(jnp.square(x - mu), axis=-1, keepdims=True)
    return (x - mu) * lax.rsqrt(var + eps) * g + b


def _mha(h_q, kv_src, bias, wq_ref, bq_ref, wk_ref, bk_ref, wv_ref, bv_ref,
         wo_ref, bo_ref, num_heads, scale):
    """Multi-head attention + output projection.

    Per-head static loop of 2-D dots (no reshape / transpose / lane slicing inside the
    kernel).  h_q: [Tq, D] f32, kv_src: [Tk, D] f32, bias: [Tq, Tk] additive f32.
    Weight refs: wq/wk/wv [H, D, d], wo [H, d, D] (bf16); biases [H, 1, d] / [1, D] (f32).
    """
    q_in = h_q.astype(jnp.bfloat16)
    kv_in = kv_src.astype(jnp.bfloat16)
    acc = None
    for h in range(num_heads):
        q = jnp.dot(q_in, wq_ref[h], preferred_element_type=jnp.float32) + bq_ref[h]
        k = jnp.dot(kv_in, wk_ref[h], preferred_element_type=jnp.float32) + bk_ref[h]
        v = jnp.dot(kv_in, wv_ref[h], preferred_element_type=jnp.float32) + bv_ref[h]
        # scores = q @ k^T : contract the last dims directly (no in-kernel transpose).
        s = lax.dot_general(q.astype(jnp.bfloat16), k.astype(jnp.bfloat16),
                            (((1,), (1,)), ((), ())),
                            preferred_element_type=jnp.float32)
        s = s * scale + bias                                   # [Tq, Tk]
        m = jnp.max(s, axis=-1, keepdims=True)
        p = jnp.exp(s - m)
        p = p * pl.reciprocal(jnp.sum(p, axis=-1, keepdims=True), approx=True)
        ctx = jnp.dot(p.astype(jnp.bfloat16), v.astype(jnp.bfloat16),
                      preferred_element_type=jnp.float32)      # [Tq, d]
        contrib = jnp.dot(ctx.astype(jnp.bfloat16), wo_ref[h],
                          preferred_element_type=jnp.float32)  # [Tq, D]
        acc = contrib if acc is None else acc + contrib
    return acc + bo_ref[...]


# --------------------------------------------------------------------------
# Pallas kernels
# --------------------------------------------------------------------------

def _self_attn_block_kernel(x_ref, bias_ref, g_ref, b_ref,
                            wq_ref, bq_ref, wk_ref, bk_ref, wv_ref, bv_ref,
                            wo_ref, bo_ref, o_ref, *, eps, num_heads, scale):
    # r -> r + OutProj(MHA(LN(r)))  — one program per batch element.
    x = x_ref[0].astype(jnp.float32)                            # [Tq, D]
    h = _ln_f32(x, g_ref[...], b_ref[...], eps)
    a = _mha(h, h, bias_ref[0], wq_ref, bq_ref, wk_ref, bk_ref, wv_ref, bv_ref,
             wo_ref, bo_ref, num_heads, scale)
    o_ref[0] = x + a


def _cross_attn_block_kernel(x_ref, mem_ref, bias_ref, g_ref, b_ref,
                             wq_ref, bq_ref, wk_ref, bk_ref, wv_ref, bv_ref,
                             wo_ref, bo_ref, o_ref, *, eps, num_heads, scale):
    # r -> r + OutProj(MHA(LN(r), memory))  — one program per batch element.
    x = x_ref[0].astype(jnp.float32)                            # [Tq, D]
    mem = mem_ref[0].astype(jnp.float32)                        # [Tk, D]
    h = _ln_f32(x, g_ref[...], b_ref[...], eps)
    a = _mha(h, mem, bias_ref[0], wq_ref, bq_ref, wk_ref, bk_ref, wv_ref, bv_ref,
             wo_ref, bo_ref, num_heads, scale)
    o_ref[0] = x + a


def _ffn_block_kernel(x_ref, g_ref, b_ref, w1_ref, b1_ref, w2_ref, b2_ref, o_ref, *, eps):
    # r -> r + W2 @ relu(W1 @ LN(r)) ; position-wise, operates on flattened [M, D].
    x = x_ref[...].astype(jnp.float32)
    h = _ln_f32(x, g_ref[...], b_ref[...], eps)
    hh = jnp.dot(h.astype(jnp.bfloat16), w1_ref[...],
                 preferred_element_type=jnp.float32) + b1_ref[...]
    hh = jnp.maximum(hh, 0.0)
    ff = jnp.dot(hh.astype(jnp.bfloat16), w2_ref[...],
                 preferred_element_type=jnp.float32) + b2_ref[...]
    o_ref[...] = x + ff


def _layernorm_kernel(x_ref, g_ref, b_ref, o_ref, *, eps):
    o_ref[...] = _ln_f32(x_ref[...].astype(jnp.float32), g_ref[...], b_ref[...], eps)


def _final_dec_kernel(x_ref, g_ref, b_ref, w_ref, xn_ref, logits_ref, *, eps):
    # Decoder tail: final LayerNorm + vocab projection fused.
    xn = _ln_f32(x_ref[...].astype(jnp.float32), g_ref[...], b_ref[...], eps)
    xn_ref[...] = xn
    logits_ref[...] = jnp.dot(xn.astype(jnp.bfloat16), w_ref[...],
                              preferred_element_type=jnp.float32)


def _matmul_bias_kernel(a_ref, b_ref, bias_ref, o_ref):
    # Single K-block fast path: no accumulator scratch, bias fused in epilogue.
    o_ref[...] = (jnp.dot(a_ref[...], b_ref[...],
                          preferred_element_type=jnp.float32)
                  + bias_ref[...]).astype(o_ref.dtype)


def _matmul_acc_kernel(a_ref, b_ref, bias_ref, o_ref, acc_ref):
    @pl.when(pl.program_id(2) == 0)
    def _():
        acc_ref[...] = jnp.zeros_like(acc_ref)

    acc_ref[...] += jnp.dot(a_ref[...], b_ref[...],
                            preferred_element_type=jnp.float32)

    @pl.when(pl.program_id(2) == pl.num_programs(2) - 1)
    def _():
        o_ref[...] = (acc_ref[...] + bias_ref[...]).astype(o_ref.dtype)


# --------------------------------------------------------------------------
# pallas_call wrappers
# --------------------------------------------------------------------------

def _rep_spec(shape):
    """Full-array block replicated across the batch grid axis."""
    n = len(shape)
    return pl.BlockSpec(shape, lambda i: (0,) * n)


def _pick_tile(dim, cap):
    """Largest tile <= cap that divides dim with no padding; full dim if it fits."""
    if dim <= cap:
        return dim
    for t in (512, 256, 128):
        if t <= cap and dim % t == 0:
            return t
    return dim


def pallas_matmul(a, b, bias=None):
    """[M, K] @ [K, N] (+ bias[N]) -> f32 [M, N]; bf16 MXU inputs, no padding."""
    M, K = a.shape
    K2, N = b.shape
    assert K == K2
    a = a.astype(jnp.bfloat16)
    b = b.astype(jnp.bfloat16)
    bias_arr = (jnp.zeros((1, N), jnp.float32) if bias is None
                else bias.reshape(1, N).astype(jnp.float32))

    tm = _pick_tile(M, 256)
    tn = _pick_tile(N, 512)
    tk = _pick_tile(K, 1024)
    grid = (M // tm, N // tn, K // tk)

    if grid[2] == 1:
        kernel = _matmul_bias_kernel
        scratch = []
    else:
        kernel = _matmul_acc_kernel
        scratch = [pltpu.VMEM((tm, tn), jnp.float32)]

    return pl.pallas_call(
        kernel,
        out_shape=jax.ShapeDtypeStruct((M, N), jnp.float32),
        grid=grid,
        in_specs=[pl.BlockSpec((tm, tk), lambda i, j, k: (i, k)),
                  pl.BlockSpec((tk, tn), lambda i, j, k: (k, j)),
                  pl.BlockSpec((1, tn), lambda i, j, k: (0, j))],
        out_specs=pl.BlockSpec((tm, tn), lambda i, j, k: (i, j)),
        scratch_shapes=scratch,
        compiler_params=pltpu.CompilerParams(
            dimension_semantics=("parallel", "parallel", "arbitrary")),
    )(a, b, bias_arr)


def linear3d(x, w, b=None):
    B, T, Din = x.shape
    y = pallas_matmul(x.reshape(B * T, Din), w, b)
    return y.reshape(B, T, w.shape[1])


def self_attn_block(x, bias, p, *, eps, num_heads):
    """x: [B, Tq, D] f32; bias: [B, Tq, Tq] additive.  Returns x + OutProj(MHA(LN(x)))."""
    B, Tq, D = x.shape
    Tk = bias.shape[-1]
    d = D // num_heads
    H = num_heads
    kernel = functools.partial(_self_attn_block_kernel, eps=eps, num_heads=H,
                               scale=1.0 / math.sqrt(d))
    return pl.pallas_call(
        kernel,
        out_shape=jax.ShapeDtypeStruct((B, Tq, D), jnp.float32),
        grid=(B,),
        in_specs=[
            pl.BlockSpec((1, Tq, D), lambda i: (i, 0, 0)),
            pl.BlockSpec((1, Tq, Tk), lambda i: (i, 0, 0)),
            _rep_spec((1, D)), _rep_spec((1, D)),
            _rep_spec((H, D, d)), _rep_spec((H, 1, d)),
            _rep_spec((H, D, d)), _rep_spec((H, 1, d)),
            _rep_spec((H, D, d)), _rep_spec((H, 1, d)),
            _rep_spec((H, d, D)), _rep_spec((1, D)),
        ],
        out_specs=pl.BlockSpec((1, Tq, D), lambda i: (i, 0, 0)),
        compiler_params=pltpu.CompilerParams(dimension_semantics=("parallel",)),
    )(x, bias, p["ln_g"].reshape(1, D), p["ln_b"].reshape(1, D),
      p["wq"], p["bq"], p["wk"], p["bk"], p["wv"], p["bv"],
      p["wo"], p["bo"].reshape(1, D))


def cross_attn_block(x, mem, bias, p, *, eps, num_heads):
    """x: [B, Tq, D]; mem: [B, Tk, D]; bias: [B, Tq, Tk].  x + OutProj(MHA(LN(x), mem))."""
    B, Tq, D = x.shape
    Tk = mem.shape[1]
    d = D // num_heads
    H = num_heads
    kernel = functools.partial(_cross_attn_block_kernel, eps=eps, num_heads=H,
                               scale=1.0 / math.sqrt(d))
    return pl.pallas_call(
        kernel,
        out_shape=jax.ShapeDtypeStruct((B, Tq, D), jnp.float32),
        grid=(B,),
        in_specs=[
            pl.BlockSpec((1, Tq, D), lambda i: (i, 0, 0)),
            pl.BlockSpec((1, Tk, D), lambda i: (i, 0, 0)),
            pl.BlockSpec((1, Tq, Tk), lambda i: (i, 0, 0)),
            _rep_spec((1, D)), _rep_spec((1, D)),
            _rep_spec((H, D, d)), _rep_spec((H, 1, d)),
            _rep_spec((H, D, d)), _rep_spec((H, 1, d)),
            _rep_spec((H, D, d)), _rep_spec((H, 1, d)),
            _rep_spec((H, d, D)), _rep_spec((1, D)),
        ],
        out_specs=pl.BlockSpec((1, Tq, D), lambda i: (i, 0, 0)),
        compiler_params=pltpu.CompilerParams(dimension_semantics=("parallel",)),
    )(x, mem, bias, p["ln_g"].reshape(1, D), p["ln_b"].reshape(1, D),
      p["wq"], p["bq"], p["wk"], p["bk"], p["wv"], p["bv"],
      p["wo"], p["bo"].reshape(1, D))


def ffn_block(x, p, *, eps):
    """Position-wise: x + W2 @ relu(W1 @ LN(x)), grid-less over the flattened token axis."""
    B, T, D = x.shape
    F = p["w1"].shape[1]
    out = pl.pallas_call(
        functools.partial(_ffn_block_kernel, eps=eps),
        out_shape=jax.ShapeDtypeStruct((B * T, D), jnp.float32),
    )(x.reshape(B * T, D), p["ln_g"].reshape(1, D), p["ln_b"].reshape(1, D),
      p["w1"], p["b1"].reshape(1, F), p["w2"], p["b2"].reshape(1, D))
    return out.reshape(B, T, D)


def layernorm3d(x, g, b, eps):
    B, T, D = x.shape
    out = pl.pallas_call(
        functools.partial(_layernorm_kernel, eps=eps),
        out_shape=jax.ShapeDtypeStruct((B * T, D), jnp.float32),
    )(x.reshape(B * T, D).astype(jnp.float32), g.reshape(1, D), b.reshape(1, D))
    return out.reshape(B, T, D)


def final_decoder_head(x, g, b, w_out, eps):
    """Fused final LayerNorm + vocab projection. Returns (xn, logits)."""
    B, T, D = x.shape
    V = w_out.shape[1]
    xn, logits = pl.pallas_call(
        functools.partial(_final_dec_kernel, eps=eps),
        out_shape=(jax.ShapeDtypeStruct((B * T, D), jnp.float32),
                   jax.ShapeDtypeStruct((B * T, V), jnp.float32)),
    )(x.reshape(B * T, D), g.reshape(1, D), b.reshape(1, D), w_out)
    return xn.reshape(B, T, D), logits.reshape(B, T, V)


# --------------------------------------------------------------------------
# Positional encodings (constants; pure JAX)
# --------------------------------------------------------------------------

def fairseq_sinusoidal_pe(S, dim, padding_idx=0):
    # MulT / fairseq SinusoidalPositionalEmbedding: concat(sin, cos), positions start at pad+1.
    half = dim // 2
    freq = jnp.exp(jnp.arange(half, dtype=jnp.float32)
                   * -(math.log(10000.0) / (half - 1)))
    pos = jnp.arange(padding_idx + 1, padding_idx + 1 + S, dtype=jnp.float32)[:, None]
    ang = pos * freq[None, :]
    return jnp.concatenate([jnp.sin(ang), jnp.cos(ang)], axis=1)


def joey_positional_encoding(T, D):
    # JoeyNMT / SLT PositionalEncoding: interleaved sin/cos, positions start at 0.
    pos = jnp.arange(T, dtype=jnp.float32)[:, None]
    div = jnp.exp(jnp.arange(0, D, 2, dtype=jnp.float32) * -(math.log(10000.0) / D))
    ang = pos * div[None, :]
    pe = jnp.zeros((T, D), jnp.float32)
    pe = pe.at[:, 0::2].set(jnp.sin(ang))
    pe = pe.at[:, 1::2].set(jnp.cos(ang))
    return pe


# --------------------------------------------------------------------------
# Model (JAX glue on top of the fused kernels)
# --------------------------------------------------------------------------

def mult_encoder(p, x, num_heads, attn_mask=True):
    """MulT TransformerEncoder (pre-LN, causal self-attn if attn_mask), eval mode."""
    B, S, E = x.shape
    x = x * math.sqrt(E) + fairseq_sinusoidal_pe(S, E)[None]
    if attn_mask:
        mask = jnp.tril(jnp.ones((S, S), dtype=bool))
    else:
        mask = jnp.ones((S, S), dtype=bool)
    bias = jnp.broadcast_to(
        jnp.where(mask, 0.0, NEG_INF).astype(jnp.float32)[None], (B, S, S))

    for layer in p["layers"]:
        x = self_attn_block(x, bias, layer["attn"], eps=1e-5, num_heads=num_heads)
        x = ffn_block(x, layer["ffn"], eps=1e-5)
    return layernorm3d(x, p["lnf_g"], p["lnf_b"], 1e-5)


def transformer_decoder(p, trg_embed, memory, src_mask, trg_mask, num_heads):
    """SLT / JoeyNMT TransformerDecoder (pre-LN layers, final LN, Linear output)."""
    B, T, D = trg_embed.shape
    S = memory.shape[1]
    x = trg_embed + joey_positional_encoding(T, D)[None]

    sub = jnp.tril(jnp.ones((1, T, T), dtype=bool))
    trg_full = jnp.logical_and(jnp.broadcast_to(trg_mask, (B, T, T)), sub)
    trg_bias = jnp.where(trg_full, 0.0, NEG_INF).astype(jnp.float32)
    src_bias = jnp.where(jnp.broadcast_to(src_mask, (B, T, S)),
                         0.0, NEG_INF).astype(jnp.float32)

    for layer in p["layers"]:
        x = self_attn_block(x, trg_bias, layer["self_attn"],
                            eps=1e-6, num_heads=num_heads)
        x = cross_attn_block(x, memory, src_bias, layer["src_attn"],
                             eps=1e-6, num_heads=num_heads)
        x = ffn_block(x, layer["ffn"], eps=1e-6)

    dec_hidden, word_outputs = final_decoder_head(x, p["lnf_g"], p["lnf_b"],
                                                  p["out_w"], 1e-6)
    return word_outputs, dec_hidden


def baseline_mult_forward(params, conf, f1, txt_input, txt, f1_mask, txt_mask, sgn_lengths):
    del txt, sgn_lengths  # unused by the PyTorch forward as well
    # F.dropout(training=False) == identity; Conv1d(k=1, bias=False) == per-token matmul.
    proj_f1 = linear3d(f1, params["proj_f1"], None)
    h_f1 = mult_encoder(params["enc"], proj_f1, conf["enc_num_heads"],
                        attn_mask=conf["enc_attn_mask"])
    encoder_outputs = h_f1                                   # [B, S, enc_emb]
    # Embeddings: lookup + sqrt(dim) scale (norm_type / activation_type disabled in conf).
    # TODO(synk): embedding gather stays in XLA (no benefit from a Pallas gather at this size).
    trg_embed = params["txt_embed"][txt_input] * math.sqrt(conf["dec_emb"])
    word_outputs, dec_hidden = transformer_decoder(
        params["dec"], trg_embed, encoder_outputs, f1_mask, txt_mask,
        conf["dec_num_heads"])
    decoder_outputs = (word_outputs, dec_hidden, None, None)
    return encoder_outputs, decoder_outputs


# --------------------------------------------------------------------------
# Deterministic parameter init (shapes follow Baseline_Mult.__init__;
# attention weights stored per-head for the fused kernels)
# --------------------------------------------------------------------------

CONF = dict(
    vocab_size=50, pad_index=0, orig_d_f1=12,
    f1_only=1,                       # channels -> dec_emb = enc_emb * 1
    enc_emb=32, enc_num_layers=2, enc_num_heads=4, enc_attn_mask=True,
    dec_emb=32, dec_num_layers=2, dec_num_heads=4,
    dec_ff_size=2048,                # TransformerDecoder ff_size default
    dec_max_out_len=10,
)


def init_params(key, conf):
    E, D, V = conf["enc_emb"], conf["dec_emb"], conf["vocab_size"]
    Fdim = conf["orig_d_f1"]
    ff_enc, ff_dec = 4 * E, conf["dec_ff_size"]
    He, Hd = conf["enc_num_heads"], conf["dec_num_heads"]

    keys = iter(jax.random.split(key, 512))

    def wmat(shape):   # matmul weights stored bf16 once at init (MXU input dtype)
        return (0.02 * jax.random.normal(next(keys), shape, jnp.float32)).astype(jnp.bfloat16)

    def nrm(shape):
        return 0.02 * jax.random.normal(next(keys), shape, jnp.float32)

    def zeros(*shape):
        return jnp.zeros(shape, jnp.float32)

    def ones(*shape):
        return jnp.ones(shape, jnp.float32)

    def attn_p(dim, heads):
        dh = dim // heads
        return dict(
            ln_g=ones(dim), ln_b=zeros(dim),
            wq=wmat((heads, dim, dh)), bq=zeros(heads, 1, dh),
            wk=wmat((heads, dim, dh)), bk=zeros(heads, 1, dh),
            wv=wmat((heads, dim, dh)), bv=zeros(heads, 1, dh),
            wo=wmat((heads, dh, dim)), bo=zeros(dim),
        )

    def ffn_p(dim, ff):
        return dict(
            ln_g=ones(dim), ln_b=zeros(dim),
            w1=wmat((dim, ff)), b1=zeros(ff),
            w2=wmat((ff, dim)), b2=zeros(dim),
        )

    params = {"proj_f1": wmat((Fdim, E))}   # Conv1d(orig_d_f1, enc_emb, k=1, bias=False)

    params["enc"] = dict(
        layers=[dict(attn=attn_p(E, He), ffn=ffn_p(E, ff_enc))
                for _ in range(conf["enc_num_layers"])],
        lnf_g=ones(E), lnf_b=zeros(E))

    emb = nrm((V, D))
    emb = emb.at[conf["pad_index"]].set(0.0)   # nn.Embedding padding_idx row is zero
    params["txt_embed"] = emb

    params["dec"] = dict(
        layers=[dict(self_attn=attn_p(D, Hd), src_attn=attn_p(D, Hd),
                     ffn=ffn_p(D, ff_dec))
                for _ in range(conf["dec_num_layers"])],
        lnf_g=ones(D), lnf_b=zeros(D),
        out_w=wmat((D, V)))   # output_layer, bias=False
    return params


# --------------------------------------------------------------------------

if __name__ == "__main__":
    key = jax.random.PRNGKey(0)
    k_f1, k_txt, k_params = jax.random.split(key, 3)

    B, S, T = 2, 16, 8
    f1 = jax.random.normal(k_f1, (B, S, CONF["orig_d_f1"]), jnp.float32)
    txt_input = jax.random.randint(k_txt, (B, T), 1, CONF["vocab_size"])
    txt = txt_input                                   # unused by forward
    f1_mask = jnp.ones((B, 1, S), dtype=bool)
    txt_mask = jnp.ones((B, 1, T), dtype=bool)
    sgn_lengths = jnp.full((B,), S, jnp.int32)        # unused by forward

    params = init_params(k_params, CONF)

    fwd = jax.jit(lambda p, a, ti, m_src, m_trg: baseline_mult_forward(
        p, CONF, a, ti, ti, m_src, m_trg, None))

    enc_out, dec_out = fwd(params, f1, txt_input, f1_mask, txt_mask)
    word_outputs, dec_hidden, _, _ = dec_out

    jax.block_until_ready((enc_out, word_outputs, dec_hidden))
    assert enc_out.shape == (B, S, CONF["enc_emb"])
    assert word_outputs.shape == (B, T, CONF["vocab_size"])
    assert dec_hidden.shape == (B, T, CONF["dec_emb"])
    assert bool(jnp.all(jnp.isfinite(enc_out)))
    assert bool(jnp.all(jnp.isfinite(word_outputs)))
    assert bool(jnp.all(jnp.isfinite(dec_hidden)))
    print("KERNEL_OK")
</pallas_src>

<mosaic_0001>
module attributes {stable_mosaic.version = 11 : i64} {
  func.func @_matmul_bias_kernel(%arg0: i32, %arg1: i32, %arg2: i32, %arg3: memref<32x12xbf16, #tpu.memory_space<vmem>>, %arg4: memref<12x32xbf16, #tpu.memory_space<vmem>>, %arg5: memref<1x32xf32, #tpu.memory_space<vmem>>, %arg6: memref<32x32xf32, #tpu.memory_space<vmem>>) attributes {dimension_semantics = [#tpu.dimension_semantics<parallel>, #tpu.dimension_semantics<parallel>, #tpu.dimension_semantics<arbitrary>], iteration_bounds = array<i64: 1, 1, 1>, scalar_prefetch = 0 : i64, scratch_operands = 0 : i64, tpu.core_type = #tpu.core_type<tc>, window_params = [{transform_indices = @transform_0, window_bounds = array<i64: 32, 12>}, {transform_indices = @transform_1, window_bounds = array<i64: 12, 32>}, {transform_indices = @transform_2, window_bounds = array<i64: 1, 32>}, {transform_indices = @transform_3, window_bounds = array<i64: 32, 32>}]} {
    %c0 = arith.constant 0 : index
    %c0_0 = arith.constant 0 : index
    %0 = vector.load %arg3[%c0, %c0_0] : memref<32x12xbf16, #tpu.memory_space<vmem>>, vector<32x12xbf16>
    %c0_1 = arith.constant 0 : index
    %c0_2 = arith.constant 0 : index
    %1 = vector.load %arg4[%c0_1, %c0_2] : memref<12x32xbf16, #tpu.memory_space<vmem>>, vector<12x32xbf16>
    %cst = arith.constant dense<0.000000e+00> : vector<32x32xf32>
    %2 = tpu.matmul %0, %1, %cst {dimension_numbers = #tpu.dot_dimension_numbers<[1], [0], [0], [1], [0, 0, 1, 1], [], []>} : vector<32x12xbf16>, vector<12x32xbf16>, vector<32x32xf32> -> vector<32x32xf32>
    %c0_3 = arith.constant 0 : index
    %c0_4 = arith.constant 0 : index
    %3 = vector.load %arg5[%c0_3, %c0_4] : memref<1x32xf32, #tpu.memory_space<vmem>>, vector<1x32xf32>
    %4 = vector.broadcast %3 : vector<1x32xf32> to vector<32x32xf32>
    %5 = arith.addf %2, %4 : vector<32x32xf32>
    %c0_5 = arith.constant 0 : index
    %c0_6 = arith.constant 0 : index
    %6 = vector.load %arg6[%c0_5, %c0_6] : memref<32x32xf32, #tpu.memory_space<vmem>>, vector<32x32xf32>
    tpu.vector_store %arg6[%c0_5, %c0_6], %5 {strides = array<i32>} : memref<32x32xf32, #tpu.memory_space<vmem>>, vector<32x32xf32>,
    return
  }
  func.func @transform_0(%arg0: i32, %arg1: i32, %arg2: i32) -> (i32, i32) {
    %c0_i32 = arith.constant 0 : i32
    return %arg0, %arg2 : i32, i32
  }
  func.func @transform_1(%arg0: i32, %arg1: i32, %arg2: i32) -> (i32, i32) {
    %c0_i32 = arith.constant 0 : i32
    return %arg2, %arg1 : i32, i32
  }
  func.func @transform_2(%arg0: i32, %arg1: i32, %arg2: i32) -> (i32, i32) {
    %c0_i32 = arith.constant 0 : i32
    %c0_i32_0 = arith.constant 0 : i32
    return %c0_i32, %arg1 : i32, i32
  }
  func.func @transform_3(%arg0: i32, %arg1: i32, %arg2: i32) -> (i32, i32) {
    %c0_i32 = arith.constant 0 : i32
    return %arg0, %arg1 : i32, i32
  }
}

module attributes {stable_mosaic.version = 11 : i64} {
  func.func @_ffn_block_kernel(%arg0: memref<32x32xf32, #tpu.memory_space<vmem>>, %arg1: memref<1x32xf32, #tpu.memory_space<vmem>>, %arg2: memref<1x32xf32, #tpu.memory_space<vmem>>, %arg3: memref<32x128xbf16, #tpu.memory_space<vmem>>, %arg4: memref<1x128xf32, #tpu.memory_space<vmem>>, %arg5: memref<128x32xbf16, #tpu.memory_space<vmem>>, %arg6: memref<1x32xf32, #tpu.memory_space<vmem>>, %arg7: memref<32x32xf32, #tpu.memory_space<vmem>>) attributes {dimension_semantics = [], scalar_prefetch = 0 : i64, scratch_operands = 0 : i64, tpu.core_type = #tpu.core_type<tc>} {
    %c0 = arith.constant 0 : index
    %c0_0 = arith.constant 0 : index
    %0 = vector.load %arg0[%c0, %c0_0] : memref<32x32xf32, #tpu.memory_space<vmem>>, vector<32x32xf32>
    %c0_1 = arith.constant 0 : index
    %c0_2 = arith.constant 0 : index
    %1 = vector.load %arg1[%c0_1, %c0_2] : memref<1x32xf32, #tpu.memory_space<vmem>>, vector<1x32xf32>
    %c0_3 = arith.constant 0 : index
    %c0_4 = arith.constant 0 : index
    %2 = vector.load %arg2[%c0_3, %c0_4] : memref<1x32xf32, #tpu.memory_space<vmem>>, vector<1x32xf32>
    %cst = arith.constant dense<0.000000e+00> : vector<32xf32>
    %3 = vector.multi_reduction <add>, %0, %cst [1] : vector<32x32xf32> to vector<32xf32>
    %4 = vector.shape_cast %3 : vector<32xf32> to vector<32x1xf32>
    %cst_5 = arith.constant 3.200000e+01 : f32
    %5 = vector.broadcast %cst_5 : f32 to vector<32x1xf32>
    %6 = arith.divf %4, %5 : vector<32x1xf32>
    %7 = vector.broadcast %6 : vector<32x1xf32> to vector<32x32xf32>
    %8 = arith.subf %0, %7 : vector<32x32xf32>
    %9 = arith.mulf %8, %8 : vector<32x32xf32>
    %cst_6 = arith.constant dense<0.000000e+00> : vector<32xf32>
    %10 = vector.multi_reduction <add>, %9, %cst_6 [1] : vector<32x32xf32> to vector<32xf32>
    %11 = vector.shape_cast %10 : vector<32xf32> to vector<32x1xf32>
    %cst_7 = arith.constant 3.200000e+01 : f32
    %12 = vector.broadcast %cst_7 : f32 to vector<32x1xf32>
    %13 = arith.divf %11, %12 : vector<32x1xf32>
    %14 = vector.broadcast %6 : vector<32x1xf32> to vector<32x32xf32>
    %15 = arith.subf %0, %14 : vector<32x32xf32>
    %cst_8 = arith.constant 9.99999974E-6 : f32
    %16 = vector.broadcast %cst_8 : f32 to vector<32x1xf32>
    %17 = arith.addf %13, %16 : vector<32x1xf32>
    %18 = math.rsqrt %17 : vector<32x1xf32>
    %19 = vector.broadcast %18 : vector<32x1xf32> to vector<32x32xf32>
    %20 = arith.mulf %15, %19 : vector<32x32xf32>
    %21 = vector.broadcast %1 : vector<1x32xf32> to vector<32x32xf32>
    %22 = arith.mulf %20, %21 : vector<32x32xf32>
    %23 = vector.broadcast %2 : vector<1x32xf32> to vector<32x32xf32>
    %24 = arith.addf %22, %23 : vector<32x32xf32>
    %25 = arith.truncf %24 : vector<32x32xf32> to vector<32x32xbf16>
    %c0_9 = arith.constant 0 : index
    %c0_10 = arith.constant 0 : index
    %26 = vector.load %arg3[%c0_9, %c0_10] : memref<32x128xbf16, #tpu.memory_space<vmem>>, vector<32x128xbf16>
    %cst_11 = arith.constant dense<0.000000e+00> : vector<32x128xf32>
    %27 = tpu.matmul %25, %26, %cst_11 {dimension_numbers = #tpu.dot_dimension_numbers<[1], [0], [0], [1], [0, 0, 1, 1], [], []>} : vector<32x32xbf16>, vector<32x128xbf16>, vector<32x128xf32> -> vector<32x128xf32>
    %c0_12 = arith.constant 0 : index
    %c0_13 = arith.constant 0 : index
    %28 = vector.load %arg4[%c0_12, %c0_13] : memref<1x128xf32, #tpu.memory_space<vmem>>, vector<1x128xf32>
    %29 = vector.broadcast %28 : vector<1x128xf32> to vector<32x128xf32>
    %30 = arith.addf %27, %29 : vector<32x128xf32>
    %cst_14 = arith.constant 0.000000e+00 : f32
    %31 = vector.broadcast %cst_14 : f32 to vector<32x128xf32>
    %32 = arith.maximumf %30, %31 : vector<32x128xf32>
    %33 = arith.truncf %32 : vector<32x128xf32> to vector<32x128xbf16>
    %c0_15 = arith.constant 0 : index
    %c0_16 = arith.constant 0 : index
    %34 = vector.load %arg5[%c0_15, %c0_16] : memref<128x32xbf16, #tpu.memory_space<vmem>>, vector<128x32xbf16>
    %cst_17 = arith.constant dense<0.000000e+00> : vector<32x32xf32>
    %35 = tpu.matmul %33, %34, %cst_17 {dimension_numbers = #tpu.dot_dimension_numbers<[1], [0], [0], [1], [0, 0, 1, 1], [], []>} : vector<32x128xbf16>, vector<128x32xbf16>, vector<32x32xf32> -> vector<32x32xf32>
    %c0_18 = arith.constant 0 : index
    %c0_19 = arith.constant 0 : index
    %36 = vector.load %arg6[%c0_18, %c0_19] : memref<1x32xf32, #tpu.memory_space<vmem>>, vector<1x32xf32>
    %37 = vector.broadcast %36 : vector<1x32xf32> to vector<32x32xf32>
    %38 = arith.addf %35, %37 : vector<32x32xf32>
    %39 = arith.addf %0, %38 : vector<32x32xf32>
    %c0_20 = arith.constant 0 : index
    %c0_21 = arith.constant 0 : index
    %40 = vector.load %arg7[%c0_20, %c0_21] : memref<32x32xf32, #tpu.memory_space<vmem>>, vector<32x32xf32>
    tpu.vector_store %arg7[%c0_20, %c0_21], %39 {strides = array<i32>} : memref<32x32xf32, #tpu.memory_space<vmem>>, vector<32x32xf32>,
    return
  }
}

module attributes {stable_mosaic.version = 11 : i64} {
  func.func @_self_attn_block_kernel(%arg0: i32, %arg1: memref<1x16x32xf32, #tpu.memory_space<vmem>>, %arg2: memref<1x16x16xf32, #tpu.memory_space<vmem>>, %arg3: memref<1x32xf32, #tpu.memory_space<vmem>>, %arg4: memref<1x32xf32, #tpu.memory_space<vmem>>, %arg5: memref<4x32x8xbf16, #tpu.memory_space<vmem>>, %arg6: memref<4x1x8xf32, #tpu.memory_space<vmem>>, %arg7: memref<4x32x8xbf16, #tpu.memory_space<vmem>>, %arg8: memref<4x1x8xf32, #tpu.memory_space<vmem>>, %arg9: memref<4x32x8xbf16, #tpu.memory_space<vmem>>, %arg10: memref<4x1x8xf32, #tpu.memory_space<vmem>>, %arg11: memref<4x8x32xbf16, #tpu.memory_space<vmem>>, %arg12: memref<1x32xf32, #tpu.memory_space<vmem>>, %arg13: memref<1x16x32xf32, #tpu.memory_space<vmem>>) attributes {dimension_semantics = [#tpu.dimension_semantics<parallel>], iteration_bounds = array<i64: 2>, scalar_prefetch = 0 : i64, scratch_operands = 0 : i64, tpu.core_type = #tpu.core_type<tc>, window_params = [{transform_indices = @transform_0, window_bounds = array<i64: 1, 16, 32>}, {transform_indices = @transform_1, window_bounds = array<i64: 1, 16, 16>}, {pipeline_mode = #tpu.pipeline_mode<synchronous>, transform_indices = @transform_2, window_bounds = array<i64: 1, 32>}, {pipeline_mode = #tpu.pipeline_mode<synchronous>, transform_indices = @transform_3, window_bounds = array<i64: 1, 32>}, {pipeline_mode = #tpu.pipeline_mode<synchronous>, transform_indices = @transform_4, window_bounds = array<i64: 4, 32, 8>}, {pipeline_mode = #tpu.pipeline_mode<synchronous>, transform_indices = @transform_5, window_bounds = array<i64: 4, 1, 8>}, {pipeline_mode = #tpu.pipeline_mode<synchronous>, transform_indices = @transform_6, window_bounds = array<i64: 4, 32, 8>}, {pipeline_mode = #tpu.pipeline_mode<synchronous>, transform_indices = @transform_7, window_bounds = array<i64: 4, 1, 8>}, {pipeline_mode = #tpu.pipeline_mode<synchronous>, transform_indices = @transform_8, window_bounds = array<i64: 4, 32, 8>}, {pipeline_mode = #tpu.pipeline_mode<synchronous>, transform_indices = @transform_9, window_bounds = array<i64: 4, 1, 8>}, {pipeline_mode = #tpu.pipeline_mode<synchronous>, transform_indices = @transform_10, window_bounds = array<i64: 4, 8, 32>}, {pipeline_mode = #tpu.pipeline_mode<synchronous>, transform_indices = @transform_11, window_bounds = array<i64: 1, 32>}, {transform_indices = @transform_12, window_bounds = array<i64: 1, 16, 32>}]} {
    %c0 = arith.constant 0 : index
    %c0_0 = arith.constant 0 : index
    %c0_1 = arith.constant 0 : index
    %0 = vector.load %arg1[%c0, %c0_0, %c0_1] : memref<1x16x32xf32, #tpu.memory_space<vmem>>, vector<1x16x32xf32>
    %1 = vector.shape_cast %0 : vector<1x16x32xf32> to vector<16x32xf32>
    %c0_2 = arith.constant 0 : index
    %c0_3 = arith.constant 0 : index
    %2 = vector.load %arg3[%c0_2, %c0_3] : memref<1x32xf32, #tpu.memory_space<vmem>>, vector<1x32xf32>
    %c0_4 = arith.constant 0 : index
    %c0_5 = arith.constant 0 : index
    %3 = vector.load %arg4[%c0_4, %c0_5] : memref<1x32xf32, #tpu.memory_space<vmem>>, vector<1x32xf32>
    %cst = arith.constant dense<0.000000e+00> : vector<16xf32>
    %4 = vector.multi_reduction <add>, %1, %cst [1] : vector<16x32xf32> to vector<16xf32>
    %5 = vector.shape_cast %4 : vector<16xf32> to vector<16x1xf32>
    %cst_6 = arith.constant 3.200000e+01 : f32
    %6 = vector.broadcast %cst_6 : f32 to vector<16x1xf32>
    %7 = arith.divf %5, %6 : vector<16x1xf32>
    %8 = vector.broadcast %7 : vector<16x1xf32> to vector<16x32xf32>
    %9 = arith.subf %1, %8 : vector<16x32xf32>
    %10 = arith.mulf %9, %9 : vector<16x32xf32>
    %cst_7 = arith.constant dense<0.000000e+00> : vector<16xf32>
    %11 = vector.multi_reduction <add>, %10, %cst_7 [1] : vector<16x32xf32> to vector<16xf32>
    %12 = vector.shape_cast %11 : vector<16xf32> to vector<16x1xf32>
    %cst_8 = arith.constant 3.200000e+01 : f32
    %13 = vector.broadcast %cst_8 : f32 to vector<16x1xf32>
    %14 = arith.divf %12, %13 : vector<16x1xf32>
    %15 = vector.broadcast %7 : vector<16x1xf32> to vector<16x32xf32>
    %16 = arith.subf %1, %15 : vector<16x32xf32>
    %cst_9 = arith.constant 9.99999974E-6 : f32
    %17 = vector.broadcast %cst_9 : f32 to vector<16x1xf32>
    %18 = arith.addf %14, %17 : vector<16x1xf32>
    %19 = math.rsqrt %18 : vector<16x1xf32>
    %20 = vector.broadcast %19 : vector<16x1xf32> to vector<16x32xf32>
    %21 = arith.mulf %16, %20 : vector<16x32xf32>
    %22 = vector.broadcast %2 : vector<1x32xf32> to vector<16x32xf32>
    %23 = arith.mulf %21, %22 : vector<16x32xf32>
    %24 = vector.broadcast %3 : vector<1x32xf32> to vector<16x32xf32>
    %25 = arith.addf %23, %24 : vector<16x32xf32>
    %c0_10 = arith.constant 0 : index
    %c0_11 = arith.constant 0 : index
    %c0_12 = arith.constant 0 : index
    %26 = vector.load %arg2[%c0_10, %c0_11, %c0_12] : memref<1x16x16xf32, #tpu.memory_space<vmem>>, vector<1x16x16xf32>
    %27 = vector.shape_cast %26 : vector<1x16x16xf32> to vector<16x16xf32>
    %28 = arith.truncf %25 : vector<16x32xf32> to vector<16x32xbf16>
    %29 = arith.truncf %25 : vector<16x32xf32> to vector<16x32xbf16>
    %c0_13 = arith.constant 0 : index
    %c0_14 = arith.constant 0 : index
    %c0_15 = arith.constant 0 : index
    %30 = vector.load %arg5[%c0_13, %c0_14, %c0_15] : memref<4x32x8xbf16, #tpu.memory_space<vmem>>, vector<1x32x8xbf16>
    %31 = vector.shape_cast %30 : vector<1x32x8xbf16> to vector<32x8xbf16>
    %cst_16 = arith.constant dense<0.000000e+00> : vector<16x8xf32>
    %32 = tpu.matmul %28, %31, %cst_16 {dimension_numbers = #tpu.dot_dimension_numbers<[1], [0], [0], [1], [0, 0, 1, 1], [], []>} : vector<16x32xbf16>, vector<32x8xbf16>, vector<16x8xf32> -> vector<16x8xf32>
    %c0_17 = arith.constant 0 : index
    %c0_18 = arith.constant 0 : index
    %c0_19 = arith.constant 0 : index
    %33 = vector.load %arg6[%c0_17, %c0_18, %c0_19] : memref<4x1x8xf32, #tpu.memory_space<vmem>>, vector<1x1x8xf32>
    %34 = vector.shape_cast %33 : vector<1x1x8xf32> to vector<1x8xf32>
    %35 = vector.broadcast %34 : vector<1x8xf32> to vector<16x8xf32>
    %36 = arith.addf %32, %35 : vector<16x8xf32>
    %c0_20 = arith.constant 0 : index
    %c0_21 = arith.constant 0 : index
    %c0_22 = arith.constant 0 : index
    %37 = vector.load %arg7[%c0_20, %c0_21, %c0_22] : memref<4x32x8xbf16, #tpu.memory_space<vmem>>, vector<1x32x8xbf16>
    %38 = vector.shape_cast %37 : vector<1x32x8xbf16> to vector<32x8xbf16>
    %cst_23 = arith.constant dense<0.000000e+00> : vector<16x8xf32>
    %39 = tpu.matmul %29, %38, %cst_23 {dimension_numbers = #tpu.dot_dimension_numbers<[1], [0], [0], [1], [0, 0, 1, 1], [], []>} : vector<16x32xbf16>, vector<32x8xbf16>, vector<16x8xf32> -> vector<16x8xf32>
    %c0_24 = arith.constant 0 : index
    %c0_25 = arith.constant 0 : index
    %c0_26 = arith.constant 0 : index
    %40 = vector.load %arg8[%c0_24, %c0_25, %c0_26] : memref<4x1x8xf32, #tpu.memory_space<vmem>>, vector<1x1x8xf32>
    %41 = vector.shape_cast %40 : vector<1x1x8xf32> to vector<1x8xf32>
    %42 = vector.broadcast %41 : vector<1x8xf32> to vector<16x8xf32>
    %43 = arith.addf %39, %42 : vector<16x8xf32>
    %c0_27 = arith.constant 0 : index
    %c0_28 = arith.constant 0 : index
    %c0_29 = arith.constant 0 : index
    %44 = vector.load %arg9[%c0_27, %c0_28, %c0_29] : memref<4x32x8xbf16, #tpu.memory_space<vmem>>, vector<1x32x8xbf16>
    %45 = vector.shape_cast %44 : vector<1x32x8xbf16> to vector<32x8xbf16>
    %cst_30 = arith.constant dense<0.000000e+00> : vector<16x8xf32>
    %46 = tpu.matmul %29, %45, %cst_30 {dimension_numbers = #tpu.dot_dimension_numbers<[1], [0], [0], [1], [0, 0, 1, 1], [], []>} : vector<16x32xbf16>, vector<32x8xbf16>, vector<16x8xf32> -> vector<16x8xf32>
    %c0_31 = arith.constant 0 : index
    %c0_32 = arith.constant 0 : index
    %c0_33 = arith.constant 0 : index
    %47 = vector.load %arg10[%c0_31, %c0_32, %c0_33] : memref<4x1x8xf32, #tpu.memory_space<vmem>>, vector<1x1x8xf32>
    %48 = vector.shape_cast %47 : vector<1x1x8xf32> to vector<1x8xf32>
    %49 = vector.broadcast %48 : vector<1x8xf32> to vector<16x8xf32>
    %50 = arith.addf %46, %49 : vector<16x8xf32>
    %51 = arith.truncf %36 : vector<16x8xf32> to vector<16x8xbf16>
    %52 = arith.truncf %43 : vector<16x8xf32> to vector<16x8xbf16>
    %cst_34 = arith.constant dense<0.000000e+00> : vector<16x16xf32>
    %53 = tpu.matmul %51, %52, %cst_34 {dimension_numbers = #tpu.dot_dimension_numbers<[1], [1], [0], [0], [0, 0, 1, 0], [], []>} : vector<16x8xbf16>, vector<16x8xbf16>, vector<16x16xf32> -> vector<16x16xf32>
    %cst_35 = arith.constant 0.353553385 : f32
    %54 = vector.broadcast %cst_35 : f32 to vector<16x16xf32>
    %55 = arith.mulf %53, %54 : vector<16x16xf32>
    %56 = arith.addf %55, %27 : vector<16x16xf32>
    %cst_36 = arith.constant dense<0xFF800000> : vector<16xf32>
    %57 = vector.multi_reduction <maximumf>, %56, %cst_36 [1] : vector<16x16xf32> to vector<16xf32>
    %58 = vector.shape_cast %57 : vector<16xf32> to vector<16x1xf32>
    %59 = vector.broadcast %58 : vector<16x1xf32> to vector<16x16xf32>
    %60 = arith.subf %56, %59 : vector<16x16xf32>
    %61 = math.exp %60 : vector<16x16xf32>
    %cst_37 = arith.constant dense<0.000000e+00> : vector<16xf32>
    %62 = vector.multi_reduction <add>, %61, %cst_37 [1] : vector<16x16xf32> to vector<16xf32>
    %63 = vector.shape_cast %62 : vector<16xf32> to vector<16x1xf32>
    %64 = tpu.reciprocal %63 {approx = true} : vector<16x1xf32> -> vector<16x1xf32>
    %65 = vector.broadcast %64 : vector<16x1xf32> to vector<16x16xf32>
    %66 = arith.mulf %61, %65 : vector<16x16xf32>
    %67 = arith.truncf %66 : vector<16x16xf32> to vector<16x16xbf16>
    %68 = arith.truncf %50 : vector<16x8xf32> to vector<16x8xbf16>
    %cst_38 = arith.constant dense<0.000000e+00> : vector<16x8xf32>
    %69 = tpu.matmul %67, %68, %cst_38 {dimension_numbers = #tpu.dot_dimension_numbers<[1], [0], [0], [1], [0, 0, 1, 1], [], []>} : vector<16x16xbf16>, vector<16x8xbf16>, vector<16x8xf32> -> vector<16x8xf32>
    %70 = arith.truncf %69 : vector<16x8xf32> to vector<16x8xbf16>
    %c0_39 = arith.constant 0 : index
    %c0_40 = arith.constant 0 : index
    %c0_41 = arith.constant 0 : index
    %71 = vector.load %arg11[%c0_39, %c0_40, %c0_41] : memref<4x8x32xbf16, #tpu.memory_space<vmem>>, vector<1x8x32xbf16>
    %72 = vector.shape_cast %71 : vector<1x8x32xbf16> to vector<8x32xbf16>
    %cst_42 = arith.constant dense<0.000000e+00> : vector<16x32xf32>
    %73 = tpu.matmul %70, %72, %cst_42 {dimension_numbers = #tpu.dot_dimension_numbers<[1], [0], [0], [1], [0, 0, 1, 1], [], []>} : vector<16x8xbf16>, vector<8x32xbf16>, vector<16x32xf32> -> vector<16x32xf32>
    %c1 = arith.constant 1 : index
    %c0_43 = arith.constant 0 : index
    %c0_44 = arith.constant 0 : index
    %74 = vector.load %arg5[%c1, %c0_43, %c0_44] : memref<4x32x8xbf16, #tpu.memory_space<vmem>>, vector<1x32x8xbf16>
    %75 = vector.shape_cast %74 : vector<1x32x8xbf16> to vector<32x8xbf16>
    %cst_45 = arith.constant dense<0.000000e+00> : vector<16x8xf32>
    %76 = tpu.matmul %28, %75, %cst_45 {dimension_numbers = #tpu.dot_dimension_numbers<[1], [0], [0], [1], [0, 0, 1, 1], [], []>} : vector<16x32xbf16>, vector<32x8xbf16>, vector<16x8xf32> -> vector<16x8xf32>
    %c1_46 = arith.constant 1 : index
    %c0_47 = arith.constant 0 : index
    %c0_48 = arith.constant 0 : index
    %77 = vector.load %arg6[%c1_46, %c0_47, %c0_48] : memref<4x1x8xf32, #tpu.memory_space<vmem>>, vector<1x1x8xf32>
    %78 = vector.shape_cast %77 : vector<1x1x8xf32> to vector<1x8xf32>
    %79 = vector.broadcast %78 : vector<1x8xf32> to vector<16x8xf32>
    %80 = arith.addf %76, %79 : vector<16x8xf32>
    %c1_49 = arith.constant 1 : index
    %c0_50 = arith.constant 0 : index
    %c0_51 = arith.constant 0 : index
    %81 = vector.load %arg7[%c1_49, %c0_50, %c0_51] : memref<4x32x8xbf16, #tpu.memory_space<vmem>>, vector<1x32x8xbf16>
    %82 = vector.shape_cast %81 : vector<1x32x8xbf16> to vector<32x8xbf16>
    %cst_52 = arith.constant dense<0.000000e+00> : vector<16x8xf32>
    %83 = tpu.matmul %29, %82, %cst_52 {dimension_numbers = #tpu.dot_dimension_numbers<[1], [0], [0], [1], [0, 0, 1, 1], [], []>} : vector<16x32xbf16>, vector<32x8xbf16>, vector<16x8xf32> -> vector<16x8xf32>
    %c1_53 = arith.constant 1 : index
    %c0_54 = arith.constant 0 : index
    %c0_55 = arith.constant 0 : index
    %84 = vector.load %arg8[%c1_53, %c0_54, %c0_55] : memref<4x1x8xf32, #tpu.memory_space<vmem>>, vector<1x1x8xf32>
    %85 = vector.shape_cast %84 : vector<1x1x8xf32> to vector<1x8xf32>
    %86 = vector.broadcast %85 : vector<1x8xf32> to vector<16x8xf32>
    %87 = arith.addf %83, %86 : vector<16x8xf32>
    %c1_56 = arith.constant 1 : index
    %c0_57 = arith.constant 0 : index
    %c0_58 = arith.constant 0 : index
    %88 = vector.load %arg9[%c1_56, %c0_57, %c0_58] : memref<4x32x8xbf16, #tpu.memory_space<vmem>>, vector<1x32x8xbf16>
    %89 = vector.shape_cast %88 : vector<1x32x8xbf16> to vector<32x8xbf16>
    %cst_59 = arith.constant dense<0.000000e+00> : vector<16x8xf32>
    %90 = tpu.matmul %29, %89, %cst_59 {dimension_numbers = #tpu.dot_dimension_numbers<[1], [0], [0], [1], [0, 0, 1, 1], [], []>} : vector<16x32xbf16>, vector<32x8xbf16>, vector<16x8xf32> -> vector<16x8xf32>
    %c1_60 = arith.constant 1 : index
    %c0_61 = arith.constant 0 : index
    %c0_62 = arith.constant 0 : index
    %91 = vector.load %arg10[%c1_60, %c0_61, %c0_62] : memref<4x1x8xf32, #tpu.memory_space<vmem>>, vector<1x1x8xf32>
    %92 = vector.shape_cast %91 : vector<1x1x8xf32> to vector<1x8xf32>
    %93 = vector.broadcast %92 : vector<1x8xf32> to vector<16x8xf32>
    %94 = arith.addf %90, %93 : vector<16x8xf32>
    %95 = arith.truncf %80 : vector<16x8xf32> to vector<16x8xbf16>
    %96 = arith.truncf %87 : vector<16x8xf32> to vector<16x8xbf16>
    %cst_63 = arith.constant dense<0.000000e+00> : vector<16x16xf32>
    %97 = tpu.matmul %95, %96, %cst_63 {dimension_numbers = #tpu.dot_dimension_numbers<[1], [1], [0], [0], [0, 0, 1, 0], [], []>} : vector<16x8xbf16>, vector<16x8xbf16>, vector<16x16xf32> -> vector<16x16xf32>
    %cst_64 = arith.constant 0.353553385 : f32
    %98 = vector.broadcast %cst_64 : f32 to vector<16x16xf32>
    %99 = arith.mulf %97, %98 : vector<16x16xf32>
    %100 = arith.addf %99, %27 : vector<16x16xf32>
    %cst_65 = arith.constant dense<0xFF800000> : vector<16xf32>
    %101 = vector.multi_reduction <maximumf>, %100, %cst_65 [1] : vector<16x16xf32> to vector<16xf32>
    %102 = vector.shape_cast %101 : vector<16xf32> to vector<16x1xf32>
    %103 = vector.broadcast %102 : vector<16x1xf32> to vector<16x16xf32>
    %104 = arith.subf %100, %103 : vector<16x16xf32>
    %105 = math.exp %104 : vector<16x16xf32>
    %cst_66 = arith.constant dense<0.000000e+00> : vector<16xf32>
    %106 = vector.multi_reduction <add>, %105, %cst_66 [1] : vector<16x16xf32> to vector<16xf32>
    %107 = vector.shape_cast %106 : vector<16xf32> to vector<16x1xf32>
    %108 = tpu.reciprocal %107 {approx = true} : vector<16x1xf32> -> vector<16x1xf32>
    %109 = vector.broadcast %108 : vector<16x1xf32> to vector<16x16xf32>
    %110 = arith.mulf %105, %109 : vector<16x16xf32>
    %111 = arith.truncf %110 : vector<16x16xf32> to vector<16x16xbf16>
    %112 = arith.truncf %94 : vector<16x8xf32> to vector<16x8xbf16>
    %cst_67 = arith.constant dense<0.000000e+00> : vector<16x8xf32>
    %113 = tpu.matmul %111, %112, %cst_67 {dimension_numbers = #tpu.dot_dimension_numbers<[1], [0], [0], [1], [0, 0, 1, 1], [], []>} : vector<16x16xbf16>, vector<16x8xbf16>, vector<16x8xf32> -> vector<16x8xf32>
    %114 = arith.truncf %113 : vector<16x8xf32> to vector<16x8xbf16>
    %c1_68 = arith.constant 1 : index
    %c0_69 = arith.constant 0 : index
    %c0_70 = arith.constant 0 : index
    %115 = vector.load %arg11[%c1_68, %c0_69, %c0_70] : memref<4x8x32xbf16, #tpu.memory_space<vmem>>, vector<1x8x32xbf16>
    %116 = vector.shape_cast %115 : vector<1x8x32xbf16> to vector<8x32xbf16>
    %cst_71 = arith.constant dense<0.000000e+00> : vector<16x32xf32>
    %117 = tpu.matmul %114, %116, %cst_71 {dimension_numbers = #tpu.dot_dimension_numbers<[1], [0], [0], [1], [0, 0, 1, 1], [], []>} : vector<16x8xbf16>, vector<8x32xbf16>, vector<16x32xf32> -> vector<16x32xf32>
    %118 = arith.addf %73, %117 : vector<16x32xf32>
    %c2 = arith.constant 2 : index
    %c0_72 = arith.constant 0 : index
    %c0_73 = arith.constant 0 : index
    %119 = vector.load %arg5[%c2, %c0_72, %c0_73] : memref<4x32x8xbf16, #tpu.memory_space<vmem>>, vector<1x32x8xbf16>
    %120 = vector.shape_cast %119 : vector<1x32x8xbf16> to vector<32x8xbf16>
    %cst_74 = arith.constant dense<0.000000e+00> : vector<16x8xf32>
    %121 = tpu.matmul %28, %120, %cst_74 {dimension_numbers = #tpu.dot_dimension_numbers<[1], [0], [0], [1], [0, 0, 1, 1], [], []>} : vector<16x32xbf16>, vector<32x8xbf16>, vector<16x8xf32> -> vector<16x8xf32>
    %c2_75 = arith.constant 2 : index
    %c0_76 = arith.constant 0 : index
    %c0_77 = arith.constant 0 : index
    %122 = vector.load %arg6[%c2_75, %c0_76, %c0_77] : memref<4x1x8xf32, #tpu.memory_space<vmem>>, vector<1x1x8xf32>
    %123 = vector.shape_cast %122 : vector<1x1x8xf32> to vector<1x8xf32>
    %124 = vector.broadcast %123 : vector<1x8xf32> to vector<16x8xf32>
    %125 = arith.addf %121, %124 : vector<16x8xf32>
    %c2_78 = arith.constant 2 : index
    %c0_79 = arith.constant 0 : index
    %c0_80 = arith.constant 0 : index
    %126 = vector.load %arg7[%c2_78, %c0_79, %c0_80] : memref<4x32x8xbf16, #tpu.memory_space<vmem>>, vector<1x32x8xbf16>
    %127 = vector.shape_cast %126 : vector<1x32x8xbf16> to vector<32x8xbf16>
    %cst_81 = arith.constant dense<0.000000e+00> : vector<16x8xf32>
    %128 = tpu.matmul %29, %127, %cst_81 {dimension_numbers = #tpu.dot_dimension_numbers<[1], [0], [0], [1], [0, 0, 1, 1], [], []>} : vector<16x32xbf16>, vector<32x8xbf16>, vector<16x8xf32> -> vector<16x8xf32>
    %c2_82 = arith.constant 2 : index
    %c0_83 = arith.constant 0 : index
    %c0_84 = arith.constant 0 : index
    %129 = vector.load %arg8[%c2_82, %c0_83, %c0_84] : memref<4x1x8xf32, #tpu.memory_space<vmem>>, vector<1x1x8xf32>
    %130 = vector.shape_cast %129 : vector<1x1x8xf32> to vector<1x8xf32>
    %131 = vector.broadcast %130 : vector<1x8xf32> to vector<16x8xf32>
    %132 = arith.addf %128, %131 : vector<16x8xf32>
    %c2_85 = arith.constant 2 : index
    %c0_86 = arith.constant 0 : index
    %c0_87 = arith.constant 0 : index
    %133 = vector.load %arg9[%c2_85, %c0_86, %c0_87] : memref<4x32x8xbf16, #tpu.memory_space<vmem>>, vector<1x32x8xbf16>
    %134 = vector.shape_cast %133 : vector<1x32x8xbf16> to vector<32x8xbf16>
    %cst_88 = arith.constant dense<0.000000e+00> : vector<16x8xf32>
    %135 = tpu.matmul %29, %134, %cst_88 {dimension_numbers = #tpu.dot_dimension_numbers<[1], [0], [0], [1], [0, 0, 1, 1], [], []>} : vector<16x32xbf16>, vector<32x8xbf16>, vector<16x8xf32> -> vector<16x8xf32>
    %c2_89 = arith.constant 2 : index
    %c0_90 = arith.constant 0 : index
    %c0_91 = arith.constant 0 : index
    %136 = vector.load %arg10[%c2_89, %c0_90, %c0_91] : memref<4x1x8xf32, #tpu.memory_space<vmem>>, vector<1x1x8xf32>
    %137 = vector.shape_cast %136 : vector<1x1x8xf32> to vector<1x8xf32>
    %138 = vector.broadcast %137 : vector<1x8xf32> to vector<16x8xf32>
    %139 = arith.addf %135, %138 : vector<16x8xf32>
    %140 = arith.truncf %125 : vector<16x8xf32> to vector<16x8xbf16>
    %141 = arith.truncf %132 : vector<16x8xf32> to vector<16x8xbf16>
    %cst_92 = arith.constant dense<0.000000e+00> : vector<16x16xf32>
    %142 = tpu.matmul %140, %141, %cst_92 {dimension_numbers = #tpu.dot_dimension_numbers<[1], [1], [0], [0], [0, 0, 1, 0], [], []>} : vector<16x8xbf16>, vector<16x8xbf16>, vector<16x16xf32> -> vector<16x16xf32>
    %cst_93 = arith.constant 0.353553385 : f32
    %143 = vector.broadcast %cst_93 : f32 to vector<16x16xf32>
    %144 = arith.mulf %142, %143 : vector<16x16xf32>
    %145 = arith.addf %144, %27 : vector<16x16xf32>
    %cst_94 = arith.constant dense<0xFF800000> : vector<16xf32>
    %146 = vector.multi_reduction <maximumf>, %145, %cst_94 [1] : vector<16x16xf32> to vector<16xf32>
    %147 = vector.shape_cast %146 : vector<16xf32> to vector<16x1xf32>
    %148 = vector.broadcast %147 : vector<16x1xf32> to vector<16x16xf32>
    %149 = arith.subf %145, %148 : vector<16x16xf32>
    %150 = math.exp %149 : vector<16x16xf32>
    %cst_95 = arith.constant dense<0.000000e+00> : vector<16xf32>
    %151 = vector.multi_reduction <add>, %150, %cst_95 [1] : vector<16x16xf32> to vector<16xf32>
    %152 = vector.shape_cast %151 : vector<16xf32> to vector<16x1xf32>
    %153 = tpu.reciprocal %152 {approx = true} : vector<16x1xf32> -> vector<16x1xf32>
    %154 = vector.broadcast %153 : vector<16x1xf32> to vector<16x16xf32>
    %155 = arith.mulf %150, %154 : vector<16x16xf32>
    %156 = arith.truncf %155 : vector<16x16xf32> to vector<16x16xbf16>
    %157 = arith.truncf %139 : vector<16x8xf32> to vector<16x8xbf16>
    %cst_96 = arith.constant dense<0.000000e+00> : vector<16x8xf32>
    %158 = tpu.matmul %156, %157, %cst_96 {dimension_numbers = #tpu.dot_dimension_numbers<[1], [0], [0], [1], [0, 0, 1, 1], [], []>} : vector<16x16xbf16>, vector<16x8xbf16>, vector<16x8xf32> -> vector<16x8xf32>
    %159 = arith.truncf %158 : vector<16x8xf32> to vector<16x8xbf16>
    %c2_97 = arith.constant 2 : index
    %c0_98 = arith.constant 0 : index
    %c0_99 = arith.constant 0 : index
    %160 = vector.load %arg11[%c2_97, %c0_98, %c0_99] : memref<4x8x32xbf16, #tpu.memory_space<vmem>>, vector<1x8x32xbf16>
    %161 = vector.shape_cast %160 : vector<1x8x32xbf16> to vector<8x32xbf16>
    %cst_100 = arith.constant dense<0.000000e+00> : vector<16x32xf32>
    %162 = tpu.matmul %159, %161, %cst_100 {dimension_numbers = #tpu.dot_dimension_numbers<[1], [0], [0], [1], [0, 0, 1, 1], [], []>} : vector<16x8xbf16>, vector<8x32xbf16>, vector<16x32xf32> -> vector<16x32xf32>
    %163 = arith.addf %118, %162 : vector<16x32xf32>
    %c3 = arith.constant 3 : index
    %c0_101 = arith.constant 0 : index
    %c0_102 = arith.constant 0 : index
    %164 = vector.load %arg5[%c3, %c0_101, %c0_102] : memref<4x32x8xbf16, #tpu.memory_space<vmem>>, vector<1x32x8xbf16>
    %165 = vector.shape_cast %164 : vector<1x32x8xbf16> to vector<32x8xbf16>
    %cst_103 = arith.constant dense<0.000000e+00> : vector<16x8xf32>
    %166 = tpu.matmul %28, %165, %cst_103 {dimension_numbers = #tpu.dot_dimension_numbers<[1], [0], [0], [1], [0, 0, 1, 1], [], []>} : vector<16x32xbf16>, vector<32x8xbf16>, vector<16x8xf32> -> vector<16x8xf32>
    %c3_104 = arith.constant 3 : index
    %c0_105 = arith.constant 0 : index
    %c0_106 = arith.constant 0 : index
    %167 = vector.load %arg6[%c3_104, %c0_105, %c0_106] : memref<4x1x8xf32, #tpu.memory_space<vmem>>, vector<1x1x8xf32>
    %168 = vector.shape_cast %167 : vector<1x1x8xf32> to vector<1x8xf32>
    %169 = vector.broadcast %168 : vector<1x8xf32> to vector<16x8xf32>
    %170 = arith.addf %166, %169 : vector<16x8xf32>
    %c3_107 = arith.constant 3 : index
    %c0_108 = arith.constant 0 : index
    %c0_109 = arith.constant 0 : index
    %171 = vector.load %arg7[%c3_107, %c0_108, %c0_109] : memref<4x32x8xbf16, #tpu.memory_space<vmem>>, vector<1x32x8xbf16>
    %172 = vector.shape_cast %171 : vector<1x32x8xbf16> to vector<32x8xbf16>
    %cst_110 = arith.constant dense<0.000000e+00> : vector<16x8xf32>
    %173 = tpu.matmul %29, %172, %cst_110 {dimension_numbers = #tpu.dot_dimension_numbers<[1], [0], [0], [1], [0, 0, 1, 1], [], []>} : vector<16x32xbf16>, vector<32x8xbf16>, vector<16x8xf32> -> vector<16x8xf32>
    %c3_111 = arith.constant 3 : index
    %c0_112 = arith.constant 0 : index
    %c0_113 = arith.constant 0 : index
    %174 = vector.load %arg8[%c3_111, %c0_112, %c0_113] : memref<4x1x8xf32, #tpu.memory_space<vmem>>, vector<1x1x8xf32>
    %175 = vector.shape_cast %174 : vector<1x1x8xf32> to vector<1x8xf32>
    %176 = vector.broadcast %175 : vector<1x8xf32> to vector<16x8xf32>
    %177 = arith.addf %173, %176 : vector<16x8xf32>
    %c3_114 = arith.constant 3 : index
    %c0_115 = arith.constant 0 : index
    %c0_116 = arith.constant 0 : index
    %178 = vector.load %arg9[%c3_114, %c0_115, %c0_116] : memref<4x32x8xbf16, #tpu.memory_space<vmem>>, vector<1x32x8xbf16>
    %179 = vector.shape_cast %178 : vector<1x32x8xbf16> to vector<32x8xbf16>
    %cst_117 = arith.constant dense<0.000000e+00> : vector<16x8xf32>
    %180 = tpu.matmul %29, %179, %cst_117 {dimension_numbers = #tpu.dot_dimension_numbers<[1], [0], [0], [1], [0, 0, 1, 1], [], []>} : vector<16x32xbf16>, vector<32x8xbf16>, vector<16x8xf32> -> vector<16x8xf32>
    %c3_118 = arith.constant 3 : index
    %c0_119 = arith.constant 0 : index
    %c0_120 = arith.constant 0 : index
    %181 = vector.load %arg10[%c3_118, %c0_119, %c0_120] : memref<4x1x8xf32, #tpu.memory_space<vmem>>, vector<1x1x8xf32>
    %182 = vector.shape_cast %181 : vector<1x1x8xf32> to vector<1x8xf32>
    %183 = vector.broadcast %182 : vector<1x8xf32> to vector<16x8xf32>
    %184 = arith.addf %180, %183 : vector<16x8xf32>
    %185 = arith.truncf %170 : vector<16x8xf32> to vector<16x8xbf16>
    %186 = arith.truncf %177 : vector<16x8xf32> to vector<16x8xbf16>
    %cst_121 = arith.constant dense<0.000000e+00> : vector<16x16xf32>
    %187 = tpu.matmul %185, %186, %cst_121 {dimension_numbers = #tpu.dot_dimension_numbers<[1], [1], [0], [0], [0, 0, 1, 0], [], []>} : vector<16x8xbf16>, vector<16x8xbf16>, vector<16x16xf32> -> vector<16x16xf32>
    %cst_122 = arith.constant 0.353553385 : f32
    %188 = vector.broadcast %cst_122 : f32 to vector<16x16xf32>
    %189 = arith.mulf %187, %188 : vector<16x16xf32>
    %190 = arith.addf %189, %27 : vector<16x16xf32>
    %cst_123 = arith.constant dense<0xFF800000> : vector<16xf32>
    %191 = vector.multi_reduction <maximumf>, %190, %cst_123 [1] : vector<16x16xf32> to vector<16xf32>
    %192 = vector.shape_cast %191 : vector<16xf32> to vector<16x1xf32>
    %193 = vector.broadcast %192 : vector<16x1xf32> to vector<16x16xf32>
    %194 = arith.subf %190, %193 : vector<16x16xf32>
    %195 = math.exp %194 : vector<16x16xf32>
    %cst_124 = arith.constant dense<0.000000e+00> : vector<16xf32>
    %196 = vector.multi_reduction <add>, %195, %cst_124 [1] : vector<16x16xf32> to vector<16xf32>
    %197 = vector.shape_cast %196 : vector<16xf32> to vector<16x1xf32>
    %198 = tpu.reciprocal %197 {approx = true} : vector<16x1xf32> -> vector<16x1xf32>
    %199 = vector.broadcast %198 : vector<16x1xf32> to vector<16x16xf32>
    %200 = arith.mulf %195, %199 : vector<16x16xf32>
    %201 = arith.truncf %200 : vector<16x16xf32> to vector<16x16xbf16>
    %202 = arith.truncf %184 : vector<16x8xf32> to vector<16x8xbf16>
    %cst_125 = arith.constant dense<0.000000e+00> : vector<16x8xf32>
    %203 = tpu.matmul %201, %202, %cst_125 {dimension_numbers = #tpu.dot_dimension_numbers<[1], [0], [0], [1], [0, 0, 1, 1], [], []>} : vector<16x16xbf16>, vector<16x8xbf16>, vector<16x8xf32> -> vector<16x8xf32>
    %204 = arith.truncf %203 : vector<16x8xf32> to vector<16x8xbf16>
    %c3_126 = arith.constant 3 : index
    %c0_127 = arith.constant 0 : index
    %c0_128 = arith.constant 0 : index
    %205 = vector.load %arg11[%c3_126, %c0_127, %c0_128] : memref<4x8x32xbf16, #tpu.memory_space<vmem>>, vector<1x8x32xbf16>
    %206 = vector.shape_cast %205 : vector<1x8x32xbf16> to vector<8x32xbf16>
    %cst_129 = arith.constant dense<0.000000e+00> : vector<16x32xf32>
    %207 = tpu.matmul %204, %206, %cst_129 {dimension_numbers = #tpu.dot_dimension_numbers<[1], [0], [0], [1], [0, 0, 1, 1], [], []>} : vector<16x8xbf16>, vector<8x32xbf16>, vector<16x32xf32> -> vector<16x32xf32>
    %208 = arith.addf %163, %207 : vector<16x32xf32>
    %c0_130 = arith.constant 0 : index
    %c0_131 = arith.constant 0 : index
    %209 = vector.load %arg12[%c0_130, %c0_131] : memref<1x32xf32, #tpu.memory_space<vmem>>, vector<1x32xf32>
    %210 = vector.broadcast %209 : vector<1x32xf32> to vector<16x32xf32>
    %211 = arith.addf %208, %210 : vector<16x32xf32>
    %212 = arith.addf %1, %211 : vector<16x32xf32>
    %c0_132 = arith.constant 0 : index
    %c0_133 = arith.constant 0 : index
    %c0_134 = arith.constant 0 : index
    %213 = vector.load %arg13[%c0_132, %c0_133, %c0_134] : memref<1x16x32xf32, #tpu.memory_space<vmem>>, vector<1x16x32xf32>
    %214 = vector.shape_cast %213 : vector<1x16x32xf32> to vector<16x32xf32>
    %215 = vector.shape_cast %212 : vector<16x32xf32> to vector<1x16x32xf32>
    tpu.vector_store %arg13[%c0_132, %c0_133, %c0_134], %215 {strides = array<i32>} : memref<1x16x32xf32, #tpu.memory_space<vmem>>, vector<1x16x32xf32>,
    return
  }
  func.func @transform_0(%arg0: i32) -> (i32, i32, i32) {
    %c0_i32 = arith.constant 0 : i32
    %c0_i32_0 = arith.constant 0 : i32
    %c0_i32_1 = arith.constant 0 : i32
    return %arg0, %c0_i32, %c0_i32_0 : i32, i32, i32
  }
  func.func @transform_1(%arg0: i32) -> (i32, i32, i32) {
    %c0_i32 = arith.constant 0 : i32
    %c0_i32_0 = arith.constant 0 : i32
    %c0_i32_1 = arith.constant 0 : i32
    return %arg0, %c0_i32, %c0_i32_0 : i32, i32, i32
  }
  func.func @transform_2(%arg0: i32) -> (i32, i32) {
    %c0_i32 = arith.constant 0 : i32
    %c0_i32_0 = arith.constant 0 : i32
    %c0_i32_1 = arith.constant 0 : i32
    return %c0_i32, %c0_i32_0 : i32, i32
  }
  func.func @transform_3(%arg0: i32) -> (i32, i32) {
    %c0_i32 = arith.constant 0 : i32
    %c0_i32_0 = arith.constant 0 : i32
    %c0_i32_1 = arith.constant 0 : i32
    return %c0_i32, %c0_i32_0 : i32, i32
  }
  func.func @transform_4(%arg0: i32) -> (i32, i32, i32) {
    %c0_i32 = arith.constant 0 : i32
    %c0_i32_0 = arith.constant 0 : i32
    %c0_i32_1 = arith.constant 0 : i32
    %c0_i32_2 = arith.constant 0 : i32
    return %c0_i32, %c0_i32_0, %c0_i32_1 : i32, i32, i32
  }
  func.func @transform_5(%arg0: i32) -> (i32, i32, i32) {
    %c0_i32 = arith.constant 0 : i32
    %c0_i32_0 = arith.constant 0 : i32
    %c0_i32_1 = arith.constant 0 : i32
    %c0_i32_2 = arith.constant 0 : i32
    return %c0_i32, %c0_i32_0, %c0_i32_1 : i32, i32, i32
  }
  func.func @transform_6(%arg0: i32) -> (i32, i32, i32) {
    %c0_i32 = arith.constant 0 : i32
    %c0_i32_0 = arith.constant 0 : i32
    %c0_i32_1 = arith.constant 0 : i32
    %c0_i32_2 = arith.constant 0 : i32
    return %c0_i32, %c0_i32_0, %c0_i32_1 : i32, i32, i32
  }
  func.func @transform_7(%arg0: i32) -> (i32, i32, i32) {
    %c0_i32 = arith.constant 0 : i32
    %c0_i32_0 = arith.constant 0 : i32
    %c0_i32_1 = arith.constant 0 : i32
    %c0_i32_2 = arith.constant 0 : i32
    return %c0_i32, %c0_i32_0, %c0_i32_1 : i32, i32, i32
  }
  func.func @transform_8(%arg0: i32) -> (i32, i32, i32) {
    %c0_i32 = arith.constant 0 : i32
    %c0_i32_0 = arith.constant 0 : i32
    %c0_i32_1 = arith.constant 0 : i32
    %c0_i32_2 = arith.constant 0 : i32
    return %c0_i32, %c0_i32_0, %c0_i32_1 : i32, i32, i32
  }
  func.func @transform_9(%arg0: i32) -> (i32, i32, i32) {
    %c0_i32 = arith.constant 0 : i32
    %c0_i32_0 = arith.constant 0 : i32
    %c0_i32_1 = arith.constant 0 : i32
    %c0_i32_2 = arith.constant 0 : i32
    return %c0_i32, %c0_i32_0, %c0_i32_1 : i32, i32, i32
  }
  func.func @transform_10(%arg0: i32) -> (i32, i32, i32) {
    %c0_i32 = arith.constant 0 : i32
    %c0_i32_0 = arith.constant 0 : i32
    %c0_i32_1 = arith.constant 0 : i32
    %c0_i32_2 = arith.constant 0 : i32
    return %c0_i32, %c0_i32_0, %c0_i32_1 : i32, i32, i32
  }
  func.func @transform_11(%arg0: i32) -> (i32, i32) {
    %c0_i32 = arith.constant 0 : i32
    %c0_i32_0 = arith.constant 0 : i32
    %c0_i32_1 = arith.constant 0 : i32
    return %c0_i32, %c0_i32_0 : i32, i32
  }
  func.func @transform_12(%arg0: i32) -> (i32, i32, i32) {
    %c0_i32 = arith.constant 0 : i32
    %c0_i32_0 = arith.constant 0 : i32
    %c0_i32_1 = arith.constant 0 : i32
    return %arg0, %c0_i32, %c0_i32_0 : i32, i32, i32
  }
}

module attributes {stable_mosaic.version = 11 : i64} {
  func.func @_layernorm_kernel(%arg0: memref<32x32xf32, #tpu.memory_space<vmem>>, %arg1: memref<1x32xf32, #tpu.memory_space<vmem>>, %arg2: memref<1x32xf32, #tpu.memory_space<vmem>>, %arg3: memref<32x32xf32, #tpu.memory_space<vmem>>) attributes {dimension_semantics = [], scalar_prefetch = 0 : i64, scratch_operands = 0 : i64, tpu.core_type = #tpu.core_type<tc>} {
    %c0 = arith.constant 0 : index
    %c0_0 = arith.constant 0 : index
    %0 = vector.load %arg0[%c0, %c0_0] : memref<32x32xf32, #tpu.memory_space<vmem>>, vector<32x32xf32>
    %c0_1 = arith.constant 0 : index
    %c0_2 = arith.constant 0 : index
    %1 = vector.load %arg1[%c0_1, %c0_2] : memref<1x32xf32, #tpu.memory_space<vmem>>, vector<1x32xf32>
    %c0_3 = arith.constant 0 : index
    %c0_4 = arith.constant 0 : index
    %2 = vector.load %arg2[%c0_3, %c0_4] : memref<1x32xf32, #tpu.memory_space<vmem>>, vector<1x32xf32>
    %cst = arith.constant dense<0.000000e+00> : vector<32xf32>
    %3 = vector.multi_reduction <add>, %0, %cst [1] : vector<32x32xf32> to vector<32xf32>
    %4 = vector.shape_cast %3 : vector<32xf32> to vector<32x1xf32>
    %cst_5 = arith.constant 3.200000e+01 : f32
    %5 = vector.broadcast %cst_5 : f32 to vector<32x1xf32>
    %6 = arith.divf %4, %5 : vector<32x1xf32>
    %7 = vector.broadcast %6 : vector<32x1xf32> to vector<32x32xf32>
    %8 = arith.subf %0, %7 : vector<32x32xf32>
    %9 = arith.mulf %8, %8 : vector<32x32xf32>
    %cst_6 = arith.constant dense<0.000000e+00> : vector<32xf32>
    %10 = vector.multi_reduction <add>, %9, %cst_6 [1] : vector<32x32xf32> to vector<32xf32>
    %11 = vector.shape_cast %10 : vector<32xf32> to vector<32x1xf32>
    %cst_7 = arith.constant 3.200000e+01 : f32
    %12 = vector.broadcast %cst_7 : f32 to vector<32x1xf32>
    %13 = arith.divf %11, %12 : vector<32x1xf32>
    %14 = vector.broadcast %6 : vector<32x1xf32> to vector<32x32xf32>
    %15 = arith.subf %0, %14 : vector<32x32xf32>
    %cst_8 = arith.constant 9.99999974E-6 : f32
    %16 = vector.broadcast %cst_8 : f32 to vector<32x1xf32>
    %17 = arith.addf %13, %16 : vector<32x1xf32>
    %18 = math.rsqrt %17 : vector<32x1xf32>
    %19 = vector.broadcast %18 : vector<32x1xf32> to vector<32x32xf32>
    %20 = arith.mulf %15, %19 : vector<32x32xf32>
    %21 = vector.broadcast %1 : vector<1x32xf32> to vector<32x32xf32>
    %22 = arith.mulf %20, %21 : vector<32x32xf32>
    %23 = vector.broadcast %2 : vector<1x32xf32> to vector<32x32xf32>
    %24 = arith.addf %22, %23 : vector<32x32xf32>
    %c0_9 = arith.constant 0 : index
    %c0_10 = arith.constant 0 : index
    %25 = vector.load %arg3[%c0_9, %c0_10] : memref<32x32xf32, #tpu.memory_space<vmem>>, vector<32x32xf32>
    tpu.vector_store %arg3[%c0_9, %c0_10], %24 {strides = array<i32>} : memref<32x32xf32, #tpu.memory_space<vmem>>, vector<32x32xf32>,
    return
  }
}

module attributes {stable_mosaic.version = 11 : i64} {
  func.func @_self_attn_block_kernel(%arg0: i32, %arg1: memref<1x8x32xf32, #tpu.memory_space<vmem>>, %arg2: memref<1x8x8xf32, #tpu.memory_space<vmem>>, %arg3: memref<1x32xf32, #tpu.memory_space<vmem>>, %arg4: memref<1x32xf32, #tpu.memory_space<vmem>>, %arg5: memref<4x32x8xbf16, #tpu.memory_space<vmem>>, %arg6: memref<4x1x8xf32, #tpu.memory_space<vmem>>, %arg7: memref<4x32x8xbf16, #tpu.memory_space<vmem>>, %arg8: memref<4x1x8xf32, #tpu.memory_space<vmem>>, %arg9: memref<4x32x8xbf16, #tpu.memory_space<vmem>>, %arg10: memref<4x1x8xf32, #tpu.memory_space<vmem>>, %arg11: memref<4x8x32xbf16, #tpu.memory_space<vmem>>, %arg12: memref<1x32xf32, #tpu.memory_space<vmem>>, %arg13: memref<1x8x32xf32, #tpu.memory_space<vmem>>) attributes {dimension_semantics = [#tpu.dimension_semantics<parallel>], iteration_bounds = array<i64: 2>, scalar_prefetch = 0 : i64, scratch_operands = 0 : i64, tpu.core_type = #tpu.core_type<tc>, window_params = [{transform_indices = @transform_0, window_bounds = array<i64: 1, 8, 32>}, {transform_indices = @transform_1, window_bounds = array<i64: 1, 8, 8>}, {pipeline_mode = #tpu.pipeline_mode<synchronous>, transform_indices = @transform_2, window_bounds = array<i64: 1, 32>}, {pipeline_mode = #tpu.pipeline_mode<synchronous>, transform_indices = @transform_3, window_bounds = array<i64: 1, 32>}, {pipeline_mode = #tpu.pipeline_mode<synchronous>, transform_indices = @transform_4, window_bounds = array<i64: 4, 32, 8>}, {pipeline_mode = #tpu.pipeline_mode<synchronous>, transform_indices = @transform_5, window_bounds = array<i64: 4, 1, 8>}, {pipeline_mode = #tpu.pipeline_mode<synchronous>, transform_indices = @transform_6, window_bounds = array<i64: 4, 32, 8>}, {pipeline_mode = #tpu.pipeline_mode<synchronous>, transform_indices = @transform_7, window_bounds = array<i64: 4, 1, 8>}, {pipeline_mode = #tpu.pipeline_mode<synchronous>, transform_indices = @transform_8, window_bounds = array<i64: 4, 32, 8>}, {pipeline_mode = #tpu.pipeline_mode<synchronous>, transform_indices = @transform_9, window_bounds = array<i64: 4, 1, 8>}, {pipeline_mode = #tpu.pipeline_mode<synchronous>, transform_indices = @transform_10, window_bounds = array<i64: 4, 8, 32>}, {pipeline_mode = #tpu.pipeline_mode<synchronous>, transform_indices = @transform_11, window_bounds = array<i64: 1, 32>}, {transform_indices = @transform_12, window_bounds = array<i64: 1, 8, 32>}]} {
    %c0 = arith.constant 0 : index
    %c0_0 = arith.constant 0 : index
    %c0_1 = arith.constant 0 : index
    %0 = vector.load %arg1[%c0, %c0_0, %c0_1] : memref<1x8x32xf32, #tpu.memory_space<vmem>>, vector<1x8x32xf32>
    %1 = vector.shape_cast %0 : vector<1x8x32xf32> to vector<8x32xf32>
    %c0_2 = arith.constant 0 : index
    %c0_3 = arith.constant 0 : index
    %2 = vector.load %arg3[%c0_2, %c0_3] : memref<1x32xf32, #tpu.memory_space<vmem>>, vector<1x32xf32>
    %c0_4 = arith.constant 0 : index
    %c0_5 = arith.constant 0 : index
    %3 = vector.load %arg4[%c0_4, %c0_5] : memref<1x32xf32, #tpu.memory_space<vmem>>, vector<1x32xf32>
    %cst = arith.constant dense<0.000000e+00> : vector<8xf32>
    %4 = vector.multi_reduction <add>, %1, %cst [1] : vector<8x32xf32> to vector<8xf32>
    %5 = vector.shape_cast %4 : vector<8xf32> to vector<8x1xf32>
    %cst_6 = arith.constant 3.200000e+01 : f32
    %6 = vector.broadcast %cst_6 : f32 to vector<8x1xf32>
    %7 = arith.divf %5, %6 : vector<8x1xf32>
    %8 = vector.broadcast %7 : vector<8x1xf32> to vector<8x32xf32>
    %9 = arith.subf %1, %8 : vector<8x32xf32>
    %10 = arith.mulf %9, %9 : vector<8x32xf32>
    %cst_7 = arith.constant dense<0.000000e+00> : vector<8xf32>
    %11 = vector.multi_reduction <add>, %10, %cst_7 [1] : vector<8x32xf32> to vector<8xf32>
    %12 = vector.shape_cast %11 : vector<8xf32> to vector<8x1xf32>
    %cst_8 = arith.constant 3.200000e+01 : f32
    %13 = vector.broadcast %cst_8 : f32 to vector<8x1xf32>
    %14 = arith.divf %12, %13 : vector<8x1xf32>
    %15 = vector.broadcast %7 : vector<8x1xf32> to vector<8x32xf32>
    %16 = arith.subf %1, %15 : vector<8x32xf32>
    %cst_9 = arith.constant 9.99999997E-7 : f32
    %17 = vector.broadcast %cst_9 : f32 to vector<8x1xf32>
    %18 = arith.addf %14, %17 : vector<8x1xf32>
    %19 = math.rsqrt %18 : vector<8x1xf32>
    %20 = vector.broadcast %19 : vector<8x1xf32> to vector<8x32xf32>
    %21 = arith.mulf %16, %20 : vector<8x32xf32>
    %22 = vector.broadcast %2 : vector<1x32xf32> to vector<8x32xf32>
    %23 = arith.mulf %21, %22 : vector<8x32xf32>
    %24 = vector.broadcast %3 : vector<1x32xf32> to vector<8x32xf32>
    %25 = arith.addf %23, %24 : vector<8x32xf32>
    %c0_10 = arith.constant 0 : index
    %c0_11 = arith.constant 0 : index
    %c0_12 = arith.constant 0 : index
    %26 = vector.load %arg2[%c0_10, %c0_11, %c0_12] : memref<1x8x8xf32, #tpu.memory_space<vmem>>, vector<1x8x8xf32>
    %27 = vector.shape_cast %26 : vector<1x8x8xf32> to vector<8x8xf32>
    %28 = arith.truncf %25 : vector<8x32xf32> to vector<8x32xbf16>
    %29 = arith.truncf %25 : vector<8x32xf32> to vector<8x32xbf16>
    %c0_13 = arith.constant 0 : index
    %c0_14 = arith.constant 0 : index
    %c0_15 = arith.constant 0 : index
    %30 = vector.load %arg5[%c0_13, %c0_14, %c0_15] : memref<4x32x8xbf16, #tpu.memory_space<vmem>>, vector<1x32x8xbf16>
    %31 = vector.shape_cast %30 : vector<1x32x8xbf16> to vector<32x8xbf16>
    %cst_16 = arith.constant dense<0.000000e+00> : vector<8x8xf32>
    %32 = tpu.matmul %28, %31, %cst_16 {dimension_numbers = #tpu.dot_dimension_numbers<[1], [0], [0], [1], [0, 0, 1, 1], [], []>} : vector<8x32xbf16>, vector<32x8xbf16>, vector<8x8xf32> -> vector<8x8xf32>
    %c0_17 = arith.constant 0 : index
    %c0_18 = arith.constant 0 : index
    %c0_19 = arith.constant 0 : index
    %33 = vector.load %arg6[%c0_17, %c0_18, %c0_19] : memref<4x1x8xf32, #tpu.memory_space<vmem>>, vector<1x1x8xf32>
    %34 = vector.shape_cast %33 : vector<1x1x8xf32> to vector<1x8xf32>
    %35 = vector.broadcast %34 : vector<1x8xf32> to vector<8x8xf32>
    %36 = arith.addf %32, %35 : vector<8x8xf32>
    %c0_20 = arith.constant 0 : index
    %c0_21 = arith.constant 0 : index
    %c0_22 = arith.constant 0 : index
    %37 = vector.load %arg7[%c0_20, %c0_21, %c0_22] : memref<4x32x8xbf16, #tpu.memory_space<vmem>>, vector<1x32x8xbf16>
    %38 = vector.shape_cast %37 : vector<1x32x8xbf16> to vector<32x8xbf16>
    %cst_23 = arith.constant dense<0.000000e+00> : vector<8x8xf32>
    %39 = tpu.matmul %29, %38, %cst_23 {dimension_numbers = #tpu.dot_dimension_numbers<[1], [0], [0], [1], [0, 0, 1, 1], [], []>} : vector<8x32xbf16>, vector<32x8xbf16>, vector<8x8xf32> -> vector<8x8xf32>
    %c0_24 = arith.constant 0 : index
    %c0_25 = arith.constant 0 : index
    %c0_26 = arith.constant 0 : index
    %40 = vector.load %arg8[%c0_24, %c0_25, %c0_26] : memref<4x1x8xf32, #tpu.memory_space<vmem>>, vector<1x1x8xf32>
    %41 = vector.shape_cast %40 : vector<1x1x8xf32> to vector<1x8xf32>
    %42 = vector.broadcast %41 : vector<1x8xf32> to vector<8x8xf32>
    %43 = arith.addf %39, %42 : vector<8x8xf32>
    %c0_27 = arith.constant 0 : index
    %c0_28 = arith.constant 0 : index
    %c0_29 = arith.constant 0 : index
    %44 = vector.load %arg9[%c0_27, %c0_28, %c0_29] : memref<4x32x8xbf16, #tpu.memory_space<vmem>>, vector<1x32x8xbf16>
    %45 = vector.shape_cast %44 : vector<1x32x8xbf16> to vector<32x8xbf16>
    %cst_30 = arith.constant dense<0.000000e+00> : vector<8x8xf32>
    %46 = tpu.matmul %29, %45, %cst_30 {dimension_numbers = #tpu.dot_dimension_numbers<[1], [0], [0], [1], [0, 0, 1, 1], [], []>} : vector<8x32xbf16>, vector<32x8xbf16>, vector<8x8xf32> -> vector<8x8xf32>
    %c0_31 = arith.constant 0 : index
    %c0_32 = arith.constant 0 : index
    %c0_33 = arith.constant 0 : index
    %47 = vector.load %arg10[%c0_31, %c0_32, %c0_33] : memref<4x1x8xf32, #tpu.memory_space<vmem>>, vector<1x1x8xf32>
    %48 = vector.shape_cast %47 : vector<1x1x8xf32> to vector<1x8xf32>
    %49 = vector.broadcast %48 : vector<1x8xf32> to vector<8x8xf32>
    %50 = arith.addf %46, %49 : vector<8x8xf32>
    %51 = arith.truncf %36 : vector<8x8xf32> to vector<8x8xbf16>
    %52 = arith.truncf %43 : vector<8x8xf32> to vector<8x8xbf16>
    %cst_34 = arith.constant dense<0.000000e+00> : vector<8x8xf32>
    %53 = tpu.matmul %51, %52, %cst_34 {dimension_numbers = #tpu.dot_dimension_numbers<[1], [1], [0], [0], [0, 0, 1, 0], [], []>} : vector<8x8xbf16>, vector<8x8xbf16>, vector<8x8xf32> -> vector<8x8xf32>
    %cst_35 = arith.constant 0.353553385 : f32
    %54 = vector.broadcast %cst_35 : f32 to vector<8x8xf32>
    %55 = arith.mulf %53, %54 : vector<8x8xf32>
    %56 = arith.addf %55, %27 : vector<8x8xf32>
    %cst_36 = arith.constant dense<0xFF800000> : vector<8xf32>
    %57 = vector.multi_reduction <maximumf>, %56, %cst_36 [1] : vector<8x8xf32> to vector<8xf32>
    %58 = vector.shape_cast %57 : vector<8xf32> to vector<8x1xf32>
    %59 = vector.broadcast %58 : vector<8x1xf32> to vector<8x8xf32>
    %60 = arith.subf %56, %59 : vector<8x8xf32>
    %61 = math.exp %60 : vector<8x8xf32>
    %cst_37 = arith.constant dense<0.000000e+00> : vector<8xf32>
    %62 = vector.multi_reduction <add>, %61, %cst_37 [1] : vector<8x8xf32> to vector<8xf32>
    %63 = vector.shape_cast %62 : vector<8xf32> to vector<8x1xf32>
    %64 = tpu.reciprocal %63 {approx = true} : vector<8x1xf32> -> vector<8x1xf32>
    %65 = vector.broadcast %64 : vector<8x1xf32> to vector<8x8xf32>
    %66 = arith.mulf %61, %65 : vector<8x8xf32>
    %67 = arith.truncf %66 : vector<8x8xf32> to vector<8x8xbf16>
    %68 = arith.truncf %50 : vector<8x8xf32> to vector<8x8xbf16>
    %cst_38 = arith.constant dense<0.000000e+00> : vector<8x8xf32>
    %69 = tpu.matmul %67, %68, %cst_38 {dimension_numbers = #tpu.dot_dimension_numbers<[1], [0], [0], [1], [0, 0, 1, 1], [], []>} : vector<8x8xbf16>, vector<8x8xbf16>, vector<8x8xf32> -> vector<8x8xf32>
    %70 = arith.truncf %69 : vector<8x8xf32> to vector<8x8xbf16>
    %c0_39 = arith.constant 0 : index
    %c0_40 = arith.constant 0 : index
    %c0_41 = arith.constant 0 : index
    %71 = vector.load %arg11[%c0_39, %c0_40, %c0_41] : memref<4x8x32xbf16, #tpu.memory_space<vmem>>, vector<1x8x32xbf16>
    %72 = vector.shape_cast %71 : vector<1x8x32xbf16> to vector<8x32xbf16>
    %cst_42 = arith.constant dense<0.000000e+00> : vector<8x32xf32>
    %73 = tpu.matmul %70, %72, %cst_42 {dimension_numbers = #tpu.dot_dimension_numbers<[1], [0], [0], [1], [0, 0, 1, 1], [], []>} : vector<8x8xbf16>, vector<8x32xbf16>, vector<8x32xf32> -> vector<8x32xf32>
    %c1 = arith.constant 1 : index
    %c0_43 = arith.constant 0 : index
    %c0_44 = arith.constant 0 : index
    %74 = vector.load %arg5[%c1, %c0_43, %c0_44] : memref<4x32x8xbf16, #tpu.memory_space<vmem>>, vector<1x32x8xbf16>
    %75 = vector.shape_cast %74 : vector<1x32x8xbf16> to vector<32x8xbf16>
    %cst_45 = arith.constant dense<0.000000e+00> : vector<8x8xf32>
    %76 = tpu.matmul %28, %75, %cst_45 {dimension_numbers = #tpu.dot_dimension_numbers<[1], [0], [0], [1], [0, 0, 1, 1], [], []>} : vector<8x32xbf16>, vector<32x8xbf16>, vector<8x8xf32> -> vector<8x8xf32>
    %c1_46 = arith.constant 1 : index
    %c0_47 = arith.constant 0 : index
    %c0_48 = arith.constant 0 : index
    %77 = vector.load %arg6[%c1_46, %c0_47, %c0_48] : memref<4x1x8xf32, #tpu.memory_space<vmem>>, vector<1x1x8xf32>
    %78 = vector.shape_cast %77 : vector<1x1x8xf32> to vector<1x8xf32>
    %79 = vector.broadcast %78 : vector<1x8xf32> to vector<8x8xf32>
    %80 = arith.addf %76, %79 : vector<8x8xf32>
    %c1_49 = arith.constant 1 : index
    %c0_50 = arith.constant 0 : index
    %c0_51 = arith.constant 0 : index
    %81 = vector.load %arg7[%c1_49, %c0_50, %c0_51] : memref<4x32x8xbf16, #tpu.memory_space<vmem>>, vector<1x32x8xbf16>
    %82 = vector.shape_cast %81 : vector<1x32x8xbf16> to vector<32x8xbf16>
    %cst_52 = arith.constant dense<0.000000e+00> : vector<8x8xf32>
    %83 = tpu.matmul %29, %82, %cst_52 {dimension_numbers = #tpu.dot_dimension_numbers<[1], [0], [0], [1], [0, 0, 1, 1], [], []>} : vector<8x32xbf16>, vector<32x8xbf16>, vector<8x8xf32> -> vector<8x8xf32>
    %c1_53 = arith.constant 1 : index
    %c0_54 = arith.constant 0 : index
    %c0_55 = arith.constant 0 : index
    %84 = vector.load %arg8[%c1_53, %c0_54, %c0_55] : memref<4x1x8xf32, #tpu.memory_space<vmem>>, vector<1x1x8xf32>
    %85 = vector.shape_cast %84 : vector<1x1x8xf32> to vector<1x8xf32>
    %86 = vector.broadcast %85 : vector<1x8xf32> to vector<8x8xf32>
    %87 = arith.addf %83, %86 : vector<8x8xf32>
    %c1_56 = arith.constant 1 : index
    %c0_57 = arith.constant 0 : index
    %c0_58 = arith.constant 0 : index
    %88 = vector.load %arg9[%c1_56, %c0_57, %c0_58] : memref<4x32x8xbf16, #tpu.memory_space<vmem>>, vector<1x32x8xbf16>
    %89 = vector.shape_cast %88 : vector<1x32x8xbf16> to vector<32x8xbf16>
    %cst_59 = arith.constant dense<0.000000e+00> : vector<8x8xf32>
    %90 = tpu.matmul %29, %89, %cst_59 {dimension_numbers = #tpu.dot_dimension_numbers<[1], [0], [0], [1], [0, 0, 1, 1], [], []>} : vector<8x32xbf16>, vector<32x8xbf16>, vector<8x8xf32> -> vector<8x8xf32>
    %c1_60 = arith.constant 1 : index
    %c0_61 = arith.constant 0 : index
    %c0_62 = arith.constant 0 : index
    %91 = vector.load %arg10[%c1_60, %c0_61, %c0_62] : memref<4x1x8xf32, #tpu.memory_space<vmem>>, vector<1x1x8xf32>
    %92 = vector.shape_cast %91 : vector<1x1x8xf32> to vector<1x8xf32>
    %93 = vector.broadcast %92 : vector<1x8xf32> to vector<8x8xf32>
    %94 = arith.addf %90, %93 : vector<8x8xf32>
    %95 = arith.truncf %80 : vector<8x8xf32> to vector<8x8xbf16>
    %96 = arith.truncf %87 : vector<8x8xf32> to vector<8x8xbf16>
    %cst_63 = arith.constant dense<0.000000e+00> : vector<8x8xf32>
    %97 = tpu.matmul %95, %96, %cst_63 {dimension_numbers = #tpu.dot_dimension_numbers<[1], [1], [0], [0], [0, 0, 1, 0], [], []>} : vector<8x8xbf16>, vector<8x8xbf16>, vector<8x8xf32> -> vector<8x8xf32>
    %cst_64 = arith.constant 0.353553385 : f32
    %98 = vector.broadcast %cst_64 : f32 to vector<8x8xf32>
    %99 = arith.mulf %97, %98 : vector<8x8xf32>
    %100 = arith.addf %99, %27 : vector<8x8xf32>
    %cst_65 = arith.constant dense<0xFF800000> : vector<8xf32>
    %101 = vector.multi_reduction <maximumf>, %100, %cst_65 [1] : vector<8x8xf32> to vector<8xf32>
    %102 = vector.shape_cast %101 : vector<8xf32> to vector<8x1xf32>
    %103 = vector.broadcast %102 : vector<8x1xf32> to vector<8x8xf32>
    %104 = arith.subf %100, %103 : vector<8x8xf32>
    %105 = math.exp %104 : vector<8x8xf32>
    %cst_66 = arith.constant dense<0.000000e+00> : vector<8xf32>
    %106 = vector.multi_reduction <add>, %105, %cst_66 [1] : vector<8x8xf32> to vector<8xf32>
    %107 = vector.shape_cast %106 : vector<8xf32> to vector<8x1xf32>
    %108 = tpu.reciprocal %107 {approx = true} : vector<8x1xf32> -> vector<8x1xf32>
    %109 = vector.broadcast %108 : vector<8x1xf32> to vector<8x8xf32>
    %110 = arith.mulf %105, %109 : vector<8x8xf32>
    %111 = arith.truncf %110 : vector<8x8xf32> to vector<8x8xbf16>
    %112 = arith.truncf %94 : vector<8x8xf32> to vector<8x8xbf16>
    %cst_67 = arith.constant dense<0.000000e+00> : vector<8x8xf32>
    %113 = tpu.matmul %111, %112, %cst_67 {dimension_numbers = #tpu.dot_dimension_numbers<[1], [0], [0], [1], [0, 0, 1, 1], [], []>} : vector<8x8xbf16>, vector<8x8xbf16>, vector<8x8xf32> -> vector<8x8xf32>
    %114 = arith.truncf %113 : vector<8x8xf32> to vector<8x8xbf16>
    %c1_68 = arith.constant 1 : index
    %c0_69 = arith.constant 0 : index
    %c0_70 = arith.constant 0 : index
    %115 = vector.load %arg11[%c1_68, %c0_69, %c0_70] : memref<4x8x32xbf16, #tpu.memory_space<vmem>>, vector<1x8x32xbf16>
    %116 = vector.shape_cast %115 : vector<1x8x32xbf16> to vector<8x32xbf16>
    %cst_71 = arith.constant dense<0.000000e+00> : vector<8x32xf32>
    %117 = tpu.matmul %114, %116, %cst_71 {dimension_numbers = #tpu.dot_dimension_numbers<[1], [0], [0], [1], [0, 0, 1, 1], [], []>} : vector<8x8xbf16>, vector<8x32xbf16>, vector<8x32xf32> -> vector<8x32xf32>
    %118 = arith.addf %73, %117 : vector<8x32xf32>
    %c2 = arith.constant 2 : index
    %c0_72 = arith.constant 0 : index
    %c0_73 = arith.constant 0 : index
    %119 = vector.load %arg5[%c2, %c0_72, %c0_73] : memref<4x32x8xbf16, #tpu.memory_space<vmem>>, vector<1x32x8xbf16>
    %120 = vector.shape_cast %119 : vector<1x32x8xbf16> to vector<32x8xbf16>
    %cst_74 = arith.constant dense<0.000000e+00> : vector<8x8xf32>
    %121 = tpu.matmul %28, %120, %cst_74 {dimension_numbers = #tpu.dot_dimension_numbers<[1], [0], [0], [1], [0, 0, 1, 1], [], []>} : vector<8x32xbf16>, vector<32x8xbf16>, vector<8x8xf32> -> vector<8x8xf32>
    %c2_75 = arith.constant 2 : index
    %c0_76 = arith.constant 0 : index
    %c0_77 = arith.constant 0 : index
    %122 = vector.load %arg6[%c2_75, %c0_76, %c0_77] : memref<4x1x8xf32, #tpu.memory_space<vmem>>, vector<1x1x8xf32>
    %123 = vector.shape_cast %122 : vector<1x1x8xf32> to vector<1x8xf32>
    %124 = vector.broadcast %123 : vector<1x8xf32> to vector<8x8xf32>
    %125 = arith.addf %121, %124 : vector<8x8xf32>
    %c2_78 = arith.constant 2 : index
    %c0_79 = arith.constant 0 : index
    %c0_80 = arith.constant 0 : index
    %126 = vector.load %arg7[%c2_78, %c0_79, %c0_80] : memref<4x32x8xbf16, #tpu.memory_space<vmem>>, vector<1x32x8xbf16>
    %127 = vector.shape_cast %126 : vector<1x32x8xbf16> to vector<32x8xbf16>
    %cst_81 = arith.constant dense<0.000000e+00> : vector<8x8xf32>
    %128 = tpu.matmul %29, %127, %cst_81 {dimension_numbers = #tpu.dot_dimension_numbers<[1], [0], [0], [1], [0, 0, 1, 1], [], []>} : vector<8x32xbf16>, vector<32x8xbf16>, vector<8x8xf32> -> vector<8x8xf32>
    %c2_82 = arith.constant 2 : index
    %c0_83 = arith.constant 0 : index
    %c0_84 = arith.constant 0 : index
    %129 = vector.load %arg8[%c2_82, %c0_83, %c0_84] : memref<4x1x8xf32, #tpu.memory_space<vmem>>, vector<1x1x8xf32>
    %130 = vector.shape_cast %129 : vector<1x1x8xf32> to vector<1x8xf32>
    %131 = vector.broadcast %130 : vector<1x8xf32> to vector<8x8xf32>
    %132 = arith.addf %128, %131 : vector<8x8xf32>
    %c2_85 = arith.constant 2 : index
    %c0_86 = arith.constant 0 : index
    %c0_87 = arith.constant 0 : index
    %133 = vector.load %arg9[%c2_85, %c0_86, %c0_87] : memref<4x32x8xbf16, #tpu.memory_space<vmem>>, vector<1x32x8xbf16>
    %134 = vector.shape_cast %133 : vector<1x32x8xbf16> to vector<32x8xbf16>
    %cst_88 = arith.constant dense<0.000000e+00> : vector<8x8xf32>
    %135 = tpu.matmul %29, %134, %cst_88 {dimension_numbers = #tpu.dot_dimension_numbers<[1], [0], [0], [1], [0, 0, 1, 1], [], []>} : vector<8x32xbf16>, vector<32x8xbf16>, vector<8x8xf32> -> vector<8x8xf32>
    %c2_89 = arith.constant 2 : index
    %c0_90 = arith.constant 0 : index
    %c0_91 = arith.constant 0 : index
    %136 = vector.load %arg10[%c2_89, %c0_90, %c0_91] : memref<4x1x8xf32, #tpu.memory_space<vmem>>, vector<1x1x8xf32>
    %137 = vector.shape_cast %136 : vector<1x1x8xf32> to vector<1x8xf32>
    %138 = vector.broadcast %137 : vector<1x8xf32> to vector<8x8xf32>
    %139 = arith.addf %135, %138 : vector<8x8xf32>
    %140 = arith.truncf %125 : vector<8x8xf32> to vector<8x8xbf16>
    %141 = arith.truncf %132 : vector<8x8xf32> to vector<8x8xbf16>
    %cst_92 = arith.constant dense<0.000000e+00> : vector<8x8xf32>
    %142 = tpu.matmul %140, %141, %cst_92 {dimension_numbers = #tpu.dot_dimension_numbers<[1], [1], [0], [0], [0, 0, 1, 0], [], []>} : vector<8x8xbf16>, vector<8x8xbf16>, vector<8x8xf32> -> vector<8x8xf32>
    %cst_93 = arith.constant 0.353553385 : f32
    %143 = vector.broadcast %cst_93 : f32 to vector<8x8xf32>
    %144 = arith.mulf %142, %143 : vector<8x8xf32>
    %145 = arith.addf %144, %27 : vector<8x8xf32>
    %cst_94 = arith.constant dense<0xFF800000> : vector<8xf32>
    %146 = vector.multi_reduction <maximumf>, %145, %cst_94 [1] : vector<8x8xf32> to vector<8xf32>
    %147 = vector.shape_cast %146 : vector<8xf32> to vector<8x1xf32>
    %148 = vector.broadcast %147 : vector<8x1xf32> to vector<8x8xf32>
    %149 = arith.subf %145, %148 : vector<8x8xf32>
    %150 = math.exp %149 : vector<8x8xf32>
    %cst_95 = arith.constant dense<0.000000e+00> : vector<8xf32>
    %151 = vector.multi_reduction <add>, %150, %cst_95 [1] : vector<8x8xf32> to vector<8xf32>
    %152 = vector.shape_cast %151 : vector<8xf32> to vector<8x1xf32>
    %153 = tpu.reciprocal %152 {approx = true} : vector<8x1xf32> -> vector<8x1xf32>
    %154 = vector.broadcast %153 : vector<8x1xf32> to vector<8x8xf32>
    %155 = arith.mulf %150, %154 : vector<8x8xf32>
    %156 = arith.truncf %155 : vector<8x8xf32> to vector<8x8xbf16>
    %157 = arith.truncf %139 : vector<8x8xf32> to vector<8x8xbf16>
    %cst_96 = arith.constant dense<0.000000e+00> : vector<8x8xf32>
    %158 = tpu.matmul %156, %157, %cst_96 {dimension_numbers = #tpu.dot_dimension_numbers<[1], [0], [0], [1], [0, 0, 1, 1], [], []>} : vector<8x8xbf16>, vector<8x8xbf16>, vector<8x8xf32> -> vector<8x8xf32>
    %159 = arith.truncf %158 : vector<8x8xf32> to vector<8x8xbf16>
    %c2_97 = arith.constant 2 : index
    %c0_98 = arith.constant 0 : index
    %c0_99 = arith.constant 0 : index
    %160 = vector.load %arg11[%c2_97, %c0_98, %c0_99] : memref<4x8x32xbf16, #tpu.memory_space<vmem>>, vector<1x8x32xbf16>
    %161 = vector.shape_cast %160 : vector<1x8x32xbf16> to vector<8x32xbf16>
    %cst_100 = arith.constant dense<0.000000e+00> : vector<8x32xf32>
    %162 = tpu.matmul %159, %161, %cst_100 {dimension_numbers = #tpu.dot_dimension_numbers<[1], [0], [0], [1], [0, 0, 1, 1], [], []>} : vector<8x8xbf16>, vector<8x32xbf16>, vector<8x32xf32> -> vector<8x32xf32>
    %163 = arith.addf %118, %162 : vector<8x32xf32>
    %c3 = arith.constant 3 : index
    %c0_101 = arith.constant 0 : index
    %c0_102 = arith.constant 0 : index
    %164 = vector.load %arg5[%c3, %c0_101, %c0_102] : memref<4x32x8xbf16, #tpu.memory_space<vmem>>, vector<1x32x8xbf16>
    %165 = vector.shape_cast %164 : vector<1x32x8xbf16> to vector<32x8xbf16>
    %cst_103 = arith.constant dense<0.000000e+00> : vector<8x8xf32>
    %166 = tpu.matmul %28, %165, %cst_103 {dimension_numbers = #tpu.dot_dimension_numbers<[1], [0], [0], [1], [0, 0, 1, 1], [], []>} : vector<8x32xbf16>, vector<32x8xbf16>, vector<8x8xf32> -> vector<8x8xf32>
    %c3_104 = arith.constant 3 : index
    %c0_105 = arith.constant 0 : index
    %c0_106 = arith.constant 0 : index
    %167 = vector.load %arg6[%c3_104, %c0_105, %c0_106] : memref<4x1x8xf32, #tpu.memory_space<vmem>>, vector<1x1x8xf32>
    %168 = vector.shape_cast %167 : vector<1x1x8xf32> to vector<1x8xf32>
    %169 = vector.broadcast %168 : vector<1x8xf32> to vector<8x8xf32>
    %170 = arith.addf %166, %169 : vector<8x8xf32>
    %c3_107 = arith.constant 3 : index
    %c0_108 = arith.constant 0 : index
    %c0_109 = arith.constant 0 : index
    %171 = vector.load %arg7[%c3_107, %c0_108, %c0_109] : memref<4x32x8xbf16, #tpu.memory_space<vmem>>, vector<1x32x8xbf16>
    %172 = vector.shape_cast %171 : vector<1x32x8xbf16> to vector<32x8xbf16>
    %cst_110 = arith.constant dense<0.000000e+00> : vector<8x8xf32>
    %173 = tpu.matmul %29, %172, %cst_110 {dimension_numbers = #tpu.dot_dimension_numbers<[1], [0], [0], [1], [0, 0, 1, 1], [], []>} : vector<8x32xbf16>, vector<32x8xbf16>, vector<8x8xf32> -> vector<8x8xf32>
    %c3_111 = arith.constant 3 : index
    %c0_112 = arith.constant 0 : index
    %c0_113 = arith.constant 0 : index
    %174 = vector.load %arg8[%c3_111, %c0_112, %c0_113] : memref<4x1x8xf32, #tpu.memory_space<vmem>>, vector<1x1x8xf32>
    %175 = vector.shape_cast %174 : vector<1x1x8xf32> to vector<1x8xf32>
    %176 = vector.broadcast %175 : vector<1x8xf32> to vector<8x8xf32>
    %177 = arith.addf %173, %176 : vector<8x8xf32>
    %c3_114 = arith.constant 3 : index
    %c0_115 = arith.constant 0 : index
    %c0_116 = arith.constant 0 : index
    %178 = vector.load %arg9[%c3_114, %c0_115, %c0_116] : memref<4x32x8xbf16, #tpu.memory_space<vmem>>, vector<1x32x8xbf16>
    %179 = vector.shape_cast %178 : vector<1x32x8xbf16> to vector<32x8xbf16>
    %cst_117 = arith.constant dense<0.000000e+00> : vector<8x8xf32>
    %180 = tpu.matmul %29, %179, %cst_117 {dimension_numbers = #tpu.dot_dimension_numbers<[1], [0], [0], [1], [0, 0, 1, 1], [], []>} : vector<8x32xbf16>, vector<32x8xbf16>, vector<8x8xf32> -> vector<8x8xf32>
    %c3_118 = arith.constant 3 : index
    %c0_119 = arith.constant 0 : index
    %c0_120 = arith.constant 0 : index
    %181 = vector.load %arg10[%c3_118, %c0_119, %c0_120] : memref<4x1x8xf32, #tpu.memory_space<vmem>>, vector<1x1x8xf32>
    %182 = vector.shape_cast %181 : vector<1x1x8xf32> to vector<1x8xf32>
    %183 = vector.broadcast %182 : vector<1x8xf32> to vector<8x8xf32>
    %184 = arith.addf %180, %183 : vector<8x8xf32>
    %185 = arith.truncf %170 : vector<8x8xf32> to vector<8x8xbf16>
    %186 = arith.truncf %177 : vector<8x8xf32> to vector<8x8xbf16>
    %cst_121 = arith.constant dense<0.000000e+00> : vector<8x8xf32>
    %187 = tpu.matmul %185, %186, %cst_121 {dimension_numbers = #tpu.dot_dimension_numbers<[1], [1], [0], [0], [0, 0, 1, 0], [], []>} : vector<8x8xbf16>, vector<8x8xbf16>, vector<8x8xf32> -> vector<8x8xf32>
    %cst_122 = arith.constant 0.353553385 : f32
    %188 = vector.broadcast %cst_122 : f32 to vector<8x8xf32>
    %189 = arith.mulf %187, %188 : vector<8x8xf32>
    %190 = arith.addf %189, %27 : vector<8x8xf32>
    %cst_123 = arith.constant dense<0xFF800000> : vector<8xf32>
    %191 = vector.multi_reduction <maximumf>, %190, %cst_123 [1] : vector<8x8xf32> to vector<8xf32>
    %192 = vector.shape_cast %191 : vector<8xf32> to vector<8x1xf32>
    %193 = vector.broadcast %192 : vector<8x1xf32> to vector<8x8xf32>
    %194 = arith.subf %190, %193 : vector<8x8xf32>
    %195 = math.exp %194 : vector<8x8xf32>
    %cst_124 = arith.constant dense<0.000000e+00> : vector<8xf32>
    %196 = vector.multi_reduction <add>, %195, %cst_124 [1] : vector<8x8xf32> to vector<8xf32>
    %197 = vector.shape_cast %196 : vector<8xf32> to vector<8x1xf32>
    %198 = tpu.reciprocal %197 {approx = true} : vector<8x1xf32> -> vector<8x1xf32>
    %199 = vector.broadcast %198 : vector<8x1xf32> to vector<8x8xf32>
    %200 = arith.mulf %195, %199 : vector<8x8xf32>
    %201 = arith.truncf %200 : vector<8x8xf32> to vector<8x8xbf16>
    %202 = arith.truncf %184 : vector<8x8xf32> to vector<8x8xbf16>
    %cst_125 = arith.constant dense<0.000000e+00> : vector<8x8xf32>
    %203 = tpu.matmul %201, %202, %cst_125 {dimension_numbers = #tpu.dot_dimension_numbers<[1], [0], [0], [1], [0, 0, 1, 1], [], []>} : vector<8x8xbf16>, vector<8x8xbf16>, vector<8x8xf32> -> vector<8x8xf32>
    %204 = arith.truncf %203 : vector<8x8xf32> to vector<8x8xbf16>
    %c3_126 = arith.constant 3 : index
    %c0_127 = arith.constant 0 : index
    %c0_128 = arith.constant 0 : index
    %205 = vector.load %arg11[%c3_126, %c0_127, %c0_128] : memref<4x8x32xbf16, #tpu.memory_space<vmem>>, vector<1x8x32xbf16>
    %206 = vector.shape_cast %205 : vector<1x8x32xbf16> to vector<8x32xbf16>
    %cst_129 = arith.constant dense<0.000000e+00> : vector<8x32xf32>
    %207 = tpu.matmul %204, %206, %cst_129 {dimension_numbers = #tpu.dot_dimension_numbers<[1], [0], [0], [1], [0, 0, 1, 1], [], []>} : vector<8x8xbf16>, vector<8x32xbf16>, vector<8x32xf32> -> vector<8x32xf32>
    %208 = arith.addf %163, %207 : vector<8x32xf32>
    %c0_130 = arith.constant 0 : index
    %c0_131 = arith.constant 0 : index
    %209 = vector.load %arg12[%c0_130, %c0_131] : memref<1x32xf32, #tpu.memory_space<vmem>>, vector<1x32xf32>
    %210 = vector.broadcast %209 : vector<1x32xf32> to vector<8x32xf32>
    %211 = arith.addf %208, %210 : vector<8x32xf32>
    %212 = arith.addf %1, %211 : vector<8x32xf32>
    %c0_132 = arith.constant 0 : index
    %c0_133 = arith.constant 0 : index
    %c0_134 = arith.constant 0 : index
    %213 = vector.load %arg13[%c0_132, %c0_133, %c0_134] : memref<1x8x32xf32, #tpu.memory_space<vmem>>, vector<1x8x32xf32>
    %214 = vector.shape_cast %213 : vector<1x8x32xf32> to vector<8x32xf32>
    %215 = vector.shape_cast %212 : vector<8x32xf32> to vector<1x8x32xf32>
    tpu.vector_store %arg13[%c0_132, %c0_133, %c0_134], %215 {strides = array<i32>} : memref<1x8x32xf32, #tpu.memory_space<vmem>>, vector<1x8x32xf32>,
    return
  }
  func.func @transform_0(%arg0: i32) -> (i32, i32, i32) {
    %c0_i32 = arith.constant 0 : i32
    %c0_i32_0 = arith.constant 0 : i32
    %c0_i32_1 = arith.constant 0 : i32
    return %arg0, %c0_i32, %c0_i32_0 : i32, i32, i32
  }
  func.func @transform_1(%arg0: i32) -> (i32, i32, i32) {
    %c0_i32 = arith.constant 0 : i32
    %c0_i32_0 = arith.constant 0 : i32
    %c0_i32_1 = arith.constant 0 : i32
    return %arg0, %c0_i32, %c0_i32_0 : i32, i32, i32
  }
  func.func @transform_2(%arg0: i32) -> (i32, i32) {
    %c0_i32 = arith.constant 0 : i32
    %c0_i32_0 = arith.constant 0 : i32
    %c0_i32_1 = arith.constant 0 : i32
    return %c0_i32, %c0_i32_0 : i32, i32
  }
  func.func @transform_3(%arg0: i32) -> (i32, i32) {
    %c0_i32 = arith.constant 0 : i32
    %c0_i32_0 = arith.constant 0 : i32
    %c0_i32_1 = arith.constant 0 : i32
    return %c0_i32, %c0_i32_0 : i32, i32
  }
  func.func @transform_4(%arg0: i32) -> (i32, i32, i32) {
    %c0_i32 = arith.constant 0 : i32
    %c0_i32_0 = arith.constant 0 : i32
    %c0_i32_1 = arith.constant 0 : i32
    %c0_i32_2 = arith.constant 0 : i32
    return %c0_i32, %c0_i32_0, %c0_i32_1 : i32, i32, i32
  }
  func.func @transform_5(%arg0: i32) -> (i32, i32, i32) {
    %c0_i32 = arith.constant 0 : i32
    %c0_i32_0 = arith.constant 0 : i32
    %c0_i32_1 = arith.constant 0 : i32
    %c0_i32_2 = arith.constant 0 : i32
    return %c0_i32, %c0_i32_0, %c0_i32_1 : i32, i32, i32
  }
  func.func @transform_6(%arg0: i32) -> (i32, i32, i32) {
    %c0_i32 = arith.constant 0 : i32
    %c0_i32_0 = arith.constant 0 : i32
    %c0_i32_1 = arith.constant 0 : i32
    %c0_i32_2 = arith.constant 0 : i32
    return %c0_i32, %c0_i32_0, %c0_i32_1 : i32, i32, i32
  }
  func.func @transform_7(%arg0: i32) -> (i32, i32, i32) {
    %c0_i32 = arith.constant 0 : i32
    %c0_i32_0 = arith.constant 0 : i32
    %c0_i32_1 = arith.constant 0 : i32
    %c0_i32_2 = arith.constant 0 : i32
    return %c0_i32, %c0_i32_0, %c0_i32_1 : i32, i32, i32
  }
  func.func @transform_8(%arg0: i32) -> (i32, i32, i32) {
    %c0_i32 = arith.constant 0 : i32
    %c0_i32_0 = arith.constant 0 : i32
    %c0_i32_1 = arith.constant 0 : i32
    %c0_i32_2 = arith.constant 0 : i32
    return %c0_i32, %c0_i32_0, %c0_i32_1 : i32, i32, i32
  }
  func.func @transform_9(%arg0: i32) -> (i32, i32, i32) {
    %c0_i32 = arith.constant 0 : i32
    %c0_i32_0 = arith.constant 0 : i32
    %c0_i32_1 = arith.constant 0 : i32
    %c0_i32_2 = arith.constant 0 : i32
    return %c0_i32, %c0_i32_0, %c0_i32_1 : i32, i32, i32
  }
  func.func @transform_10(%arg0: i32) -> (i32, i32, i32) {
    %c0_i32 = arith.constant 0 : i32
    %c0_i32_0 = arith.constant 0 : i32
    %c0_i32_1 = arith.constant 0 : i32
    %c0_i32_2 = arith.constant 0 : i32
    return %c0_i32, %c0_i32_0, %c0_i32_1 : i32, i32, i32
  }
  func.func @transform_11(%arg0: i32) -> (i32, i32) {
    %c0_i32 = arith.constant 0 : i32
    %c0_i32_0 = arith.constant 0 : i32
    %c0_i32_1 = arith.constant 0 : i32
    return %c0_i32, %c0_i32_0 : i32, i32
  }
  func.func @transform_12(%arg0: i32) -> (i32, i32, i32) {
    %c0_i32 = arith.constant 0 : i32
    %c0_i32_0 = arith.constant 0 : i32
    %c0_i32_1 = arith.constant 0 : i32
    return %arg0, %c0_i32, %c0_i32_0 : i32, i32, i32
  }
}

module attributes {stable_mosaic.version = 11 : i64} {
  func.func @_cross_attn_block_kernel(%arg0: i32, %arg1: memref<1x8x32xf32, #tpu.memory_space<vmem>>, %arg2: memref<1x16x32xf32, #tpu.memory_space<vmem>>, %arg3: memref<1x8x16xf32, #tpu.memory_space<vmem>>, %arg4: memref<1x32xf32, #tpu.memory_space<vmem>>, %arg5: memref<1x32xf32, #tpu.memory_space<vmem>>, %arg6: memref<4x32x8xbf16, #tpu.memory_space<vmem>>, %arg7: memref<4x1x8xf32, #tpu.memory_space<vmem>>, %arg8: memref<4x32x8xbf16, #tpu.memory_space<vmem>>, %arg9: memref<4x1x8xf32, #tpu.memory_space<vmem>>, %arg10: memref<4x32x8xbf16, #tpu.memory_space<vmem>>, %arg11: memref<4x1x8xf32, #tpu.memory_space<vmem>>, %arg12: memref<4x8x32xbf16, #tpu.memory_space<vmem>>, %arg13: memref<1x32xf32, #tpu.memory_space<vmem>>, %arg14: memref<1x8x32xf32, #tpu.memory_space<vmem>>) attributes {dimension_semantics = [#tpu.dimension_semantics<parallel>], iteration_bounds = array<i64: 2>, scalar_prefetch = 0 : i64, scratch_operands = 0 : i64, tpu.core_type = #tpu.core_type<tc>, window_params = [{transform_indices = @transform_0, window_bounds = array<i64: 1, 8, 32>}, {transform_indices = @transform_1, window_bounds = array<i64: 1, 16, 32>}, {transform_indices = @transform_2, window_bounds = array<i64: 1, 8, 16>}, {pipeline_mode = #tpu.pipeline_mode<synchronous>, transform_indices = @transform_3, window_bounds = array<i64: 1, 32>}, {pipeline_mode = #tpu.pipeline_mode<synchronous>, transform_indices = @transform_4, window_bounds = array<i64: 1, 32>}, {pipeline_mode = #tpu.pipeline_mode<synchronous>, transform_indices = @transform_5, window_bounds = array<i64: 4, 32, 8>}, {pipeline_mode = #tpu.pipeline_mode<synchronous>, transform_indices = @transform_6, window_bounds = array<i64: 4, 1, 8>}, {pipeline_mode = #tpu.pipeline_mode<synchronous>, transform_indices = @transform_7, window_bounds = array<i64: 4, 32, 8>}, {pipeline_mode = #tpu.pipeline_mode<synchronous>, transform_indices = @transform_8, window_bounds = array<i64: 4, 1, 8>}, {pipeline_mode = #tpu.pipeline_mode<synchronous>, transform_indices = @transform_9, window_bounds = array<i64: 4, 32, 8>}, {pipeline_mode = #tpu.pipeline_mode<synchronous>, transform_indices = @transform_10, window_bounds = array<i64: 4, 1, 8>}, {pipeline_mode = #tpu.pipeline_mode<synchronous>, transform_indices = @transform_11, window_bounds = array<i64: 4, 8, 32>}, {pipeline_mode = #tpu.pipeline_mode<synchronous>, transform_indices = @transform_12, window_bounds = array<i64: 1, 32>}, {transform_indices = @transform_13, window_bounds = array<i64: 1, 8, 32>}]} {
    %c0 = arith.constant 0 : index
    %c0_0 = arith.constant 0 : index
    %c0_1 = arith.constant 0 : index
    %0 = vector.load %arg1[%c0, %c0_0, %c0_1] : memref<1x8x32xf32, #tpu.memory_space<vmem>>, vector<1x8x32xf32>
    %1 = vector.shape_cast %0 : vector<1x8x32xf32> to vector<8x32xf32>
    %c0_2 = arith.constant 0 : index
    %c0_3 = arith.constant 0 : index
    %c0_4 = arith.constant 0 : index
    %2 = vector.load %arg2[%c0_2, %c0_3, %c0_4] : memref<1x16x32xf32, #tpu.memory_space<vmem>>, vector<1x16x32xf32>
    %3 = vector.shape_cast %2 : vector<1x16x32xf32> to vector<16x32xf32>
    %c0_5 = arith.constant 0 : index
    %c0_6 = arith.constant 0 : index
    %4 = vector.load %arg4[%c0_5, %c0_6] : memref<1x32xf32, #tpu.memory_space<vmem>>, vector<1x32xf32>
    %c0_7 = arith.constant 0 : index
    %c0_8 = arith.constant 0 : index
    %5 = vector.load %arg5[%c0_7, %c0_8] : memref<1x32xf32, #tpu.memory_space<vmem>>, vector<1x32xf32>
    %cst = arith.constant dense<0.000000e+00> : vector<8xf32>
    %6 = vector.multi_reduction <add>, %1, %cst [1] : vector<8x32xf32> to vector<8xf32>
    %7 = vector.shape_cast %6 : vector<8xf32> to vector<8x1xf32>
    %cst_9 = arith.constant 3.200000e+01 : f32
    %8 = vector.broadcast %cst_9 : f32 to vector<8x1xf32>
    %9 = arith.divf %7, %8 : vector<8x1xf32>
    %10 = vector.broadcast %9 : vector<8x1xf32> to vector<8x32xf32>
    %11 = arith.subf %1, %10 : vector<8x32xf32>
    %12 = arith.mulf %11, %11 : vector<8x32xf32>
    %cst_10 = arith.constant dense<0.000000e+00> : vector<8xf32>
    %13 = vector.multi_reduction <add>, %12, %cst_10 [1] : vector<8x32xf32> to vector<8xf32>
    %14 = vector.shape_cast %13 : vector<8xf32> to vector<8x1xf32>
    %cst_11 = arith.constant 3.200000e+01 : f32
    %15 = vector.broadcast %cst_11 : f32 to vector<8x1xf32>
    %16 = arith.divf %14, %15 : vector<8x1xf32>
    %17 = vector.broadcast %9 : vector<8x1xf32> to vector<8x32xf32>
    %18 = arith.subf %1, %17 : vector<8x32xf32>
    %cst_12 = arith.constant 9.99999997E-7 : f32
    %19 = vector.broadcast %cst_12 : f32 to vector<8x1xf32>
    %20 = arith.addf %16, %19 : vector<8x1xf32>
    %21 = math.rsqrt %20 : vector<8x1xf32>
    %22 = vector.broadcast %21 : vector<8x1xf32> to vector<8x32xf32>
    %23 = arith.mulf %18, %22 : vector<8x32xf32>
    %24 = vector.broadcast %4 : vector<1x32xf32> to vector<8x32xf32>
    %25 = arith.mulf %23, %24 : vector<8x32xf32>
    %26 = vector.broadcast %5 : vector<1x32xf32> to vector<8x32xf32>
    %27 = arith.addf %25, %26 : vector<8x32xf32>
    %c0_13 = arith.constant 0 : index
    %c0_14 = arith.constant 0 : index
    %c0_15 = arith.constant 0 : index
    %28 = vector.load %arg3[%c0_13, %c0_14, %c0_15] : memref<1x8x16xf32, #tpu.memory_space<vmem>>, vector<1x8x16xf32>
    %29 = vector.shape_cast %28 : vector<1x8x16xf32> to vector<8x16xf32>
    %30 = arith.truncf %27 : vector<8x32xf32> to vector<8x32xbf16>
    %31 = arith.truncf %3 : vector<16x32xf32> to vector<16x32xbf16>
    %c0_16 = arith.constant 0 : index
    %c0_17 = arith.constant 0 : index
    %c0_18 = arith.constant 0 : index
    %32 = vector.load %arg6[%c0_16, %c0_17, %c0_18] : memref<4x32x8xbf16, #tpu.memory_space<vmem>>, vector<1x32x8xbf16>
    %33 = vector.shape_cast %32 : vector<1x32x8xbf16> to vector<32x8xbf16>
    %cst_19 = arith.constant dense<0.000000e+00> : vector<8x8xf32>
    %34 = tpu.matmul %30, %33, %cst_19 {dimension_numbers = #tpu.dot_dimension_numbers<[1], [0], [0], [1], [0, 0, 1, 1], [], []>} : vector<8x32xbf16>, vector<32x8xbf16>, vector<8x8xf32> -> vector<8x8xf32>
    %c0_20 = arith.constant 0 : index
    %c0_21 = arith.constant 0 : index
    %c0_22 = arith.constant 0 : index
    %35 = vector.load %arg7[%c0_20, %c0_21, %c0_22] : memref<4x1x8xf32, #tpu.memory_space<vmem>>, vector<1x1x8xf32>
    %36 = vector.shape_cast %35 : vector<1x1x8xf32> to vector<1x8xf32>
    %37 = vector.broadcast %36 : vector<1x8xf32> to vector<8x8xf32>
    %38 = arith.addf %34, %37 : vector<8x8xf32>
    %c0_23 = arith.constant 0 : index
    %c0_24 = arith.constant 0 : index
    %c0_25 = arith.constant 0 : index
    %39 = vector.load %arg8[%c0_23, %c0_24, %c0_25] : memref<4x32x8xbf16, #tpu.memory_space<vmem>>, vector<1x32x8xbf16>
    %40 = vector.shape_cast %39 : vector<1x32x8xbf16> to vector<32x8xbf16>
    %cst_26 = arith.constant dense<0.000000e+00> : vector<16x8xf32>
    %41 = tpu.matmul %31, %40, %cst_26 {dimension_numbers = #tpu.dot_dimension_numbers<[1], [0], [0], [1], [0, 0, 1, 1], [], []>} : vector<16x32xbf16>, vector<32x8xbf16>, vector<16x8xf32> -> vector<16x8xf32>
    %c0_27 = arith.constant 0 : index
    %c0_28 = arith.constant 0 : index
    %c0_29 = arith.constant 0 : index
    %42 = vector.load %arg9[%c0_27, %c0_28, %c0_29] : memref<4x1x8xf32, #tpu.memory_space<vmem>>, vector<1x1x8xf32>
    %43 = vector.shape_cast %42 : vector<1x1x8xf32> to vector<1x8xf32>
    %44 = vector.broadcast %43 : vector<1x8xf32> to vector<16x8xf32>
    %45 = arith.addf %41, %44 : vector<16x8xf32>
    %c0_30 = arith.constant 0 : index
    %c0_31 = arith.constant 0 : index
    %c0_32 = arith.constant 0 : index
    %46 = vector.load %arg10[%c0_30, %c0_31, %c0_32] : memref<4x32x8xbf16, #tpu.memory_space<vmem>>, vector<1x32x8xbf16>
    %47 = vector.shape_cast %46 : vector<1x32x8xbf16> to vector<32x8xbf16>
    %cst_33 = arith.constant dense<0.000000e+00> : vector<16x8xf32>
    %48 = tpu.matmul %31, %47, %cst_33 {dimension_numbers = #tpu.dot_dimension_numbers<[1], [0], [0], [1], [0, 0, 1, 1], [], []>} : vector<16x32xbf16>, vector<32x8xbf16>, vector<16x8xf32> -> vector<16x8xf32>
    %c0_34 = arith.constant 0 : index
    %c0_35 = arith.constant 0 : index
    %c0_36 = arith.constant 0 : index
    %49 = vector.load %arg11[%c0_34, %c0_35, %c0_36] : memref<4x1x8xf32, #tpu.memory_space<vmem>>, vector<1x1x8xf32>
    %50 = vector.shape_cast %49 : vector<1x1x8xf32> to vector<1x8xf32>
    %51 = vector.broadcast %50 : vector<1x8xf32> to vector<16x8xf32>
    %52 = arith.addf %48, %51 : vector<16x8xf32>
    %53 = arith.truncf %38 : vector<8x8xf32> to vector<8x8xbf16>
    %54 = arith.truncf %45 : vector<16x8xf32> to vector<16x8xbf16>
    %cst_37 = arith.constant dense<0.000000e+00> : vector<8x16xf32>
    %55 = tpu.matmul %53, %54, %cst_37 {dimension_numbers = #tpu.dot_dimension_numbers<[1], [1], [0], [0], [0, 0, 1, 0], [], []>} : vector<8x8xbf16>, vector<16x8xbf16>, vector<8x16xf32> -> vector<8x16xf32>
    %cst_38 = arith.constant 0.353553385 : f32
    %56 = vector.broadcast %cst_38 : f32 to vector<8x16xf32>
    %57 = arith.mulf %55, %56 : vector<8x16xf32>
    %58 = arith.addf %57, %29 : vector<8x16xf32>
    %cst_39 = arith.constant dense<0xFF800000> : vector<8xf32>
    %59 = vector.multi_reduction <maximumf>, %58, %cst_39 [1] : vector<8x16xf32> to vector<8xf32>
    %60 = vector.shape_cast %59 : vector<8xf32> to vector<8x1xf32>
    %61 = vector.broadcast %60 : vector<8x1xf32> to vector<8x16xf32>
    %62 = arith.subf %58, %61 : vector<8x16xf32>
    %63 = math.exp %62 : vector<8x16xf32>
    %cst_40 = arith.constant dense<0.000000e+00> : vector<8xf32>
    %64 = vector.multi_reduction <add>, %63, %cst_40 [1] : vector<8x16xf32> to vector<8xf32>
    %65 = vector.shape_cast %64 : vector<8xf32> to vector<8x1xf32>
    %66 = tpu.reciprocal %65 {approx = true} : vector<8x1xf32> -> vector<8x1xf32>
    %67 = vector.broadcast %66 : vector<8x1xf32> to vector<8x16xf32>
    %68 = arith.mulf %63, %67 : vector<8x16xf32>
    %69 = arith.truncf %68 : vector<8x16xf32> to vector<8x16xbf16>
    %70 = arith.truncf %52 : vector<16x8xf32> to vector<16x8xbf16>
    %cst_41 = arith.constant dense<0.000000e+00> : vector<8x8xf32>
    %71 = tpu.matmul %69, %70, %cst_41 {dimension_numbers = #tpu.dot_dimension_numbers<[1], [0], [0], [1], [0, 0, 1, 1], [], []>} : vector<8x16xbf16>, vector<16x8xbf16>, vector<8x8xf32> -> vector<8x8xf32>
    %72 = arith.truncf %71 : vector<8x8xf32> to vector<8x8xbf16>
    %c0_42 = arith.constant 0 : index
    %c0_43 = arith.constant 0 : index
    %c0_44 = arith.constant 0 : index
    %73 = vector.load %arg12[%c0_42, %c0_43, %c0_44] : memref<4x8x32xbf16, #tpu.memory_space<vmem>>, vector<1x8x32xbf16>
    %74 = vector.shape_cast %73 : vector<1x8x32xbf16> to vector<8x32xbf16>
    %cst_45 = arith.constant dense<0.000000e+00> : vector<8x32xf32>
    %75 = tpu.matmul %72, %74, %cst_45 {dimension_numbers = #tpu.dot_dimension_numbers<[1], [0], [0], [1], [0, 0, 1, 1], [], []>} : vector<8x8xbf16>, vector<8x32xbf16>, vector<8x32xf32> -> vector<8x32xf32>
    %c1 = arith.constant 1 : index
    %c0_46 = arith.constant 0 : index
    %c0_47 = arith.constant 0 : index
    %76 = vector.load %arg6[%c1, %c0_46, %c0_47] : memref<4x32x8xbf16, #tpu.memory_space<vmem>>, vector<1x32x8xbf16>
    %77 = vector.shape_cast %76 : vector<1x32x8xbf16> to vector<32x8xbf16>
    %cst_48 = arith.constant dense<0.000000e+00> : vector<8x8xf32>
    %78 = tpu.matmul %30, %77, %cst_48 {dimension_numbers = #tpu.dot_dimension_numbers<[1], [0], [0], [1], [0, 0, 1, 1], [], []>} : vector<8x32xbf16>, vector<32x8xbf16>, vector<8x8xf32> -> vector<8x8xf32>
    %c1_49 = arith.constant 1 : index
    %c0_50 = arith.constant 0 : index
    %c0_51 = arith.constant 0 : index
    %79 = vector.load %arg7[%c1_49, %c0_50, %c0_51] : memref<4x1x8xf32, #tpu.memory_space<vmem>>, vector<1x1x8xf32>
    %80 = vector.shape_cast %79 : vector<1x1x8xf32> to vector<1x8xf32>
    %81 = vector.broadcast %80 : vector<1x8xf32> to vector<8x8xf32>
    %82 = arith.addf %78, %81 : vector<8x8xf32>
    %c1_52 = arith.constant 1 : index
    %c0_53 = arith.constant 0 : index
    %c0_54 = arith.constant 0 : index
    %83 = vector.load %arg8[%c1_52, %c0_53, %c0_54] : memref<4x32x8xbf16, #tpu.memory_space<vmem>>, vector<1x32x8xbf16>
    %84 = vector.shape_cast %83 : vector<1x32x8xbf16> to vector<32x8xbf16>
    %cst_55 = arith.constant dense<0.000000e+00> : vector<16x8xf32>
    %85 = tpu.matmul %31, %84, %cst_55 {dimension_numbers = #tpu.dot_dimension_numbers<[1], [0], [0], [1], [0, 0, 1, 1], [], []>} : vector<16x32xbf16>, vector<32x8xbf16>, vector<16x8xf32> -> vector<16x8xf32>
    %c1_56 = arith.constant 1 : index
    %c0_57 = arith.constant 0 : index
    %c0_58 = arith.constant 0 : index
    %86 = vector.load %arg9[%c1_56, %c0_57, %c0_58] : memref<4x1x8xf32, #tpu.memory_space<vmem>>, vector<1x1x8xf32>
    %87 = vector.shape_cast %86 : vector<1x1x8xf32> to vector<1x8xf32>
    %88 = vector.broadcast %87 : vector<1x8xf32> to vector<16x8xf32>
    %89 = arith.addf %85, %88 : vector<16x8xf32>
    %c1_59 = arith.constant 1 : index
    %c0_60 = arith.constant 0 : index
    %c0_61 = arith.constant 0 : index
    %90 = vector.load %arg10[%c1_59, %c0_60, %c0_61] : memref<4x32x8xbf16, #tpu.memory_space<vmem>>, vector<1x32x8xbf16>
    %91 = vector.shape_cast %90 : vector<1x32x8xbf16> to vector<32x8xbf16>
    %cst_62 = arith.constant dense<0.000000e+00> : vector<16x8xf32>
    %92 = tpu.matmul %31, %91, %cst_62 {dimension_numbers = #tpu.dot_dimension_numbers<[1], [0], [0], [1], [0, 0, 1, 1], [], []>} : vector<16x32xbf16>, vector<32x8xbf16>, vector<16x8xf32> -> vector<16x8xf32>
    %c1_63 = arith.constant 1 : index
    %c0_64 = arith.constant 0 : index
    %c0_65 = arith.constant 0 : index
    %93 = vector.load %arg11[%c1_63, %c0_64, %c0_65] : memref<4x1x8xf32, #tpu.memory_space<vmem>>, vector<1x1x8xf32>
    %94 = vector.shape_cast %93 : vector<1x1x8xf32> to vector<1x8xf32>
    %95 = vector.broadcast %94 : vector<1x8xf32> to vector<16x8xf32>
    %96 = arith.addf %92, %95 : vector<16x8xf32>
    %97 = arith.truncf %82 : vector<8x8xf32> to vector<8x8xbf16>
    %98 = arith.truncf %89 : vector<16x8xf32> to vector<16x8xbf16>
    %cst_66 = arith.constant dense<0.000000e+00> : vector<8x16xf32>
    %99 = tpu.matmul %97, %98, %cst_66 {dimension_numbers = #tpu.dot_dimension_numbers<[1], [1], [0], [0], [0, 0, 1, 0], [], []>} : vector<8x8xbf16>, vector<16x8xbf16>, vector<8x16xf32> -> vector<8x16xf32>
    %cst_67 = arith.constant 0.353553385 : f32
    %100 = vector.broadcast %cst_67 : f32 to vector<8x16xf32>
    %101 = arith.mulf %99, %100 : vector<8x16xf32>
    %102 = arith.addf %101, %29 : vector<8x16xf32>
    %cst_68 = arith.constant dense<0xFF800000> : vector<8xf32>
    %103 = vector.multi_reduction <maximumf>, %102, %cst_68 [1] : vector<8x16xf32> to vector<8xf32>
    %104 = vector.shape_cast %103 : vector<8xf32> to vector<8x1xf32>
    %105 = vector.broadcast %104 : vector<8x1xf32> to vector<8x16xf32>
    %106 = arith.subf %102, %105 : vector<8x16xf32>
    %107 = math.exp %106 : vector<8x16xf32>
    %cst_69 = arith.constant dense<0.000000e+00> : vector<8xf32>
    %108 = vector.multi_reduction <add>, %107, %cst_69 [1] : vector<8x16xf32> to vector<8xf32>
    %109 = vector.shape_cast %108 : vector<8xf32> to vector<8x1xf32>
    %110 = tpu.reciprocal %109 {approx = true} : vector<8x1xf32> -> vector<8x1xf32>
    %111 = vector.broadcast %110 : vector<8x1xf32> to vector<8x16xf32>
    %112 = arith.mulf %107, %111 : vector<8x16xf32>
    %113 = arith.truncf %112 : vector<8x16xf32> to vector<8x16xbf16>
    %114 = arith.truncf %96 : vector<16x8xf32> to vector<16x8xbf16>
    %cst_70 = arith.constant dense<0.000000e+00> : vector<8x8xf32>
    %115 = tpu.matmul %113, %114, %cst_70 {dimension_numbers = #tpu.dot_dimension_numbers<[1], [0], [0], [1], [0, 0, 1, 1], [], []>} : vector<8x16xbf16>, vector<16x8xbf16>, vector<8x8xf32> -> vector<8x8xf32>
    %116 = arith.truncf %115 : vector<8x8xf32> to vector<8x8xbf16>
    %c1_71 = arith.constant 1 : index
    %c0_72 = arith.constant 0 : index
    %c0_73 = arith.constant 0 : index
    %117 = vector.load %arg12[%c1_71, %c0_72, %c0_73] : memref<4x8x32xbf16, #tpu.memory_space<vmem>>, vector<1x8x32xbf16>
    %118 = vector.shape_cast %117 : vector<1x8x32xbf16> to vector<8x32xbf16>
    %cst_74 = arith.constant dense<0.000000e+00> : vector<8x32xf32>
    %119 = tpu.matmul %116, %118, %cst_74 {dimension_numbers = #tpu.dot_dimension_numbers<[1], [0], [0], [1], [0, 0, 1, 1], [], []>} : vector<8x8xbf16>, vector<8x32xbf16>, vector<8x32xf32> -> vector<8x32xf32>
    %120 = arith.addf %75, %119 : vector<8x32xf32>
    %c2 = arith.constant 2 : index
    %c0_75 = arith.constant 0 : index
    %c0_76 = arith.constant 0 : index
    %121 = vector.load %arg6[%c2, %c0_75, %c0_76] : memref<4x32x8xbf16, #tpu.memory_space<vmem>>, vector<1x32x8xbf16>
    %122 = vector.shape_cast %121 : vector<1x32x8xbf16> to vector<32x8xbf16>
    %cst_77 = arith.constant dense<0.000000e+00> : vector<8x8xf32>
    %123 = tpu.matmul %30, %122, %cst_77 {dimension_numbers = #tpu.dot_dimension_numbers<[1], [0], [0], [1], [0, 0, 1, 1], [], []>} : vector<8x32xbf16>, vector<32x8xbf16>, vector<8x8xf32> -> vector<8x8xf32>
    %c2_78 = arith.constant 2 : index
    %c0_79 = arith.constant 0 : index
    %c0_80 = arith.constant 0 : index
    %124 = vector.load %arg7[%c2_78, %c0_79, %c0_80] : memref<4x1x8xf32, #tpu.memory_space<vmem>>, vector<1x1x8xf32>
    %125 = vector.shape_cast %124 : vector<1x1x8xf32> to vector<1x8xf32>
    %126 = vector.broadcast %125 : vector<1x8xf32> to vector<8x8xf32>
    %127 = arith.addf %123, %126 : vector<8x8xf32>
    %c2_81 = arith.constant 2 : index
    %c0_82 = arith.constant 0 : index
    %c0_83 = arith.constant 0 : index
    %128 = vector.load %arg8[%c2_81, %c0_82, %c0_83] : memref<4x32x8xbf16, #tpu.memory_space<vmem>>, vector<1x32x8xbf16>
    %129 = vector.shape_cast %128 : vector<1x32x8xbf16> to vector<32x8xbf16>
    %cst_84 = arith.constant dense<0.000000e+00> : vector<16x8xf32>
    %130 = tpu.matmul %31, %129, %cst_84 {dimension_numbers = #tpu.dot_dimension_numbers<[1], [0], [0], [1], [0, 0, 1, 1], [], []>} : vector<16x32xbf16>, vector<32x8xbf16>, vector<16x8xf32> -> vector<16x8xf32>
    %c2_85 = arith.constant 2 : index
    %c0_86 = arith.constant 0 : index
    %c0_87 = arith.constant 0 : index
    %131 = vector.load %arg9[%c2_85, %c0_86, %c0_87] : memref<4x1x8xf32, #tpu.memory_space<vmem>>, vector<1x1x8xf32>
    %132 = vector.shape_cast %131 : vector<1x1x8xf32> to vector<1x8xf32>
    %133 = vector.broadcast %132 : vector<1x8xf32> to vector<16x8xf32>
    %134 = arith.addf %130, %133 : vector<16x8xf32>
    %c2_88 = arith.constant 2 : index
    %c0_89 = arith.constant 0 : index
    %c0_90 = arith.constant 0 : index
    %135 = vector.load %arg10[%c2_88, %c0_89, %c0_90] : memref<4x32x8xbf16, #tpu.memory_space<vmem>>, vector<1x32x8xbf16>
    %136 = vector.shape_cast %135 : vector<1x32x8xbf16> to vector<32x8xbf16>
    %cst_91 = arith.constant dense<0.000000e+00> : vector<16x8xf32>
    %137 = tpu.matmul %31, %136, %cst_91 {dimension_numbers = #tpu.dot_dimension_numbers<[1], [0], [0], [1], [0, 0, 1, 1], [], []>} : vector<16x32xbf16>, vector<32x8xbf16>, vector<16x8xf32> -> vector<16x8xf32>
    %c2_92 = arith.constant 2 : index
    %c0_93 = arith.constant 0 : index
    %c0_94 = arith.constant 0 : index
    %138 = vector.load %arg11[%c2_92, %c0_93, %c0_94] : memref<4x1x8xf32, #tpu.memory_space<vmem>>, vector<1x1x8xf32>
    %139 = vector.shape_cast %138 : vector<1x1x8xf32> to vector<1x8xf32>
    %140 = vector.broadcast %139 : vector<1x8xf32> to vector<16x8xf32>
    %141 = arith.addf %137, %140 : vector<16x8xf32>
    %142 = arith.truncf %127 : vector<8x8xf32> to vector<8x8xbf16>
    %143 = arith.truncf %134 : vector<16x8xf32> to vector<16x8xbf16>
    %cst_95 = arith.constant dense<0.000000e+00> : vector<8x16xf32>
    %144 = tpu.matmul %142, %143, %cst_95 {dimension_numbers = #tpu.dot_dimension_numbers<[1], [1], [0], [0], [0, 0, 1, 0], [], []>} : vector<8x8xbf16>, vector<16x8xbf16>, vector<8x16xf32> -> vector<8x16xf32>
    %cst_96 = arith.constant 0.353553385 : f32
    %145 = vector.broadcast %cst_96 : f32 to vector<8x16xf32>
    %146 = arith.mulf %144, %145 : vector<8x16xf32>
    %147 = arith.addf %146, %29 : vector<8x16xf32>
    %cst_97 = arith.constant dense<0xFF800000> : vector<8xf32>
    %148 = vector.multi_reduction <maximumf>, %147, %cst_97 [1] : vector<8x16xf32> to vector<8xf32>
    %149 = vector.shape_cast %148 : vector<8xf32> to vector<8x1xf32>
    %150 = vector.broadcast %149 : vector<8x1xf32> to vector<8x16xf32>
    %151 = arith.subf %147, %150 : vector<8x16xf32>
    %152 = math.exp %151 : vector<8x16xf32>
    %cst_98 = arith.constant dense<0.000000e+00> : vector<8xf32>
    %153 = vector.multi_reduction <add>, %152, %cst_98 [1] : vector<8x16xf32> to vector<8xf32>
    %154 = vector.shape_cast %153 : vector<8xf32> to vector<8x1xf32>
    %155 = tpu.reciprocal %154 {approx = true} : vector<8x1xf32> -> vector<8x1xf32>
    %156 = vector.broadcast %155 : vector<8x1xf32> to vector<8x16xf32>
    %157 = arith.mulf %152, %156 : vector<8x16xf32>
    %158 = arith.truncf %157 : vector<8x16xf32> to vector<8x16xbf16>
    %159 = arith.truncf %141 : vector<16x8xf32> to vector<16x8xbf16>
    %cst_99 = arith.constant dense<0.000000e+00> : vector<8x8xf32>
    %160 = tpu.matmul %158, %159, %cst_99 {dimension_numbers = #tpu.dot_dimension_numbers<[1], [0], [0], [1], [0, 0, 1, 1], [], []>} : vector<8x16xbf16>, vector<16x8xbf16>, vector<8x8xf32> -> vector<8x8xf32>
    %161 = arith.truncf %160 : vector<8x8xf32> to vector<8x8xbf16>
    %c2_100 = arith.constant 2 : index
    %c0_101 = arith.constant 0 : index
    %c0_102 = arith.constant 0 : index
    %162 = vector.load %arg12[%c2_100, %c0_101, %c0_102] : memref<4x8x32xbf16, #tpu.memory_space<vmem>>, vector<1x8x32xbf16>
    %163 = vector.shape_cast %162 : vector<1x8x32xbf16> to vector<8x32xbf16>
    %cst_103 = arith.constant dense<0.000000e+00> : vector<8x32xf32>
    %164 = tpu.matmul %161, %163, %cst_103 {dimension_numbers = #tpu.dot_dimension_numbers<[1], [0], [0], [1], [0, 0, 1, 1], [], []>} : vector<8x8xbf16>, vector<8x32xbf16>, vector<8x32xf32> -> vector<8x32xf32>
    %165 = arith.addf %120, %164 : vector<8x32xf32>
    %c3 = arith.constant 3 : index
    %c0_104 = arith.constant 0 : index
    %c0_105 = arith.constant 0 : index
    %166 = vector.load %arg6[%c3, %c0_104, %c0_105] : memref<4x32x8xbf16, #tpu.memory_space<vmem>>, vector<1x32x8xbf16>
    %167 = vector.shape_cast %166 : vector<1x32x8xbf16> to vector<32x8xbf16>
    %cst_106 = arith.constant dense<0.000000e+00> : vector<8x8xf32>
    %168 = tpu.matmul %30, %167, %cst_106 {dimension_numbers = #tpu.dot_dimension_numbers<[1], [0], [0], [1], [0, 0, 1, 1], [], []>} : vector<8x32xbf16>, vector<32x8xbf16>, vector<8x8xf32> -> vector<8x8xf32>
    %c3_107 = arith.constant 3 : index
    %c0_108 = arith.constant 0 : index
    %c0_109 = arith.constant 0 : index
    %169 = vector.load %arg7[%c3_107, %c0_108, %c0_109] : memref<4x1x8xf32, #tpu.memory_space<vmem>>, vector<1x1x8xf32>
    %170 = vector.shape_cast %169 : vector<1x1x8xf32> to vector<1x8xf32>
    %171 = vector.broadcast %170 : vector<1x8xf32> to vector<8x8xf32>
    %172 = arith.addf %168, %171 : vector<8x8xf32>
    %c3_110 = arith.constant 3 : index
    %c0_111 = arith.constant 0 : index
    %c0_112 = arith.constant 0 : index
    %173 = vector.load %arg8[%c3_110, %c0_111, %c0_112] : memref<4x32x8xbf16, #tpu.memory_space<vmem>>, vector<1x32x8xbf16>
    %174 = vector.shape_cast %173 : vector<1x32x8xbf16> to vector<32x8xbf16>
    %cst_113 = arith.constant dense<0.000000e+00> : vector<16x8xf32>
    %175 = tpu.matmul %31, %174, %cst_113 {dimension_numbers = #tpu.dot_dimension_numbers<[1], [0], [0], [1], [0, 0, 1, 1], [], []>} : vector<16x32xbf16>, vector<32x8xbf16>, vector<16x8xf32> -> vector<16x8xf32>
    %c3_114 = arith.constant 3 : index
    %c0_115 = arith.constant 0 : index
    %c0_116 = arith.constant 0 : index
    %176 = vector.load %arg9[%c3_114, %c0_115, %c0_116] : memref<4x1x8xf32, #tpu.memory_space<vmem>>, vector<1x1x8xf32>
    %177 = vector.shape_cast %176 : vector<1x1x8xf32> to vector<1x8xf32>
    %178 = vector.broadcast %177 : vector<1x8xf32> to vector<16x8xf32>
    %179 = arith.addf %175, %178 : vector<16x8xf32>
    %c3_117 = arith.constant 3 : index
    %c0_118 = arith.constant 0 : index
    %c0_119 = arith.constant 0 : index
    %180 = vector.load %arg10[%c3_117, %c0_118, %c0_119] : memref<4x32x8xbf16, #tpu.memory_space<vmem>>, vector<1x32x8xbf16>
    %181 = vector.shape_cast %180 : vector<1x32x8xbf16> to vector<32x8xbf16>
    %cst_120 = arith.constant dense<0.000000e+00> : vector<16x8xf32>
    %182 = tpu.matmul %31, %181, %cst_120 {dimension_numbers = #tpu.dot_dimension_numbers<[1], [0], [0], [1], [0, 0, 1, 1], [], []>} : vector<16x32xbf16>, vector<32x8xbf16>, vector<16x8xf32> -> vector<16x8xf32>
    %c3_121 = arith.constant 3 : index
    %c0_122 = arith.constant 0 : index
    %c0_123 = arith.constant 0 : index
    %183 = vector.load %arg11[%c3_121, %c0_122, %c0_123] : memref<4x1x8xf32, #tpu.memory_space<vmem>>, vector<1x1x8xf32>
    %184 = vector.shape_cast %183 : vector<1x1x8xf32> to vector<1x8xf32>
    %185 = vector.broadcast %184 : vector<1x8xf32> to vector<16x8xf32>
    %186 = arith.addf %182, %185 : vector<16x8xf32>
    %187 = arith.truncf %172 : vector<8x8xf32> to vector<8x8xbf16>
    %188 = arith.truncf %179 : vector<16x8xf32> to vector<16x8xbf16>
    %cst_124 = arith.constant dense<0.000000e+00> : vector<8x16xf32>
    %189 = tpu.matmul %187, %188, %cst_124 {dimension_numbers = #tpu.dot_dimension_numbers<[1], [1], [0], [0], [0, 0, 1, 0], [], []>} : vector<8x8xbf16>, vector<16x8xbf16>, vector<8x16xf32> -> vector<8x16xf32>
    %cst_125 = arith.constant 0.353553385 : f32
    %190 = vector.broadcast %cst_125 : f32 to vector<8x16xf32>
    %191 = arith.mulf %189, %190 : vector<8x16xf32>
    %192 = arith.addf %191, %29 : vector<8x16xf32>
    %cst_126 = arith.constant dense<0xFF800000> : vector<8xf32>
    %193 = vector.multi_reduction <maximumf>, %192, %cst_126 [1] : vector<8x16xf32> to vector<8xf32>
    %194 = vector.shape_cast %193 : vector<8xf32> to vector<8x1xf32>
    %195 = vector.broadcast %194 : vector<8x1xf32> to vector<8x16xf32>
    %196 = arith.subf %192, %195 : vector<8x16xf32>
    %197 = math.exp %196 : vector<8x16xf32>
    %cst_127 = arith.constant dense<0.000000e+00> : vector<8xf32>
    %198 = vector.multi_reduction <add>, %197, %cst_127 [1] : vector<8x16xf32> to vector<8xf32>
    %199 = vector.shape_cast %198 : vector<8xf32> to vector<8x1xf32>
    %200 = tpu.reciprocal %199 {approx = true} : vector<8x1xf32> -> vector<8x1xf32>
    %201 = vector.broadcast %200 : vector<8x1xf32> to vector<8x16xf32>
    %202 = arith.mulf %197, %201 : vector<8x16xf32>
    %203 = arith.truncf %202 : vector<8x16xf32> to vector<8x16xbf16>
    %204 = arith.truncf %186 : vector<16x8xf32> to vector<16x8xbf16>
    %cst_128 = arith.constant dense<0.000000e+00> : vector<8x8xf32>
    %205 = tpu.matmul %203, %204, %cst_128 {dimension_numbers = #tpu.dot_dimension_numbers<[1], [0], [0], [1], [0, 0, 1, 1], [], []>} : vector<8x16xbf16>, vector<16x8xbf16>, vector<8x8xf32> -> vector<8x8xf32>
    %206 = arith.truncf %205 : vector<8x8xf32> to vector<8x8xbf16>
    %c3_129 = arith.constant 3 : index
    %c0_130 = arith.constant 0 : index
    %c0_131 = arith.constant 0 : index
    %207 = vector.load %arg12[%c3_129, %c0_130, %c0_131] : memref<4x8x32xbf16, #tpu.memory_space<vmem>>, vector<1x8x32xbf16>
    %208 = vector.shape_cast %207 : vector<1x8x32xbf16> to vector<8x32xbf16>
    %cst_132 = arith.constant dense<0.000000e+00> : vector<8x32xf32>
    %209 = tpu.matmul %206, %208, %cst_132 {dimension_numbers = #tpu.dot_dimension_numbers<[1], [0], [0], [1], [0, 0, 1, 1], [], []>} : vector<8x8xbf16>, vector<8x32xbf16>, vector<8x32xf32> -> vector<8x32xf32>
    %210 = arith.addf %165, %209 : vector<8x32xf32>
    %c0_133 = arith.constant 0 : index
    %c0_134 = arith.constant 0 : index
    %211 = vector.load %arg13[%c0_133, %c0_134] : memref<1x32xf32, #tpu.memory_space<vmem>>, vector<1x32xf32>
    %212 = vector.broadcast %211 : vector<1x32xf32> to vector<8x32xf32>
    %213 = arith.addf %210, %212 : vector<8x32xf32>
    %214 = arith.addf %1, %213 : vector<8x32xf32>
    %c0_135 = arith.constant 0 : index
    %c0_136 = arith.constant 0 : index
    %c0_137 = arith.constant 0 : index
    %215 = vector.load %arg14[%c0_135, %c0_136, %c0_137] : memref<1x8x32xf32, #tpu.memory_space<vmem>>, vector<1x8x32xf32>
    %216 = vector.shape_cast %215 : vector<1x8x32xf32> to vector<8x32xf32>
    %217 = vector.shape_cast %214 : vector<8x32xf32> to vector<1x8x32xf32>
    tpu.vector_store %arg14[%c0_135, %c0_136, %c0_137], %217 {strides = array<i32>} : memref<1x8x32xf32, #tpu.memory_space<vmem>>, vector<1x8x32xf32>,
    return
  }
  func.func @transform_0(%arg0: i32) -> (i32, i32, i32) {
    %c0_i32 = arith.constant 0 : i32
    %c0_i32_0 = arith.constant 0 : i32
    %c0_i32_1 = arith.constant 0 : i32
    return %arg0, %c0_i32, %c0_i32_0 : i32, i32, i32
  }
  func.func @transform_1(%arg0: i32) -> (i32, i32, i32) {
    %c0_i32 = arith.constant 0 : i32
    %c0_i32_0 = arith.constant 0 : i32
    %c0_i32_1 = arith.constant 0 : i32
    return %arg0, %c0_i32, %c0_i32_0 : i32, i32, i32
  }
  func.func @transform_2(%arg0: i32) -> (i32, i32, i32) {
    %c0_i32 = arith.constant 0 : i32
    %c0_i32_0 = arith.constant 0 : i32
    %c0_i32_1 = arith.constant 0 : i32
    return %arg0, %c0_i32, %c0_i32_0 : i32, i32, i32
  }
  func.func @transform_3(%arg0: i32) -> (i32, i32) {
    %c0_i32 = arith.constant 0 : i32
    %c0_i32_0 = arith.constant 0 : i32
    %c0_i32_1 = arith.constant 0 : i32
    return %c0_i32, %c0_i32_0 : i32, i32
  }
  func.func @transform_4(%arg0: i32) -> (i32, i32) {
    %c0_i32 = arith.constant 0 : i32
    %c0_i32_0 = arith.constant 0 : i32
    %c0_i32_1 = arith.constant 0 : i32
    return %c0_i32, %c0_i32_0 : i32, i32
  }
  func.func @transform_5(%arg0: i32) -> (i32, i32, i32) {
    %c0_i32 = arith.constant 0 : i32
    %c0_i32_0 = arith.constant 0 : i32
    %c0_i32_1 = arith.constant 0 : i32
    %c0_i32_2 = arith.constant 0 : i32
    return %c0_i32, %c0_i32_0, %c0_i32_1 : i32, i32, i32
  }
  func.func @transform_6(%arg0: i32) -> (i32, i32, i32) {
    %c0_i32 = arith.constant 0 : i32
    %c0_i32_0 = arith.constant 0 : i32
    %c0_i32_1 = arith.constant 0 : i32
    %c0_i32_2 = arith.constant 0 : i32
    return %c0_i32, %c0_i32_0, %c0_i32_1 : i32, i32, i32
  }
  func.func @transform_7(%arg0: i32) -> (i32, i32, i32) {
    %c0_i32 = arith.constant 0 : i32
    %c0_i32_0 = arith.constant 0 : i32
    %c0_i32_1 = arith.constant 0 : i32
    %c0_i32_2 = arith.constant 0 : i32
    return %c0_i32, %c0_i32_0, %c0_i32_1 : i32, i32, i32
  }
  func.func @transform_8(%arg0: i32) -> (i32, i32, i32) {
    %c0_i32 = arith.constant 0 : i32
    %c0_i32_0 = arith.constant 0 : i32
    %c0_i32_1 = arith.constant 0 : i32
    %c0_i32_2 = arith.constant 0 : i32
    return %c0_i32, %c0_i32_0, %c0_i32_1 : i32, i32, i32
  }
  func.func @transform_9(%arg0: i32) -> (i32, i32, i32) {
    %c0_i32 = arith.constant 0 : i32
    %c0_i32_0 = arith.constant 0 : i32
    %c0_i32_1 = arith.constant 0 : i32
    %c0_i32_2 = arith.constant 0 : i32
    return %c0_i32, %c0_i32_0, %c0_i32_1 : i32, i32, i32
  }
  func.func @transform_10(%arg0: i32) -> (i32, i32, i32) {
    %c0_i32 = arith.constant 0 : i32
    %c0_i32_0 = arith.constant 0 : i32
    %c0_i32_1 = arith.constant 0 : i32
    %c0_i32_2 = arith.constant 0 : i32
    return %c0_i32, %c0_i32_0, %c0_i32_1 : i32, i32, i32
  }
  func.func @transform_11(%arg0: i32) -> (i32, i32, i32) {
    %c0_i32 = arith.constant 0 : i32
    %c0_i32_0 = arith.constant 0 : i32
    %c0_i32_1 = arith.constant 0 : i32
    %c0_i32_2 = arith.constant 0 : i32
    return %c0_i32, %c0_i32_0, %c0_i32_1 : i32, i32, i32
  }
  func.func @transform_12(%arg0: i32) -> (i32, i32) {
    %c0_i32 = arith.constant 0 : i32
    %c0_i32_0 = arith.constant 0 : i32
    %c0_i32_1 = arith.constant 0 : i32
    return %c0_i32, %c0_i32_0 : i32, i32
  }
  func.func @transform_13(%arg0: i32) -> (i32, i32, i32) {
    %c0_i32 = arith.constant 0 : i32
    %c0_i32_0 = arith.constant 0 : i32
    %c0_i32_1 = arith.constant 0 : i32
    return %arg0, %c0_i32, %c0_i32_0 : i32, i32, i32
  }
}

module attributes {stable_mosaic.version = 11 : i64} {
  func.func @_ffn_block_kernel(%arg0: memref<16x32xf32, #tpu.memory_space<vmem>>, %arg1: memref<1x32xf32, #tpu.memory_space<vmem>>, %arg2: memref<1x32xf32, #tpu.memory_space<vmem>>, %arg3: memref<32x2048xbf16, #tpu.memory_space<vmem>>, %arg4: memref<1x2048xf32, #tpu.memory_space<vmem>>, %arg5: memref<2048x32xbf16, #tpu.memory_space<vmem>>, %arg6: memref<1x32xf32, #tpu.memory_space<vmem>>, %arg7: memref<16x32xf32, #tpu.memory_space<vmem>>) attributes {dimension_semantics = [], scalar_prefetch = 0 : i64, scratch_operands = 0 : i64, tpu.core_type = #tpu.core_type<tc>} {
    %c0 = arith.constant 0 : index
    %c0_0 = arith.constant 0 : index
    %0 = vector.load %arg0[%c0, %c0_0] : memref<16x32xf32, #tpu.memory_space<vmem>>, vector<16x32xf32>
    %c0_1 = arith.constant 0 : index
    %c0_2 = arith.constant 0 : index
    %1 = vector.load %arg1[%c0_1, %c0_2] : memref<1x32xf32, #tpu.memory_space<vmem>>, vector<1x32xf32>
    %c0_3 = arith.constant 0 : index
    %c0_4 = arith.constant 0 : index
    %2 = vector.load %arg2[%c0_3, %c0_4] : memref<1x32xf32, #tpu.memory_space<vmem>>, vector<1x32xf32>
    %cst = arith.constant dense<0.000000e+00> : vector<16xf32>
    %3 = vector.multi_reduction <add>, %0, %cst [1] : vector<16x32xf32> to vector<16xf32>
    %4 = vector.shape_cast %3 : vector<16xf32> to vector<16x1xf32>
    %cst_5 = arith.constant 3.200000e+01 : f32
    %5 = vector.broadcast %cst_5 : f32 to vector<16x1xf32>
    %6 = arith.divf %4, %5 : vector<16x1xf32>
    %7 = vector.broadcast %6 : vector<16x1xf32> to vector<16x32xf32>
    %8 = arith.subf %0, %7 : vector<16x32xf32>
    %9 = arith.mulf %8, %8 : vector<16x32xf32>
    %cst_6 = arith.constant dense<0.000000e+00> : vector<16xf32>
    %10 = vector.multi_reduction <add>, %9, %cst_6 [1] : vector<16x32xf32> to vector<16xf32>
    %11 = vector.shape_cast %10 : vector<16xf32> to vector<16x1xf32>
    %cst_7 = arith.constant 3.200000e+01 : f32
    %12 = vector.broadcast %cst_7 : f32 to vector<16x1xf32>
    %13 = arith.divf %11, %12 : vector<16x1xf32>
    %14 = vector.broadcast %6 : vector<16x1xf32> to vector<16x32xf32>
    %15 = arith.subf %0, %14 : vector<16x32xf32>
    %cst_8 = arith.constant 9.99999997E-7 : f32
    %16 = vector.broadcast %cst_8 : f32 to vector<16x1xf32>
    %17 = arith.addf %13, %16 : vector<16x1xf32>
    %18 = math.rsqrt %17 : vector<16x1xf32>
    %19 = vector.broadcast %18 : vector<16x1xf32> to vector<16x32xf32>
    %20 = arith.mulf %15, %19 : vector<16x32xf32>
    %21 = vector.broadcast %1 : vector<1x32xf32> to vector<16x32xf32>
    %22 = arith.mulf %20, %21 : vector<16x32xf32>
    %23 = vector.broadcast %2 : vector<1x32xf32> to vector<16x32xf32>
    %24 = arith.addf %22, %23 : vector<16x32xf32>
    %25 = arith.truncf %24 : vector<16x32xf32> to vector<16x32xbf16>
    %c0_9 = arith.constant 0 : index
    %c0_10 = arith.constant 0 : index
    %26 = vector.load %arg3[%c0_9, %c0_10] : memref<32x2048xbf16, #tpu.memory_space<vmem>>, vector<32x2048xbf16>
    %cst_11 = arith.constant dense<0.000000e+00> : vector<16x2048xf32>
    %27 = tpu.matmul %25, %26, %cst_11 {dimension_numbers = #tpu.dot_dimension_numbers<[1], [0], [0], [1], [0, 0, 1, 1], [], []>} : vector<16x32xbf16>, vector<32x2048xbf16>, vector<16x2048xf32> -> vector<16x2048xf32>
    %c0_12 = arith.constant 0 : index
    %c0_13 = arith.constant 0 : index
    %28 = vector.load %arg4[%c0_12, %c0_13] : memref<1x2048xf32, #tpu.memory_space<vmem>>, vector<1x2048xf32>
    %29 = vector.broadcast %28 : vector<1x2048xf32> to vector<16x2048xf32>
    %30 = arith.addf %27, %29 : vector<16x2048xf32>
    %cst_14 = arith.constant 0.000000e+00 : f32
    %31 = vector.broadcast %cst_14 : f32 to vector<16x2048xf32>
    %32 = arith.maximumf %30, %31 : vector<16x2048xf32>
    %33 = arith.truncf %32 : vector<16x2048xf32> to vector<16x2048xbf16>
    %c0_15 = arith.constant 0 : index
    %c0_16 = arith.constant 0 : index
    %34 = vector.load %arg5[%c0_15, %c0_16] : memref<2048x32xbf16, #tpu.memory_space<vmem>>, vector<2048x32xbf16>
    %cst_17 = arith.constant dense<0.000000e+00> : vector<16x32xf32>
    %35 = tpu.matmul %33, %34, %cst_17 {dimension_numbers = #tpu.dot_dimension_numbers<[1], [0], [0], [1], [0, 0, 1, 1], [], []>} : vector<16x2048xbf16>, vector<2048x32xbf16>, vector<16x32xf32> -> vector<16x32xf32>
    %c0_18 = arith.constant 0 : index
    %c0_19 = arith.constant 0 : index
    %36 = vector.load %arg6[%c0_18, %c0_19] : memref<1x32xf32, #tpu.memory_space<vmem>>, vector<1x32xf32>
    %37 = vector.broadcast %36 : vector<1x32xf32> to vector<16x32xf32>
    %38 = arith.addf %35, %37 : vector<16x32xf32>
    %39 = arith.addf %0, %38 : vector<16x32xf32>
    %c0_20 = arith.constant 0 : index
    %c0_21 = arith.constant 0 : index
    %40 = vector.load %arg7[%c0_20, %c0_21] : memref<16x32xf32, #tpu.memory_space<vmem>>, vector<16x32xf32>
    tpu.vector_store %arg7[%c0_20, %c0_21], %39 {strides = array<i32>} : memref<16x32xf32, #tpu.memory_space<vmem>>, vector<16x32xf32>,
    return
  }
}

module attributes {stable_mosaic.version = 11 : i64} {
  func.func @_final_dec_kernel(%arg0: memref<16x32xf32, #tpu.memory_space<vmem>>, %arg1: memref<1x32xf32, #tpu.memory_space<vmem>>, %arg2: memref<1x32xf32, #tpu.memory_space<vmem>>, %arg3: memref<32x50xbf16, #tpu.memory_space<vmem>>, %arg4: memref<16x32xf32, #tpu.memory_space<vmem>>, %arg5: memref<16x50xf32, #tpu.memory_space<vmem>>) attributes {dimension_semantics = [], scalar_prefetch = 0 : i64, scratch_operands = 0 : i64, tpu.core_type = #tpu.core_type<tc>} {
    %c0 = arith.constant 0 : index
    %c0_0 = arith.constant 0 : index
    %0 = vector.load %arg0[%c0, %c0_0] : memref<16x32xf32, #tpu.memory_space<vmem>>, vector<16x32xf32>
    %c0_1 = arith.constant 0 : index
    %c0_2 = arith.constant 0 : index
    %1 = vector.load %arg1[%c0_1, %c0_2] : memref<1x32xf32, #tpu.memory_space<vmem>>, vector<1x32xf32>
    %c0_3 = arith.constant 0 : index
    %c0_4 = arith.constant 0 : index
    %2 = vector.load %arg2[%c0_3, %c0_4] : memref<1x32xf32, #tpu.memory_space<vmem>>, vector<1x32xf32>
    %cst = arith.constant dense<0.000000e+00> : vector<16xf32>
    %3 = vector.multi_reduction <add>, %0, %cst [1] : vector<16x32xf32> to vector<16xf32>
    %4 = vector.shape_cast %3 : vector<16xf32> to vector<16x1xf32>
    %cst_5 = arith.constant 3.200000e+01 : f32
    %5 = vector.broadcast %cst_5 : f32 to vector<16x1xf32>
    %6 = arith.divf %4, %5 : vector<16x1xf32>
    %7 = vector.broadcast %6 : vector<16x1xf32> to vector<16x32xf32>
    %8 = arith.subf %0, %7 : vector<16x32xf32>
    %9 = arith.mulf %8, %8 : vector<16x32xf32>
    %cst_6 = arith.constant dense<0.000000e+00> : vector<16xf32>
    %10 = vector.multi_reduction <add>, %9, %cst_6 [1] : vector<16x32xf32> to vector<16xf32>
    %11 = vector.shape_cast %10 : vector<16xf32> to vector<16x1xf32>
    %cst_7 = arith.constant 3.200000e+01 : f32
    %12 = vector.broadcast %cst_7 : f32 to vector<16x1xf32>
    %13 = arith.divf %11, %12 : vector<16x1xf32>
    %14 = vector.broadcast %6 : vector<16x1xf32> to vector<16x32xf32>
    %15 = arith.subf %0, %14 : vector<16x32xf32>
    %cst_8 = arith.constant 9.99999997E-7 : f32
    %16 = vector.broadcast %cst_8 : f32 to vector<16x1xf32>
    %17 = arith.addf %13, %16 : vector<16x1xf32>
    %18 = math.rsqrt %17 : vector<16x1xf32>
    %19 = vector.broadcast %18 : vector<16x1xf32> to vector<16x32xf32>
    %20 = arith.mulf %15, %19 : vector<16x32xf32>
    %21 = vector.broadcast %1 : vector<1x32xf32> to vector<16x32xf32>
    %22 = arith.mulf %20, %21 : vector<16x32xf32>
    %23 = vector.broadcast %2 : vector<1x32xf32> to vector<16x32xf32>
    %24 = arith.addf %22, %23 : vector<16x32xf32>
    %c0_9 = arith.constant 0 : index
    %c0_10 = arith.constant 0 : index
    %25 = vector.load %arg4[%c0_9, %c0_10] : memref<16x32xf32, #tpu.memory_space<vmem>>, vector<16x32xf32>
    tpu.vector_store %arg4[%c0_9, %c0_10], %24 {strides = array<i32>} : memref<16x32xf32, #tpu.memory_space<vmem>>, vector<16x32xf32>,
    %26 = arith.truncf %24 : vector<16x32xf32> to vector<16x32xbf16>
    %c0_11 = arith.constant 0 : index
    %c0_12 = arith.constant 0 : index
    %27 = vector.load %arg3[%c0_11, %c0_12] : memref<32x50xbf16, #tpu.memory_space<vmem>>, vector<32x50xbf16>
    %cst_13 = arith.constant dense<0.000000e+00> : vector<16x50xf32>
    %28 = tpu.matmul %26, %27, %cst_13 {dimension_numbers = #tpu.dot_dimension_numbers<[1], [0], [0], [1], [0, 0, 1, 1], [], []>} : vector<16x32xbf16>, vector<32x50xbf16>, vector<16x50xf32> -> vector<16x50xf32>
    %c0_14 = arith.constant 0 : index
    %c0_15 = arith.constant 0 : index
    %29 = vector.load %arg5[%c0_14, %c0_15] : memref<16x50xf32, #tpu.memory_space<vmem>>, vector<16x50xf32>
    tpu.vector_store %arg5[%c0_14, %c0_15], %28 {strides = array<i32>} : memref<16x50xf32, #tpu.memory_space<vmem>>, vector<16x50xf32>,
    return
  }
}

</mosaic_0001>

<llo_original>
// kernel: _lambda_.13
$region0: #{_lambda_.13}
  #allocation0 [shape = 'u32[]', space=smem, size = 0x4, offset = 0x4, fixed_abs, tag = 'smem constant byte address 0x4 - core index']
  #allocation1 [shape = 'u32[144,128]{1,0:T(1,128)}', space=vmem, size = 0x12000, scoped, tag = 'internal scratch']
  %s0 = inlined_call_operand.vmem [shape: bf16[32,12], index: 0, kind: input, shape index: {}]
  %s1 = inlined_call_operand.vmem [shape: bf16[12,32], index: 1, kind: input, shape index: {}]
  %s2 = inlined_call_operand.vmem [shape: f32[1,32], index: 2, kind: input, shape index: {}]
  %s3 = inlined_call_operand.vmem [shape: f32[32,32], index: 3, kind: output, shape index: {}]
  %s4 = sld [smem:[#allocation0]]
  $region22: #{_lambda_.13} parent=0
    _
  %s6 = ssub.s32 1, %s4
  %s7 = scalar_select 0, %s6, %s4
  // Predicated region
  $region2: #{_lambda_.13} parent=0 // pred_check
    _
  $region3: #{_lambda_.13} parent=0 // pred_check_branch
    %9 = sbr.rel (0) target = $region5
  $region4: #{_lambda_.13} parent=0 // pred_region
    _
  $region5: #{_lambda_.13} parent=0 // pred_fallthru
    _
  // Predicated region
  $region6: #{_lambda_.13} parent=0 // pred_check
    _
  $region7: #{_lambda_.13} parent=0 // pred_check_branch
    %11 = sbr.rel (0) target = $region9
  $region8: #{_lambda_.13} parent=0 // pred_region
    _
  $region9: #{_lambda_.13} parent=0 // pred_fallthru
    _
  // Predicated region
  $region10: #{_lambda_.13} parent=0 // pred_check
    _
  $region11: #{_lambda_.13} parent=0 // pred_check_branch
    %13 = sbr.rel (0) target = $region13
  $region12: #{_lambda_.13} parent=0 // pred_region
    _
  $region13: #{_lambda_.13} parent=0 // pred_fallthru
    _
  %v15 = vld [vmem:[%s0] sm:$0xf]
  %v16 = vld [vmem:[%s0 + $0x4] sm:$0xf]
  %v17 = vld [vmem:[%s0 + $0x8] sm:$0xf]
  %v18 = vld [vmem:[%s0 + $0xc] sm:$0xf]
  %v19 = vld [vmem:[%s1] sm:$0xf]
  %v20 = vld [vmem:[%s1 + $0x4] sm:$0x3]
  %v21 = vld [vmem:[%s2] sm:$0x1]
  %v23 = vlaneseq
  %v24 = vshrl.u32 %v23, 7
  %v25 = vsub.s32 0, %v24
  %v26 = vrot.slane %v21, %v25
  %v32 = vunpack.c.l.b16 %v15
  %v33 = vunpack.c.l.b16 %v16
  %v34 = vunpack.c.l.b16 %v17
  %v35 = vunpack.c.l.b16 %v18
  %v36 = vpack.c.b16 %v33, %v32
  %v37 = vpack.c.b16 %v35, %v34
  %v40 = vunpack.c.l.b16 %v19
  %v41 = vunpack.c.l.b16 %v20
  %v42 = vpack.c.b16 %v41, %v40
  %vm43 = vcmask 97280
  %v45 = vsel %vm43, %v36, 0
  %v48 = vsel %vm43, %v37, 0
  %vm50 = vcmask 1045504
  %v52 = vsel %vm50, %v42, 0
  %54 = vmatprep.subr.bf16.mxu0 0
  %55 = vmatpush1.bf16.msra.mxu0 0
  %56 = vmatprep.subr.bf16.mxu0 0
  %57 = vmatpush1.bf16.msra.mxu0 0
  %58 = vmatprep.subr.bf16.mxu0 0
  %59 = vmatpush1.bf16.msra.mxu0 0
  %60 = vmatprep.subr.bf16.mxu0 0
  %61 = vmatpush1.bf16.msra.mxu0 0
  %62 = vmatprep.subr.bf16.mxu0 0
  %63 = vmatpush1.bf16.msra.mxu0 0
  %64 = vmatprep.subr.bf16.mxu0 0
  %65 = vmatpush1.bf16.msra.mxu0 0
  %66 = vmatprep.subr.bf16.mxu0 0
  %67 = vmatpush1.bf16.msra.mxu0 0
  %68 = vmatprep.subr.bf16.mxu0 0
  %69 = vmatpush1.bf16.msra.mxu0 %v52
  %70 = vmatprep.subr.bf16.mxu0 0
  %71 = vmatpush2.bf16.msra.mxu0 0
  %72 = vmatprep.subr.bf16.mxu0 0
  %73 = vmatpush2.bf16.msra.mxu0 0
  %74 = vmatprep.subr.bf16.mxu0 0
  %75 = vmatpush2.bf16.msra.mxu0 0
  %76 = vmatprep.subr.bf16.mxu0 0
  %77 = vmatpush2.bf16.msra.mxu0 0
  %78 = vmatprep.subr.bf16.mxu0 0
  %79 = vmatpush2.bf16.msra.mxu0 0
  %80 = vmatprep.subr.bf16.mxu0 0
  %81 = vmatpush2.bf16.msra.mxu0 0
  %82 = vmatprep.subr.bf16.mxu0 0
  %83 = vmatpush2.bf16.msra.mxu0 0
  %84 = vmatprep.subr.bf16.mxu0 0
  %85 = vmatpush2.bf16.msra.mxu0 0
  %86 = vmatprep.mubr.bf16.mxu0 0
  %87 = vmatmul.mubr.bf16.gmra.mxu0 %v45
  %v88 = vpop.f32.mrf.mxu0
  %v89 = vadd.f32 %v26, %v88
  %v90 = vpop.f32.mrf.mxu0
  %v91 = vpop.f32.mrf.mxu0
  %v92 = vadd.f32 %v26, %v91
  %v93 = vpop.f32.mrf.mxu0
  %94 = vmatprep.mubr.bf16.mxu0 0
  %95 = vmatmul.mubr.bf16.gmra.mxu0 %v48
  %v96 = vpop.f32.mrf.mxu0
  %v97 = vadd.f32 %v26, %v96
  %v98 = vpop.f32.mrf.mxu0
  %v99 = vpop.f32.mrf.mxu0
  %v100 = vadd.f32 %v26, %v99
  %v101 = vpop.f32.mrf.mxu0
  %102 = vdwg.mxu0
  %vm103 = vcmask 261120
  %104 = vst.msk [vmem:[%s3] sm:$0xff] %vm103, %v89
  %105 = vst.msk [vmem:[%s3 + $0x8] sm:$0xff] %vm103, %v92
  %106 = vst.msk [vmem:[%s3 + $0x10] sm:$0xff] %vm103, %v97
  %107 = vst.msk [vmem:[%s3 + $0x18] sm:$0xff] %vm103, %v100
  // Predicated region
  $region14: #{_lambda_.13} parent=0 // pred_check
    _
  $region15: #{_lambda_.13} parent=0 // pred_check_branch
    %109 = sbr.rel (0) target = $region17
  $region16: #{_lambda_.13} parent=0 // pred_region
    _
  $region17: #{_lambda_.13} parent=0 // pred_fallthru
    _
  // Predicated region
  $region18: #{_lambda_.13} parent=0 // pred_check
    _
  $region19: #{_lambda_.13} parent=0 // pred_check_branch
    %111 = sbr.rel (0) target = $region21
  $region20: #{_lambda_.13} parent=0 // pred_region
    _
  $region21: #{_lambda_.13} parent=0 // pred_fallthru
    _

// kernel: _lambda_.18
$region0: #{_lambda_.18}
  #allocation0 [shape = 'u32[]', space=smem, size = 0x4, offset = 0x4, fixed_abs, tag = 'smem constant byte address 0x4 - core index']
  #allocation1 [shape = 'u32[144,128]{1,0:T(1,128)}', space=vmem, size = 0x12000, scoped, tag = 'internal scratch']
  %s0 = inlined_call_operand.vmem [shape: f32[32,32], index: 0, kind: input, shape index: {}]
  %s1 = inlined_call_operand.vmem [shape: f32[1,32], index: 1, kind: input, shape index: {}]
  %s2 = inlined_call_operand.vmem [shape: f32[1,32], index: 2, kind: input, shape index: {}]
  %s3 = inlined_call_operand.vmem [shape: f32[32,32], index: 3, kind: output, shape index: {}]
  %s4 = sld [smem:[#allocation0]]
  $region22: #{_lambda_.18} parent=0
    _
  %s6 = ssub.s32 1, %s4
  %s7 = scalar_select 0, %s6, %s4
  // Predicated region
  $region2: #{_lambda_.18} parent=0 // pred_check
    _
  $region3: #{_lambda_.18} parent=0 // pred_check_branch
    %9 = sbr.rel (0) target = $region5
  $region4: #{_lambda_.18} parent=0 // pred_region
    _
  $region5: #{_lambda_.18} parent=0 // pred_fallthru
    _
  // Predicated region
  $region6: #{_lambda_.18} parent=0 // pred_check
    _
  $region7: #{_lambda_.18} parent=0 // pred_check_branch
    %11 = sbr.rel (0) target = $region9
  $region8: #{_lambda_.18} parent=0 // pred_region
    _
  $region9: #{_lambda_.18} parent=0 // pred_fallthru
    _
  // Predicated region
  $region10: #{_lambda_.18} parent=0 // pred_check
    _
  $region11: #{_lambda_.18} parent=0 // pred_check_branch
    %13 = sbr.rel (0) target = $region13
  $region12: #{_lambda_.18} parent=0 // pred_region
    _
  $region13: #{_lambda_.18} parent=0 // pred_fallthru
    _
  %v14 = vld [vmem:[%s0] sm:$0xff]
  %v15 = vld [vmem:[%s0 + $0x8] sm:$0xff]
  %v16 = vld [vmem:[%s0 + $0x10] sm:$0xff]
  %v17 = vld [vmem:[%s0 + $0x18] sm:$0xff]
  %v18 = vld [vmem:[%s1] sm:$0x1]
  %v19 = vld [vmem:[%s2] sm:$0x1]
  %vm20 = vcmask 261120
  %v21 = vsel %vm20, %v14, 0.0
  %22 = vadd.xlane.f32.xlu0 %v21
  %v23 = vpop.xlane.xlu0 %22
  %v24 = vsel %vm20, %v15, 0.0
  %25 = vadd.xlane.f32.xlu0 %v24
  %v26 = vpop.xlane.xlu0 %25
  %v27 = vsel %vm20, %v16, 0.0
  %28 = vadd.xlane.f32.xlu0 %v27
  %v29 = vpop.xlane.xlu0 %28
  %v30 = vsel %vm20, %v17, 0.0
  %31 = vadd.xlane.f32.xlu0 %v30
  %v32 = vpop.xlane.xlu0 %31
  %v33 = vrcp.pop 32.0
  %v34 = vmul.f32 %v23, %v33
  %v35 = vmul.f32 %v26, %v33
  %v36 = vmul.f32 %v29, %v33
  %v37 = vmul.f32 %v32, %v33
  %v38 = vsub.f32 %v14, %v34
  %v39 = vsub.f32 %v15, %v35
  %v40 = vsub.f32 %v16, %v36
  %v41 = vsub.f32 %v17, %v37
  %v42 = vmul.f32 %v38, %v38
  %v43 = vmul.f32 %v39, %v39
  %v44 = vmul.f32 %v40, %v40
  %v45 = vmul.f32 %v41, %v41
  %v46 = vsel %vm20, %v42, 0.0
  %47 = vadd.xlane.f32.xlu0 %v46
  %v48 = vpop.xlane.xlu0 %47
  %v49 = vsel %vm20, %v43, 0.0
  %50 = vadd.xlane.f32.xlu0 %v49
  %v51 = vpop.xlane.xlu0 %50
  %v52 = vsel %vm20, %v44, 0.0
  %53 = vadd.xlane.f32.xlu0 %v52
  %v54 = vpop.xlane.xlu0 %53
  %v55 = vsel %vm20, %v45, 0.0
  %56 = vadd.xlane.f32.xlu0 %v55
  %v57 = vpop.xlane.xlu0 %56
  %v58 = vmul.f32 %v48, %v33
  %v59 = vmul.f32 %v51, %v33
  %v60 = vmul.f32 %v54, %v33
  %v61 = vmul.f32 %v57, %v33
  %v62 = vadd.f32 %v58, 1e-05
  %v63 = vadd.f32 %v59, 1e-05
  %v64 = vadd.f32 %v60, 1e-05
  %v65 = vadd.f32 %v61, 1e-05
  %v66 = vrsqrt.pop %v62
  %v67 = vrsqrt.pop %v63
  %v68 = vrsqrt.pop %v64
  %v69 = vrsqrt.pop %v65
  %v70 = vmul.f32 %v38, %v66
  %v71 = vmul.f32 %v39, %v67
  %v72 = vmul.f32 %v40, %v68
  %v73 = vmul.f32 %v41, %v69
  %v75 = vlaneseq
  %v76 = vshrl.u32 %v75, 7
  %v77 = vsub.s32 0, %v76
  %v78 = vrot.slane %v18, %v77
  %v80 = vmul.f32 %v70, %v78
  %v81 = vmul.f32 %v71, %v78
  %v82 = vmul.f32 %v72, %v78
  %v83 = vmul.f32 %v73, %v78
  %v85 = vlaneseq
  %v86 = vshrl.u32 %v85, 7
  %v87 = vsub.s32 0, %v86
  %v88 = vrot.slane %v19, %v87
  %v90 = vadd.f32 %v80, %v88
  %v91 = vadd.f32 %v81, %v88
  %v92 = vadd.f32 %v82, %v88
  %v93 = vadd.f32 %v83, %v88
  %94 = vst.msk [vmem:[%s3] sm:$0xff] %vm20, %v90
  %95 = vst.msk [vmem:[%s3 + $0x8] sm:$0xff] %vm20, %v91
  %96 = vst.msk [vmem:[%s3 + $0x10] sm:$0xff] %vm20, %v92
  %97 = vst.msk [vmem:[%s3 + $0x18] sm:$0xff] %vm20, %v93
  // Predicated region
  $region14: #{_lambda_.18} parent=0 // pred_check
    _
  $region15: #{_lambda_.18} parent=0 // pred_check_branch
    %99 = sbr.rel (0) target = $region17
  $region16: #{_lambda_.18} parent=0 // pred_region
    _
  $region17: #{_lambda_.18} parent=0 // pred_fallthru
    _
  // Predicated region
  $region18: #{_lambda_.18} parent=0 // pred_check
    _
  $region19: #{_lambda_.18} parent=0 // pred_check_branch
    %101 = sbr.rel (0) target = $region21
  $region20: #{_lambda_.18} parent=0 // pred_region
    _
  $region21: #{_lambda_.18} parent=0 // pred_fallthru
    _

// kernel: _lambda_.15
$region0: #{_lambda_.15}
  #allocation0 [shape = 'u32[]', space=smem, size = 0x4, offset = 0x4, fixed_abs, tag = 'smem constant byte address 0x4 - core index']
  #allocation1 [shape = 'u32[144,128]{1,0:T(1,128)}', space=vmem, size = 0x12000, scoped, tag = 'internal scratch']
  %s0 = inlined_call_operand.vmem [shape: f32[32,32], index: 0, kind: input, shape index: {}]
  %s1 = inlined_call_operand.vmem [shape: f32[1,32], index: 1, kind: input, shape index: {}]
  %s2 = inlined_call_operand.vmem [shape: f32[1,32], index: 2, kind: input, shape index: {}]
  %s3 = inlined_call_operand.vmem [shape: bf16[32,128], index: 3, kind: input, shape index: {}]
  %s4 = inlined_call_operand.vmem [shape: f32[1,128], index: 4, kind: input, shape index: {}]
  %s5 = inlined_call_operand.vmem [shape: bf16[128,32], index: 5, kind: input, shape index: {}]
  %s6 = inlined_call_operand.vmem [shape: f32[1,32], index: 6, kind: input, shape index: {}]
  %s7 = inlined_call_operand.vmem [shape: f32[32,32], index: 7, kind: output, shape index: {}]
  %s8 = sld [smem:[#allocation0]]
  $region38: #{_lambda_.15} parent=0
    _
  %s10 = ssub.s32 1, %s8
  %s11 = scalar_select 0, %s10, %s8
  // Predicated region
  $region2: #{_lambda_.15} parent=0 // pred_check
    _
  $region3: #{_lambda_.15} parent=0 // pred_check_branch
    %13 = sbr.rel (0) target = $region5
  $region4: #{_lambda_.15} parent=0 // pred_region
    _
  $region5: #{_lambda_.15} parent=0 // pred_fallthru
    _
  // Predicated region
  $region6: #{_lambda_.15} parent=0 // pred_check
    _
  $region7: #{_lambda_.15} parent=0 // pred_check_branch
    %15 = sbr.rel (0) target = $region9
  $region8: #{_lambda_.15} parent=0 // pred_region
    _
  $region9: #{_lambda_.15} parent=0 // pred_fallthru
    _
  // Predicated region
  $region10: #{_lambda_.15} parent=0 // pred_check
    _
  $region11: #{_lambda_.15} parent=0 // pred_check_branch
    %17 = sbr.rel (0) target = $region13
  $region12: #{_lambda_.15} parent=0 // pred_region
    _
  $region13: #{_lambda_.15} parent=0 // pred_fallthru
    _
  // Predicated region
  $region14: #{_lambda_.15} parent=0 // pred_check
    _
  $region15: #{_lambda_.15} parent=0 // pred_check_branch
    %19 = sbr.rel (0) target = $region17
  $region16: #{_lambda_.15} parent=0 // pred_region
    _
  $region17: #{_lambda_.15} parent=0 // pred_fallthru
    _
  // Predicated region
  $region18: #{_lambda_.15} parent=0 // pred_check
    _
  $region19: #{_lambda_.15} parent=0 // pred_check_branch
    %21 = sbr.rel (0) target = $region21
  $region20: #{_lambda_.15} parent=0 // pred_region
    _
  $region21: #{_lambda_.15} parent=0 // pred_fallthru
    _
  // Predicated region
  $region22: #{_lambda_.15} parent=0 // pred_check
    _
  $region23: #{_lambda_.15} parent=0 // pred_check_branch
    %23 = sbr.rel (0) target = $region25
  $region24: #{_lambda_.15} parent=0 // pred_region
    _
  $region25: #{_lambda_.15} parent=0 // pred_fallthru
    _
  // Predicated region
  $region26: #{_lambda_.15} parent=0 // pred_check
    _
  $region27: #{_lambda_.15} parent=0 // pred_check_branch
    %25 = sbr.rel (0) target = $region29
  $region28: #{_lambda_.15} parent=0 // pred_region
    _
  $region29: #{_lambda_.15} parent=0 // pred_fallthru
    _
  %v27 = vld [vmem:[%s0] sm:$0xff]
  %v28 = vld [vmem:[%s0 + $0x8] sm:$0xff]
  %v29 = vld [vmem:[%s0 + $0x10] sm:$0xff]
  %v30 = vld [vmem:[%s0 + $0x18] sm:$0xff]
  %v31 = vld [vmem:[%s1] sm:$0x1]
  %v32 = vld [vmem:[%s2] sm:$0x1]
  %vm33 = vcmask 261120
  %v34 = vsel %vm33, %v27, 0.0
  %35 = vadd.xlane.f32.xlu0 %v34
  %v36 = vpop.xlane.xlu0 %35
  %v37 = vsel %vm33, %v28, 0.0
  %38 = vadd.xlane.f32.xlu0 %v37
  %v39 = vpop.xlane.xlu0 %38
  %v40 = vsel %vm33, %v29, 0.0
  %41 = vadd.xlane.f32.xlu0 %v40
  %v42 = vpop.xlane.xlu0 %41
  %v43 = vsel %vm33, %v30, 0.0
  %44 = vadd.xlane.f32.xlu0 %v43
  %v45 = vpop.xlane.xlu0 %44
  %v46 = vrcp.pop 32.0
  %v47 = vmul.f32 %v36, %v46
  %v48 = vmul.f32 %v39, %v46
  %v49 = vmul.f32 %v42, %v46
  %v50 = vmul.f32 %v45, %v46
  %v51 = vsub.f32 %v27, %v47
  %v52 = vsub.f32 %v28, %v48
  %v53 = vsub.f32 %v29, %v49
  %v54 = vsub.f32 %v30, %v50
  %v55 = vmul.f32 %v51, %v51
  %v56 = vmul.f32 %v52, %v52
  %v57 = vmul.f32 %v53, %v53
  %v58 = vmul.f32 %v54, %v54
  %v59 = vsel %vm33, %v55, 0.0
  %60 = vadd.xlane.f32.xlu0 %v59
  %v61 = vpop.xlane.xlu0 %60
  %v62 = vsel %vm33, %v56, 0.0
  %63 = vadd.xlane.f32.xlu0 %v62
  %v64 = vpop.xlane.xlu0 %63
  %v65 = vsel %vm33, %v57, 0.0
  %66 = vadd.xlane.f32.xlu0 %v65
  %v67 = vpop.xlane.xlu0 %66
  %v68 = vsel %vm33, %v58, 0.0
  %69 = vadd.xlane.f32.xlu0 %v68
  %v70 = vpop.xlane.xlu0 %69
  %v71 = vmul.f32 %v61, %v46
  %v72 = vmul.f32 %v64, %v46
  %v73 = vmul.f32 %v67, %v46
  %v74 = vmul.f32 %v70, %v46
  %v75 = vadd.f32 %v71, 1e-05
  %v76 = vadd.f32 %v72, 1e-05
  %v77 = vadd.f32 %v73, 1e-05
  %v78 = vadd.f32 %v74, 1e-05
  %v79 = vrsqrt.pop %v75
  %v80 = vrsqrt.pop %v76
  %v81 = vrsqrt.pop %v77
  %v82 = vrsqrt.pop %v78
  %v83 = vmul.f32 %v51, %v79
  %v84 = vmul.f32 %v52, %v80
  %v85 = vmul.f32 %v53, %v81
  %v86 = vmul.f32 %v54, %v82
  %v88 = vlaneseq
  %v89 = vshrl.u32 %v88, 7
  %v90 = vsub.s32 0, %v89
  %v91 = vrot.slane %v31, %v90
  %v93 = vmul.f32 %v83, %v91
  %v94 = vmul.f32 %v84, %v91
  %v95 = vmul.f32 %v85, %v91
  %v96 = vmul.f32 %v86, %v91
  %v98 = vlaneseq
  %v99 = vshrl.u32 %v98, 7
  %v100 = vsub.s32 0, %v99
  %v101 = vrot.slane %v32, %v100
  %v103 = vadd.f32 %v93, %v101
  %v104 = vadd.f32 %v94, %v101
  %v105 = vadd.f32 %v95, %v101
  %v106 = vadd.f32 %v96, %v101
  %v107 = vpack.c.bf16 %v104, %v103
  %v108 = vpack.c.bf16 %v106, %v105
  %v109 = vld [vmem:[%s3] sm:$0xf]
  %v110 = vld [vmem:[%s3 + $0x4] sm:$0xf]
  %v111 = vld [vmem:[%s3 + $0x8] sm:$0xf]
  %v112 = vld [vmem:[%s3 + $0xc] sm:$0xf]
  %v113 = vld [vmem:[%s4] sm:$0x1]
  %v115 = vlaneseq
  %v116 = vshrl.u32 %v115, 7
  %v117 = vsub.s32 0, %v116
  %v118 = vrot.slane %v113, %v117
  %v124 = vunpack.c.l.b16 %v109
  %v125 = vunpack.c.l.b16 %v110
  %v126 = vunpack.c.l.b16 %v111
  %v127 = vunpack.c.l.b16 %v112
  %v128 = vpack.c.b16 %v125, %v124
  %v129 = vpack.c.b16 %v127, %v126
  %v133 = vsel %vm33, %v107, 0
  %v136 = vsel %vm33, %v108, 0
  %138 = vmatprep.subr.bf16.mxu0 0
  %139 = vmatpush1.bf16.msra.mxu0 0
  %140 = vmatprep.subr.bf16.mxu0 0
  %141 = vmatpush1.bf16.msra.mxu0 0
  %142 = vmatprep.subr.bf16.mxu0 0
  %143 = vmatpush1.bf16.msra.mxu0 0
  %144 = vmatprep.subr.bf16.mxu0 0
  %145 = vmatpush1.bf16.msra.mxu0 0
  %146 = vmatprep.subr.bf16.mxu0 0
  %147 = vmatpush1.bf16.msra.mxu0 0
  %148 = vmatprep.subr.bf16.mxu0 0
  %149 = vmatpush1.bf16.msra.mxu0 0
  %150 = vmatprep.subr.bf16.mxu0 0
  %151 = vmatpush1.bf16.msra.mxu0 %v129
  %152 = vmatprep.subr.bf16.mxu0 0
  %153 = vmatpush1.bf16.msra.mxu0 %v128
  %154 = vmatprep.subr.bf16.mxu0 0
  %155 = vmatpush2.bf16.msra.mxu0 0
  %156 = vmatprep.subr.bf16.mxu0 0
  %157 = vmatpush2.bf16.msra.mxu0 0
  %158 = vmatprep.subr.bf16.mxu0 0
  %159 = vmatpush2.bf16.msra.mxu0 0
  %160 = vmatprep.subr.bf16.mxu0 0
  %161 = vmatpush2.bf16.msra.mxu0 0
  %162 = vmatprep.subr.bf16.mxu0 0
  %163 = vmatpush2.bf16.msra.mxu0 0
  %164 = vmatprep.subr.bf16.mxu0 0
  %165 = vmatpush2.bf16.msra.mxu0 0
  %166 = vmatprep.subr.bf16.mxu0 0
  %167 = vmatpush2.bf16.msra.mxu0 0
  %168 = vmatprep.subr.bf16.mxu0 0
  %169 = vmatpush2.bf16.msra.mxu0 0
  %170 = vmatprep.mubr.bf16.mxu0 0
  %171 = vmatmul.mubr.bf16.gmra.mxu0 %v133
  %v172 = vpop.f32.mrf.mxu0
  %v173 = vadd.f32 %v118, %v172
  %v174 = vpop.f32.mrf.mxu0
  %v175 = vpop.f32.mrf.mxu0
  %v176 = vadd.f32 %v118, %v175
  %v177 = vpop.f32.mrf.mxu0
  %178 = vmatprep.mubr.bf16.mxu0 0
  %179 = vmatmul.mubr.bf16.gmra.mxu0 %v136
  %v180 = vpop.f32.mrf.mxu0
  %v181 = vadd.f32 %v118, %v180
  %v182 = vpop.f32.mrf.mxu0
  %v183 = vpop.f32.mrf.mxu0
  %v184 = vadd.f32 %v118, %v183
  %v185 = vpop.f32.mrf.mxu0
  %186 = vdwg.mxu0
  %v187 = vmax.f32 %v173, 0.0
  %v188 = vmax.f32 %v176, 0.0
  %v189 = vmax.f32 %v181, 0.0
  %v190 = vmax.f32 %v184, 0.0
  %v191 = vpack.c.bf16 %v188, %v187
  %v192 = vpack.c.bf16 %v190, %v189
  %v193 = vld [vmem:[%s5] sm:$0xf]
  %v194 = vld [vmem:[%s5 + $0x4] sm:$0xf]
  %v195 = vld [vmem:[%s5 + $0x8] sm:$0xf]
  %v196 = vld [vmem:[%s5 + $0xc] sm:$0xf]
  %v197 = vld [vmem:[%s5 + $0x10] sm:$0xf]
  %v198 = vld [vmem:[%s5 + $0x14] sm:$0xf]
  %v199 = vld [vmem:[%s5 + $0x18] sm:$0xf]
  %v200 = vld [vmem:[%s5 + $0x1c] sm:$0xf]
  %v201 = vld [vmem:[%s5 + $0x20] sm:$0xf]
  %v202 = vld [vmem:[%s5 + $0x24] sm:$0xf]
  %v203 = vld [vmem:[%s5 + $0x28] sm:$0xf]
  %v204 = vld [vmem:[%s5 + $0x2c] sm:$0xf]
  %v205 = vld [vmem:[%s5 + $0x30] sm:$0xf]
  %v206 = vld [vmem:[%s5 + $0x34] sm:$0xf]
  %v207 = vld [vmem:[%s5 + $0x38] sm:$0xf]
  %v208 = vld [vmem:[%s5 + $0x3c] sm:$0xf]
  %v209 = vld [vmem:[%s6] sm:$0x1]
  %v211 = vlaneseq
  %v212 = vshrl.u32 %v211, 7
  %v213 = vsub.s32 0, %v212
  %v214 = vrot.slane %v209, %v213
  %v232 = vunpack.c.l.b16 %v193
  %v233 = vunpack.c.l.b16 %v194
  %v234 = vunpack.c.l.b16 %v195
  %v235 = vunpack.c.l.b16 %v196
  %v236 = vunpack.c.l.b16 %v197
  %v237 = vunpack.c.l.b16 %v198
  %v238 = vunpack.c.l.b16 %v199
  %v239 = vunpack.c.l.b16 %v200
  %v240 = vunpack.c.l.b16 %v201
  %v241 = vunpack.c.l.b16 %v202
  %v242 = vunpack.c.l.b16 %v203
  %v243 = vunpack.c.l.b16 %v204
  %v244 = vunpack.c.l.b16 %v205
  %v245 = vunpack.c.l.b16 %v206
  %v246 = vunpack.c.l.b16 %v207
  %v247 = vunpack.c.l.b16 %v208
  %v248 = vpack.c.b16 %v233, %v232
  %v249 = vpack.c.b16 %v235, %v234
  %v250 = vpack.c.b16 %v237, %v236
  %v251 = vpack.c.b16 %v239, %v238
  %v252 = vpack.c.b16 %v241, %v240
  %v253 = vpack.c.b16 %v243, %v242
  %v254 = vpack.c.b16 %v245, %v244
  %v255 = vpack.c.b16 %v247, %v246
  %264 = vmatprep.subr.bf16.mxu0 0
  %265 = vmatpush1.bf16.msra.mxu0 %v255
  %266 = vmatprep.subr.bf16.mxu0 0
  %267 = vmatpush1.bf16.msra.mxu0 %v254
  %268 = vmatprep.subr.bf16.mxu0 0
  %269 = vmatpush1.bf16.msra.mxu0 %v253
  %270 = vmatprep.subr.bf16.mxu0 0
  %271 = vmatpush1.bf16.msra.mxu0 %v252
  %272 = vmatprep.subr.bf16.mxu0 0
  %273 = vmatpush1.bf16.msra.mxu0 %v251
  %274 = vmatprep.subr.bf16.mxu0 0
  %275 = vmatpush1.bf16.msra.mxu0 %v250
  %276 = vmatprep.subr.bf16.mxu0 0
  %277 = vmatpush1.bf16.msra.mxu0 %v249
  %278 = vmatprep.subr.bf16.mxu0 0
  %279 = vmatpush1.bf16.msra.mxu0 %v248
  %280 = vmatprep.subr.bf16.mxu0 0
  %281 = vmatpush2.bf16.msra.mxu0 0
  %282 = vmatprep.subr.bf16.mxu0 0
  %283 = vmatpush2.bf16.msra.mxu0 0
  %284 = vmatprep.subr.bf16.mxu0 0
  %285 = vmatpush2.bf16.msra.mxu0 0
  %286 = vmatprep.subr.bf16.mxu0 0
  %287 = vmatpush2.bf16.msra.mxu0 0
  %288 = vmatprep.subr.bf16.mxu0 0
  %289 = vmatpush2.bf16.msra.mxu0 0
  %290 = vmatprep.subr.bf16.mxu0 0
  %291 = vmatpush2.bf16.msra.mxu0 0
  %292 = vmatprep.subr.bf16.mxu0 0
  %293 = vmatpush2.bf16.msra.mxu0 0
  %294 = vmatprep.subr.bf16.mxu0 0
  %295 = vmatpush2.bf16.msra.mxu0 0
  %296 = vmatprep.mubr.bf16.mxu0 0
  %297 = vmatmul.mubr.bf16.gmra.mxu0 %v191
  %v298 = vpop.f32.mrf.mxu0
  %v299 = vadd.f32 %v214, %v298
  %v300 = vpop.f32.mrf.mxu0
  %v301 = vpop.f32.mrf.mxu0
  %v302 = vadd.f32 %v214, %v301
  %v303 = vpop.f32.mrf.mxu0
  %304 = vmatprep.mubr.bf16.mxu0 0
  %305 = vmatmul.mubr.bf16.gmra.mxu0 %v192
  %v306 = vpop.f32.mrf.mxu0
  %v307 = vadd.f32 %v214, %v306
  %v308 = vpop.f32.mrf.mxu0
  %v309 = vpop.f32.mrf.mxu0
  %v310 = vadd.f32 %v214, %v309
  %v311 = vpop.f32.mrf.mxu0
  %312 = vdwg.mxu0
  %v313 = vadd.f32 %v27, %v299
  %v314 = vadd.f32 %v28, %v302
  %v315 = vadd.f32 %v29, %v307
  %v316 = vadd.f32 %v30, %v310
  %317 = vst.msk [vmem:[%s7] sm:$0xff] %vm33, %v313
  %318 = vst.msk [vmem:[%s7 + $0x8] sm:$0xff] %vm33, %v314
  %319 = vst.msk [vmem:[%s7 + $0x10] sm:$0xff] %vm33, %v315
  %320 = vst.msk [vmem:[%s7 + $0x18] sm:$0xff] %vm33, %v316
  // Predicated region
  $region30: #{_lambda_.15} parent=0 // pred_check
    _
  $region31: #{_lambda_.15} parent=0 // pred_check_branch
    %322 = sbr.rel (0) target = $region33
  $region32: #{_lambda_.15} parent=0 // pred_region
    _
  $region33: #{_lambda_.15} parent=0 // pred_fallthru
    _
  // Predicated region
  $region34: #{_lambda_.15} parent=0 // pred_check
    _
  $region35: #{_lambda_.15} parent=0 // pred_check_branch
    %324 = sbr.rel (0) target = $region37
  $region36: #{_lambda_.15} parent=0 // pred_region
    _
  $region37: #{_lambda_.15} parent=0 // pred_fallthru
    _

// kernel: _lambda_.14
$region0: #{_lambda_.14}
  #allocation0 [shape = 'u32[]', space=smem, size = 0x4, offset = 0x4, fixed_abs, tag = 'smem constant byte address 0x4 - core index']
  #allocation1 [shape = 'u32[144,128]{1,0:T(1,128)}', space=vmem, size = 0x12000, scoped, tag = 'internal scratch']
  %s0 = inlined_call_operand.vmem [shape: f32[2,16,32], index: 0, kind: input, shape index: {}]
  %s1 = inlined_call_operand.vmem [shape: f32[2,16,16], index: 1, kind: input, shape index: {}]
  %s2 = inlined_call_operand.vmem [shape: f32[1,32], index: 2, kind: input, shape index: {}]
  %s3 = inlined_call_operand.vmem [shape: f32[1,32], index: 3, kind: input, shape index: {}]
  %s4 = inlined_call_operand.vmem [shape: bf16[4,32,8], index: 4, kind: input, shape index: {}]
  %s5 = inlined_call_operand.vmem [shape: f32[4,1,8], index: 5, kind: input, shape index: {}]
  %s6 = inlined_call_operand.vmem [shape: bf16[4,32,8], index: 6, kind: input, shape index: {}]
  %s7 = inlined_call_operand.vmem [shape: f32[4,1,8], index: 7, kind: input, shape index: {}]
  %s8 = inlined_call_operand.vmem [shape: bf16[4,32,8], index: 8, kind: input, shape index: {}]
  %s9 = inlined_call_operand.vmem [shape: f32[4,1,8], index: 9, kind: input, shape index: {}]
  %s10 = inlined_call_operand.vmem [shape: bf16[4,8,32], index: 10, kind: input, shape index: {}]
  %s11 = inlined_call_operand.vmem [shape: f32[1,32], index: 11, kind: input, shape index: {}]
  %s12 = inlined_call_operand.vmem [shape: f32[2,16,32], index: 12, kind: output, shape index: {}]
  %s13 = sld [smem:[#allocation0]]
  $region81: #{_lambda_.14} parent=0
    _
  %s15 = ssub.s32 1, %s13
  %s16 = scalar_select 0, %s15, %s13
  loop: start=0, step=1, limit=4
  $region2: #{_lambda_.14} parent=0 // loop_pre_header
    _
  $region3: #{_lambda_.14} parent=0 // loop_header
    %s18 = sphi 0, %s22
    %p19 = scmp.ge.s32.totalorder %s18, 4
    %s28 = sphi 0, %s30
    %s31 = sphi 0, %s28
    %s32 = sphi 0, %s31
    %s48 = sphi 0, %s32
    %s54 = sphi 0, %s56
    %s57 = sphi 0, %s54
    %s58 = sphi 0, %s57
    %s74 = sphi 0, %s58
    %s78 = sphi 0, %s78
    %s80 = sphi 0, %s78
    %s81 = sphi 0, %s80
    %s95 = sphi 0, %s81
    %s99 = sphi 0, %s99
    %s101 = sphi 0, %s99
    %s102 = sphi 0, %s101
    %s116 = sphi 0, %s102
    %s120 = sphi 0, %s120
    %s122 = sphi 0, %s120
    %s123 = sphi 0, %s122
    %s137 = sphi 0, %s123
    %s141 = sphi 0, %s141
    %s143 = sphi 0, %s141
    %s144 = sphi 0, %s143
    %s158 = sphi 0, %s144
    %s162 = sphi 0, %s162
    %s164 = sphi 0, %s162
    %s165 = sphi 0, %s164
    %s179 = sphi 0, %s165
    %s183 = sphi 0, %s183
    %s185 = sphi 0, %s183
    %s186 = sphi 0, %s185
    %s200 = sphi 0, %s186
    %s204 = sphi 0, %s204
    %s206 = sphi 0, %s204
    %s207 = sphi 0, %s206
    %s221 = sphi 0, %s207
    %s225 = sphi 0, %s225
    %s227 = sphi 0, %s225
    %s228 = sphi 0, %s227
    %s242 = sphi 0, %s228
    %s246 = sphi 0, %s246
    %s248 = sphi 0, %s246
    %s249 = sphi 0, %s248
    %s263 = sphi 0, %s249
    %s267 = sphi 0, %s267
    %s269 = sphi 0, %s267
    %s270 = sphi 0, %s269
    %s284 = sphi 0, %s270
    %s290 = sphi 0, %s292
    %s293 = sphi 0, %s290
    %s294 = sphi 0, %s293
    %s310 = sphi 0, %s294
  $region4: #{_lambda_.14} parent=0 // loop_header_branch
    %21 = sbr.rel (%p19) target = $region8
  $region5: #{_lambda_.14} parent=0 // loop_body
    %s23 = ssub.s32 %s18, 1
    %s24 = ssub.s32 %s18, 2
    %s25 = sadd.s32 %s18, 1
    %s26 = ssub.s32 %s18, %s25
    %p27 = scmp.eq.s32.totalorder %s26, 0
    %s29 = sadd.s32 %s28, 1
    %s30 = scalar_select %p27, %s28, %s29
    %p33 = pneg %p27
    %p34 = scmp.eq.s32.totalorder %s18, 1
    %p35 = por %p33, %p34
    %p36 = scmp.ne.s32.totalorder %s28, %s31
    %p37 = scmp.eq.s32.totalorder %s18, 0
    %p38 = por %p36, %p37
    %p39 = scmp.ne.s32.totalorder %s28, %s31
    %p40 = scmp.eq.s32.totalorder %s23, 1
    %p41 = por %p39, %p40
    %p42 = scmp.ne.s32.totalorder %s31, %s32
    %p43 = scmp.eq.s32.totalorder %s23, 0
    %p44 = por %p42, %p43
    %p45 = scmp.ne.s32.totalorder %s31, %s32
    %p46 = scmp.eq.s32.totalorder %s24, 1
    %p47 = por %p45, %p46
    %p49 = scmp.ne.s32.totalorder %s32, %s48
    %p50 = scmp.eq.s32.totalorder %s24, 0
    %p51 = por %p49, %p50
    %s52 = ssub.s32 %s18, %s25
    %p53 = scmp.eq.s32.totalorder %s52, 0
    %s55 = sadd.s32 %s54, 1
    %s56 = scalar_select %p53, %s54, %s55
    %p59 = pneg %p53
    %p60 = scmp.eq.s32.totalorder %s18, 1
    %p61 = por %p59, %p60
    %p62 = scmp.ne.s32.totalorder %s54, %s57
    %p63 = scmp.eq.s32.totalorder %s18, 0
    %p64 = por %p62, %p63
    %p65 = scmp.ne.s32.totalorder %s54, %s57
    %p66 = scmp.eq.s32.totalorder %s23, 1
    %p67 = por %p65, %p66
    %p68 = scmp.ne.s32.totalorder %s57, %s58
    %p69 = scmp.eq.s32.totalorder %s23, 0
    %p70 = por %p68, %p69
    %p71 = scmp.ne.s32.totalorder %s57, %s58
    %p72 = scmp.eq.s32.totalorder %s24, 1
    %p73 = por %p71, %p72
    %p75 = scmp.ne.s32.totalorder %s58, %s74
    %p76 = scmp.eq.s32.totalorder %s24, 0
    %p77 = por %p75, %p76
    %s79 = sadd.s32 %s78, 1
    %p82 = scmp.eq.s32.totalorder %s18, 1
    %p83 = scmp.ne.s32.totalorder %s78, %s80
    %p84 = scmp.eq.s32.totalorder %s18, 0
    %p85 = por %p83, %p84
    %p86 = scmp.ne.s32.totalorder %s78, %s80
    %p87 = scmp.eq.s32.totalorder %s23, 1
    %p88 = por %p86, %p87
    %p89 = scmp.ne.s32.totalorder %s80, %s81
    %p90 = scmp.eq.s32.totalorder %s23, 0
    %p91 = por %p89, %p90
    %p92 = scmp.ne.s32.totalorder %s80, %s81
    %p93 = scmp.eq.s32.totalorder %s24, 1
    %p94 = por %p92, %p93
    %p96 = scmp.ne.s32.totalorder %s81, %s95
    %p97 = scmp.eq.s32.totalorder %s24, 0
    %p98 = por %p96, %p97
    %s100 = sadd.s32 %s99, 1
    %p103 = scmp.eq.s32.totalorder %s18, 1
    %p104 = scmp.ne.s32.totalorder %s99, %s101
    %p105 = scmp.eq.s32.totalorder %s18, 0
    %p106 = por %p104, %p105
    %p107 = scmp.ne.s32.totalorder %s99, %s101
    %p108 = scmp.eq.s32.totalorder %s23, 1
    %p109 = por %p107, %p108
    %p110 = scmp.ne.s32.totalorder %s101, %s102
    %p111 = scmp.eq.s32.totalorder %s23, 0
    %p112 = por %p110, %p111
    %p113 = scmp.ne.s32.totalorder %s101, %s102
    %p114 = scmp.eq.s32.totalorder %s24, 1
    %p115 = por %p113, %p114
    %p117 = scmp.ne.s32.totalorder %s102, %s116
    %p118 = scmp.eq.s32.totalorder %s24, 0
    %p119 = por %p117, %p118
    %s121 = sadd.s32 %s120, 1
    %p124 = scmp.eq.s32.totalorder %s18, 1
    %p125 = scmp.ne.s32.totalorder %s120, %s122
    %p126 = scmp.eq.s32.totalorder %s18, 0
    %p127 = por %p125, %p126
    %p128 = scmp.ne.s32.totalorder %s120, %s122
    %p129 = scmp.eq.s32.totalorder %s23, 1
    %p130 = por %p128, %p129
    %p131 = scmp.ne.s32.totalorder %s122, %s123
    %p132 = scmp.eq.s32.totalorder %s23, 0
    %p133 = por %p131, %p132
    %p134 = scmp.ne.s32.totalorder %s122, %s123
    %p135 = scmp.eq.s32.totalorder %s24, 1
    %p136 = por %p134, %p135
    %p138 = scmp.ne.s32.totalorder %s123, %s137
    %p139 = scmp.eq.s32.totalorder %s24, 0
    %p140 = por %p138, %p139
    %s142 = sadd.s32 %s141, 1
    %p145 = scmp.eq.s32.totalorder %s18, 1
    %p146 = scmp.ne.s32.totalorder %s141, %s143
    %p147 = scmp.eq.s32.totalorder %s18, 0
    %p148 = por %p146, %p147
    %p149 = scmp.ne.s32.totalorder %s141, %s143
    %p150 = scmp.eq.s32.totalorder %s23, 1
    %p151 = por %p149, %p150
    %p152 = scmp.ne.s32.totalorder %s143, %s144
    %p153 = scmp.eq.s32.totalorder %s23, 0
    %p154 = por %p152, %p153
    %p155 = scmp.ne.s32.totalorder %s143, %s144
    %p156 = scmp.eq.s32.totalorder %s24, 1
    %p157 = por %p155, %p156
    %p159 = scmp.ne.s32.totalorder %s144, %s158
    %p160 = scmp.eq.s32.totalorder %s24, 0
    %p161 = por %p159, %p160
    %s163 = sadd.s32 %s162, 1
    %p166 = scmp.eq.s32.totalorder %s18, 1
    %p167 = scmp.ne.s32.totalorder %s162, %s164
    %p168 = scmp.eq.s32.totalorder %s18, 0
    %p169 = por %p167, %p168
    %p170 = scmp.ne.s32.totalorder %s162, %s164
    %p171 = scmp.eq.s32.totalorder %s23, 1
    %p172 = por %p170, %p171
    %p173 = scmp.ne.s32.totalorder %s164, %s165
    %p174 = scmp.eq.s32.totalorder %s23, 0
    %p175 = por %p173, %p174
    %p176 = scmp.ne.s32.totalorder %s164, %s165
    %p177 = scmp.eq.s32.totalorder %s24, 1
    %p178 = por %p176, %p177
    %p180 = scmp.ne.s32.totalorder %s165, %s179
    %p181 = scmp.eq.s32.totalorder %s24, 0
    %p182 = por %p180, %p181
    %s184 = sadd.s32 %s183, 1
    %p187 = scmp.eq.s32.totalorder %s18, 1
    %p188 = scmp.ne.s32.totalorder %s183, %s185
    %p189 = scmp.eq.s32.totalorder %s18, 0
    %p190 = por %p188, %p189
    %p191 = scmp.ne.s32.totalorder %s183, %s185
    %p192 = scmp.eq.s32.totalorder %s23, 1
    %p193 = por %p191, %p192
    %p194 = scmp.ne.s32.totalorder %s185, %s186
    %p195 = scmp.eq.s32.totalorder %s23, 0
    %p196 = por %p194, %p195
    %p197 = scmp.ne.s32.totalorder %s185, %s186
    %p198 = scmp.eq.s32.totalorder %s24, 1
    %p199 = por %p197, %p198
    %p201 = scmp.ne.s32.totalorder %s186, %s200
    %p202 = scmp.eq.s32.totalorder %s24, 0
    %p203 = por %p201, %p202
    %s205 = sadd.s32 %s204, 1
    %p208 = scmp.eq.s32.totalorder %s18, 1
    %p209 = scmp.ne.s32.totalorder %s204, %s206
    %p210 = scmp.eq.s32.totalorder %s18, 0
    %p211 = por %p209, %p210
    %p212 = scmp.ne.s32.totalorder %s204, %s206
    %p213 = scmp.eq.s32.totalorder %s23, 1
    %p214 = por %p212, %p213
    %p215 = scmp.ne.s32.totalorder %s206, %s207
    %p216 = scmp.eq.s32.totalorder %s23, 0
    %p217 = por %p215, %p216
    %p218 = scmp.ne.s32.totalorder %s206, %s207
    %p219 = scmp.eq.s32.totalorder %s24, 1
    %p220 = por %p218, %p219
    %p222 = scmp.ne.s32.totalorder %s207, %s221
    %p223 = scmp.eq.s32.totalorder %s24, 0
    %p224 = por %p222, %p223
    %s226 = sadd.s32 %s225, 1
    %p229 = scmp.eq.s32.totalorder %s18, 1
    %p230 = scmp.ne.s32.totalorder %s225, %s227
    %p231 = scmp.eq.s32.totalorder %s18, 0
    %p232 = por %p230, %p231
    %p233 = scmp.ne.s32.totalorder %s225, %s227
    %p234 = scmp.eq.s32.totalorder %s23, 1
    %p235 = por %p233, %p234
    %p236 = scmp.ne.s32.totalorder %s227, %s228
    %p237 = scmp.eq.s32.totalorder %s23, 0
    %p238 = por %p236, %p237
    %p239 = scmp.ne.s32.totalorder %s227, %s228
    %p240 = scmp.eq.s32.totalorder %s24, 1
    %p241 = por %p239, %p240
    %p243 = scmp.ne.s32.totalorder %s228, %s242
    %p244 = scmp.eq.s32.totalorder %s24, 0
    %p245 = por %p243, %p244
    %s247 = sadd.s32 %s246, 1
    %p250 = scmp.eq.s32.totalorder %s18, 1
    %p251 = scmp.ne.s32.totalorder %s246, %s248
    %p252 = scmp.eq.s32.totalorder %s18, 0
    %p253 = por %p251, %p252
    %p254 = scmp.ne.s32.totalorder %s246, %s248
    %p255 = scmp.eq.s32.totalorder %s23, 1
    %p256 = por %p254, %p255
    %p257 = scmp.ne.s32.totalorder %s248, %s249
    %p258 = scmp.eq.s32.totalorder %s23, 0
    %p259 = por %p257, %p258
    %p260 = scmp.ne.s32.totalorder %s248, %s249
    %p261 = scmp.eq.s32.totalorder %s24, 1
    %p262 = por %p260, %p261
    %p264 = scmp.ne.s32.totalorder %s249, %s263
    %p265 = scmp.eq.s32.totalorder %s24, 0
    %p266 = por %p264, %p265
    %s268 = sadd.s32 %s267, 1
    %p271 = scmp.eq.s32.totalorder %s18, 1
    %p272 = scmp.ne.s32.totalorder %s267, %s269
    %p273 = scmp.eq.s32.totalorder %s18, 0
    %p274 = por %p272, %p273
    %p275 = scmp.ne.s32.totalorder %s267, %s269
    %p276 = scmp.eq.s32.totalorder %s23, 1
    %p277 = por %p275, %p276
    %p278 = scmp.ne.s32.totalorder %s269, %s270
    %p279 = scmp.eq.s32.totalorder %s23, 0
    %p280 = por %p278, %p279
    %p281 = scmp.ne.s32.totalorder %s269, %s270
    %p282 = scmp.eq.s32.totalorder %s24, 1
    %p283 = por %p281, %p282
    %p285 = scmp.ne.s32.totalorder %s270, %s284
    %p286 = scmp.eq.s32.totalorder %s24, 0
    %p287 = por %p285, %p286
    %s288 = ssub.s32 %s18, %s25
    %p289 = scmp.eq.s32.totalorder %s288, 0
    %s291 = sadd.s32 %s290, 1
    %s292 = scalar_select %p289, %s290, %s291
    %p295 = pneg %p289
    %p296 = scmp.eq.s32.totalorder %s18, 1
    %p297 = por %p295, %p296
    %p298 = scmp.ne.s32.totalorder %s290, %s293
    %p299 = scmp.eq.s32.totalorder %s18, 0
    %p300 = por %p298, %p299
    %p301 = scmp.ne.s32.totalorder %s290, %s293
    %p302 = scmp.eq.s32.totalorder %s23, 1
    %p303 = por %p301, %p302
    %p304 = scmp.ne.s32.totalorder %s293, %s294
    %p305 = scmp.eq.s32.totalorder %s23, 0
    %p306 = por %p304, %p305
    %p307 = scmp.ne.s32.totalorder %s293, %s294
    %p308 = scmp.eq.s32.totalorder %s24, 1
    %p309 = por %p307, %p308
    %p311 = scmp.ne.s32.totalorder %s294, %s310
    %p312 = scmp.eq.s32.totalorder %s24, 0
    %p313 = por %p311, %p312
    %p314 = scmp.le.s32.totalorder 1, %s18
    %p315 = scmp.lt.s32.totalorder %s18, 3
    %p316 = pnand %p314, %p315
    %p317 = pneg %p316
    // Predicated region
    $region9: #{_lambda_.14} parent=5 // pred_check
      _
    $region10: #{_lambda_.14} parent=5 // pred_check_branch
      %319 = sbr.rel (%p316) target = $region12
    $region11: #{_lambda_.14} parent=5 // pred_region
      %s320 = ssub.s32 %s18, 1
      // Predicated region
      $region13: #{_lambda_.14} parent=11 // pred_check
        %p321 = pneg %p91
      $region14: #{_lambda_.14} parent=11 // pred_check_branch
        %323 = sbr.rel (%p321) target = $region16
      $region15: #{_lambda_.14} parent=11 // pred_region
        _
      $region16: #{_lambda_.14} parent=11 // pred_fallthru
        _
      // Predicated region
      $region17: #{_lambda_.14} parent=11 // pred_check
        %p324 = pneg %p112
      $region18: #{_lambda_.14} parent=11 // pred_check_branch
        %326 = sbr.rel (%p324) target = $region20
      $region19: #{_lambda_.14} parent=11 // pred_region
        _
      $region20: #{_lambda_.14} parent=11 // pred_fallthru
        _
      // Predicated region
      $region21: #{_lambda_.14} parent=11 // pred_check
        %p327 = pneg %p133
      $region22: #{_lambda_.14} parent=11 // pred_check_branch
        %329 = sbr.rel (%p327) target = $region24
      $region23: #{_lambda_.14} parent=11 // pred_region
        _
      $region24: #{_lambda_.14} parent=11 // pred_fallthru
        _
      // Predicated region
      $region25: #{_lambda_.14} parent=11 // pred_check
        %p330 = pneg %p154
      $region26: #{_lambda_.14} parent=11 // pred_check_branch
        %332 = sbr.rel (%p330) target = $region28
      $region27: #{_lambda_.14} parent=11 // pred_region
        _
      $region28: #{_lambda_.14} parent=11 // pred_fallthru
        _
      // Predicated region
      $region29: #{_lambda_.14} parent=11 // pred_check
        %p333 = pneg %p175
      $region30: #{_lambda_.14} parent=11 // pred_check_branch
        %335 = sbr.rel (%p333) target = $region32
      $region31: #{_lambda_.14} parent=11 // pred_region
        _
      $region32: #{_lambda_.14} parent=11 // pred_fallthru
        _
      // Predicated region
      $region33: #{_lambda_.14} parent=11 // pred_check
        %p336 = pneg %p196
      $region34: #{_lambda_.14} parent=11 // pred_check_branch
        %338 = sbr.rel (%p336) target = $region36
      $region35: #{_lambda_.14} parent=11 // pred_region
        _
      $region36: #{_lambda_.14} parent=11 // pred_fallthru
        _
      // Predicated region
      $region37: #{_lambda_.14} parent=11 // pred_check
        %p339 = pneg %p217
      $region38: #{_lambda_.14} parent=11 // pred_check_branch
        %341 = sbr.rel (%p339) target = $region40
      $region39: #{_lambda_.14} parent=11 // pred_region
        _
      $region40: #{_lambda_.14} parent=11 // pred_fallthru
        _
      // Predicated region
      $region41: #{_lambda_.14} parent=11 // pred_check
        %p342 = pneg %p238
      $region42: #{_lambda_.14} parent=11 // pred_check_branch
        %344 = sbr.rel (%p342) target = $region44
      $region43: #{_lambda_.14} parent=11 // pred_region
        _
      $region44: #{_lambda_.14} parent=11 // pred_fallthru
        _
      // Predicated region
      $region45: #{_lambda_.14} parent=11 // pred_check
        %p345 = pneg %p259
      $region46: #{_lambda_.14} parent=11 // pred_check_branch
        %347 = sbr.rel (%p345) target = $region48
      $region47: #{_lambda_.14} parent=11 // pred_region
        _
      $region48: #{_lambda_.14} parent=11 // pred_fallthru
        _
      // Predicated region
      $region49: #{_lambda_.14} parent=11 // pred_check
        %p348 = pneg %p280
      $region50: #{_lambda_.14} parent=11 // pred_check_branch
        %350 = sbr.rel (%p348) target = $region52
      $region51: #{_lambda_.14} parent=11 // pred_region
        _
      $region52: #{_lambda_.14} parent=11 // pred_fallthru
        _
    $region12: #{_lambda_.14} parent=5 // pred_fallthru
      _
    %p351 = scmp.lt.s32.totalorder %s18, 2
    // Predicated region
    $region53: #{_lambda_.14} parent=5 // pred_check
      %p352 = pneg %p351
    $region54: #{_lambda_.14} parent=5 // pred_check_branch
      %354 = sbr.rel (%p352) target = $region56
    $region55: #{_lambda_.14} parent=5 // pred_region
      // Predicated region
      $region57: #{_lambda_.14} parent=55 // pred_check
        %p355 = pneg %p38
      $region58: #{_lambda_.14} parent=55 // pred_check_branch
        %357 = sbr.rel (%p355) target = $region60
      $region59: #{_lambda_.14} parent=55 // pred_region
        %p358 = scmp.lt.s32.totalorder %s18, 1
        %s359 = scalar_select %p358, %s18, 1
        %s360 = smul.addr %s359, 2
        %s361 = smul.addr %s360, 8
        %s362 = scalar_lea.vmem %s0, %s361
      $region60: #{_lambda_.14} parent=55 // pred_fallthru
        _
      // Predicated region
      $region61: #{_lambda_.14} parent=55 // pred_check
        %p363 = pneg %p64
      $region62: #{_lambda_.14} parent=55 // pred_check_branch
        %365 = sbr.rel (%p363) target = $region64
      $region63: #{_lambda_.14} parent=55 // pred_region
        %p366 = scmp.lt.s32.totalorder %s18, 1
        %s367 = scalar_select %p366, %s18, 1
        %s368 = smul.addr %s367, 2
        %s369 = smul.addr %s368, 8
        %s370 = scalar_lea.vmem %s1, %s369
      $region64: #{_lambda_.14} parent=55 // pred_fallthru
        _
    $region56: #{_lambda_.14} parent=5 // pred_fallthru
      _
    %p371 = scmp.le.s32.totalorder 1, %s18
    %p372 = scmp.lt.s32.totalorder %s18, 3
    %p373 = pnand %p371, %p372
    %p374 = pneg %p373
    // Predicated region
    $region65: #{_lambda_.14} parent=5 // pred_check
      _
    $region66: #{_lambda_.14} parent=5 // pred_check_branch
      %376 = sbr.rel (%p373) target = $region68
    $region67: #{_lambda_.14} parent=5 // pred_region
      %s377 = ssub.s32 %s18, 1
      %p378 = scmp.lt.s32.totalorder %s23, 1
      %s379 = scalar_select %p378, %s23, 1
      %s380 = smul.addr %s379, 2
      %s381 = smul.addr %s380, 8
      %s382 = scalar_lea.vmem %s0, %s381
      %p383 = pneg %p44
      %p384 = pneg %p41
      %p385 = scmp.lt.s32.totalorder %s23, 1
      %s386 = scalar_select %p385, %s23, 1
      %s387 = smul.addr %s386, 2
      %s388 = smul.addr %s387, 8
      %s389 = scalar_lea.vmem %s1, %s388
      %p390 = pneg %p70
      %p391 = pneg %p67
      %p392 = pneg %p91
      %p393 = pneg %p88
      %p394 = pneg %p112
      %p395 = pneg %p109
      %p396 = pneg %p133
      %p397 = pneg %p130
      %p398 = pneg %p154
      %p399 = pneg %p151
      %p400 = pneg %p175
      %p401 = pneg %p172
      %p402 = pneg %p196
      %p403 = pneg %p193
      %p404 = pneg %p217
      %p405 = pneg %p214
      %p406 = pneg %p238
      %p407 = pneg %p235
      %p408 = pneg %p259
      %p409 = pneg %p256
      %p410 = pneg %p280
      %p411 = pneg %p277
      %p412 = pneg %p306
      %p413 = pneg %p303
      %p414 = scmp.lt.s32.totalorder %s23, 1
      %s415 = scalar_select %p414, %s23, 1
      %s416 = smul.addr %s415, 2
      %s417 = smul.addr %s416, 8
      %s418 = scalar_lea.vmem %s12, %s417
      %p419 = scmp.lt.s32.totalorder %s23, 1
      %s420 = scalar_select %p419, %s23, 1
      %s421 = smul.addr %s420, 2
      %s422 = smul.addr %s421, 8
      %s423 = scalar_lea.vmem %s0, %s422
      %p424 = scmp.lt.s32.totalorder %s23, 1
      %s425 = scalar_select %p424, %s23, 1
      %s426 = smul.addr %s425, 2
      %s427 = smul.addr %s426, 8
      %s428 = scalar_lea.vmem %s1, %s427
      %p429 = scmp.lt.s32.totalorder %s23, 1
      %s430 = scalar_select %p429, %s23, 1
      %s431 = smul.addr %s430, 2
      %s432 = smul.addr %s431, 8
      %s433 = scalar_lea.vmem %s12, %s432
      %v435 = vld [vmem:[%s423] sm:$0xff]
      %v436 = vld [vmem:[%s423 + $0x8] sm:$0xff]
      %v437 = vld [vmem:[%s2] sm:$0x1]
      %v438 = vld [vmem:[%s3] sm:$0x1]
      %vm439 = vcmask 261120
      %v440 = vsel %vm439, %v435, 0.0
      %441 = vadd.xlane.f32.xlu0 %v440
      %v442 = vpop.xlane.xlu0 %441
      %v443 = vsel %vm439, %v436, 0.0
      %444 = vadd.xlane.f32.xlu0 %v443
      %v445 = vpop.xlane.xlu0 %444
      %v446 = vrcp.pop 32.0
      %v447 = vmul.f32 %v442, %v446
      %v448 = vmul.f32 %v445, %v446
      %v449 = vsub.f32 %v435, %v447
      %v450 = vsub.f32 %v436, %v448
      %v451 = vmul.f32 %v449, %v449
      %v452 = vmul.f32 %v450, %v450
      %v453 = vsel %vm439, %v451, 0.0
      %454 = vadd.xlane.f32.xlu0 %v453
      %v455 = vpop.xlane.xlu0 %454
      %v456 = vsel %vm439, %v452, 0.0
      %457 = vadd.xlane.f32.xlu0 %v456
      %v458 = vpop.xlane.xlu0 %457
      %v459 = vmul.f32 %v455, %v446
      %v460 = vmul.f32 %v458, %v446
      %v461 = vadd.f32 %v459, 1e-05
      %v462 = vadd.f32 %v460, 1e-05
      %v463 = vrsqrt.pop %v461
      %v464 = vrsqrt.pop %v462
      %v465 = vmul.f32 %v449, %v463
      %v466 = vmul.f32 %v450, %v464
      %v468 = vlaneseq
      %v469 = vshrl.u32 %v468, 7
      %v470 = vsub.s32 0, %v469
      %v471 = vrot.slane %v437, %v470
      %v473 = vmul.f32 %v465, %v471
      %v474 = vmul.f32 %v466, %v471
      %v476 = vlaneseq
      %v477 = vshrl.u32 %v476, 7
      %v478 = vsub.s32 0, %v477
      %v479 = vrot.slane %v438, %v478
      %v481 = vadd.f32 %v473, %v479
      %v482 = vadd.f32 %v474, %v479
      %v483 = vld [vmem:[%s428] sm:$0xff]
      %v484 = vld [vmem:[%s428 + $0x8] sm:$0xff]
      %v485 = vpack.c.bf16 %v482, %v481
      %v486 = vld [vmem:[%s4] sm:$0xf]
      %v487 = vld [vmem:[%s4 + $0x4] sm:$0xf]
      %v488 = vld [vmem:[%s4 + $0x8] sm:$0xf]
      %v489 = vld [vmem:[%s4 + $0xc] sm:$0xf]
      %v490 = vld [vmem:[%s5] sm:$0x1]
      %v492 = vlaneseq
      %v493 = vshrl.u32 %v492, 7
      %v494 = vsub.s32 0, %v493
      %v495 = vrot.slane %v490, %v494
      %v501 = vunpack.c.l.b16 %v486
      %v502 = vunpack.c.l.b16 %v487
      %v503 = vunpack.c.l.b16 %v488
      %v504 = vunpack.c.l.b16 %v489
      %v505 = vpack.c.b16 %v502, %v501
      %v506 = vpack.c.b16 %v504, %v503
      %v510 = vsel %vm439, %v485, 0
      %512 = vmatprep.subr.bf16.mxu0 0
      %513 = vmatpush1.bf16.msra.mxu0 0
      %514 = vmatprep.subr.bf16.mxu0 0
      %515 = vmatpush1.bf16.msra.mxu0 0
      %516 = vmatprep.subr.bf16.mxu0 0
      %517 = vmatpush1.bf16.msra.mxu0 0
      %518 = vmatprep.subr.bf16.mxu0 0
      %519 = vmatpush1.bf16.msra.mxu0 0
      %520 = vmatprep.subr.bf16.mxu0 0
      %521 = vmatpush1.bf16.msra.mxu0 0
      %522 = vmatprep.subr.bf16.mxu0 0
      %523 = vmatpush1.bf16.msra.mxu0 0
      %524 = vmatprep.subr.bf16.mxu0 0
      %525 = vmatpush1.bf16.msra.mxu0 %v506
      %526 = vmatprep.subr.bf16.mxu0 0
      %527 = vmatpush1.bf16.msra.mxu0 %v505
      %528 = vmatprep.subr.bf16.mxu0 0
      %529 = vmatpush2.bf16.msra.mxu0 0
      %530 = vmatprep.subr.bf16.mxu0 0
      %531 = vmatpush2.bf16.msra.mxu0 0
      %532 = vmatprep.subr.bf16.mxu0 0
      %533 = vmatpush2.bf16.msra.mxu0 0
      %534 = vmatprep.subr.bf16.mxu0 0
      %535 = vmatpush2.bf16.msra.mxu0 0
      %536 = vmatprep.subr.bf16.mxu0 0
      %537 = vmatpush2.bf16.msra.mxu0 0
      %538 = vmatprep.subr.bf16.mxu0 0
      %539 = vmatpush2.bf16.msra.mxu0 0
      %540 = vmatprep.subr.bf16.mxu0 0
      %541 = vmatpush2.bf16.msra.mxu0 0
      %542 = vmatprep.subr.bf16.mxu0 0
      %543 = vmatpush2.bf16.msra.mxu0 0
      %544 = vmatprep.mubr.bf16.mxu0 0
      %545 = vmatmul.mubr.bf16.gmra.mxu0 %v510
      %v546 = vpop.f32.mrf.mxu0
      %v547 = vadd.f32 %v495, %v546
      %v548 = vpop.f32.mrf.mxu0
      %v549 = vpop.f32.mrf.mxu0
      %v550 = vadd.f32 %v495, %v549
      %v551 = vpop.f32.mrf.mxu0
      %552 = vdwg.mxu0
      %v553 = vld [vmem:[%s6] sm:$0xf]
      %v554 = vld [vmem:[%s6 + $0x4] sm:$0xf]
      %v555 = vld [vmem:[%s6 + $0x8] sm:$0xf]
      %v556 = vld [vmem:[%s6 + $0xc] sm:$0xf]
      %v557 = vld [vmem:[%s7] sm:$0x1]
      %v559 = vlaneseq
      %v560 = vshrl.u32 %v559, 7
      %v561 = vsub.s32 0, %v560
      %v562 = vrot.slane %v557, %v561
      %v568 = vunpack.c.l.b16 %v553
      %v569 = vunpack.c.l.b16 %v554
      %v570 = vunpack.c.l.b16 %v555
      %v571 = vunpack.c.l.b16 %v556
      %v572 = vpack.c.b16 %v569, %v568
      %v573 = vpack.c.b16 %v571, %v570
      %576 = vmatprep.subr.bf16.mxu0 0
      %577 = vmatpush1.bf16.msra.mxu0 0
      %578 = vmatprep.subr.bf16.mxu0 0
      %579 = vmatpush1.bf16.msra.mxu0 0
      %580 = vmatprep.subr.bf16.mxu0 0
      %581 = vmatpush1.bf16.msra.mxu0 0
      %582 = vmatprep.subr.bf16.mxu0 0
      %583 = vmatpush1.bf16.msra.mxu0 0
      %584 = vmatprep.subr.bf16.mxu0 0
      %585 = vmatpush1.bf16.msra.mxu0 0
      %586 = vmatprep.subr.bf16.mxu0 0
      %587 = vmatpush1.bf16.msra.mxu0 0
      %588 = vmatprep.subr.bf16.mxu0 0
      %589 = vmatpush1.bf16.msra.mxu0 %v573
      %590 = vmatprep.subr.bf16.mxu0 0
      %591 = vmatpush1.bf16.msra.mxu0 %v572
      %592 = vmatprep.subr.bf16.mxu0 0
      %593 = vmatpush2.bf16.msra.mxu0 0
      %594 = vmatprep.subr.bf16.mxu0 0
      %595 = vmatpush2.bf16.msra.mxu0 0
      %596 = vmatprep.subr.bf16.mxu0 0
      %597 = vmatpush2.bf16.msra.mxu0 0
      %598 = vmatprep.subr.bf16.mxu0 0
      %599 = vmatpush2.bf16.msra.mxu0 0
      %600 = vmatprep.subr.bf16.mxu0 0
      %601 = vmatpush2.bf16.msra.mxu0 0
      %602 = vmatprep.subr.bf16.mxu0 0
      %603 = vmatpush2.bf16.msra.mxu0 0
      %604 = vmatprep.subr.bf16.mxu0 0
      %605 = vmatpush2.bf16.msra.mxu0 0
      %606 = vmatprep.subr.bf16.mxu0 0
      %607 = vmatpush2.bf16.msra.mxu0 0
      %608 = vmatprep.mubr.bf16.mxu0 0
      %609 = vmatmul.mubr.bf16.gmra.mxu0 %v510
      %v610 = vpop.f32.mrf.mxu0
      %v611 = vadd.f32 %v562, %v610
      %v612 = vpop.f32.mrf.mxu0
      %v613 = vpop.f32.mrf.mxu0
      %v614 = vadd.f32 %v562, %v613
      %v615 = vpop.f32.mrf.mxu0
      %616 = vdwg.mxu0
      %v617 = vld [vmem:[%s8] sm:$0xf]
      %v618 = vld [vmem:[%s8 + $0x4] sm:$0xf]
      %v619 = vld [vmem:[%s8 + $0x8] sm:$0xf]
      %v620 = vld [vmem:[%s8 + $0xc] sm:$0xf]
      %v621 = vld [vmem:[%s9] sm:$0x1]
      %v623 = vlaneseq
      %v624 = vshrl.u32 %v623, 7
      %v625 = vsub.s32 0, %v624
      %v626 = vrot.slane %v621, %v625
      %v632 = vunpack.c.l.b16 %v617
      %v633 = vunpack.c.l.b16 %v618
      %v634 = vunpack.c.l.b16 %v619
      %v635 = vunpack.c.l.b16 %v620
      %v636 = vpack.c.b16 %v633, %v632
      %v637 = vpack.c.b16 %v635, %v634
      %640 = vmatprep.subr.bf16.mxu0 0
      %641 = vmatpush1.bf16.msra.mxu0 0
      %642 = vmatprep.subr.bf16.mxu0 0
      %643 = vmatpush1.bf16.msra.mxu0 0
      %644 = vmatprep.subr.bf16.mxu0 0
      %645 = vmatpush1.bf16.msra.mxu0 0
      %646 = vmatprep.subr.bf16.mxu0 0
      %647 = vmatpush1.bf16.msra.mxu0 0
      %648 = vmatprep.subr.bf16.mxu0 0
      %649 = vmatpush1.bf16.msra.mxu0 0
      %650 = vmatprep.subr.bf16.mxu0 0
      %651 = vmatpush1.bf16.msra.mxu0 0
      %652 = vmatprep.subr.bf16.mxu0 0
      %653 = vmatpush1.bf16.msra.mxu0 %v637
      %654 = vmatprep.subr.bf16.mxu0 0
      %655 = vmatpush1.bf16.msra.mxu0 %v636
      %656 = vmatprep.subr.bf16.mxu0 0
      %657 = vmatpush2.bf16.msra.mxu0 0
      %658 = vmatprep.subr.bf16.mxu0 0
      %659 = vmatpush2.bf16.msra.mxu0 0
      %660 = vmatprep.subr.bf16.mxu0 0
      %661 = vmatpush2.bf16.msra.mxu0 0
      %662 = vmatprep.subr.bf16.mxu0 0
      %663 = vmatpush2.bf16.msra.mxu0 0
      %664 = vmatprep.subr.bf16.mxu0 0
      %665 = vmatpush2.bf16.msra.mxu0 0
      %666 = vmatprep.subr.bf16.mxu0 0
      %667 = vmatpush2.bf16.msra.mxu0 0
      %668 = vmatprep.subr.bf16.mxu0 0
      %669 = vmatpush2.bf16.msra.mxu0 0
      %670 = vmatprep.subr.bf16.mxu0 0
      %671 = vmatpush2.bf16.msra.mxu0 0
      %672 = vmatprep.mubr.bf16.mxu0 0
      %673 = vmatmul.mubr.bf16.gmra.mxu0 %v510
      %v674 = vpop.f32.mrf.mxu0
      %v675 = vadd.f32 %v626, %v674
      %v676 = vpop.f32.mrf.mxu0
      %v677 = vpop.f32.mrf.mxu0
      %v678 = vadd.f32 %v626, %v677
      %v679 = vpop.f32.mrf.mxu0
      %680 = vdwg.mxu0
      %v681 = vpack.c.bf16 %v550, %v547
      %v682 = vpack.c.bf16 %v614, %v611
      %vm683 = vcmask 64512
      %v685 = vsel %vm683, %v681, 0
      %v688 = vsel %vm683, %v682, 0
      %690 = vmatprep.subr.bf16.mxu0 0
      %691 = vmatpush1.bf16.xpose.msra.mxu0 0
      %692 = vmatprep.subr.bf16.mxu0 0
      %693 = vmatpush1.bf16.xpose.msra.mxu0 0
      %694 = vmatprep.subr.bf16.mxu0 0
      %695 = vmatpush1.bf16.xpose.msra.mxu0 0
      %696 = vmatprep.subr.bf16.mxu0 0
      %697 = vmatpush1.bf16.xpose.msra.mxu0 0
      %698 = vmatprep.subr.bf16.mxu0 0
      %699 = vmatpush1.bf16.xpose.msra.mxu0 0
      %700 = vmatprep.subr.bf16.mxu0 0
      %701 = vmatpush1.bf16.xpose.msra.mxu0 0
      %702 = vmatprep.subr.bf16.mxu0 0
      %703 = vmatpush1.bf16.xpose.msra.mxu0 0
      %704 = vmatprep.subr.bf16.mxu0 0
      %705 = vmatpush1.bf16.xpose.msra.mxu0 %v688
      %706 = vmatprep.subr.bf16.mxu0 0
      %707 = vmatpush2.bf16.xpose.msra.mxu0 0
      %708 = vmatprep.subr.bf16.mxu0 0
      %709 = vmatpush2.bf16.xpose.msra.mxu0 0
      %710 = vmatprep.subr.bf16.mxu0 0
      %711 = vmatpush2.bf16.xpose.msra.mxu0 0
      %712 = vmatprep.subr.bf16.mxu0 0
      %713 = vmatpush2.bf16.xpose.msra.mxu0 0
      %714 = vmatprep.subr.bf16.mxu0 0
      %715 = vmatpush2.bf16.xpose.msra.mxu0 0
      %716 = vmatprep.subr.bf16.mxu0 0
      %717 = vmatpush2.bf16.xpose.msra.mxu0 0
      %718 = vmatprep.subr.bf16.mxu0 0
      %719 = vmatpush2.bf16.xpose.msra.mxu0 0
      %720 = vmatprep.subr.bf16.mxu0 0
      %721 = vmatpush2.bf16.xpose.msra.mxu0 0
      %722 = vmatprep.mubr.bf16.mxu0 0
      %723 = vmatmul.mubr.bf16.gmra.mxu0 %v685
      %v724 = vpop.f32.mrf.mxu0
      %v725 = vadd.f32 0.0, %v724
      %v726 = vpop.f32.mrf.mxu0
      %v727 = vpop.f32.mrf.mxu0
      %v728 = vadd.f32 0.0, %v727
      %v729 = vpop.f32.mrf.mxu0
      %730 = vdwg.mxu0
      %v731 = vmul.f32 %v725, 0.35355338
      %v732 = vmul.f32 %v728, 0.35355338
      %v733 = vadd.f32 %v731, %v483
      %v734 = vadd.f32 %v732, %v484
      %vm735 = vcmask 130048
      %v736 = vsel %vm735, %v733, -inf
      %737 = vmax.xlane.f32.xlu0 %v736
      %v738 = vpop.xlane.xlu0 %737
      %v739 = vsel %vm735, %v734, -inf
      %740 = vmax.xlane.f32.xlu0 %v739
      %v741 = vpop.xlane.xlu0 %740
      %v742 = vsub.f32 %v733, %v738
      %v743 = vsub.f32 %v734, %v741
      %v744 = vmul.f32 %v742, 1.442695
      %v745 = vpow.pop %v744
      %v746 = vmul.f32 %v743, 1.442695
      %v747 = vpow.pop %v746
      %v748 = vsel %vm735, %v745, 0.0
      %749 = vadd.xlane.f32.xlu0 %v748
      %v750 = vpop.xlane.xlu0 %749
      %v751 = vsel %vm735, %v747, 0.0
      %752 = vadd.xlane.f32.xlu0 %v751
      %v753 = vpop.xlane.xlu0 %752
      %v754 = vrcp.pop %v750
      %v755 = vrcp.pop %v753
      %v756 = vmul.f32 %v745, %v754
      %v757 = vmul.f32 %v747, %v755
      %v758 = vpack.c.bf16 %v757, %v756
      %v759 = vpack.c.bf16 %v678, %v675
      %v761 = vsel %vm735, %v758, 0
      %763 = vmatprep.subr.bf16.mxu0 0
      %764 = vmatpush1.bf16.msra.mxu0 0
      %765 = vmatprep.subr.bf16.mxu0 0
      %766 = vmatpush1.bf16.msra.mxu0 0
      %767 = vmatprep.subr.bf16.mxu0 0
      %768 = vmatpush1.bf16.msra.mxu0 0
      %769 = vmatprep.subr.bf16.mxu0 0
      %770 = vmatpush1.bf16.msra.mxu0 0
      %771 = vmatprep.subr.bf16.mxu0 0
      %772 = vmatpush1.bf16.msra.mxu0 0
      %773 = vmatprep.subr.bf16.mxu0 0
      %774 = vmatpush1.bf16.msra.mxu0 0
      %775 = vmatprep.subr.bf16.mxu0 0
      %776 = vmatpush1.bf16.msra.mxu0 0
      %777 = vmatprep.subr.bf16.mxu0 0
      %778 = vmatpush1.bf16.msra.mxu0 %v759
      %779 = vmatprep.subr.bf16.mxu0 0
      %780 = vmatpush2.bf16.msra.mxu0 0
      %781 = vmatprep.subr.bf16.mxu0 0
      %782 = vmatpush2.bf16.msra.mxu0 0
      %783 = vmatprep.subr.bf16.mxu0 0
      %784 = vmatpush2.bf16.msra.mxu0 0
      %785 = vmatprep.subr.bf16.mxu0 0
      %786 = vmatpush2.bf16.msra.mxu0 0
      %787 = vmatprep.subr.bf16.mxu0 0
      %788 = vmatpush2.bf16.msra.mxu0 0
      %789 = vmatprep.subr.bf16.mxu0 0
      %790 = vmatpush2.bf16.msra.mxu0 0
      %791 = vmatprep.subr.bf16.mxu0 0
      %792 = vmatpush2.bf16.msra.mxu0 0
      %793 = vmatprep.subr.bf16.mxu0 0
      %794 = vmatpush2.bf16.msra.mxu0 0
      %795 = vmatprep.mubr.bf16.mxu0 0
      %796 = vmatmul.mubr.bf16.gmra.mxu0 %v761
      %v797 = vpop.f32.mrf.mxu0
      %v798 = vadd.f32 0.0, %v797
      %v799 = vpop.f32.mrf.mxu0
      %v800 = vpop.f32.mrf.mxu0
      %v801 = vadd.f32 0.0, %v800
      %v802 = vpop.f32.mrf.mxu0
      %803 = vdwg.mxu0
      %v804 = vpack.c.bf16 %v801, %v798
      %v805 = vld [vmem:[%s10] sm:$0xf]
      %s806 = scalar_lea.vmem %s4, 16
      %v807 = vld [vmem:[%s806] sm:$0xf]
      %v808 = vld [vmem:[%s806 + $0x4] sm:$0xf]
      %v809 = vld [vmem:[%s806 + $0x8] sm:$0xf]
      %v810 = vld [vmem:[%s806 + $0xc] sm:$0xf]
      %s811 = scalar_lea.vmem %s5, 1
      %v812 = vld [vmem:[%s811] sm:$0x1]
      %v814 = vlaneseq
      %v815 = vshrl.u32 %v814, 7
      %v816 = vsub.s32 0, %v815
      %v817 = vrot.slane %v812, %v816
      %v823 = vunpack.c.l.b16 %v807
      %v824 = vunpack.c.l.b16 %v808
      %v825 = vunpack.c.l.b16 %v809
      %v826 = vunpack.c.l.b16 %v810
      %v827 = vpack.c.b16 %v824, %v823
      %v828 = vpack.c.b16 %v826, %v825
      %831 = vmatprep.subr.bf16.mxu0 0
      %832 = vmatpush1.bf16.msra.mxu0 0
      %833 = vmatprep.subr.bf16.mxu0 0
      %834 = vmatpush1.bf16.msra.mxu0 0
      %835 = vmatprep.subr.bf16.mxu0 0
      %836 = vmatpush1.bf16.msra.mxu0 0
      %837 = vmatprep.subr.bf16.mxu0 0
      %838 = vmatpush1.bf16.msra.mxu0 0
      %839 = vmatprep.subr.bf16.mxu0 0
      %840 = vmatpush1.bf16.msra.mxu0 0
      %841 = vmatprep.subr.bf16.mxu0 0
      %842 = vmatpush1.bf16.msra.mxu0 0
      %843 = vmatprep.subr.bf16.mxu0 0
      %844 = vmatpush1.bf16.msra.mxu0 %v828
      %845 = vmatprep.subr.bf16.mxu0 0
      %846 = vmatpush1.bf16.msra.mxu0 %v827
      %847 = vmatprep.subr.bf16.mxu0 0
      %848 = vmatpush2.bf16.msra.mxu0 0
      %849 = vmatprep.subr.bf16.mxu0 0
      %850 = vmatpush2.bf16.msra.mxu0 0
      %851 = vmatprep.subr.bf16.mxu0 0
      %852 = vmatpush2.bf16.msra.mxu0 0
      %853 = vmatprep.subr.bf16.mxu0 0
      %854 = vmatpush2.bf16.msra.mxu0 0
      %855 = vmatprep.subr.bf16.mxu0 0
      %856 = vmatpush2.bf16.msra.mxu0 0
      %857 = vmatprep.subr.bf16.mxu0 0
      %858 = vmatpush2.bf16.msra.mxu0 0
      %859 = vmatprep.subr.bf16.mxu0 0
      %860 = vmatpush2.bf16.msra.mxu0 0
      %861 = vmatprep.subr.bf16.mxu0 0
      %862 = vmatpush2.bf16.msra.mxu0 0
      %863 = vmatprep.mubr.bf16.mxu0 0
      %864 = vmatmul.mubr.bf16.gmra.mxu0 %v510
      %v865 = vpop.f32.mrf.mxu0
      %v866 = vadd.f32 %v817, %v865
      %v867 = vpop.f32.mrf.mxu0
      %v868 = vpop.f32.mrf.mxu0
      %v869 = vadd.f32 %v817, %v868
      %v870 = vpop.f32.mrf.mxu0
      %871 = vdwg.mxu0
      %s872 = scalar_lea.vmem %s6, 16
      %v873 = vld [vmem:[%s872] sm:$0xf]
      %v874 = vld [vmem:[%s872 + $0x4] sm:$0xf]
      %v875 = vld [vmem:[%s872 + $0x8] sm:$0xf]
      %v876 = vld [vmem:[%s872 + $0xc] sm:$0xf]
      %s877 = scalar_lea.vmem %s7, 1
      %v878 = vld [vmem:[%s877] sm:$0x1]
      %v880 = vlaneseq
      %v881 = vshrl.u32 %v880, 7
      %v882 = vsub.s32 0, %v881
      %v883 = vrot.slane %v878, %v882
      %v889 = vunpack.c.l.b16 %v873
      %v890 = vunpack.c.l.b16 %v874
      %v891 = vunpack.c.l.b16 %v875
      %v892 = vunpack.c.l.b16 %v876
      %v893 = vpack.c.b16 %v890, %v889
      %v894 = vpack.c.b16 %v892, %v891
      %897 = vmatprep.subr.bf16.mxu0 0
      %898 = vmatpush1.bf16.msra.mxu0 0
      %899 = vmatprep.subr.bf16.mxu0 0
      %900 = vmatpush1.bf16.msra.mxu0 0
      %901 = vmatprep.subr.bf16.mxu0 0
      %902 = vmatpush1.bf16.msra.mxu0 0
      %903 = vmatprep.subr.bf16.mxu0 0
      %904 = vmatpush1.bf16.msra.mxu0 0
      %905 = vmatprep.subr.bf16.mxu0 0
      %906 = vmatpush1.bf16.msra.mxu0 0
      %907 = vmatprep.subr.bf16.mxu0 0
      %908 = vmatpush1.bf16.msra.mxu0 0
      %909 = vmatprep.subr.bf16.mxu0 0
      %910 = vmatpush1.bf16.msra.mxu0 %v894
      %911 = vmatprep.subr.bf16.mxu0 0
      %912 = vmatpush1.bf16.msra.mxu0 %v893
      %913 = vmatprep.subr.bf16.mxu0 0
      %914 = vmatpush2.bf16.msra.mxu0 0
      %915 = vmatprep.subr.bf16.mxu0 0
      %916 = vmatpush2.bf16.msra.mxu0 0
      %917 = vmatprep.subr.bf16.mxu0 0
      %918 = vmatpush2.bf16.msra.mxu0 0
      %919 = vmatprep.subr.bf16.mxu0 0
      %920 = vmatpush2.bf16.msra.mxu0 0
      %921 = vmatprep.subr.bf16.mxu0 0
      %922 = vmatpush2.bf16.msra.mxu0 0
      %923 = vmatprep.subr.bf16.mxu0 0
      %924 = vmatpush2.bf16.msra.mxu0 0
      %925 = vmatprep.subr.bf16.mxu0 0
      %926 = vmatpush2.bf16.msra.mxu0 0
      %927 = vmatprep.subr.bf16.mxu0 0
      %928 = vmatpush2.bf16.msra.mxu0 0
      %929 = vmatprep.mubr.bf16.mxu0 0
      %930 = vmatmul.mubr.bf16.gmra.mxu0 %v510
      %v931 = vpop.f32.mrf.mxu0
      %v932 = vadd.f32 %v883, %v931
      %v933 = vpop.f32.mrf.mxu0
      %v934 = vpop.f32.mrf.mxu0
      %v935 = vadd.f32 %v883, %v934
      %v936 = vpop.f32.mrf.mxu0
      %937 = vdwg.mxu0
      %s938 = scalar_lea.vmem %s8, 16
      %v939 = vld [vmem:[%s938] sm:$0xf]
      %v940 = vld [vmem:[%s938 + $0x4] sm:$0xf]
      %v941 = vld [vmem:[%s938 + $0x8] sm:$0xf]
      %v942 = vld [vmem:[%s938 + $0xc] sm:$0xf]
      %s943 = scalar_lea.vmem %s9, 1
      %v944 = vld [vmem:[%s943] sm:$0x1]
      %v946 = vlaneseq
      %v947 = vshrl.u32 %v946, 7
      %v948 = vsub.s32 0, %v947
      %v949 = vrot.slane %v944, %v948
      %v955 = vunpack.c.l.b16 %v939
      %v956 = vunpack.c.l.b16 %v940
      %v957 = vunpack.c.l.b16 %v941
      %v958 = vunpack.c.l.b16 %v942
      %v959 = vpack.c.b16 %v956, %v955
      %v960 = vpack.c.b16 %v958, %v957
      %963 = vmatprep.subr.bf16.mxu0 0
      %964 = vmatpush1.bf16.msra.mxu0 0
      %965 = vmatprep.subr.bf16.mxu0 0
      %966 = vmatpush1.bf16.msra.mxu0 0
      %967 = vmatprep.subr.bf16.mxu0 0
      %968 = vmatpush1.bf16.msra.mxu0 0
      %969 = vmatprep.subr.bf16.mxu0 0
      %970 = vmatpush1.bf16.msra.mxu0 0
      %971 = vmatprep.subr.bf16.mxu0 0
      %972 = vmatpush1.bf16.msra.mxu0 0
      %973 = vmatprep.subr.bf16.mxu0 0
      %974 = vmatpush1.bf16.msra.mxu0 0
      %975 = vmatprep.subr.bf16.mxu0 0
      %976 = vmatpush1.bf16.msra.mxu0 %v960
      %977 = vmatprep.subr.bf16.mxu0 0
      %978 = vmatpush1.bf16.msra.mxu0 %v959
      %979 = vmatprep.subr.bf16.mxu0 0
      %980 = vmatpush2.bf16.msra.mxu0 0
      %981 = vmatprep.subr.bf16.mxu0 0
      %982 = vmatpush2.bf16.msra.mxu0 0
      %983 = vmatprep.subr.bf16.mxu0 0
      %984 = vmatpush2.bf16.msra.mxu0 0
      %985 = vmatprep.subr.bf16.mxu0 0
      %986 = vmatpush2.bf16.msra.mxu0 0
      %987 = vmatprep.subr.bf16.mxu0 0
      %988 = vmatpush2.bf16.msra.mxu0 0
      %989 = vmatprep.subr.bf16.mxu0 0
      %990 = vmatpush2.bf16.msra.mxu0 0
      %991 = vmatprep.subr.bf16.mxu0 0
      %992 = vmatpush2.bf16.msra.mxu0 0
      %993 = vmatprep.subr.bf16.mxu0 0
      %994 = vmatpush2.bf16.msra.mxu0 0
      %995 = vmatprep.mubr.bf16.mxu0 0
      %996 = vmatmul.mubr.bf16.gmra.mxu0 %v510
      %v997 = vpop.f32.mrf.mxu0
      %v998 = vadd.f32 %v949, %v997
      %v999 = vpop.f32.mrf.mxu0
      %v1000 = vpop.f32.mrf.mxu0
      %v1001 = vadd.f32 %v949, %v1000
      %v1002 = vpop.f32.mrf.mxu0
      %1003 = vdwg.mxu0
      %v1004 = vpack.c.bf16 %v869, %v866
      %v1005 = vpack.c.bf16 %v935, %v932
      %v1007 = vsel %vm683, %v1004, 0
      %v1010 = vsel %vm683, %v1005, 0
      %1012 = vmatprep.subr.bf16.mxu0 0
      %1013 = vmatpush1.bf16.xpose.msra.mxu0 0
      %1014 = vmatprep.subr.bf16.mxu0 0
      %1015 = vmatpush1.bf16.xpose.msra.mxu0 0
      %1016 = vmatprep.subr.bf16.mxu0 0
      %1017 = vmatpush1.bf16.xpose.msra.mxu0 0
      %1018 = vmatprep.subr.bf16.mxu0 0
      %1019 = vmatpush1.bf16.xpose.msra.mxu0 0
      %1020 = vmatprep.subr.bf16.mxu0 0
      %1021 = vmatpush1.bf16.xpose.msra.mxu0 0
      %1022 = vmatprep.subr.bf16.mxu0 0
      %1023 = vmatpush1.bf16.xpose.msra.mxu0 0
      %1024 = vmatprep.subr.bf16.mxu0 0
      %1025 = vmatpush1.bf16.xpose.msra.mxu0 0
      %1026 = vmatprep.subr.bf16.mxu0 0
      %1027 = vmatpush1.bf16.xpose.msra.mxu0 %v1010
      %1028 = vmatprep.subr.bf16.mxu0 0
      %1029 = vmatpush2.bf16.xpose.msra.mxu0 0
      %1030 = vmatprep.subr.bf16.mxu0 0
      %1031 = vmatpush2.bf16.xpose.msra.mxu0 0
      %1032 = vmatprep.subr.bf16.mxu0 0
      %1033 = vmatpush2.bf16.xpose.msra.mxu0 0
      %1034 = vmatprep.subr.bf16.mxu0 0
      %1035 = vmatpush2.bf16.xpose.msra.mxu0 0
      %1036 = vmatprep.subr.bf16.mxu0 0
      %1037 = vmatpush2.bf16.xpose.msra.mxu0 0
      %1038 = vmatprep.subr.bf16.mxu0 0
      %1039 = vmatpush2.bf16.xpose.msra.mxu0 0
      %1040 = vmatprep.subr.bf16.mxu0 0
      %1041 = vmatpush2.bf16.xpose.msra.mxu0 0
      %1042 = vmatprep.subr.bf16.mxu0 0
      %1043 = vmatpush2.bf16.xpose.msra.mxu0 0
      %1044 = vmatprep.mubr.bf16.mxu0 0
      %1045 = vmatmul.mubr.bf16.gmra.mxu0 %v1007
      %v1046 = vpop.f32.mrf.mxu0
      %v1047 = vadd.f32 0.0, %v1046
      %v1048 = vpop.f32.mrf.mxu0
      %v1049 = vpop.f32.mrf.mxu0
      %v1050 = vadd.f32 0.0, %v1049
      %v1051 = vpop.f32.mrf.mxu0
      %1052 = vdwg.mxu0
      %v1053 = vmul.f32 %v1047, 0.35355338
      %v1054 = vmul.f32 %v1050, 0.35355338
      %v1055 = vadd.f32 %v1053, %v483
      %v1056 = vadd.f32 %v1054, %v484
      %v1057 = vsel %vm735, %v1055, -inf
      %1058 = vmax.xlane.f32.xlu0 %v1057
      %v1059 = vpop.xlane.xlu0 %1058
      %v1060 = vsel %vm735, %v1056, -inf
      %1061 = vmax.xlane.f32.xlu0 %v1060
      %v1062 = vpop.xlane.xlu0 %1061
      %v1063 = vsub.f32 %v1055, %v1059
      %v1064 = vsub.f32 %v1056, %v1062
      %v1065 = vmul.f32 %v1063, 1.442695
      %v1066 = vpow.pop %v1065
      %v1067 = vmul.f32 %v1064, 1.442695
      %v1068 = vpow.pop %v1067
      %v1069 = vsel %vm735, %v1066, 0.0
      %1070 = vadd.xlane.f32.xlu0 %v1069
      %v1071 = vpop.xlane.xlu0 %1070
      %v1072 = vsel %vm735, %v1068, 0.0
      %1073 = vadd.xlane.f32.xlu0 %v1072
      %v1074 = vpop.xlane.xlu0 %1073
      %v1075 = vrcp.pop %v1071
      %v1076 = vrcp.pop %v1074
      %v1077 = vmul.f32 %v1066, %v1075
      %v1078 = vmul.f32 %v1068, %v1076
      %v1079 = vpack.c.bf16 %v1078, %v1077
      %v1080 = vpack.c.bf16 %v1001, %v998
      %v1082 = vsel %vm735, %v1079, 0
      %1084 = vmatprep.subr.bf16.mxu0 0
      %1085 = vmatpush1.bf16.msra.mxu0 0
      %1086 = vmatprep.subr.bf16.mxu0 0
      %1087 = vmatpush1.bf16.msra.mxu0 0
      %1088 = vmatprep.subr.bf16.mxu0 0
      %1089 = vmatpush1.bf16.msra.mxu0 0
      %1090 = vmatprep.subr.bf16.mxu0 0
      %1091 = vmatpush1.bf16.msra.mxu0 0
      %1092 = vmatprep.subr.bf16.mxu0 0
      %1093 = vmatpush1.bf16.msra.mxu0 0
      %1094 = vmatprep.subr.bf16.mxu0 0
      %1095 = vmatpush1.bf16.msra.mxu0 0
      %1096 = vmatprep.subr.bf16.mxu0 0
      %1097 = vmatpush1.bf16.msra.mxu0 0
      %1098 = vmatprep.subr.bf16.mxu0 0
      %1099 = vmatpush1.bf16.msra.mxu0 %v1080
      %1100 = vmatprep.subr.bf16.mxu0 0
      %1101 = vmatpush2.bf16.msra.mxu0 0
      %1102 = vmatprep.subr.bf16.mxu0 0
      %1103 = vmatpush2.bf16.msra.mxu0 0
      %1104 = vmatprep.subr.bf16.mxu0 0
      %1105 = vmatpush2.bf16.msra.mxu0 0
      %1106 = vmatprep.subr.bf16.mxu0 0
      %1107 = vmatpush2.bf16.msra.mxu0 0
      %1108 = vmatprep.subr.bf16.mxu0 0
      %1109 = vmatpush2.bf16.msra.mxu0 0
      %1110 = vmatprep.subr.bf16.mxu0 0
      %1111 = vmatpush2.bf16.msra.mxu0 0
      %1112 = vmatprep.subr.bf16.mxu0 0
      %1113 = vmatpush2.bf16.msra.mxu0 0
      %1114 = vmatprep.subr.bf16.mxu0 0
      %1115 = vmatpush2.bf16.msra.mxu0 0
      %1116 = vmatprep.mubr.bf16.mxu0 0
      %1117 = vmatmul.mubr.bf16.gmra.mxu0 %v1082
      %v1118 = vpop.f32.mrf.mxu0
      %v1119 = vadd.f32 0.0, %v1118
      %v1120 = vpop.f32.mrf.mxu0
      %v1121 = vpop.f32.mrf.mxu0
      %v1122 = vadd.f32 0.0, %v1121
      %v1123 = vpop.f32.mrf.mxu0
      %1124 = vdwg.mxu0
      %v1125 = vpack.c.bf16 %v1122, %v1119
      %s1126 = scalar_lea.vmem %s10, 4
      %v1127 = vld [vmem:[%s1126] sm:$0xf]
      %v1129 = vsel %vm683, %v1125, 0
      %vm1131 = vcmask 1043456
      %v1133 = vsel %vm1131, %v1127, 0
      %1135 = vmatprep.subr.bf16.mxu0 0
      %1136 = vmatpush1.bf16.msra.mxu0 0
      %1137 = vmatprep.subr.bf16.mxu0 0
      %1138 = vmatpush1.bf16.msra.mxu0 0
      %1139 = vmatprep.subr.bf16.mxu0 0
      %1140 = vmatpush1.bf16.msra.mxu0 0
      %1141 = vmatprep.subr.bf16.mxu0 0
      %1142 = vmatpush1.bf16.msra.mxu0 0
      %1143 = vmatprep.subr.bf16.mxu0 0
      %1144 = vmatpush1.bf16.msra.mxu0 0
      %1145 = vmatprep.subr.bf16.mxu0 0
      %1146 = vmatpush1.bf16.msra.mxu0 0
      %1147 = vmatprep.subr.bf16.mxu0 0
      %1148 = vmatpush1.bf16.msra.mxu0 0
      %1149 = vmatprep.subr.bf16.mxu0 0
      %1150 = vmatpush1.bf16.msra.mxu0 %v1133
      %1151 = vmatprep.subr.bf16.mxu0 0
      %1152 = vmatpush2.bf16.msra.mxu0 0
      %1153 = vmatprep.subr.bf16.mxu0 0
      %1154 = vmatpush2.bf16.msra.mxu0 0
      %1155 = vmatprep.subr.bf16.mxu0 0
      %1156 = vmatpush2.bf16.msra.mxu0 0
      %1157 = vmatprep.subr.bf16.mxu0 0
      %1158 = vmatpush2.bf16.msra.mxu0 0
      %1159 = vmatprep.subr.bf16.mxu0 0
      %1160 = vmatpush2.bf16.msra.mxu0 0
      %1161 = vmatprep.subr.bf16.mxu0 0
      %1162 = vmatpush2.bf16.msra.mxu0 0
      %1163 = vmatprep.subr.bf16.mxu0 0
      %1164 = vmatpush2.bf16.msra.mxu0 0
      %1165 = vmatprep.subr.bf16.mxu0 0
      %1166 = vmatpush2.bf16.msra.mxu0 0
      %1167 = vmatprep.mubr.bf16.mxu0 0
      %1168 = vmatmul.mubr.bf16.gmra.mxu0 %v1129
      %v1169 = vpop.f32.mrf.mxu0
      %v1170 = vadd.f32 0.0, %v1169
      %v1171 = vpop.f32.mrf.mxu0
      %v1172 = vpop.f32.mrf.mxu0
      %v1173 = vadd.f32 0.0, %v1172
      %v1174 = vpop.f32.mrf.mxu0
      %1175 = vdwg.mxu0
      %v1177 = vsel %vm683, %v804, 0
      %v1180 = vsel %vm1131, %v805, 0
      %1182 = vmatprep.subr.bf16.mxu0 0
      %1183 = vmatpush1.bf16.msra.mxu0 0
      %1184 = vmatprep.subr.bf16.mxu0 0
      %1185 = vmatpush1.bf16.msra.mxu0 0
      %1186 = vmatprep.subr.bf16.mxu0 0
      %1187 = vmatpush1.bf16.msra.mxu0 0
      %1188 = vmatprep.subr.bf16.mxu0 0
      %1189 = vmatpush1.bf16.msra.mxu0 0
      %1190 = vmatprep.subr.bf16.mxu0 0
      %1191 = vmatpush1.bf16.msra.mxu0 0
      %1192 = vmatprep.subr.bf16.mxu0 0
      %1193 = vmatpush1.bf16.msra.mxu0 0
      %1194 = vmatprep.subr.bf16.mxu0 0
      %1195 = vmatpush1.bf16.msra.mxu0 0
      %1196 = vmatprep.subr.bf16.mxu0 0
      %1197 = vmatpush1.bf16.msra.mxu0 %v1180
      %1198 = vmatprep.subr.bf16.mxu0 0
      %1199 = vmatpush2.bf16.msra.mxu0 0
      %1200 = vmatprep.subr.bf16.mxu0 0
      %1201 = vmatpush2.bf16.msra.mxu0 0
      %1202 = vmatprep.subr.bf16.mxu0 0
      %1203 = vmatpush2.bf16.msra.mxu0 0
      %1204 = vmatprep.subr.bf16.mxu0 0
      %1205 = vmatpush2.bf16.msra.mxu0 0
      %1206 = vmatprep.subr.bf16.mxu0 0
      %1207 = vmatpush2.bf16.msra.mxu0 0
      %1208 = vmatprep.subr.bf16.mxu0 0
      %1209 = vmatpush2.bf16.msra.mxu0 0
      %1210 = vmatprep.subr.bf16.mxu0 0
      %1211 = vmatpush2.bf16.msra.mxu0 0
      %1212 = vmatprep.subr.bf16.mxu0 0
      %1213 = vmatpush2.bf16.msra.mxu0 0
      %1214 = vmatprep.mubr.bf16.mxu0 0
      %1215 = vmatmul.mubr.bf16.gmra.mxu0 %v1177
      %v1216 = vpop.f32.mrf.mxu0
      %v1217 = vadd.f32 %v1170, %v1216
      %v1218 = vpop.f32.mrf.mxu0
      %v1219 = vpop.f32.mrf.mxu0
      %v1220 = vadd.f32 %v1173, %v1219
      %v1221 = vpop.f32.mrf.mxu0
      %1222 = vdwg.mxu0
      %s1223 = scalar_lea.vmem %s4, 32
      %v1224 = vld [vmem:[%s1223] sm:$0xf]
      %v1225 = vld [vmem:[%s1223 + $0x4] sm:$0xf]
      %v1226 = vld [vmem:[%s1223 + $0x8] sm:$0xf]
      %v1227 = vld [vmem:[%s1223 + $0xc] sm:$0xf]
      %s1228 = scalar_lea.vmem %s5, 2
      %v1229 = vld [vmem:[%s1228] sm:$0x1]
      %v1231 = vlaneseq
      %v1232 = vshrl.u32 %v1231, 7
      %v1233 = vsub.s32 0, %v1232
      %v1234 = vrot.slane %v1229, %v1233
      %v1240 = vunpack.c.l.b16 %v1224
      %v1241 = vunpack.c.l.b16 %v1225
      %v1242 = vunpack.c.l.b16 %v1226
      %v1243 = vunpack.c.l.b16 %v1227
      %v1244 = vpack.c.b16 %v1241, %v1240
      %v1245 = vpack.c.b16 %v1243, %v1242
      %1248 = vmatprep.subr.bf16.mxu0 0
      %1249 = vmatpush1.bf16.msra.mxu0 0
      %1250 = vmatprep.subr.bf16.mxu0 0
      %1251 = vmatpush1.bf16.msra.mxu0 0
      %1252 = vmatprep.subr.bf16.mxu0 0
      %1253 = vmatpush1.bf16.msra.mxu0 0
      %1254 = vmatprep.subr.bf16.mxu0 0
      %1255 = vmatpush1.bf16.msra.mxu0 0
      %1256 = vmatprep.subr.bf16.mxu0 0
      %1257 = vmatpush1.bf16.msra.mxu0 0
      %1258 = vmatprep.subr.bf16.mxu0 0
      %1259 = vmatpush1.bf16.msra.mxu0 0
      %1260 = vmatprep.subr.bf16.mxu0 0
      %1261 = vmatpush1.bf16.msra.mxu0 %v1245
      %1262 = vmatprep.subr.bf16.mxu0 0
      %1263 = vmatpush1.bf16.msra.mxu0 %v1244
      %1264 = vmatprep.subr.bf16.mxu0 0
      %1265 = vmatpush2.bf16.msra.mxu0 0
      %1266 = vmatprep.subr.bf16.mxu0 0
      %1267 = vmatpush2.bf16.msra.mxu0 0
      %1268 = vmatprep.subr.bf16.mxu0 0
      %1269 = vmatpush2.bf16.msra.mxu0 0
      %1270 = vmatprep.subr.bf16.mxu0 0
      %1271 = vmatpush2.bf16.msra.mxu0 0
      %1272 = vmatprep.subr.bf16.mxu0 0
      %1273 = vmatpush2.bf16.msra.mxu0 0
      %1274 = vmatprep.subr.bf16.mxu0 0
      %1275 = vmatpush2.bf16.msra.mxu0 0
      %1276 = vmatprep.subr.bf16.mxu0 0
      %1277 = vmatpush2.bf16.msra.mxu0 0
      %1278 = vmatprep.subr.bf16.mxu0 0
      %1279 = vmatpush2.bf16.msra.mxu0 0
      %1280 = vmatprep.mubr.bf16.mxu0 0
      %1281 = vmatmul.mubr.bf16.gmra.mxu0 %v510
      %v1282 = vpop.f32.mrf.mxu0
      %v1283 = vadd.f32 %v1234, %v1282
      %v1284 = vpop.f32.mrf.mxu0
      %v1285 = vpop.f32.mrf.mxu0
      %v1286 = vadd.f32 %v1234, %v1285
      %v1287 = vpop.f32.mrf.mxu0
      %1288 = vdwg.mxu0
      %s1289 = scalar_lea.vmem %s6, 32
      %v1290 = vld [vmem:[%s1289] sm:$0xf]
      %v1291 = vld [vmem:[%s1289 + $0x4] sm:$0xf]
      %v1292 = vld [vmem:[%s1289 + $0x8] sm:$0xf]
      %v1293 = vld [vmem:[%s1289 + $0xc] sm:$0xf]
      %s1294 = scalar_lea.vmem %s7, 2
      %v1295 = vld [vmem:[%s1294] sm:$0x1]
      %v1297 = vlaneseq
      %v1298 = vshrl.u32 %v1297, 7
      %v1299 = vsub.s32 0, %v1298
      %v1300 = vrot.slane %v1295, %v1299
      %v1306 = vunpack.c.l.b16 %v1290
      %v1307 = vunpack.c.l.b16 %v1291
      %v1308 = vunpack.c.l.b16 %v1292
      %v1309 = vunpack.c.l.b16 %v1293
      %v1310 = vpack.c.b16 %v1307, %v1306
      %v1311 = vpack.c.b16 %v1309, %v1308
      %1314 = vmatprep.subr.bf16.mxu0 0
      %1315 = vmatpush1.bf16.msra.mxu0 0
      %1316 = vmatprep.subr.bf16.mxu0 0
      %1317 = vmatpush1.bf16.msra.mxu0 0
      %1318 = vmatprep.subr.bf16.mxu0 0
      %1319 = vmatpush1.bf16.msra.mxu0 0
      %1320 = vmatprep.subr.bf16.mxu0 0
      %1321 = vmatpush1.bf16.msra.mxu0 0
      %1322 = vmatprep.subr.bf16.mxu0 0
      %1323 = vmatpush1.bf16.msra.mxu0 0
      %1324 = vmatprep.subr.bf16.mxu0 0
      %1325 = vmatpush1.bf16.msra.mxu0 0
      %1326 = vmatprep.subr.bf16.mxu0 0
      %1327 = vmatpush1.bf16.msra.mxu0 %v1311
      %1328 = vmatprep.subr.bf16.mxu0 0
      %1329 = vmatpush1.bf16.msra.mxu0 %v1310
      %1330 = vmatprep.subr.bf16.mxu0 0
      %1331 = vmatpush2.bf16.msra.mxu0 0
      %1332 = vmatprep.subr.bf16.mxu0 0
      %1333 = vmatpush2.bf16.msra.mxu0 0
      %1334 = vmatprep.subr.bf16.mxu0 0
      %1335 = vmatpush2.bf16.msra.mxu0 0
      %1336 = vmatprep.subr.bf16.mxu0 0
      %1337 = vmatpush2.bf16.msra.mxu0 0
      %1338 = vmatprep.subr.bf16.mxu0 0
      %1339 = vmatpush2.bf16.msra.mxu0 0
      %1340 = vmatprep.subr.bf16.mxu0 0
      %1341 = vmatpush2.bf16.msra.mxu0 0
      %1342 = vmatprep.subr.bf16.mxu0 0
      %1343 = vmatpush2.bf16.msra.mxu0 0
      %1344 = vmatprep.subr.bf16.mxu0 0
      %1345 = vmatpush2.bf16.msra.mxu0 0
      %1346 = vmatprep.mubr.bf16.mxu0 0
      %1347 = vmatmul.mubr.bf16.gmra.mxu0 %v510
      %v1348 = vpop.f32.mrf.mxu0
      %v1349 = vadd.f32 %v1300, %v1348
      %v1350 = vpop.f32.mrf.mxu0
      %v1351 = vpop.f32.mrf.mxu0
      %v1352 = vadd.f32 %v1300, %v1351
      %v1353 = vpop.f32.mrf.mxu0
      %1354 = vdwg.mxu0
      %s1355 = scalar_lea.vmem %s8, 32
      %v1356 = vld [vmem:[%s1355] sm:$0xf]
      %v1357 = vld [vmem:[%s1355 + $0x4] sm:$0xf]
      %v1358 = vld [vmem:[%s1355 + $0x8] sm:$0xf]
      %v1359 = vld [vmem:[%s1355 + $0xc] sm:$0xf]
      %s1360 = scalar_lea.vmem %s9, 2
      %v1361 = vld [vmem:[%s1360] sm:$0x1]
      %v1363 = vlaneseq
      %v1364 = vshrl.u32 %v1363, 7
      %v1365 = vsub.s32 0, %v1364
      %v1366 = vrot.slane %v1361, %v1365
      %v1372 = vunpack.c.l.b16 %v1356
      %v1373 = vunpack.c.l.b16 %v1357
      %v1374 = vunpack.c.l.b16 %v1358
      %v1375 = vunpack.c.l.b16 %v1359
      %v1376 = vpack.c.b16 %v1373, %v1372
      %v1377 = vpack.c.b16 %v1375, %v1374
      %1380 = vmatprep.subr.bf16.mxu0 0
      %1381 = vmatpush1.bf16.msra.mxu0 0
      %1382 = vmatprep.subr.bf16.mxu0 0
      %1383 = vmatpush1.bf16.msra.mxu0 0
      %1384 = vmatprep.subr.bf16.mxu0 0
      %1385 = vmatpush1.bf16.msra.mxu0 0
      %1386 = vmatprep.subr.bf16.mxu0 0
      %1387 = vmatpush1.bf16.msra.mxu0 0
      %1388 = vmatprep.subr.bf16.mxu0 0
      %1389 = vmatpush1.bf16.msra.mxu0 0
      %1390 = vmatprep.subr.bf16.mxu0 0
      %1391 = vmatpush1.bf16.msra.mxu0 0
      %1392 = vmatprep.subr.bf16.mxu0 0
      %1393 = vmatpush1.bf16.msra.mxu0 %v1377
      %1394 = vmatprep.subr.bf16.mxu0 0
      %1395 = vmatpush1.bf16.msra.mxu0 %v1376
      %1396 = vmatprep.subr.bf16.mxu0 0
      %1397 = vmatpush2.bf16.msra.mxu0 0
      %1398 = vmatprep.subr.bf16.mxu0 0
      %1399 = vmatpush2.bf16.msra.mxu0 0
      %1400 = vmatprep.subr.bf16.mxu0 0
      %1401 = vmatpush2.bf16.msra.mxu0 0
      %1402 = vmatprep.subr.bf16.mxu0 0
      %1403 = vmatpush2.bf16.msra.mxu0 0
      %1404 = vmatprep.subr.bf16.mxu0 0
      %1405 = vmatpush2.bf16.msra.mxu0 0
      %1406 = vmatprep.subr.bf16.mxu0 0
      %1407 = vmatpush2.bf16.msra.mxu0 0
      %1408 = vmatprep.subr.bf16.mxu0 0
      %1409 = vmatpush2.bf16.msra.mxu0 0
      %1410 = vmatprep.subr.bf16.mxu0 0
      %1411 = vmatpush2.bf16.msra.mxu0 0
      %1412 = vmatprep.mubr.bf16.mxu0 0
      %1413 = vmatmul.mubr.bf16.gmra.mxu0 %v510
      %v1414 = vpop.f32.mrf.mxu0
      %v1415 = vadd.f32 %v1366, %v1414
      %v1416 = vpop.f32.mrf.mxu0
      %v1417 = vpop.f32.mrf.mxu0
      %v1418 = vadd.f32 %v1366, %v1417
      %v1419 = vpop.f32.mrf.mxu0
      %1420 = vdwg.mxu0
      %v1421 = vpack.c.bf16 %v1286, %v1283
      %v1422 = vpack.c.bf16 %v1352, %v1349
      %v1424 = vsel %vm683, %v1421, 0
      %v1427 = vsel %vm683, %v1422, 0
      %1429 = vmatprep.subr.bf16.mxu0 0
      %1430 = vmatpush1.bf16.xpose.msra.mxu0 0
      %1431 = vmatprep.subr.bf16.mxu0 0
      %1432 = vmatpush1.bf16.xpose.msra.mxu0 0
      %1433 = vmatprep.subr.bf16.mxu0 0
      %1434 = vmatpush1.bf16.xpose.msra.mxu0 0
      %1435 = vmatprep.subr.bf16.mxu0 0
      %1436 = vmatpush1.bf16.xpose.msra.mxu0 0
      %1437 = vmatprep.subr.bf16.mxu0 0
      %1438 = vmatpush1.bf16.xpose.msra.mxu0 0
      %1439 = vmatprep.subr.bf16.mxu0 0
      %1440 = vmatpush1.bf16.xpose.msra.mxu0 0
      %1441 = vmatprep.subr.bf16.mxu0 0
      %1442 = vmatpush1.bf16.xpose.msra.mxu0 0
      %1443 = vmatprep.subr.bf16.mxu0 0
      %1444 = vmatpush1.bf16.xpose.msra.mxu0 %v1427
      %1445 = vmatprep.subr.bf16.mxu0 0
      %1446 = vmatpush2.bf16.xpose.msra.mxu0 0
      %1447 = vmatprep.subr.bf16.mxu0 0
      %1448 = vmatpush2.bf16.xpose.msra.mxu0 0
      %1449 = vmatprep.subr.bf16.mxu0 0
      %1450 = vmatpush2.bf16.xpose.msra.mxu0 0
      %1451 = vmatprep.subr.bf16.mxu0 0
      %1452 = vmatpush2.bf16.xpose.msra.mxu0 0
      %1453 = vmatprep.subr.bf16.mxu0 0
      %1454 = vmatpush2.bf16.xpose.msra.mxu0 0
      %1455 = vmatprep.subr.bf16.mxu0 0
      %1456 = vmatpush2.bf16.xpose.msra.mxu0 0
      %1457 = vmatprep.subr.bf16.mxu0 0
      %1458 = vmatpush2.bf16.xpose.msra.mxu0 0
      %1459 = vmatprep.subr.bf16.mxu0 0
      %1460 = vmatpush2.bf16.xpose.msra.mxu0 0
      %1461 = vmatprep.mubr.bf16.mxu0 0
      %1462 = vmatmul.mubr.bf16.gmra.mxu0 %v1424
      %v1463 = vpop.f32.mrf.mxu0
      %v1464 = vadd.f32 0.0, %v1463
      %v1465 = vpop.f32.mrf.mxu0
      %v1466 = vpop.f32.mrf.mxu0
      %v1467 = vadd.f32 0.0, %v1466
      %v1468 = vpop.f32.mrf.mxu0
      %1469 = vdwg.mxu0
      %v1470 = vmul.f32 %v1464, 0.35355338
      %v1471 = vmul.f32 %v1467, 0.35355338
      %v1472 = vadd.f32 %v1470, %v483
      %v1473 = vadd.f32 %v1471, %v484
      %v1474 = vsel %vm735, %v1472, -inf
      %1475 = vmax.xlane.f32.xlu0 %v1474
      %v1476 = vpop.xlane.xlu0 %1475
      %v1477 = vsel %vm735, %v1473, -inf
      %1478 = vmax.xlane.f32.xlu0 %v1477
      %v1479 = vpop.xlane.xlu0 %1478
      %v1480 = vsub.f32 %v1472, %v1476
      %v1481 = vsub.f32 %v1473, %v1479
      %v1482 = vmul.f32 %v1480, 1.442695
      %v1483 = vpow.pop %v1482
      %v1484 = vmul.f32 %v1481, 1.442695
      %v1485 = vpow.pop %v1484
      %v1486 = vsel %vm735, %v1483, 0.0
      %1487 = vadd.xlane.f32.xlu0 %v1486
      %v1488 = vpop.xlane.xlu0 %1487
      %v1489 = vsel %vm735, %v1485, 0.0
      %1490 = vadd.xlane.f32.xlu0 %v1489
      %v1491 = vpop.xlane.xlu0 %1490
      %v1492 = vrcp.pop %v1488
      %v1493 = vrcp.pop %v1491
      %v1494 = vmul.f32 %v1483, %v1492
      %v1495 = vmul.f32 %v1485, %v1493
      %v1496 = vpack.c.bf16 %v1495, %v1494
      %v1497 = vpack.c.bf16 %v1418, %v1415
      %v1499 = vsel %vm735, %v1496, 0
      %1501 = vmatprep.subr.bf16.mxu0 0
      %1502 = vmatpush1.bf16.msra.mxu0 0
      %1503 = vmatprep.subr.bf16.mxu0 0
      %1504 = vmatpush1.bf16.msra.mxu0 0
      %1505 = vmatprep.subr.bf16.mxu0 0
      %1506 = vmatpush1.bf16.msra.mxu0 0
      %1507 = vmatprep.subr.bf16.mxu0 0
      %1508 = vmatpush1.bf16.msra.mxu0 0
      %1509 = vmatprep.subr.bf16.mxu0 0
      %1510 = vmatpush1.bf16.msra.mxu0 0
      %1511 = vmatprep.subr.bf16.mxu0 0
      %1512 = vmatpush1.bf16.msra.mxu0 0
      %1513 = vmatprep.subr.bf16.mxu0 0
      %1514 = vmatpush1.bf16.msra.mxu0 0
      %1515 = vmatprep.subr.bf16.mxu0 0
      %1516 = vmatpush1.bf16.msra.mxu0 %v1497
      %1517 = vmatprep.subr.bf16.mxu0 0
      %1518 = vmatpush2.bf16.msra.mxu0 0
      %1519 = vmatprep.subr.bf16.mxu0 0
      %1520 = vmatpush2.bf16.msra.mxu0 0
      %1521 = vmatprep.subr.bf16.mxu0 0
      %1522 = vmatpush2.bf16.msra.mxu0 0
      %1523 = vmatprep.subr.bf16.mxu0 0
      %1524 = vmatpush2.bf16.msra.mxu0 0
      %1525 = vmatprep.subr.bf16.mxu0 0
      %1526 = vmatpush2.bf16.msra.mxu0 0
      %1527 = vmatprep.subr.bf16.mxu0 0
      %1528 = vmatpush2.bf16.msra.mxu0 0
      %1529 = vmatprep.subr.bf16.mxu0 0
      %1530 = vmatpush2.bf16.msra.mxu0 0
      %1531 = vmatprep.subr.bf16.mxu0 0
      %1532 = vmatpush2.bf16.msra.mxu0 0
      %1533 = vmatprep.mubr.bf16.mxu0 0
      %1534 = vmatmul.mubr.bf16.gmra.mxu0 %v1499
      %v1535 = vpop.f32.mrf.mxu0
      %v1536 = vadd.f32 0.0, %v1535
      %v1537 = vpop.f32.mrf.mxu0
      %v1538 = vpop.f32.mrf.mxu0
      %v1539 = vadd.f32 0.0, %v1538
      %v1540 = vpop.f32.mrf.mxu0
      %1541 = vdwg.mxu0
      %v1542 = vpack.c.bf16 %v1539, %v1536
      %s1543 = scalar_lea.vmem %s10, 8
      %v1544 = vld [vmem:[%s1543] sm:$0xf]
      %v1546 = vsel %vm683, %v1542, 0
      %v1549 = vsel %vm1131, %v1544, 0
      %1551 = vmatprep.subr.bf16.mxu0 0
      %1552 = vmatpush1.bf16.msra.mxu0 0
      %1553 = vmatprep.subr.bf16.mxu0 0
      %1554 = vmatpush1.bf16.msra.mxu0 0
      %1555 = vmatprep.subr.bf16.mxu0 0
      %1556 = vmatpush1.bf16.msra.mxu0 0
      %1557 = vmatprep.subr.bf16.mxu0 0
      %1558 = vmatpush1.bf16.msra.mxu0 0
      %1559 = vmatprep.subr.bf16.mxu0 0
      %1560 = vmatpush1.bf16.msra.mxu0 0
      %1561 = vmatprep.subr.bf16.mxu0 0
      %1562 = vmatpush1.bf16.msra.mxu0 0
      %1563 = vmatprep.subr.bf16.mxu0 0
      %1564 = vmatpush1.bf16.msra.mxu0 0
      %1565 = vmatprep.subr.bf16.mxu0 0
      %1566 = vmatpush1.bf16.msra.mxu0 %v1549
      %1567 = vmatprep.subr.bf16.mxu0 0
      %1568 = vmatpush2.bf16.msra.mxu0 0
      %1569 = vmatprep.subr.bf16.mxu0 0
      %1570 = vmatpush2.bf16.msra.mxu0 0
      %1571 = vmatprep.subr.bf16.mxu0 0
      %1572 = vmatpush2.bf16.msra.mxu0 0
      %1573 = vmatprep.subr.bf16.mxu0 0
      %1574 = vmatpush2.bf16.msra.mxu0 0
      %1575 = vmatprep.subr.bf16.mxu0 0
      %1576 = vmatpush2.bf16.msra.mxu0 0
      %1577 = vmatprep.subr.bf16.mxu0 0
      %1578 = vmatpush2.bf16.msra.mxu0 0
      %1579 = vmatprep.subr.bf16.mxu0 0
      %1580 = vmatpush2.bf16.msra.mxu0 0
      %1581 = vmatprep.subr.bf16.mxu0 0
      %1582 = vmatpush2.bf16.msra.mxu0 0
      %1583 = vmatprep.mubr.bf16.mxu0 0
      %1584 = vmatmul.mubr.bf16.gmra.mxu0 %v1546
      %v1585 = vpop.f32.mrf.mxu0
      %v1586 = vadd.f32 0.0, %v1585
      %v1587 = vpop.f32.mrf.mxu0
      %v1588 = vpop.f32.mrf.mxu0
      %v1589 = vadd.f32 0.0, %v1588
      %v1590 = vpop.f32.mrf.mxu0
      %1591 = vdwg.mxu0
      %v1592 = vadd.f32 %v1217, %v1586
      %v1593 = vadd.f32 %v1220, %v1589
      %s1594 = scalar_lea.vmem %s4, 48
      %v1595 = vld [vmem:[%s1594] sm:$0xf]
      %v1596 = vld [vmem:[%s1594 + $0x4] sm:$0xf]
      %v1597 = vld [vmem:[%s1594 + $0x8] sm:$0xf]
      %v1598 = vld [vmem:[%s1594 + $0xc] sm:$0xf]
      %s1599 = scalar_lea.vmem %s5, 3
      %v1600 = vld [vmem:[%s1599] sm:$0x1]
      %v1602 = vlaneseq
      %v1603 = vshrl.u32 %v1602, 7
      %v1604 = vsub.s32 0, %v1603
      %v1605 = vrot.slane %v1600, %v1604
      %v1611 = vunpack.c.l.b16 %v1595
      %v1612 = vunpack.c.l.b16 %v1596
      %v1613 = vunpack.c.l.b16 %v1597
      %v1614 = vunpack.c.l.b16 %v1598
      %v1615 = vpack.c.b16 %v1612, %v1611
      %v1616 = vpack.c.b16 %v1614, %v1613
      %1619 = vmatprep.subr.bf16.mxu0 0
      %1620 = vmatpush1.bf16.msra.mxu0 0
      %1621 = vmatprep.subr.bf16.mxu0 0
      %1622 = vmatpush1.bf16.msra.mxu0 0
      %1623 = vmatprep.subr.bf16.mxu0 0
      %1624 = vmatpush1.bf16.msra.mxu0 0
      %1625 = vmatprep.subr.bf16.mxu0 0
      %1626 = vmatpush1.bf16.msra.mxu0 0
      %1627 = vmatprep.subr.bf16.mxu0 0
      %1628 = vmatpush1.bf16.msra.mxu0 0
      %1629 = vmatprep.subr.bf16.mxu0 0
      %1630 = vmatpush1.bf16.msra.mxu0 0
      %1631 = vmatprep.subr.bf16.mxu0 0
      %1632 = vmatpush1.bf16.msra.mxu0 %v1616
      %1633 = vmatprep.subr.bf16.mxu0 0
      %1634 = vmatpush1.bf16.msra.mxu0 %v1615
      %1635 = vmatprep.subr.bf16.mxu0 0
      %1636 = vmatpush2.bf16.msra.mxu0 0
      %1637 = vmatprep.subr.bf16.mxu0 0
      %1638 = vmatpush2.bf16.msra.mxu0 0
      %1639 = vmatprep.subr.bf16.mxu0 0
      %1640 = vmatpush2.bf16.msra.mxu0 0
      %1641 = vmatprep.subr.bf16.mxu0 0
      %1642 = vmatpush2.bf16.msra.mxu0 0
      %1643 = vmatprep.subr.bf16.mxu0 0
      %1644 = vmatpush2.bf16.msra.mxu0 0
      %1645 = vmatprep.subr.bf16.mxu0 0
      %1646 = vmatpush2.bf16.msra.mxu0 0
      %1647 = vmatprep.subr.bf16.mxu0 0
      %1648 = vmatpush2.bf16.msra.mxu0 0
      %1649 = vmatprep.subr.bf16.mxu0 0
      %1650 = vmatpush2.bf16.msra.mxu0 0
      %1651 = vmatprep.mubr.bf16.mxu0 0
      %1652 = vmatmul.mubr.bf16.gmra.mxu0 %v510
      %v1653 = vpop.f32.mrf.mxu0
      %v1654 = vadd.f32 %v1605, %v1653
      %v1655 = vpop.f32.mrf.mxu0
      %v1656 = vpop.f32.mrf.mxu0
      %v1657 = vadd.f32 %v1605, %v1656
      %v1658 = vpop.f32.mrf.mxu0
      %1659 = vdwg.mxu0
      %s1660 = scalar_lea.vmem %s6, 48
      %v1661 = vld [vmem:[%s1660] sm:$0xf]
      %v1662 = vld [vmem:[%s1660 + $0x4] sm:$0xf]
      %v1663 = vld [vmem:[%s1660 + $0x8] sm:$0xf]
      %v1664 = vld [vmem:[%s1660 + $0xc] sm:$0xf]
      %s1665 = scalar_lea.vmem %s7, 3
      %v1666 = vld [vmem:[%s1665] sm:$0x1]
      %v1668 = vlaneseq
      %v1669 = vshrl.u32 %v1668, 7
      %v1670 = vsub.s32 0, %v1669
      %v1671 = vrot.slane %v1666, %v1670
      %v1677 = vunpack.c.l.b16 %v1661
      %v1678 = vunpack.c.l.b16 %v1662
      %v1679 = vunpack.c.l.b16 %v1663
      %v1680 = vunpack.c.l.b16 %v1664
      %v1681 = vpack.c.b16 %v1678, %v1677
      %v1682 = vpack.c.b16 %v1680, %v1679
      %1685 = vmatprep.subr.bf16.mxu0 0
      %1686 = vmatpush1.bf16.msra.mxu0 0
      %1687 = vmatprep.subr.bf16.mxu0 0
      %1688 = vmatpush1.bf16.msra.mxu0 0
      %1689 = vmatprep.subr.bf16.mxu0 0
      %1690 = vmatpush1.bf16.msra.mxu0 0
      %1691 = vmatprep.subr.bf16.mxu0 0
      %1692 = vmatpush1.bf16.msra.mxu0 0
      %1693 = vmatprep.subr.bf16.mxu0 0
      %1694 = vmatpush1.bf16.msra.mxu0 0
      %1695 = vmatprep.subr.bf16.mxu0 0
      %1696 = vmatpush1.bf16.msra.mxu0 0
      %1697 = vmatprep.subr.bf16.mxu0 0
      %1698 = vmatpush1.bf16.msra.mxu0 %v1682
      %1699 = vmatprep.subr.bf16.mxu0 0
      %1700 = vmatpush1.bf16.msra.mxu0 %v1681
      %1701 = vmatprep.subr.bf16.mxu0 0
      %1702 = vmatpush2.bf16.msra.mxu0 0
      %1703 = vmatprep.subr.bf16.mxu0 0
      %1704 = vmatpush2.bf16.msra.mxu0 0
      %1705 = vmatprep.subr.bf16.mxu0 0
      %1706 = vmatpush2.bf16.msra.mxu0 0
      %1707 = vmatprep.subr.bf16.mxu0 0
      %1708 = vmatpush2.bf16.msra.mxu0 0
      %1709 = vmatprep.subr.bf16.mxu0 0
      %1710 = vmatpush2.bf16.msra.mxu0 0
      %1711 = vmatprep.subr.bf16.mxu0 0
      %1712 = vmatpush2.bf16.msra.mxu0 0
      %1713 = vmatprep.subr.bf16.mxu0 0
      %1714 = vmatpush2.bf16.msra.mxu0 0
      %1715 = vmatprep.subr.bf16.mxu0 0
      %1716 = vmatpush2.bf16.msra.mxu0 0
      %1717 = vmatprep.mubr.bf16.mxu0 0
      %1718 = vmatmul.mubr.bf16.gmra.mxu0 %v510
      %v1719 = vpop.f32.mrf.mxu0
      %v1720 = vadd.f32 %v1671, %v1719
      %v1721 = vpop.f32.mrf.mxu0
      %v1722 = vpop.f32.mrf.mxu0
      %v1723 = vadd.f32 %v1671, %v1722
      %v1724 = vpop.f32.mrf.mxu0
      %1725 = vdwg.mxu0
      %s1726 = scalar_lea.vmem %s8, 48
      %v1727 = vld [vmem:[%s1726] sm:$0xf]
      %v1728 = vld [vmem:[%s1726 + $0x4] sm:$0xf]
      %v1729 = vld [vmem:[%s1726 + $0x8] sm:$0xf]
      %v1730 = vld [vmem:[%s1726 + $0xc] sm:$0xf]
      %s1731 = scalar_lea.vmem %s9, 3
      %v1732 = vld [vmem:[%s1731] sm:$0x1]
      %v1734 = vlaneseq
      %v1735 = vshrl.u32 %v1734, 7
      %v1736 = vsub.s32 0, %v1735
      %v1737 = vrot.slane %v1732, %v1736
      %v1743 = vunpack.c.l.b16 %v1727
      %v1744 = vunpack.c.l.b16 %v1728
      %v1745 = vunpack.c.l.b16 %v1729
      %v1746 = vunpack.c.l.b16 %v1730
      %v1747 = vpack.c.b16 %v1744, %v1743
      %v1748 = vpack.c.b16 %v1746, %v1745
      %1751 = vmatprep.subr.bf16.mxu0 0
      %1752 = vmatpush1.bf16.msra.mxu0 0
      %1753 = vmatprep.subr.bf16.mxu0 0
      %1754 = vmatpush1.bf16.msra.mxu0 0
      %1755 = vmatprep.subr.bf16.mxu0 0
      %1756 = vmatpush1.bf16.msra.mxu0 0
      %1757 = vmatprep.subr.bf16.mxu0 0
      %1758 = vmatpush1.bf16.msra.mxu0 0
      %1759 = vmatprep.subr.bf16.mxu0 0
      %1760 = vmatpush1.bf16.msra.mxu0 0
      %1761 = vmatprep.subr.bf16.mxu0 0
      %1762 = vmatpush1.bf16.msra.mxu0 0
      %1763 = vmatprep.subr.bf16.mxu0 0
      %1764 = vmatpush1.bf16.msra.mxu0 %v1748
      %1765 = vmatprep.subr.bf16.mxu0 0
      %1766 = vmatpush1.bf16.msra.mxu0 %v1747
      %1767 = vmatprep.subr.bf16.mxu0 0
      %1768 = vmatpush2.bf16.msra.mxu0 0
      %1769 = vmatprep.subr.bf16.mxu0 0
      %1770 = vmatpush2.bf16.msra.mxu0 0
      %1771 = vmatprep.subr.bf16.mxu0 0
      %1772 = vmatpush2.bf16.msra.mxu0 0
      %1773 = vmatprep.subr.bf16.mxu0 0
      %1774 = vmatpush2.bf16.msra.mxu0 0
      %1775 = vmatprep.subr.bf16.mxu0 0
      %1776 = vmatpush2.bf16.msra.mxu0 0
      %1777 = vmatprep.subr.bf16.mxu0 0
      %1778 = vmatpush2.bf16.msra.mxu0 0
      %1779 = vmatprep.subr.bf16.mxu0 0
      %1780 = vmatpush2.bf16.msra.mxu0 0
      %1781 = vmatprep.subr.bf16.mxu0 0
      %1782 = vmatpush2.bf16.msra.mxu0 0
      %1783 = vmatprep.mubr.bf16.mxu0 0
      %1784 = vmatmul.mubr.bf16.gmra.mxu0 %v510
      %v1785 = vpop.f32.mrf.mxu0
      %v1786 = vadd.f32 %v1737, %v1785
      %v1787 = vpop.f32.mrf.mxu0
      %v1788 = vpop.f32.mrf.mxu0
      %v1789 = vadd.f32 %v1737, %v1788
      %v1790 = vpop.f32.mrf.mxu0
      %1791 = vdwg.mxu0
      %v1792 = vpack.c.bf16 %v1657, %v1654
      %v1793 = vpack.c.bf16 %v1723, %v1720
      %v1795 = vsel %vm683, %v1792, 0
      %v1798 = vsel %vm683, %v1793, 0
      %1800 = vmatprep.subr.bf16.mxu0 0
      %1801 = vmatpush1.bf16.xpose.msra.mxu0 0
      %1802 = vmatprep.subr.bf16.mxu0 0
      %1803 = vmatpush1.bf16.xpose.msra.mxu0 0
      %1804 = vmatprep.subr.bf16.mxu0 0
      %1805 = vmatpush1.bf16.xpose.msra.mxu0 0
      %1806 = vmatprep.subr.bf16.mxu0 0
      %1807 = vmatpush1.bf16.xpose.msra.mxu0 0
      %1808 = vmatprep.subr.bf16.mxu0 0
      %1809 = vmatpush1.bf16.xpose.msra.mxu0 0
      %1810 = vmatprep.subr.bf16.mxu0 0
      %1811 = vmatpush1.bf16.xpose.msra.mxu0 0
      %1812 = vmatprep.subr.bf16.mxu0 0
      %1813 = vmatpush1.bf16.xpose.msra.mxu0 0
      %1814 = vmatprep.subr.bf16.mxu0 0
      %1815 = vmatpush1.bf16.xpose.msra.mxu0 %v1798
      %1816 = vmatprep.subr.bf16.mxu0 0
      %1817 = vmatpush2.bf16.xpose.msra.mxu0 0
      %1818 = vmatprep.subr.bf16.mxu0 0
      %1819 = vmatpush2.bf16.xpose.msra.mxu0 0
      %1820 = vmatprep.subr.bf16.mxu0 0
      %1821 = vmatpush2.bf16.xpose.msra.mxu0 0
      %1822 = vmatprep.subr.bf16.mxu0 0
      %1823 = vmatpush2.bf16.xpose.msra.mxu0 0
      %1824 = vmatprep.subr.bf16.mxu0 0
      %1825 = vmatpush2.bf16.xpose.msra.mxu0 0
      %1826 = vmatprep.subr.bf16.mxu0 0
      %1827 = vmatpush2.bf16.xpose.msra.mxu0 0
      %1828 = vmatprep.subr.bf16.mxu0 0
      %1829 = vmatpush2.bf16.xpose.msra.mxu0 0
      %1830 = vmatprep.subr.bf16.mxu0 0
      %1831 = vmatpush2.bf16.xpose.msra.mxu0 0
      %1832 = vmatprep.mubr.bf16.mxu0 0
      %1833 = vmatmul.mubr.bf16.gmra.mxu0 %v1795
      %v1834 = vpop.f32.mrf.mxu0
      %v1835 = vadd.f32 0.0, %v1834
      %v1836 = vpop.f32.mrf.mxu0
      %v1837 = vpop.f32.mrf.mxu0
      %v1838 = vadd.f32 0.0, %v1837
      %v1839 = vpop.f32.mrf.mxu0
      %1840 = vdwg.mxu0
      %v1841 = vmul.f32 %v1835, 0.35355338
      %v1842 = vmul.f32 %v1838, 0.35355338
      %v1843 = vadd.f32 %v1841, %v483
      %v1844 = vadd.f32 %v1842, %v484
      %v1845 = vsel %vm735, %v1843, -inf
      %1846 = vmax.xlane.f32.xlu0 %v1845
      %v1847 = vpop.xlane.xlu0 %1846
      %v1848 = vsel %vm735, %v1844, -inf
      %1849 = vmax.xlane.f32.xlu0 %v1848
      %v1850 = vpop.xlane.xlu0 %1849
      %v1851 = vsub.f32 %v1843, %v1847
      %v1852 = vsub.f32 %v1844, %v1850
      %v1853 = vmul.f32 %v1851, 1.442695
      %v1854 = vpow.pop %v1853
      %v1855 = vmul.f32 %v1852, 1.442695
      %v1856 = vpow.pop %v1855
      %v1857 = vsel %vm735, %v1854, 0.0
      %1858 = vadd.xlane.f32.xlu0 %v1857
      %v1859 = vpop.xlane.xlu0 %1858
      %v1860 = vsel %vm735, %v1856, 0.0
      %1861 = vadd.xlane.f32.xlu0 %v1860
      %v1862 = vpop.xlane.xlu0 %1861
      %v1863 = vrcp.pop %v1859
      %v1864 = vrcp.pop %v1862
      %v1865 = vmul.f32 %v1854, %v1863
      %v1866 = vmul.f32 %v1856, %v1864
      %v1867 = vpack.c.bf16 %v1866, %v1865
      %v1868 = vpack.c.bf16 %v1789, %v1786
      %v1870 = vsel %vm735, %v1867, 0
      %1872 = vmatprep.subr.bf16.mxu0 0
      %1873 = vmatpush1.bf16.msra.mxu0 0
      %1874 = vmatprep.subr.bf16.mxu0 0
      %1875 = vmatpush1.bf16.msra.mxu0 0
      %1876 = vmatprep.subr.bf16.mxu0 0
      %1877 = vmatpush1.bf16.msra.mxu0 0
      %1878 = vmatprep.subr.bf16.mxu0 0
      %1879 = vmatpush1.bf16.msra.mxu0 0
      %1880 = vmatprep.subr.bf16.mxu0 0
      %1881 = vmatpush1.bf16.msra.mxu0 0
      %1882 = vmatprep.subr.bf16.mxu0 0
      %1883 = vmatpush1.bf16.msra.mxu0 0
      %1884 = vmatprep.subr.bf16.mxu0 0
      %1885 = vmatpush1.bf16.msra.mxu0 0
      %1886 = vmatprep.subr.bf16.mxu0 0
      %1887 = vmatpush1.bf16.msra.mxu0 %v1868
      %1888 = vmatprep.subr.bf16.mxu0 0
      %1889 = vmatpush2.bf16.msra.mxu0 0
      %1890 = vmatprep.subr.bf16.mxu0 0
      %1891 = vmatpush2.bf16.msra.mxu0 0
      %1892 = vmatprep.subr.bf16.mxu0 0
      %1893 = vmatpush2.bf16.msra.mxu0 0
      %1894 = vmatprep.subr.bf16.mxu0 0
      %1895 = vmatpush2.bf16.msra.mxu0 0
      %1896 = vmatprep.subr.bf16.mxu0 0
      %1897 = vmatpush2.bf16.msra.mxu0 0
      %1898 = vmatprep.subr.bf16.mxu0 0
      %1899 = vmatpush2.bf16.msra.mxu0 0
      %1900 = vmatprep.subr.bf16.mxu0 0
      %1901 = vmatpush2.bf16.msra.mxu0 0
      %1902 = vmatprep.subr.bf16.mxu0 0
      %1903 = vmatpush2.bf16.msra.mxu0 0
      %1904 = vmatprep.mubr.bf16.mxu0 0
      %1905 = vmatmul.mubr.bf16.gmra.mxu0 %v1870
      %v1906 = vpop.f32.mrf.mxu0
      %v1907 = vadd.f32 0.0, %v1906
      %v1908 = vpop.f32.mrf.mxu0
      %v1909 = vpop.f32.mrf.mxu0
      %v1910 = vadd.f32 0.0, %v1909
      %v1911 = vpop.f32.mrf.mxu0
      %1912 = vdwg.mxu0
      %v1913 = vpack.c.bf16 %v1910, %v1907
      %s1914 = scalar_lea.vmem %s10, 12
      %v1915 = vld [vmem:[%s1914] sm:$0xf]
      %v1917 = vsel %vm683, %v1913, 0
      %v1920 = vsel %vm1131, %v1915, 0
      %1922 = vmatprep.subr.bf16.mxu0 0
      %1923 = vmatpush1.bf16.msra.mxu0 0
      %1924 = vmatprep.subr.bf16.mxu0 0
      %1925 = vmatpush1.bf16.msra.mxu0 0
      %1926 = vmatprep.subr.bf16.mxu0 0
      %1927 = vmatpush1.bf16.msra.mxu0 0
      %1928 = vmatprep.subr.bf16.mxu0 0
      %1929 = vmatpush1.bf16.msra.mxu0 0
      %1930 = vmatprep.subr.bf16.mxu0 0
      %1931 = vmatpush1.bf16.msra.mxu0 0
      %1932 = vmatprep.subr.bf16.mxu0 0
      %1933 = vmatpush1.bf16.msra.mxu0 0
      %1934 = vmatprep.subr.bf16.mxu0 0
      %1935 = vmatpush1.bf16.msra.mxu0 0
      %1936 = vmatprep.subr.bf16.mxu0 0
      %1937 = vmatpush1.bf16.msra.mxu0 %v1920
      %1938 = vmatprep.subr.bf16.mxu0 0
      %1939 = vmatpush2.bf16.msra.mxu0 0
      %1940 = vmatprep.subr.bf16.mxu0 0
      %1941 = vmatpush2.bf16.msra.mxu0 0
      %1942 = vmatprep.subr.bf16.mxu0 0
      %1943 = vmatpush2.bf16.msra.mxu0 0
      %1944 = vmatprep.subr.bf16.mxu0 0
      %1945 = vmatpush2.bf16.msra.mxu0 0
      %1946 = vmatprep.subr.bf16.mxu0 0
      %1947 = vmatpush2.bf16.msra.mxu0 0
      %1948 = vmatprep.subr.bf16.mxu0 0
      %1949 = vmatpush2.bf16.msra.mxu0 0
      %1950 = vmatprep.subr.bf16.mxu0 0
      %1951 = vmatpush2.bf16.msra.mxu0 0
      %1952 = vmatprep.subr.bf16.mxu0 0
      %1953 = vmatpush2.bf16.msra.mxu0 0
      %1954 = vmatprep.mubr.bf16.mxu0 0
      %1955 = vmatmul.mubr.bf16.gmra.mxu0 %v1917
      %v1956 = vpop.f32.mrf.mxu0
      %v1957 = vadd.f32 0.0, %v1956
      %v1958 = vpop.f32.mrf.mxu0
      %v1959 = vpop.f32.mrf.mxu0
      %v1960 = vadd.f32 0.0, %v1959
      %v1961 = vpop.f32.mrf.mxu0
      %1962 = vdwg.mxu0
      %v1963 = vadd.f32 %v1592, %v1957
      %v1964 = vadd.f32 %v1593, %v1960
      %v1965 = vld [vmem:[%s11] sm:$0x1]
      %v1967 = vlaneseq
      %v1968 = vshrl.u32 %v1967, 7
      %v1969 = vsub.s32 0, %v1968
      %v1970 = vrot.slane %v1965, %v1969
      %v1972 = vadd.f32 %v1963, %v1970
      %v1973 = vadd.f32 %v1964, %v1970
      %v1974 = vadd.f32 %v435, %v1972
      %v1975 = vadd.f32 %v436, %v1973
      %1976 = vst.msk [vmem:[%s433] sm:$0xff] %vm439, %v1974
      %1977 = vst.msk [vmem:[%s433 + $0x8] sm:$0xff] %vm439, %v1975
      %p1978 = scmp.lt.s32.totalorder %s23, 1
      %s1979 = scalar_select %p1978, %s23, 1
      %s1980 = smul.addr %s1979, 2
      %s1981 = smul.addr %s1980, 8
      %s1982 = scalar_lea.vmem %s12, %s1981
      // Predicated region
      $region69: #{_lambda_.14} parent=67 // pred_check
        %p1983 = pneg %p303
      $region70: #{_lambda_.14} parent=67 // pred_check_branch
        %1985 = sbr.rel (%p1983) target = $region72
      $region71: #{_lambda_.14} parent=67 // pred_region
        _
      $region72: #{_lambda_.14} parent=67 // pred_fallthru
        _
    $region68: #{_lambda_.14} parent=5 // pred_fallthru
      _
    %p1986 = scmp.le.s32.totalorder 2, %s18
    // Predicated region
    $region73: #{_lambda_.14} parent=5 // pred_check
      %p1987 = pneg %p1986
    $region74: #{_lambda_.14} parent=5 // pred_check_branch
      %1989 = sbr.rel (%p1987) target = $region76
    $region75: #{_lambda_.14} parent=5 // pred_region
      %s1990 = ssub.s32 %s18, 2
      // Predicated region
      $region77: #{_lambda_.14} parent=75 // pred_check
        %p1991 = pneg %p309
      $region78: #{_lambda_.14} parent=75 // pred_check_branch
        %1993 = sbr.rel (%p1991) target = $region80
      $region79: #{_lambda_.14} parent=75 // pred_region
        %p1994 = scmp.lt.s32.totalorder %s24, 1
        %s1995 = scalar_select %p1994, %s24, 1
        %s1996 = smul.addr %s1995, 2
        %s1997 = smul.addr %s1996, 8
        %s1998 = scalar_lea.vmem %s12, %s1997
      $region80: #{_lambda_.14} parent=75 // pred_fallthru
        _
    $region76: #{_lambda_.14} parent=5 // pred_fallthru
      _
  $region6: #{_lambda_.14} parent=0 // loop_footer
    %s22 = sadd.s32 1, %s18
  $region7: #{_lambda_.14} parent=0 // loop_footer_branch
    %17 = sbr.rel target = $region3
  $region8: #{_lambda_.14} parent=0 // loop_exit
    _

// kernel: _lambda_.19
$region0: #{_lambda_.19}
  #allocation0 [shape = 'u32[]', space=smem, size = 0x4, offset = 0x4, fixed_abs, tag = 'smem constant byte address 0x4 - core index']
  #allocation1 [shape = 'u32[144,128]{1,0:T(1,128)}', space=vmem, size = 0x12000, scoped, tag = 'internal scratch']
  %s0 = inlined_call_operand.vmem [shape: f32[2,8,32], index: 0, kind: input, shape index: {}]
  %s1 = inlined_call_operand.vmem [shape: f32[2,8,8], index: 1, kind: input, shape index: {}]
  %s2 = inlined_call_operand.vmem [shape: f32[1,32], index: 2, kind: input, shape index: {}]
  %s3 = inlined_call_operand.vmem [shape: f32[1,32], index: 3, kind: input, shape index: {}]
  %s4 = inlined_call_operand.vmem [shape: bf16[4,32,8], index: 4, kind: input, shape index: {}]
  %s5 = inlined_call_operand.vmem [shape: f32[4,1,8], index: 5, kind: input, shape index: {}]
  %s6 = inlined_call_operand.vmem [shape: bf16[4,32,8], index: 6, kind: input, shape index: {}]
  %s7 = inlined_call_operand.vmem [shape: f32[4,1,8], index: 7, kind: input, shape index: {}]
  %s8 = inlined_call_operand.vmem [shape: bf16[4,32,8], index: 8, kind: input, shape index: {}]
  %s9 = inlined_call_operand.vmem [shape: f32[4,1,8], index: 9, kind: input, shape index: {}]
  %s10 = inlined_call_operand.vmem [shape: bf16[4,8,32], index: 10, kind: input, shape index: {}]
  %s11 = inlined_call_operand.vmem [shape: f32[1,32], index: 11, kind: input, shape index: {}]
  %s12 = inlined_call_operand.vmem [shape: f32[2,8,32], index: 12, kind: output, shape index: {}]
  %s13 = sld [smem:[#allocation0]]
  $region81: #{_lambda_.19} parent=0
    _
  %s15 = ssub.s32 1, %s13
  %s16 = scalar_select 0, %s15, %s13
  loop: start=0, step=1, limit=4
  $region2: #{_lambda_.19} parent=0 // loop_pre_header
    _
  $region3: #{_lambda_.19} parent=0 // loop_header
    %s18 = sphi 0, %s22
    %p19 = scmp.ge.s32.totalorder %s18, 4
    %s28 = sphi 0, %s30
    %s31 = sphi 0, %s28
    %s32 = sphi 0, %s31
    %s48 = sphi 0, %s32
    %s54 = sphi 0, %s56
    %s57 = sphi 0, %s54
    %s58 = sphi 0, %s57
    %s74 = sphi 0, %s58
    %s78 = sphi 0, %s78
    %s80 = sphi 0, %s78
    %s81 = sphi 0, %s80
    %s95 = sphi 0, %s81
    %s99 = sphi 0, %s99
    %s101 = sphi 0, %s99
    %s102 = sphi 0, %s101
    %s116 = sphi 0, %s102
    %s120 = sphi 0, %s120
    %s122 = sphi 0, %s120
    %s123 = sphi 0, %s122
    %s137 = sphi 0, %s123
    %s141 = sphi 0, %s141
    %s143 = sphi 0, %s141
    %s144 = sphi 0, %s143
    %s158 = sphi 0, %s144
    %s162 = sphi 0, %s162
    %s164 = sphi 0, %s162
    %s165 = sphi 0, %s164
    %s179 = sphi 0, %s165
    %s183 = sphi 0, %s183
    %s185 = sphi 0, %s183
    %s186 = sphi 0, %s185
    %s200 = sphi 0, %s186
    %s204 = sphi 0, %s204
    %s206 = sphi 0, %s204
    %s207 = sphi 0, %s206
    %s221 = sphi 0, %s207
    %s225 = sphi 0, %s225
    %s227 = sphi 0, %s225
    %s228 = sphi 0, %s227
    %s242 = sphi 0, %s228
    %s246 = sphi 0, %s246
    %s248 = sphi 0, %s246
    %s249 = sphi 0, %s248
    %s263 = sphi 0, %s249
    %s267 = sphi 0, %s267
    %s269 = sphi 0, %s267
    %s270 = sphi 0, %s269
    %s284 = sphi 0, %s270
    %s290 = sphi 0, %s292
    %s293 = sphi 0, %s290
    %s294 = sphi 0, %s293
    %s310 = sphi 0, %s294
  $region4: #{_lambda_.19} parent=0 // loop_header_branch
    %21 = sbr.rel (%p19) target = $region8
  $region5: #{_lambda_.19} parent=0 // loop_body
    %s23 = ssub.s32 %s18, 1
    %s24 = ssub.s32 %s18, 2
    %s25 = sadd.s32 %s18, 1
    %s26 = ssub.s32 %s18, %s25
    %p27 = scmp.eq.s32.totalorder %s26, 0
    %s29 = sadd.s32 %s28, 1
    %s30 = scalar_select %p27, %s28, %s29
    %p33 = pneg %p27
    %p34 = scmp.eq.s32.totalorder %s18, 1
    %p35 = por %p33, %p34
    %p36 = scmp.ne.s32.totalorder %s28, %s31
    %p37 = scmp.eq.s32.totalorder %s18, 0
    %p38 = por %p36, %p37
    %p39 = scmp.ne.s32.totalorder %s28, %s31
    %p40 = scmp.eq.s32.totalorder %s23, 1
    %p41 = por %p39, %p40
    %p42 = scmp.ne.s32.totalorder %s31, %s32
    %p43 = scmp.eq.s32.totalorder %s23, 0
    %p44 = por %p42, %p43
    %p45 = scmp.ne.s32.totalorder %s31, %s32
    %p46 = scmp.eq.s32.totalorder %s24, 1
    %p47 = por %p45, %p46
    %p49 = scmp.ne.s32.totalorder %s32, %s48
    %p50 = scmp.eq.s32.totalorder %s24, 0
    %p51 = por %p49, %p50
    %s52 = ssub.s32 %s18, %s25
    %p53 = scmp.eq.s32.totalorder %s52, 0
    %s55 = sadd.s32 %s54, 1
    %s56 = scalar_select %p53, %s54, %s55
    %p59 = pneg %p53
    %p60 = scmp.eq.s32.totalorder %s18, 1
    %p61 = por %p59, %p60
    %p62 = scmp.ne.s32.totalorder %s54, %s57
    %p63 = scmp.eq.s32.totalorder %s18, 0
    %p64 = por %p62, %p63
    %p65 = scmp.ne.s32.totalorder %s54, %s57
    %p66 = scmp.eq.s32.totalorder %s23, 1
    %p67 = por %p65, %p66
    %p68 = scmp.ne.s32.totalorder %s57, %s58
    %p69 = scmp.eq.s32.totalorder %s23, 0
    %p70 = por %p68, %p69
    %p71 = scmp.ne.s32.totalorder %s57, %s58
    %p72 = scmp.eq.s32.totalorder %s24, 1
    %p73 = por %p71, %p72
    %p75 = scmp.ne.s32.totalorder %s58, %s74
    %p76 = scmp.eq.s32.totalorder %s24, 0
    %p77 = por %p75, %p76
    %s79 = sadd.s32 %s78, 1
    %p82 = scmp.eq.s32.totalorder %s18, 1
    %p83 = scmp.ne.s32.totalorder %s78, %s80
    %p84 = scmp.eq.s32.totalorder %s18, 0
    %p85 = por %p83, %p84
    %p86 = scmp.ne.s32.totalorder %s78, %s80
    %p87 = scmp.eq.s32.totalorder %s23, 1
    %p88 = por %p86, %p87
    %p89 = scmp.ne.s32.totalorder %s80, %s81
    %p90 = scmp.eq.s32.totalorder %s23, 0
    %p91 = por %p89, %p90
    %p92 = scmp.ne.s32.totalorder %s80, %s81
    %p93 = scmp.eq.s32.totalorder %s24, 1
    %p94 = por %p92, %p93
    %p96 = scmp.ne.s32.totalorder %s81, %s95
    %p97 = scmp.eq.s32.totalorder %s24, 0
    %p98 = por %p96, %p97
    %s100 = sadd.s32 %s99, 1
    %p103 = scmp.eq.s32.totalorder %s18, 1
    %p104 = scmp.ne.s32.totalorder %s99, %s101
    %p105 = scmp.eq.s32.totalorder %s18, 0
    %p106 = por %p104, %p105
    %p107 = scmp.ne.s32.totalorder %s99, %s101
    %p108 = scmp.eq.s32.totalorder %s23, 1
    %p109 = por %p107, %p108
    %p110 = scmp.ne.s32.totalorder %s101, %s102
    %p111 = scmp.eq.s32.totalorder %s23, 0
    %p112 = por %p110, %p111
    %p113 = scmp.ne.s32.totalorder %s101, %s102
    %p114 = scmp.eq.s32.totalorder %s24, 1
    %p115 = por %p113, %p114
    %p117 = scmp.ne.s32.totalorder %s102, %s116
    %p118 = scmp.eq.s32.totalorder %s24, 0
    %p119 = por %p117, %p118
    %s121 = sadd.s32 %s120, 1
    %p124 = scmp.eq.s32.totalorder %s18, 1
    %p125 = scmp.ne.s32.totalorder %s120, %s122
    %p126 = scmp.eq.s32.totalorder %s18, 0
    %p127 = por %p125, %p126
    %p128 = scmp.ne.s32.totalorder %s120, %s122
    %p129 = scmp.eq.s32.totalorder %s23, 1
    %p130 = por %p128, %p129
    %p131 = scmp.ne.s32.totalorder %s122, %s123
    %p132 = scmp.eq.s32.totalorder %s23, 0
    %p133 = por %p131, %p132
    %p134 = scmp.ne.s32.totalorder %s122, %s123
    %p135 = scmp.eq.s32.totalorder %s24, 1
    %p136 = por %p134, %p135
    %p138 = scmp.ne.s32.totalorder %s123, %s137
    %p139 = scmp.eq.s32.totalorder %s24, 0
    %p140 = por %p138, %p139
    %s142 = sadd.s32 %s141, 1
    %p145 = scmp.eq.s32.totalorder %s18, 1
    %p146 = scmp.ne.s32.totalorder %s141, %s143
    %p147 = scmp.eq.s32.totalorder %s18, 0
    %p148 = por %p146, %p147
    %p149 = scmp.ne.s32.totalorder %s141, %s143
    %p150 = scmp.eq.s32.totalorder %s23, 1
    %p151 = por %p149, %p150
    %p152 = scmp.ne.s32.totalorder %s143, %s144
    %p153 = scmp.eq.s32.totalorder %s23, 0
    %p154 = por %p152, %p153
    %p155 = scmp.ne.s32.totalorder %s143, %s144
    %p156 = scmp.eq.s32.totalorder %s24, 1
    %p157 = por %p155, %p156
    %p159 = scmp.ne.s32.totalorder %s144, %s158
    %p160 = scmp.eq.s32.totalorder %s24, 0
    %p161 = por %p159, %p160
    %s163 = sadd.s32 %s162, 1
    %p166 = scmp.eq.s32.totalorder %s18, 1
    %p167 = scmp.ne.s32.totalorder %s162, %s164
    %p168 = scmp.eq.s32.totalorder %s18, 0
    %p169 = por %p167, %p168
    %p170 = scmp.ne.s32.totalorder %s162, %s164
    %p171 = scmp.eq.s32.totalorder %s23, 1
    %p172 = por %p170, %p171
    %p173 = scmp.ne.s32.totalorder %s164, %s165
    %p174 = scmp.eq.s32.totalorder %s23, 0
    %p175 = por %p173, %p174
    %p176 = scmp.ne.s32.totalorder %s164, %s165
    %p177 = scmp.eq.s32.totalorder %s24, 1
    %p178 = por %p176, %p177
    %p180 = scmp.ne.s32.totalorder %s165, %s179
    %p181 = scmp.eq.s32.totalorder %s24, 0
    %p182 = por %p180, %p181
    %s184 = sadd.s32 %s183, 1
    %p187 = scmp.eq.s32.totalorder %s18, 1
    %p188 = scmp.ne.s32.totalorder %s183, %s185
    %p189 = scmp.eq.s32.totalorder %s18, 0
    %p190 = por %p188, %p189
    %p191 = scmp.ne.s32.totalorder %s183, %s185
    %p192 = scmp.eq.s32.totalorder %s23, 1
    %p193 = por %p191, %p192
    %p194 = scmp.ne.s32.totalorder %s185, %s186
    %p195 = scmp.eq.s32.totalorder %s23, 0
    %p196 = por %p194, %p195
    %p197 = scmp.ne.s32.totalorder %s185, %s186
    %p198 = scmp.eq.s32.totalorder %s24, 1
    %p199 = por %p197, %p198
    %p201 = scmp.ne.s32.totalorder %s186, %s200
    %p202 = scmp.eq.s32.totalorder %s24, 0
    %p203 = por %p201, %p202
    %s205 = sadd.s32 %s204, 1
    %p208 = scmp.eq.s32.totalorder %s18, 1
    %p209 = scmp.ne.s32.totalorder %s204, %s206
    %p210 = scmp.eq.s32.totalorder %s18, 0
    %p211 = por %p209, %p210
    %p212 = scmp.ne.s32.totalorder %s204, %s206
    %p213 = scmp.eq.s32.totalorder %s23, 1
    %p214 = por %p212, %p213
    %p215 = scmp.ne.s32.totalorder %s206, %s207
    %p216 = scmp.eq.s32.totalorder %s23, 0
    %p217 = por %p215, %p216
    %p218 = scmp.ne.s32.totalorder %s206, %s207
    %p219 = scmp.eq.s32.totalorder %s24, 1
    %p220 = por %p218, %p219
    %p222 = scmp.ne.s32.totalorder %s207, %s221
    %p223 = scmp.eq.s32.totalorder %s24, 0
    %p224 = por %p222, %p223
    %s226 = sadd.s32 %s225, 1
    %p229 = scmp.eq.s32.totalorder %s18, 1
    %p230 = scmp.ne.s32.totalorder %s225, %s227
    %p231 = scmp.eq.s32.totalorder %s18, 0
    %p232 = por %p230, %p231
    %p233 = scmp.ne.s32.totalorder %s225, %s227
    %p234 = scmp.eq.s32.totalorder %s23, 1
    %p235 = por %p233, %p234
    %p236 = scmp.ne.s32.totalorder %s227, %s228
    %p237 = scmp.eq.s32.totalorder %s23, 0
    %p238 = por %p236, %p237
    %p239 = scmp.ne.s32.totalorder %s227, %s228
    %p240 = scmp.eq.s32.totalorder %s24, 1
    %p241 = por %p239, %p240
    %p243 = scmp.ne.s32.totalorder %s228, %s242
    %p244 = scmp.eq.s32.totalorder %s24, 0
    %p245 = por %p243, %p244
    %s247 = sadd.s32 %s246, 1
    %p250 = scmp.eq.s32.totalorder %s18, 1
    %p251 = scmp.ne.s32.totalorder %s246, %s248
    %p252 = scmp.eq.s32.totalorder %s18, 0
    %p253 = por %p251, %p252
    %p254 = scmp.ne.s32.totalorder %s246, %s248
    %p255 = scmp.eq.s32.totalorder %s23, 1
    %p256 = por %p254, %p255
    %p257 = scmp.ne.s32.totalorder %s248, %s249
    %p258 = scmp.eq.s32.totalorder %s23, 0
    %p259 = por %p257, %p258
    %p260 = scmp.ne.s32.totalorder %s248, %s249
    %p261 = scmp.eq.s32.totalorder %s24, 1
    %p262 = por %p260, %p261
    %p264 = scmp.ne.s32.totalorder %s249, %s263
    %p265 = scmp.eq.s32.totalorder %s24, 0
    %p266 = por %p264, %p265
    %s268 = sadd.s32 %s267, 1
    %p271 = scmp.eq.s32.totalorder %s18, 1
    %p272 = scmp.ne.s32.totalorder %s267, %s269
    %p273 = scmp.eq.s32.totalorder %s18, 0
    %p274 = por %p272, %p273
    %p275 = scmp.ne.s32.totalorder %s267, %s269
    %p276 = scmp.eq.s32.totalorder %s23, 1
    %p277 = por %p275, %p276
    %p278 = scmp.ne.s32.totalorder %s269, %s270
    %p279 = scmp.eq.s32.totalorder %s23, 0
    %p280 = por %p278, %p279
    %p281 = scmp.ne.s32.totalorder %s269, %s270
    %p282 = scmp.eq.s32.totalorder %s24, 1
    %p283 = por %p281, %p282
    %p285 = scmp.ne.s32.totalorder %s270, %s284
    %p286 = scmp.eq.s32.totalorder %s24, 0
    %p287 = por %p285, %p286
    %s288 = ssub.s32 %s18, %s25
    %p289 = scmp.eq.s32.totalorder %s288, 0
    %s291 = sadd.s32 %s290, 1
    %s292 = scalar_select %p289, %s290, %s291
    %p295 = pneg %p289
    %p296 = scmp.eq.s32.totalorder %s18, 1
    %p297 = por %p295, %p296
    %p298 = scmp.ne.s32.totalorder %s290, %s293
    %p299 = scmp.eq.s32.totalorder %s18, 0
    %p300 = por %p298, %p299
    %p301 = scmp.ne.s32.totalorder %s290, %s293
    %p302 = scmp.eq.s32.totalorder %s23, 1
    %p303 = por %p301, %p302
    %p304 = scmp.ne.s32.totalorder %s293, %s294
    %p305 = scmp.eq.s32.totalorder %s23, 0
    %p306 = por %p304, %p305
    %p307 = scmp.ne.s32.totalorder %s293, %s294
    %p308 = scmp.eq.s32.totalorder %s24, 1
    %p309 = por %p307, %p308
    %p311 = scmp.ne.s32.totalorder %s294, %s310
    %p312 = scmp.eq.s32.totalorder %s24, 0
    %p313 = por %p311, %p312
    %p314 = scmp.le.s32.totalorder 1, %s18
    %p315 = scmp.lt.s32.totalorder %s18, 3
    %p316 = pnand %p314, %p315
    %p317 = pneg %p316
    // Predicated region
    $region9: #{_lambda_.19} parent=5 // pred_check
      _
    $region10: #{_lambda_.19} parent=5 // pred_check_branch
      %319 = sbr.rel (%p316) target = $region12
    $region11: #{_lambda_.19} parent=5 // pred_region
      %s320 = ssub.s32 %s18, 1
      // Predicated region
      $region13: #{_lambda_.19} parent=11 // pred_check
        %p321 = pneg %p91
      $region14: #{_lambda_.19} parent=11 // pred_check_branch
        %323 = sbr.rel (%p321) target = $region16
      $region15: #{_lambda_.19} parent=11 // pred_region
        _
      $region16: #{_lambda_.19} parent=11 // pred_fallthru
        _
      // Predicated region
      $region17: #{_lambda_.19} parent=11 // pred_check
        %p324 = pneg %p112
      $region18: #{_lambda_.19} parent=11 // pred_check_branch
        %326 = sbr.rel (%p324) target = $region20
      $region19: #{_lambda_.19} parent=11 // pred_region
        _
      $region20: #{_lambda_.19} parent=11 // pred_fallthru
        _
      // Predicated region
      $region21: #{_lambda_.19} parent=11 // pred_check
        %p327 = pneg %p133
      $region22: #{_lambda_.19} parent=11 // pred_check_branch
        %329 = sbr.rel (%p327) target = $region24
      $region23: #{_lambda_.19} parent=11 // pred_region
        _
      $region24: #{_lambda_.19} parent=11 // pred_fallthru
        _
      // Predicated region
      $region25: #{_lambda_.19} parent=11 // pred_check
        %p330 = pneg %p154
      $region26: #{_lambda_.19} parent=11 // pred_check_branch
        %332 = sbr.rel (%p330) target = $region28
      $region27: #{_lambda_.19} parent=11 // pred_region
        _
      $region28: #{_lambda_.19} parent=11 // pred_fallthru
        _
      // Predicated region
      $region29: #{_lambda_.19} parent=11 // pred_check
        %p333 = pneg %p175
      $region30: #{_lambda_.19} parent=11 // pred_check_branch
        %335 = sbr.rel (%p333) target = $region32
      $region31: #{_lambda_.19} parent=11 // pred_region
        _
      $region32: #{_lambda_.19} parent=11 // pred_fallthru
        _
      // Predicated region
      $region33: #{_lambda_.19} parent=11 // pred_check
        %p336 = pneg %p196
      $region34: #{_lambda_.19} parent=11 // pred_check_branch
        %338 = sbr.rel (%p336) target = $region36
      $region35: #{_lambda_.19} parent=11 // pred_region
        _
      $region36: #{_lambda_.19} parent=11 // pred_fallthru
        _
      // Predicated region
      $region37: #{_lambda_.19} parent=11 // pred_check
        %p339 = pneg %p217
      $region38: #{_lambda_.19} parent=11 // pred_check_branch
        %341 = sbr.rel (%p339) target = $region40
      $region39: #{_lambda_.19} parent=11 // pred_region
        _
      $region40: #{_lambda_.19} parent=11 // pred_fallthru
        _
      // Predicated region
      $region41: #{_lambda_.19} parent=11 // pred_check
        %p342 = pneg %p238
      $region42: #{_lambda_.19} parent=11 // pred_check_branch
        %344 = sbr.rel (%p342) target = $region44
      $region43: #{_lambda_.19} parent=11 // pred_region
        _
      $region44: #{_lambda_.19} parent=11 // pred_fallthru
        _
      // Predicated region
      $region45: #{_lambda_.19} parent=11 // pred_check
        %p345 = pneg %p259
      $region46: #{_lambda_.19} parent=11 // pred_check_branch
        %347 = sbr.rel (%p345) target = $region48
      $region47: #{_lambda_.19} parent=11 // pred_region
        _
      $region48: #{_lambda_.19} parent=11 // pred_fallthru
        _
      // Predicated region
      $region49: #{_lambda_.19} parent=11 // pred_check
        %p348 = pneg %p280
      $region50: #{_lambda_.19} parent=11 // pred_check_branch
        %350 = sbr.rel (%p348) target = $region52
      $region51: #{_lambda_.19} parent=11 // pred_region
        _
      $region52: #{_lambda_.19} parent=11 // pred_fallthru
        _
    $region12: #{_lambda_.19} parent=5 // pred_fallthru
      _
    %p351 = scmp.lt.s32.totalorder %s18, 2
    // Predicated region
    $region53: #{_lambda_.19} parent=5 // pred_check
      %p352 = pneg %p351
    $region54: #{_lambda_.19} parent=5 // pred_check_branch
      %354 = sbr.rel (%p352) target = $region56
    $region55: #{_lambda_.19} parent=5 // pred_region
      // Predicated region
      $region57: #{_lambda_.19} parent=55 // pred_check
        %p355 = pneg %p38
      $region58: #{_lambda_.19} parent=55 // pred_check_branch
        %357 = sbr.rel (%p355) target = $region60
      $region59: #{_lambda_.19} parent=55 // pred_region
        %p358 = scmp.lt.s32.totalorder %s18, 1
        %s359 = scalar_select %p358, %s18, 1
        %s360 = smul.addr %s359, 8
        %s361 = scalar_lea.vmem %s0, %s360
      $region60: #{_lambda_.19} parent=55 // pred_fallthru
        _
      // Predicated region
      $region61: #{_lambda_.19} parent=55 // pred_check
        %p362 = pneg %p64
      $region62: #{_lambda_.19} parent=55 // pred_check_branch
        %364 = sbr.rel (%p362) target = $region64
      $region63: #{_lambda_.19} parent=55 // pred_region
        %p365 = scmp.lt.s32.totalorder %s18, 1
        %s366 = scalar_select %p365, %s18, 1
        %s367 = smul.addr %s366, 8
        %s368 = scalar_lea.vmem %s1, %s367
      $region64: #{_lambda_.19} parent=55 // pred_fallthru
        _
    $region56: #{_lambda_.19} parent=5 // pred_fallthru
      _
    %p369 = scmp.le.s32.totalorder 1, %s18
    %p370 = scmp.lt.s32.totalorder %s18, 3
    %p371 = pnand %p369, %p370
    %p372 = pneg %p371
    // Predicated region
    $region65: #{_lambda_.19} parent=5 // pred_check
      _
    $region66: #{_lambda_.19} parent=5 // pred_check_branch
      %374 = sbr.rel (%p371) target = $region68
    $region67: #{_lambda_.19} parent=5 // pred_region
      %s375 = ssub.s32 %s18, 1
      %p376 = scmp.lt.s32.totalorder %s23, 1
      %s377 = scalar_select %p376, %s23, 1
      %s378 = smul.addr %s377, 8
      %s379 = scalar_lea.vmem %s0, %s378
      %p380 = pneg %p44
      %p381 = pneg %p41
      %p382 = scmp.lt.s32.totalorder %s23, 1
      %s383 = scalar_select %p382, %s23, 1
      %s384 = smul.addr %s383, 8
      %s385 = scalar_lea.vmem %s1, %s384
      %p386 = pneg %p70
      %p387 = pneg %p67
      %p388 = pneg %p91
      %p389 = pneg %p88
      %p390 = pneg %p112
      %p391 = pneg %p109
      %p392 = pneg %p133
      %p393 = pneg %p130
      %p394 = pneg %p154
      %p395 = pneg %p151
      %p396 = pneg %p175
      %p397 = pneg %p172
      %p398 = pneg %p196
      %p399 = pneg %p193
      %p400 = pneg %p217
      %p401 = pneg %p214
      %p402 = pneg %p238
      %p403 = pneg %p235
      %p404 = pneg %p259
      %p405 = pneg %p256
      %p406 = pneg %p280
      %p407 = pneg %p277
      %p408 = pneg %p306
      %p409 = pneg %p303
      %p410 = scmp.lt.s32.totalorder %s23, 1
      %s411 = scalar_select %p410, %s23, 1
      %s412 = smul.addr %s411, 8
      %s413 = scalar_lea.vmem %s12, %s412
      %p414 = scmp.lt.s32.totalorder %s23, 1
      %s415 = scalar_select %p414, %s23, 1
      %s416 = smul.addr %s415, 8
      %s417 = scalar_lea.vmem %s0, %s416
      %p418 = scmp.lt.s32.totalorder %s23, 1
      %s419 = scalar_select %p418, %s23, 1
      %s420 = smul.addr %s419, 8
      %s421 = scalar_lea.vmem %s1, %s420
      %p422 = scmp.lt.s32.totalorder %s23, 1
      %s423 = scalar_select %p422, %s23, 1
      %s424 = smul.addr %s423, 8
      %s425 = scalar_lea.vmem %s12, %s424
      %v427 = vld [vmem:[%s417] sm:$0xff]
      %v428 = vld [vmem:[%s2] sm:$0x1]
      %v429 = vld [vmem:[%s3] sm:$0x1]
      %vm430 = vcmask 261120
      %v431 = vsel %vm430, %v427, 0.0
      %432 = vadd.xlane.f32.xlu0 %v431
      %v433 = vpop.xlane.xlu0 %432
      %v434 = vrcp.pop 32.0
      %v435 = vmul.f32 %v433, %v434
      %v436 = vsub.f32 %v427, %v435
      %v437 = vmul.f32 %v436, %v436
      %v438 = vsel %vm430, %v437, 0.0
      %439 = vadd.xlane.f32.xlu0 %v438
      %v440 = vpop.xlane.xlu0 %439
      %v441 = vmul.f32 %v440, %v434
      %v442 = vadd.f32 %v441, 1e-06
      %v443 = vrsqrt.pop %v442
      %v444 = vmul.f32 %v436, %v443
      %v446 = vlaneseq
      %v447 = vshrl.u32 %v446, 7
      %v448 = vsub.s32 0, %v447
      %v449 = vrot.slane %v428, %v448
      %v451 = vmul.f32 %v444, %v449
      %v453 = vlaneseq
      %v454 = vshrl.u32 %v453, 7
      %v455 = vsub.s32 0, %v454
      %v456 = vrot.slane %v429, %v455
      %v458 = vadd.f32 %v451, %v456
      %v459 = vld [vmem:[%s421] sm:$0xff]
      %v460 = vpack.c.bf16 %v458, %v458
      %v461 = vld [vmem:[%s4] sm:$0xf]
      %v462 = vld [vmem:[%s4 + $0x4] sm:$0xf]
      %v463 = vld [vmem:[%s4 + $0x8] sm:$0xf]
      %v464 = vld [vmem:[%s4 + $0xc] sm:$0xf]
      %v465 = vld [vmem:[%s5] sm:$0x1]
      %v467 = vlaneseq
      %v468 = vshrl.u32 %v467, 7
      %v469 = vsub.s32 0, %v468
      %v470 = vrot.slane %v465, %v469
      %v476 = vunpack.c.l.b16 %v461
      %v477 = vunpack.c.l.b16 %v462
      %v478 = vunpack.c.l.b16 %v463
      %v479 = vunpack.c.l.b16 %v464
      %v480 = vpack.c.b16 %v477, %v476
      %v481 = vpack.c.b16 %v479, %v478
      %v485 = vsel %vm430, %v460, 0
      %487 = vmatprep.subr.bf16.mxu0 0
      %488 = vmatpush1.bf16.msra.mxu0 0
      %489 = vmatprep.subr.bf16.mxu0 0
      %490 = vmatpush1.bf16.msra.mxu0 0
      %491 = vmatprep.subr.bf16.mxu0 0
      %492 = vmatpush1.bf16.msra.mxu0 0
      %493 = vmatprep.subr.bf16.mxu0 0
      %494 = vmatpush1.bf16.msra.mxu0 0
      %495 = vmatprep.subr.bf16.mxu0 0
      %496 = vmatpush1.bf16.msra.mxu0 0
      %497 = vmatprep.subr.bf16.mxu0 0
      %498 = vmatpush1.bf16.msra.mxu0 0
      %499 = vmatprep.subr.bf16.mxu0 0
      %500 = vmatpush1.bf16.msra.mxu0 %v481
      %501 = vmatprep.subr.bf16.mxu0 0
      %502 = vmatpush1.bf16.msra.mxu0 %v480
      %503 = vmatprep.subr.bf16.mxu0 0
      %504 = vmatpush2.bf16.msra.mxu0 0
      %505 = vmatprep.subr.bf16.mxu0 0
      %506 = vmatpush2.bf16.msra.mxu0 0
      %507 = vmatprep.subr.bf16.mxu0 0
      %508 = vmatpush2.bf16.msra.mxu0 0
      %509 = vmatprep.subr.bf16.mxu0 0
      %510 = vmatpush2.bf16.msra.mxu0 0
      %511 = vmatprep.subr.bf16.mxu0 0
      %512 = vmatpush2.bf16.msra.mxu0 0
      %513 = vmatprep.subr.bf16.mxu0 0
      %514 = vmatpush2.bf16.msra.mxu0 0
      %515 = vmatprep.subr.bf16.mxu0 0
      %516 = vmatpush2.bf16.msra.mxu0 0
      %517 = vmatprep.subr.bf16.mxu0 0
      %518 = vmatpush2.bf16.msra.mxu0 0
      %519 = vmatprep.mubr.bf16.mxu0 0
      %520 = vmatmul.mubr.bf16.gmra.mxu0 %v485
      %v521 = vpop.f32.mrf.mxu0
      %v522 = vadd.f32 %v470, %v521
      %v523 = vpop.f32.mrf.mxu0
      %v524 = vpop.f32.mrf.mxu0
      %v525 = vpop.f32.mrf.mxu0
      %526 = vdwg.mxu0
      %v527 = vld [vmem:[%s6] sm:$0xf]
      %v528 = vld [vmem:[%s6 + $0x4] sm:$0xf]
      %v529 = vld [vmem:[%s6 + $0x8] sm:$0xf]
      %v530 = vld [vmem:[%s6 + $0xc] sm:$0xf]
      %v531 = vld [vmem:[%s7] sm:$0x1]
      %v533 = vlaneseq
      %v534 = vshrl.u32 %v533, 7
      %v535 = vsub.s32 0, %v534
      %v536 = vrot.slane %v531, %v535
      %v542 = vunpack.c.l.b16 %v527
      %v543 = vunpack.c.l.b16 %v528
      %v544 = vunpack.c.l.b16 %v529
      %v545 = vunpack.c.l.b16 %v530
      %v546 = vpack.c.b16 %v543, %v542
      %v547 = vpack.c.b16 %v545, %v544
      %550 = vmatprep.subr.bf16.mxu0 0
      %551 = vmatpush1.bf16.msra.mxu0 0
      %552 = vmatprep.subr.bf16.mxu0 0
      %553 = vmatpush1.bf16.msra.mxu0 0
      %554 = vmatprep.subr.bf16.mxu0 0
      %555 = vmatpush1.bf16.msra.mxu0 0
      %556 = vmatprep.subr.bf16.mxu0 0
      %557 = vmatpush1.bf16.msra.mxu0 0
      %558 = vmatprep.subr.bf16.mxu0 0
      %559 = vmatpush1.bf16.msra.mxu0 0
      %560 = vmatprep.subr.bf16.mxu0 0
      %561 = vmatpush1.bf16.msra.mxu0 0
      %562 = vmatprep.subr.bf16.mxu0 0
      %563 = vmatpush1.bf16.msra.mxu0 %v547
      %564 = vmatprep.subr.bf16.mxu0 0
      %565 = vmatpush1.bf16.msra.mxu0 %v546
      %566 = vmatprep.subr.bf16.mxu0 0
      %567 = vmatpush2.bf16.msra.mxu0 0
      %568 = vmatprep.subr.bf16.mxu0 0
      %569 = vmatpush2.bf16.msra.mxu0 0
      %570 = vmatprep.subr.bf16.mxu0 0
      %571 = vmatpush2.bf16.msra.mxu0 0
      %572 = vmatprep.subr.bf16.mxu0 0
      %573 = vmatpush2.bf16.msra.mxu0 0
      %574 = vmatprep.subr.bf16.mxu0 0
      %575 = vmatpush2.bf16.msra.mxu0 0
      %576 = vmatprep.subr.bf16.mxu0 0
      %577 = vmatpush2.bf16.msra.mxu0 0
      %578 = vmatprep.subr.bf16.mxu0 0
      %579 = vmatpush2.bf16.msra.mxu0 0
      %580 = vmatprep.subr.bf16.mxu0 0
      %581 = vmatpush2.bf16.msra.mxu0 0
      %582 = vmatprep.mubr.bf16.mxu0 0
      %583 = vmatmul.mubr.bf16.gmra.mxu0 %v485
      %v584 = vpop.f32.mrf.mxu0
      %v585 = vadd.f32 %v536, %v584
      %v586 = vpop.f32.mrf.mxu0
      %v587 = vpop.f32.mrf.mxu0
      %v588 = vpop.f32.mrf.mxu0
      %589 = vdwg.mxu0
      %v590 = vld [vmem:[%s8] sm:$0xf]
      %v591 = vld [vmem:[%s8 + $0x4] sm:$0xf]
      %v592 = vld [vmem:[%s8 + $0x8] sm:$0xf]
      %v593 = vld [vmem:[%s8 + $0xc] sm:$0xf]
      %v594 = vld [vmem:[%s9] sm:$0x1]
      %v596 = vlaneseq
      %v597 = vshrl.u32 %v596, 7
      %v598 = vsub.s32 0, %v597
      %v599 = vrot.slane %v594, %v598
      %v605 = vunpack.c.l.b16 %v590
      %v606 = vunpack.c.l.b16 %v591
      %v607 = vunpack.c.l.b16 %v592
      %v608 = vunpack.c.l.b16 %v593
      %v609 = vpack.c.b16 %v606, %v605
      %v610 = vpack.c.b16 %v608, %v607
      %613 = vmatprep.subr.bf16.mxu0 0
      %614 = vmatpush1.bf16.msra.mxu0 0
      %615 = vmatprep.subr.bf16.mxu0 0
      %616 = vmatpush1.bf16.msra.mxu0 0
      %617 = vmatprep.subr.bf16.mxu0 0
      %618 = vmatpush1.bf16.msra.mxu0 0
      %619 = vmatprep.subr.bf16.mxu0 0
      %620 = vmatpush1.bf16.msra.mxu0 0
      %621 = vmatprep.subr.bf16.mxu0 0
      %622 = vmatpush1.bf16.msra.mxu0 0
      %623 = vmatprep.subr.bf16.mxu0 0
      %624 = vmatpush1.bf16.msra.mxu0 0
      %625 = vmatprep.subr.bf16.mxu0 0
      %626 = vmatpush1.bf16.msra.mxu0 %v610
      %627 = vmatprep.subr.bf16.mxu0 0
      %628 = vmatpush1.bf16.msra.mxu0 %v609
      %629 = vmatprep.subr.bf16.mxu0 0
      %630 = vmatpush2.bf16.msra.mxu0 0
      %631 = vmatprep.subr.bf16.mxu0 0
      %632 = vmatpush2.bf16.msra.mxu0 0
      %633 = vmatprep.subr.bf16.mxu0 0
      %634 = vmatpush2.bf16.msra.mxu0 0
      %635 = vmatprep.subr.bf16.mxu0 0
      %636 = vmatpush2.bf16.msra.mxu0 0
      %637 = vmatprep.subr.bf16.mxu0 0
      %638 = vmatpush2.bf16.msra.mxu0 0
      %639 = vmatprep.subr.bf16.mxu0 0
      %640 = vmatpush2.bf16.msra.mxu0 0
      %641 = vmatprep.subr.bf16.mxu0 0
      %642 = vmatpush2.bf16.msra.mxu0 0
      %643 = vmatprep.subr.bf16.mxu0 0
      %644 = vmatpush2.bf16.msra.mxu0 0
      %645 = vmatprep.mubr.bf16.mxu0 0
      %646 = vmatmul.mubr.bf16.gmra.mxu0 %v485
      %v647 = vpop.f32.mrf.mxu0
      %v648 = vadd.f32 %v599, %v647
      %v649 = vpop.f32.mrf.mxu0
      %v650 = vpop.f32.mrf.mxu0
      %v651 = vpop.f32.mrf.mxu0
      %652 = vdwg.mxu0
      %v653 = vpack.c.bf16 %v522, %v522
      %v654 = vpack.c.bf16 %v585, %v585
      %vm655 = vcmask 64512
      %v657 = vsel %vm655, %v653, 0
      %v660 = vsel %vm655, %v654, 0
      %662 = vmatprep.subr.bf16.mxu0 0
      %663 = vmatpush1.bf16.xpose.msra.mxu0 0
      %664 = vmatprep.subr.bf16.mxu0 0
      %665 = vmatpush1.bf16.xpose.msra.mxu0 0
      %666 = vmatprep.subr.bf16.mxu0 0
      %667 = vmatpush1.bf16.xpose.msra.mxu0 0
      %668 = vmatprep.subr.bf16.mxu0 0
      %669 = vmatpush1.bf16.xpose.msra.mxu0 0
      %670 = vmatprep.subr.bf16.mxu0 0
      %671 = vmatpush1.bf16.xpose.msra.mxu0 0
      %672 = vmatprep.subr.bf16.mxu0 0
      %673 = vmatpush1.bf16.xpose.msra.mxu0 0
      %674 = vmatprep.subr.bf16.mxu0 0
      %675 = vmatpush1.bf16.xpose.msra.mxu0 0
      %676 = vmatprep.subr.bf16.mxu0 0
      %677 = vmatpush1.bf16.xpose.msra.mxu0 %v660
      %678 = vmatprep.subr.bf16.mxu0 0
      %679 = vmatpush2.bf16.xpose.msra.mxu0 0
      %680 = vmatprep.subr.bf16.mxu0 0
      %681 = vmatpush2.bf16.xpose.msra.mxu0 0
      %682 = vmatprep.subr.bf16.mxu0 0
      %683 = vmatpush2.bf16.xpose.msra.mxu0 0
      %684 = vmatprep.subr.bf16.mxu0 0
      %685 = vmatpush2.bf16.xpose.msra.mxu0 0
      %686 = vmatprep.subr.bf16.mxu0 0
      %687 = vmatpush2.bf16.xpose.msra.mxu0 0
      %688 = vmatprep.subr.bf16.mxu0 0
      %689 = vmatpush2.bf16.xpose.msra.mxu0 0
      %690 = vmatprep.subr.bf16.mxu0 0
      %691 = vmatpush2.bf16.xpose.msra.mxu0 0
      %692 = vmatprep.subr.bf16.mxu0 0
      %693 = vmatpush2.bf16.xpose.msra.mxu0 0
      %694 = vmatprep.mubr.bf16.mxu0 0
      %695 = vmatmul.mubr.bf16.gmra.mxu0 %v657
      %v696 = vpop.f32.mrf.mxu0
      %v697 = vadd.f32 0.0, %v696
      %v698 = vpop.f32.mrf.mxu0
      %v699 = vpop.f32.mrf.mxu0
      %v700 = vpop.f32.mrf.mxu0
      %701 = vdwg.mxu0
      %v702 = vmul.f32 %v697, 0.35355338
      %v703 = vadd.f32 %v702, %v459
      %v704 = vsel %vm655, %v703, -inf
      %705 = vmax.xlane.f32.xlu0 %v704
      %v706 = vpop.xlane.xlu0 %705
      %v707 = vsub.f32 %v703, %v706
      %v708 = vmul.f32 %v707, 1.442695
      %v709 = vpow.pop %v708
      %v710 = vsel %vm655, %v709, 0.0
      %711 = vadd.xlane.f32.xlu0 %v710
      %v712 = vpop.xlane.xlu0 %711
      %v713 = vrcp.pop %v712
      %v714 = vmul.f32 %v709, %v713
      %v715 = vpack.c.bf16 %v714, %v714
      %v716 = vpack.c.bf16 %v648, %v648
      %v718 = vsel %vm655, %v715, 0
      %vm720 = vcmask 1043456
      %v722 = vsel %vm720, %v716, 0
      %724 = vmatprep.subr.bf16.mxu0 0
      %725 = vmatpush1.bf16.msra.mxu0 0
      %726 = vmatprep.subr.bf16.mxu0 0
      %727 = vmatpush1.bf16.msra.mxu0 0
      %728 = vmatprep.subr.bf16.mxu0 0
      %729 = vmatpush1.bf16.msra.mxu0 0
      %730 = vmatprep.subr.bf16.mxu0 0
      %731 = vmatpush1.bf16.msra.mxu0 0
      %732 = vmatprep.subr.bf16.mxu0 0
      %733 = vmatpush1.bf16.msra.mxu0 0
      %734 = vmatprep.subr.bf16.mxu0 0
      %735 = vmatpush1.bf16.msra.mxu0 0
      %736 = vmatprep.subr.bf16.mxu0 0
      %737 = vmatpush1.bf16.msra.mxu0 0
      %738 = vmatprep.subr.bf16.mxu0 0
      %739 = vmatpush1.bf16.msra.mxu0 %v722
      %740 = vmatprep.subr.bf16.mxu0 0
      %741 = vmatpush2.bf16.msra.mxu0 0
      %742 = vmatprep.subr.bf16.mxu0 0
      %743 = vmatpush2.bf16.msra.mxu0 0
      %744 = vmatprep.subr.bf16.mxu0 0
      %745 = vmatpush2.bf16.msra.mxu0 0
      %746 = vmatprep.subr.bf16.mxu0 0
      %747 = vmatpush2.bf16.msra.mxu0 0
      %748 = vmatprep.subr.bf16.mxu0 0
      %749 = vmatpush2.bf16.msra.mxu0 0
      %750 = vmatprep.subr.bf16.mxu0 0
      %751 = vmatpush2.bf16.msra.mxu0 0
      %752 = vmatprep.subr.bf16.mxu0 0
      %753 = vmatpush2.bf16.msra.mxu0 0
      %754 = vmatprep.subr.bf16.mxu0 0
      %755 = vmatpush2.bf16.msra.mxu0 0
      %756 = vmatprep.mubr.bf16.mxu0 0
      %757 = vmatmul.mubr.bf16.gmra.mxu0 %v718
      %v758 = vpop.f32.mrf.mxu0
      %v759 = vadd.f32 0.0, %v758
      %v760 = vpop.f32.mrf.mxu0
      %v761 = vpop.f32.mrf.mxu0
      %v762 = vpop.f32.mrf.mxu0
      %763 = vdwg.mxu0
      %v764 = vpack.c.bf16 %v759, %v759
      %v765 = vld [vmem:[%s10] sm:$0xf]
      %s766 = scalar_lea.vmem %s4, 16
      %v767 = vld [vmem:[%s766] sm:$0xf]
      %v768 = vld [vmem:[%s766 + $0x4] sm:$0xf]
      %v769 = vld [vmem:[%s766 + $0x8] sm:$0xf]
      %v770 = vld [vmem:[%s766 + $0xc] sm:$0xf]
      %s771 = scalar_lea.vmem %s5, 1
      %v772 = vld [vmem:[%s771] sm:$0x1]
      %v774 = vlaneseq
      %v775 = vshrl.u32 %v774, 7
      %v776 = vsub.s32 0, %v775
      %v777 = vrot.slane %v772, %v776
      %v783 = vunpack.c.l.b16 %v767
      %v784 = vunpack.c.l.b16 %v768
      %v785 = vunpack.c.l.b16 %v769
      %v786 = vunpack.c.l.b16 %v770
      %v787 = vpack.c.b16 %v784, %v783
      %v788 = vpack.c.b16 %v786, %v785
      %791 = vmatprep.subr.bf16.mxu0 0
      %792 = vmatpush1.bf16.msra.mxu0 0
      %793 = vmatprep.subr.bf16.mxu0 0
      %794 = vmatpush1.bf16.msra.mxu0 0
      %795 = vmatprep.subr.bf16.mxu0 0
      %796 = vmatpush1.bf16.msra.mxu0 0
      %797 = vmatprep.subr.bf16.mxu0 0
      %798 = vmatpush1.bf16.msra.mxu0 0
      %799 = vmatprep.subr.bf16.mxu0 0
      %800 = vmatpush1.bf16.msra.mxu0 0
      %801 = vmatprep.subr.bf16.mxu0 0
      %802 = vmatpush1.bf16.msra.mxu0 0
      %803 = vmatprep.subr.bf16.mxu0 0
      %804 = vmatpush1.bf16.msra.mxu0 %v788
      %805 = vmatprep.subr.bf16.mxu0 0
      %806 = vmatpush1.bf16.msra.mxu0 %v787
      %807 = vmatprep.subr.bf16.mxu0 0
      %808 = vmatpush2.bf16.msra.mxu0 0
      %809 = vmatprep.subr.bf16.mxu0 0
      %810 = vmatpush2.bf16.msra.mxu0 0
      %811 = vmatprep.subr.bf16.mxu0 0
      %812 = vmatpush2.bf16.msra.mxu0 0
      %813 = vmatprep.subr.bf16.mxu0 0
      %814 = vmatpush2.bf16.msra.mxu0 0
      %815 = vmatprep.subr.bf16.mxu0 0
      %816 = vmatpush2.bf16.msra.mxu0 0
      %817 = vmatprep.subr.bf16.mxu0 0
      %818 = vmatpush2.bf16.msra.mxu0 0
      %819 = vmatprep.subr.bf16.mxu0 0
      %820 = vmatpush2.bf16.msra.mxu0 0
      %821 = vmatprep.subr.bf16.mxu0 0
      %822 = vmatpush2.bf16.msra.mxu0 0
      %823 = vmatprep.mubr.bf16.mxu0 0
      %824 = vmatmul.mubr.bf16.gmra.mxu0 %v485
      %v825 = vpop.f32.mrf.mxu0
      %v826 = vadd.f32 %v777, %v825
      %v827 = vpop.f32.mrf.mxu0
      %v828 = vpop.f32.mrf.mxu0
      %v829 = vpop.f32.mrf.mxu0
      %830 = vdwg.mxu0
      %s831 = scalar_lea.vmem %s6, 16
      %v832 = vld [vmem:[%s831] sm:$0xf]
      %v833 = vld [vmem:[%s831 + $0x4] sm:$0xf]
      %v834 = vld [vmem:[%s831 + $0x8] sm:$0xf]
      %v835 = vld [vmem:[%s831 + $0xc] sm:$0xf]
      %s836 = scalar_lea.vmem %s7, 1
      %v837 = vld [vmem:[%s836] sm:$0x1]
      %v839 = vlaneseq
      %v840 = vshrl.u32 %v839, 7
      %v841 = vsub.s32 0, %v840
      %v842 = vrot.slane %v837, %v841
      %v848 = vunpack.c.l.b16 %v832
      %v849 = vunpack.c.l.b16 %v833
      %v850 = vunpack.c.l.b16 %v834
      %v851 = vunpack.c.l.b16 %v835
      %v852 = vpack.c.b16 %v849, %v848
      %v853 = vpack.c.b16 %v851, %v850
      %856 = vmatprep.subr.bf16.mxu0 0
      %857 = vmatpush1.bf16.msra.mxu0 0
      %858 = vmatprep.subr.bf16.mxu0 0
      %859 = vmatpush1.bf16.msra.mxu0 0
      %860 = vmatprep.subr.bf16.mxu0 0
      %861 = vmatpush1.bf16.msra.mxu0 0
      %862 = vmatprep.subr.bf16.mxu0 0
      %863 = vmatpush1.bf16.msra.mxu0 0
      %864 = vmatprep.subr.bf16.mxu0 0
      %865 = vmatpush1.bf16.msra.mxu0 0
      %866 = vmatprep.subr.bf16.mxu0 0
      %867 = vmatpush1.bf16.msra.mxu0 0
      %868 = vmatprep.subr.bf16.mxu0 0
      %869 = vmatpush1.bf16.msra.mxu0 %v853
      %870 = vmatprep.subr.bf16.mxu0 0
      %871 = vmatpush1.bf16.msra.mxu0 %v852
      %872 = vmatprep.subr.bf16.mxu0 0
      %873 = vmatpush2.bf16.msra.mxu0 0
      %874 = vmatprep.subr.bf16.mxu0 0
      %875 = vmatpush2.bf16.msra.mxu0 0
      %876 = vmatprep.subr.bf16.mxu0 0
      %877 = vmatpush2.bf16.msra.mxu0 0
      %878 = vmatprep.subr.bf16.mxu0 0
      %879 = vmatpush2.bf16.msra.mxu0 0
      %880 = vmatprep.subr.bf16.mxu0 0
      %881 = vmatpush2.bf16.msra.mxu0 0
      %882 = vmatprep.subr.bf16.mxu0 0
      %883 = vmatpush2.bf16.msra.mxu0 0
      %884 = vmatprep.subr.bf16.mxu0 0
      %885 = vmatpush2.bf16.msra.mxu0 0
      %886 = vmatprep.subr.bf16.mxu0 0
      %887 = vmatpush2.bf16.msra.mxu0 0
      %888 = vmatprep.mubr.bf16.mxu0 0
      %889 = vmatmul.mubr.bf16.gmra.mxu0 %v485
      %v890 = vpop.f32.mrf.mxu0
      %v891 = vadd.f32 %v842, %v890
      %v892 = vpop.f32.mrf.mxu0
      %v893 = vpop.f32.mrf.mxu0
      %v894 = vpop.f32.mrf.mxu0
      %895 = vdwg.mxu0
      %s896 = scalar_lea.vmem %s8, 16
      %v897 = vld [vmem:[%s896] sm:$0xf]
      %v898 = vld [vmem:[%s896 + $0x4] sm:$0xf]
      %v899 = vld [vmem:[%s896 + $0x8] sm:$0xf]
      %v900 = vld [vmem:[%s896 + $0xc] sm:$0xf]
      %s901 = scalar_lea.vmem %s9, 1
      %v902 = vld [vmem:[%s901] sm:$0x1]
      %v904 = vlaneseq
      %v905 = vshrl.u32 %v904, 7
      %v906 = vsub.s32 0, %v905
      %v907 = vrot.slane %v902, %v906
      %v913 = vunpack.c.l.b16 %v897
      %v914 = vunpack.c.l.b16 %v898
      %v915 = vunpack.c.l.b16 %v899
      %v916 = vunpack.c.l.b16 %v900
      %v917 = vpack.c.b16 %v914, %v913
      %v918 = vpack.c.b16 %v916, %v915
      %921 = vmatprep.subr.bf16.mxu0 0
      %922 = vmatpush1.bf16.msra.mxu0 0
      %923 = vmatprep.subr.bf16.mxu0 0
      %924 = vmatpush1.bf16.msra.mxu0 0
      %925 = vmatprep.subr.bf16.mxu0 0
      %926 = vmatpush1.bf16.msra.mxu0 0
      %927 = vmatprep.subr.bf16.mxu0 0
      %928 = vmatpush1.bf16.msra.mxu0 0
      %929 = vmatprep.subr.bf16.mxu0 0
      %930 = vmatpush1.bf16.msra.mxu0 0
      %931 = vmatprep.subr.bf16.mxu0 0
      %932 = vmatpush1.bf16.msra.mxu0 0
      %933 = vmatprep.subr.bf16.mxu0 0
      %934 = vmatpush1.bf16.msra.mxu0 %v918
      %935 = vmatprep.subr.bf16.mxu0 0
      %936 = vmatpush1.bf16.msra.mxu0 %v917
      %937 = vmatprep.subr.bf16.mxu0 0
      %938 = vmatpush2.bf16.msra.mxu0 0
      %939 = vmatprep.subr.bf16.mxu0 0
      %940 = vmatpush2.bf16.msra.mxu0 0
      %941 = vmatprep.subr.bf16.mxu0 0
      %942 = vmatpush2.bf16.msra.mxu0 0
      %943 = vmatprep.subr.bf16.mxu0 0
      %944 = vmatpush2.bf16.msra.mxu0 0
      %945 = vmatprep.subr.bf16.mxu0 0
      %946 = vmatpush2.bf16.msra.mxu0 0
      %947 = vmatprep.subr.bf16.mxu0 0
      %948 = vmatpush2.bf16.msra.mxu0 0
      %949 = vmatprep.subr.bf16.mxu0 0
      %950 = vmatpush2.bf16.msra.mxu0 0
      %951 = vmatprep.subr.bf16.mxu0 0
      %952 = vmatpush2.bf16.msra.mxu0 0
      %953 = vmatprep.mubr.bf16.mxu0 0
      %954 = vmatmul.mubr.bf16.gmra.mxu0 %v485
      %v955 = vpop.f32.mrf.mxu0
      %v956 = vadd.f32 %v907, %v955
      %v957 = vpop.f32.mrf.mxu0
      %v958 = vpop.f32.mrf.mxu0
      %v959 = vpop.f32.mrf.mxu0
      %960 = vdwg.mxu0
      %v961 = vpack.c.bf16 %v826, %v826
      %v962 = vpack.c.bf16 %v891, %v891
      %v964 = vsel %vm655, %v961, 0
      %v967 = vsel %vm655, %v962, 0
      %969 = vmatprep.subr.bf16.mxu0 0
      %970 = vmatpush1.bf16.xpose.msra.mxu0 0
      %971 = vmatprep.subr.bf16.mxu0 0
      %972 = vmatpush1.bf16.xpose.msra.mxu0 0
      %973 = vmatprep.subr.bf16.mxu0 0
      %974 = vmatpush1.bf16.xpose.msra.mxu0 0
      %975 = vmatprep.subr.bf16.mxu0 0
      %976 = vmatpush1.bf16.xpose.msra.mxu0 0
      %977 = vmatprep.subr.bf16.mxu0 0
      %978 = vmatpush1.bf16.xpose.msra.mxu0 0
      %979 = vmatprep.subr.bf16.mxu0 0
      %980 = vmatpush1.bf16.xpose.msra.mxu0 0
      %981 = vmatprep.subr.bf16.mxu0 0
      %982 = vmatpush1.bf16.xpose.msra.mxu0 0
      %983 = vmatprep.subr.bf16.mxu0 0
      %984 = vmatpush1.bf16.xpose.msra.mxu0 %v967
      %985 = vmatprep.subr.bf16.mxu0 0
      %986 = vmatpush2.bf16.xpose.msra.mxu0 0
      %987 = vmatprep.subr.bf16.mxu0 0
      %988 = vmatpush2.bf16.xpose.msra.mxu0 0
      %989 = vmatprep.subr.bf16.mxu0 0
      %990 = vmatpush2.bf16.xpose.msra.mxu0 0
      %991 = vmatprep.subr.bf16.mxu0 0
      %992 = vmatpush2.bf16.xpose.msra.mxu0 0
      %993 = vmatprep.subr.bf16.mxu0 0
      %994 = vmatpush2.bf16.xpose.msra.mxu0 0
      %995 = vmatprep.subr.bf16.mxu0 0
      %996 = vmatpush2.bf16.xpose.msra.mxu0 0
      %997 = vmatprep.subr.bf16.mxu0 0
      %998 = vmatpush2.bf16.xpose.msra.mxu0 0
      %999 = vmatprep.subr.bf16.mxu0 0
      %1000 = vmatpush2.bf16.xpose.msra.mxu0 0
      %1001 = vmatprep.mubr.bf16.mxu0 0
      %1002 = vmatmul.mubr.bf16.gmra.mxu0 %v964
      %v1003 = vpop.f32.mrf.mxu0
      %v1004 = vadd.f32 0.0, %v1003
      %v1005 = vpop.f32.mrf.mxu0
      %v1006 = vpop.f32.mrf.mxu0
      %v1007 = vpop.f32.mrf.mxu0
      %1008 = vdwg.mxu0
      %v1009 = vmul.f32 %v1004, 0.35355338
      %v1010 = vadd.f32 %v1009, %v459
      %v1011 = vsel %vm655, %v1010, -inf
      %1012 = vmax.xlane.f32.xlu0 %v1011
      %v1013 = vpop.xlane.xlu0 %1012
      %v1014 = vsub.f32 %v1010, %v1013
      %v1015 = vmul.f32 %v1014, 1.442695
      %v1016 = vpow.pop %v1015
      %v1017 = vsel %vm655, %v1016, 0.0
      %1018 = vadd.xlane.f32.xlu0 %v1017
      %v1019 = vpop.xlane.xlu0 %1018
      %v1020 = vrcp.pop %v1019
      %v1021 = vmul.f32 %v1016, %v1020
      %v1022 = vpack.c.bf16 %v1021, %v1021
      %v1023 = vpack.c.bf16 %v956, %v956
      %v1025 = vsel %vm655, %v1022, 0
      %v1028 = vsel %vm720, %v1023, 0
      %1030 = vmatprep.subr.bf16.mxu0 0
      %1031 = vmatpush1.bf16.msra.mxu0 0
      %1032 = vmatprep.subr.bf16.mxu0 0
      %1033 = vmatpush1.bf16.msra.mxu0 0
      %1034 = vmatprep.subr.bf16.mxu0 0
      %1035 = vmatpush1.bf16.msra.mxu0 0
      %1036 = vmatprep.subr.bf16.mxu0 0
      %1037 = vmatpush1.bf16.msra.mxu0 0
      %1038 = vmatprep.subr.bf16.mxu0 0
      %1039 = vmatpush1.bf16.msra.mxu0 0
      %1040 = vmatprep.subr.bf16.mxu0 0
      %1041 = vmatpush1.bf16.msra.mxu0 0
      %1042 = vmatprep.subr.bf16.mxu0 0
      %1043 = vmatpush1.bf16.msra.mxu0 0
      %1044 = vmatprep.subr.bf16.mxu0 0
      %1045 = vmatpush1.bf16.msra.mxu0 %v1028
      %1046 = vmatprep.subr.bf16.mxu0 0
      %1047 = vmatpush2.bf16.msra.mxu0 0
      %1048 = vmatprep.subr.bf16.mxu0 0
      %1049 = vmatpush2.bf16.msra.mxu0 0
      %1050 = vmatprep.subr.bf16.mxu0 0
      %1051 = vmatpush2.bf16.msra.mxu0 0
      %1052 = vmatprep.subr.bf16.mxu0 0
      %1053 = vmatpush2.bf16.msra.mxu0 0
      %1054 = vmatprep.subr.bf16.mxu0 0
      %1055 = vmatpush2.bf16.msra.mxu0 0
      %1056 = vmatprep.subr.bf16.mxu0 0
      %1057 = vmatpush2.bf16.msra.mxu0 0
      %1058 = vmatprep.subr.bf16.mxu0 0
      %1059 = vmatpush2.bf16.msra.mxu0 0
      %1060 = vmatprep.subr.bf16.mxu0 0
      %1061 = vmatpush2.bf16.msra.mxu0 0
      %1062 = vmatprep.mubr.bf16.mxu0 0
      %1063 = vmatmul.mubr.bf16.gmra.mxu0 %v1025
      %v1064 = vpop.f32.mrf.mxu0
      %v1065 = vadd.f32 0.0, %v1064
      %v1066 = vpop.f32.mrf.mxu0
      %v1067 = vpop.f32.mrf.mxu0
      %v1068 = vpop.f32.mrf.mxu0
      %1069 = vdwg.mxu0
      %v1070 = vpack.c.bf16 %v1065, %v1065
      %s1071 = scalar_lea.vmem %s10, 4
      %v1072 = vld [vmem:[%s1071] sm:$0xf]
      %v1074 = vsel %vm655, %v1070, 0
      %v1077 = vsel %vm720, %v1072, 0
      %1079 = vmatprep.subr.bf16.mxu0 0
      %1080 = vmatpush1.bf16.msra.mxu0 0
      %1081 = vmatprep.subr.bf16.mxu0 0
      %1082 = vmatpush1.bf16.msra.mxu0 0
      %1083 = vmatprep.subr.bf16.mxu0 0
      %1084 = vmatpush1.bf16.msra.mxu0 0
      %1085 = vmatprep.subr.bf16.mxu0 0
      %1086 = vmatpush1.bf16.msra.mxu0 0
      %1087 = vmatprep.subr.bf16.mxu0 0
      %1088 = vmatpush1.bf16.msra.mxu0 0
      %1089 = vmatprep.subr.bf16.mxu0 0
      %1090 = vmatpush1.bf16.msra.mxu0 0
      %1091 = vmatprep.subr.bf16.mxu0 0
      %1092 = vmatpush1.bf16.msra.mxu0 0
      %1093 = vmatprep.subr.bf16.mxu0 0
      %1094 = vmatpush1.bf16.msra.mxu0 %v1077
      %1095 = vmatprep.subr.bf16.mxu0 0
      %1096 = vmatpush2.bf16.msra.mxu0 0
      %1097 = vmatprep.subr.bf16.mxu0 0
      %1098 = vmatpush2.bf16.msra.mxu0 0
      %1099 = vmatprep.subr.bf16.mxu0 0
      %1100 = vmatpush2.bf16.msra.mxu0 0
      %1101 = vmatprep.subr.bf16.mxu0 0
      %1102 = vmatpush2.bf16.msra.mxu0 0
      %1103 = vmatprep.subr.bf16.mxu0 0
      %1104 = vmatpush2.bf16.msra.mxu0 0
      %1105 = vmatprep.subr.bf16.mxu0 0
      %1106 = vmatpush2.bf16.msra.mxu0 0
      %1107 = vmatprep.subr.bf16.mxu0 0
      %1108 = vmatpush2.bf16.msra.mxu0 0
      %1109 = vmatprep.subr.bf16.mxu0 0
      %1110 = vmatpush2.bf16.msra.mxu0 0
      %1111 = vmatprep.mubr.bf16.mxu0 0
      %1112 = vmatmul.mubr.bf16.gmra.mxu0 %v1074
      %v1113 = vpop.f32.mrf.mxu0
      %v1114 = vadd.f32 0.0, %v1113
      %v1115 = vpop.f32.mrf.mxu0
      %v1116 = vpop.f32.mrf.mxu0
      %v1117 = vpop.f32.mrf.mxu0
      %1118 = vdwg.mxu0
      %v1120 = vsel %vm655, %v764, 0
      %v1123 = vsel %vm720, %v765, 0
      %1125 = vmatprep.subr.bf16.mxu0 0
      %1126 = vmatpush1.bf16.msra.mxu0 0
      %1127 = vmatprep.subr.bf16.mxu0 0
      %1128 = vmatpush1.bf16.msra.mxu0 0
      %1129 = vmatprep.subr.bf16.mxu0 0
      %1130 = vmatpush1.bf16.msra.mxu0 0
      %1131 = vmatprep.subr.bf16.mxu0 0
      %1132 = vmatpush1.bf16.msra.mxu0 0
      %1133 = vmatprep.subr.bf16.mxu0 0
      %1134 = vmatpush1.bf16.msra.mxu0 0
      %1135 = vmatprep.subr.bf16.mxu0 0
      %1136 = vmatpush1.bf16.msra.mxu0 0
      %1137 = vmatprep.subr.bf16.mxu0 0
      %1138 = vmatpush1.bf16.msra.mxu0 0
      %1139 = vmatprep.subr.bf16.mxu0 0
      %1140 = vmatpush1.bf16.msra.mxu0 %v1123
      %1141 = vmatprep.subr.bf16.mxu0 0
      %1142 = vmatpush2.bf16.msra.mxu0 0
      %1143 = vmatprep.subr.bf16.mxu0 0
      %1144 = vmatpush2.bf16.msra.mxu0 0
      %1145 = vmatprep.subr.bf16.mxu0 0
      %1146 = vmatpush2.bf16.msra.mxu0 0
      %1147 = vmatprep.subr.bf16.mxu0 0
      %1148 = vmatpush2.bf16.msra.mxu0 0
      %1149 = vmatprep.subr.bf16.mxu0 0
      %1150 = vmatpush2.bf16.msra.mxu0 0
      %1151 = vmatprep.subr.bf16.mxu0 0
      %1152 = vmatpush2.bf16.msra.mxu0 0
      %1153 = vmatprep.subr.bf16.mxu0 0
      %1154 = vmatpush2.bf16.msra.mxu0 0
      %1155 = vmatprep.subr.bf16.mxu0 0
      %1156 = vmatpush2.bf16.msra.mxu0 0
      %1157 = vmatprep.mubr.bf16.mxu0 0
      %1158 = vmatmul.mubr.bf16.gmra.mxu0 %v1120
      %v1159 = vpop.f32.mrf.mxu0
      %v1160 = vadd.f32 %v1114, %v1159
      %v1161 = vpop.f32.mrf.mxu0
      %v1162 = vpop.f32.mrf.mxu0
      %v1163 = vpop.f32.mrf.mxu0
      %1164 = vdwg.mxu0
      %s1165 = scalar_lea.vmem %s4, 32
      %v1166 = vld [vmem:[%s1165] sm:$0xf]
      %v1167 = vld [vmem:[%s1165 + $0x4] sm:$0xf]
      %v1168 = vld [vmem:[%s1165 + $0x8] sm:$0xf]
      %v1169 = vld [vmem:[%s1165 + $0xc] sm:$0xf]
      %s1170 = scalar_lea.vmem %s5, 2
      %v1171 = vld [vmem:[%s1170] sm:$0x1]
      %v1173 = vlaneseq
      %v1174 = vshrl.u32 %v1173, 7
      %v1175 = vsub.s32 0, %v1174
      %v1176 = vrot.slane %v1171, %v1175
      %v1182 = vunpack.c.l.b16 %v1166
      %v1183 = vunpack.c.l.b16 %v1167
      %v1184 = vunpack.c.l.b16 %v1168
      %v1185 = vunpack.c.l.b16 %v1169
      %v1186 = vpack.c.b16 %v1183, %v1182
      %v1187 = vpack.c.b16 %v1185, %v1184
      %1190 = vmatprep.subr.bf16.mxu0 0
      %1191 = vmatpush1.bf16.msra.mxu0 0
      %1192 = vmatprep.subr.bf16.mxu0 0
      %1193 = vmatpush1.bf16.msra.mxu0 0
      %1194 = vmatprep.subr.bf16.mxu0 0
      %1195 = vmatpush1.bf16.msra.mxu0 0
      %1196 = vmatprep.subr.bf16.mxu0 0
      %1197 = vmatpush1.bf16.msra.mxu0 0
      %1198 = vmatprep.subr.bf16.mxu0 0
      %1199 = vmatpush1.bf16.msra.mxu0 0
      %1200 = vmatprep.subr.bf16.mxu0 0
      %1201 = vmatpush1.bf16.msra.mxu0 0
      %1202 = vmatprep.subr.bf16.mxu0 0
      %1203 = vmatpush1.bf16.msra.mxu0 %v1187
      %1204 = vmatprep.subr.bf16.mxu0 0
      %1205 = vmatpush1.bf16.msra.mxu0 %v1186
      %1206 = vmatprep.subr.bf16.mxu0 0
      %1207 = vmatpush2.bf16.msra.mxu0 0
      %1208 = vmatprep.subr.bf16.mxu0 0
      %1209 = vmatpush2.bf16.msra.mxu0 0
      %1210 = vmatprep.subr.bf16.mxu0 0
      %1211 = vmatpush2.bf16.msra.mxu0 0
      %1212 = vmatprep.subr.bf16.mxu0 0
      %1213 = vmatpush2.bf16.msra.mxu0 0
      %1214 = vmatprep.subr.bf16.mxu0 0
      %1215 = vmatpush2.bf16.msra.mxu0 0
      %1216 = vmatprep.subr.bf16.mxu0 0
      %1217 = vmatpush2.bf16.msra.mxu0 0
      %1218 = vmatprep.subr.bf16.mxu0 0
      %1219 = vmatpush2.bf16.msra.mxu0 0
      %1220 = vmatprep.subr.bf16.mxu0 0
      %1221 = vmatpush2.bf16.msra.mxu0 0
      %1222 = vmatprep.mubr.bf16.mxu0 0
      %1223 = vmatmul.mubr.bf16.gmra.mxu0 %v485
      %v1224 = vpop.f32.mrf.mxu0
      %v1225 = vadd.f32 %v1176, %v1224
      %v1226 = vpop.f32.mrf.mxu0
      %v1227 = vpop.f32.mrf.mxu0
      %v1228 = vpop.f32.mrf.mxu0
      %1229 = vdwg.mxu0
      %s1230 = scalar_lea.vmem %s6, 32
      %v1231 = vld [vmem:[%s1230] sm:$0xf]
      %v1232 = vld [vmem:[%s1230 + $0x4] sm:$0xf]
      %v1233 = vld [vmem:[%s1230 + $0x8] sm:$0xf]
      %v1234 = vld [vmem:[%s1230 + $0xc] sm:$0xf]
      %s1235 = scalar_lea.vmem %s7, 2
      %v1236 = vld [vmem:[%s1235] sm:$0x1]
      %v1238 = vlaneseq
      %v1239 = vshrl.u32 %v1238, 7
      %v1240 = vsub.s32 0, %v1239
      %v1241 = vrot.slane %v1236, %v1240
      %v1247 = vunpack.c.l.b16 %v1231
      %v1248 = vunpack.c.l.b16 %v1232
      %v1249 = vunpack.c.l.b16 %v1233
      %v1250 = vunpack.c.l.b16 %v1234
      %v1251 = vpack.c.b16 %v1248, %v1247
      %v1252 = vpack.c.b16 %v1250, %v1249
      %1255 = vmatprep.subr.bf16.mxu0 0
      %1256 = vmatpush1.bf16.msra.mxu0 0
      %1257 = vmatprep.subr.bf16.mxu0 0
      %1258 = vmatpush1.bf16.msra.mxu0 0
      %1259 = vmatprep.subr.bf16.mxu0 0
      %1260 = vmatpush1.bf16.msra.mxu0 0
      %1261 = vmatprep.subr.bf16.mxu0 0
      %1262 = vmatpush1.bf16.msra.mxu0 0
      %1263 = vmatprep.subr.bf16.mxu0 0
      %1264 = vmatpush1.bf16.msra.mxu0 0
      %1265 = vmatprep.subr.bf16.mxu0 0
      %1266 = vmatpush1.bf16.msra.mxu0 0
      %1267 = vmatprep.subr.bf16.mxu0 0
      %1268 = vmatpush1.bf16.msra.mxu0 %v1252
      %1269 = vmatprep.subr.bf16.mxu0 0
      %1270 = vmatpush1.bf16.msra.mxu0 %v1251
      %1271 = vmatprep.subr.bf16.mxu0 0
      %1272 = vmatpush2.bf16.msra.mxu0 0
      %1273 = vmatprep.subr.bf16.mxu0 0
      %1274 = vmatpush2.bf16.msra.mxu0 0
      %1275 = vmatprep.subr.bf16.mxu0 0
      %1276 = vmatpush2.bf16.msra.mxu0 0
      %1277 = vmatprep.subr.bf16.mxu0 0
      %1278 = vmatpush2.bf16.msra.mxu0 0
      %1279 = vmatprep.subr.bf16.mxu0 0
      %1280 = vmatpush2.bf16.msra.mxu0 0
      %1281 = vmatprep.subr.bf16.mxu0 0
      %1282 = vmatpush2.bf16.msra.mxu0 0
      %1283 = vmatprep.subr.bf16.mxu0 0
      %1284 = vmatpush2.bf16.msra.mxu0 0
      %1285 = vmatprep.subr.bf16.mxu0 0
      %1286 = vmatpush2.bf16.msra.mxu0 0
      %1287 = vmatprep.mubr.bf16.mxu0 0
      %1288 = vmatmul.mubr.bf16.gmra.mxu0 %v485
      %v1289 = vpop.f32.mrf.mxu0
      %v1290 = vadd.f32 %v1241, %v1289
      %v1291 = vpop.f32.mrf.mxu0
      %v1292 = vpop.f32.mrf.mxu0
      %v1293 = vpop.f32.mrf.mxu0
      %1294 = vdwg.mxu0
      %s1295 = scalar_lea.vmem %s8, 32
      %v1296 = vld [vmem:[%s1295] sm:$0xf]
      %v1297 = vld [vmem:[%s1295 + $0x4] sm:$0xf]
      %v1298 = vld [vmem:[%s1295 + $0x8] sm:$0xf]
      %v1299 = vld [vmem:[%s1295 + $0xc] sm:$0xf]
      %s1300 = scalar_lea.vmem %s9, 2
      %v1301 = vld [vmem:[%s1300] sm:$0x1]
      %v1303 = vlaneseq
      %v1304 = vshrl.u32 %v1303, 7
      %v1305 = vsub.s32 0, %v1304
      %v1306 = vrot.slane %v1301, %v1305
      %v1312 = vunpack.c.l.b16 %v1296
      %v1313 = vunpack.c.l.b16 %v1297
      %v1314 = vunpack.c.l.b16 %v1298
      %v1315 = vunpack.c.l.b16 %v1299
      %v1316 = vpack.c.b16 %v1313, %v1312
      %v1317 = vpack.c.b16 %v1315, %v1314
      %1320 = vmatprep.subr.bf16.mxu0 0
      %1321 = vmatpush1.bf16.msra.mxu0 0
      %1322 = vmatprep.subr.bf16.mxu0 0
      %1323 = vmatpush1.bf16.msra.mxu0 0
      %1324 = vmatprep.subr.bf16.mxu0 0
      %1325 = vmatpush1.bf16.msra.mxu0 0
      %1326 = vmatprep.subr.bf16.mxu0 0
      %1327 = vmatpush1.bf16.msra.mxu0 0
      %1328 = vmatprep.subr.bf16.mxu0 0
      %1329 = vmatpush1.bf16.msra.mxu0 0
      %1330 = vmatprep.subr.bf16.mxu0 0
      %1331 = vmatpush1.bf16.msra.mxu0 0
      %1332 = vmatprep.subr.bf16.mxu0 0
      %1333 = vmatpush1.bf16.msra.mxu0 %v1317
      %1334 = vmatprep.subr.bf16.mxu0 0
      %1335 = vmatpush1.bf16.msra.mxu0 %v1316
      %1336 = vmatprep.subr.bf16.mxu0 0
      %1337 = vmatpush2.bf16.msra.mxu0 0
      %1338 = vmatprep.subr.bf16.mxu0 0
      %1339 = vmatpush2.bf16.msra.mxu0 0
      %1340 = vmatprep.subr.bf16.mxu0 0
      %1341 = vmatpush2.bf16.msra.mxu0 0
      %1342 = vmatprep.subr.bf16.mxu0 0
      %1343 = vmatpush2.bf16.msra.mxu0 0
      %1344 = vmatprep.subr.bf16.mxu0 0
      %1345 = vmatpush2.bf16.msra.mxu0 0
      %1346 = vmatprep.subr.bf16.mxu0 0
      %1347 = vmatpush2.bf16.msra.mxu0 0
      %1348 = vmatprep.subr.bf16.mxu0 0
      %1349 = vmatpush2.bf16.msra.mxu0 0
      %1350 = vmatprep.subr.bf16.mxu0 0
      %1351 = vmatpush2.bf16.msra.mxu0 0
      %1352 = vmatprep.mubr.bf16.mxu0 0
      %1353 = vmatmul.mubr.bf16.gmra.mxu0 %v485
      %v1354 = vpop.f32.mrf.mxu0
      %v1355 = vadd.f32 %v1306, %v1354
      %v1356 = vpop.f32.mrf.mxu0
      %v1357 = vpop.f32.mrf.mxu0
      %v1358 = vpop.f32.mrf.mxu0
      %1359 = vdwg.mxu0
      %v1360 = vpack.c.bf16 %v1225, %v1225
      %v1361 = vpack.c.bf16 %v1290, %v1290
      %v1363 = vsel %vm655, %v1360, 0
      %v1366 = vsel %vm655, %v1361, 0
      %1368 = vmatprep.subr.bf16.mxu0 0
      %1369 = vmatpush1.bf16.xpose.msra.mxu0 0
      %1370 = vmatprep.subr.bf16.mxu0 0
      %1371 = vmatpush1.bf16.xpose.msra.mxu0 0
      %1372 = vmatprep.subr.bf16.mxu0 0
      %1373 = vmatpush1.bf16.xpose.msra.mxu0 0
      %1374 = vmatprep.subr.bf16.mxu0 0
      %1375 = vmatpush1.bf16.xpose.msra.mxu0 0
      %1376 = vmatprep.subr.bf16.mxu0 0
      %1377 = vmatpush1.bf16.xpose.msra.mxu0 0
      %1378 = vmatprep.subr.bf16.mxu0 0
      %1379 = vmatpush1.bf16.xpose.msra.mxu0 0
      %1380 = vmatprep.subr.bf16.mxu0 0
      %1381 = vmatpush1.bf16.xpose.msra.mxu0 0
      %1382 = vmatprep.subr.bf16.mxu0 0
      %1383 = vmatpush1.bf16.xpose.msra.mxu0 %v1366
      %1384 = vmatprep.subr.bf16.mxu0 0
      %1385 = vmatpush2.bf16.xpose.msra.mxu0 0
      %1386 = vmatprep.subr.bf16.mxu0 0
      %1387 = vmatpush2.bf16.xpose.msra.mxu0 0
      %1388 = vmatprep.subr.bf16.mxu0 0
      %1389 = vmatpush2.bf16.xpose.msra.mxu0 0
      %1390 = vmatprep.subr.bf16.mxu0 0
      %1391 = vmatpush2.bf16.xpose.msra.mxu0 0
      %1392 = vmatprep.subr.bf16.mxu0 0
      %1393 = vmatpush2.bf16.xpose.msra.mxu0 0
      %1394 = vmatprep.subr.bf16.mxu0 0
      %1395 = vmatpush2.bf16.xpose.msra.mxu0 0
      %1396 = vmatprep.subr.bf16.mxu0 0
      %1397 = vmatpush2.bf16.xpose.msra.mxu0 0
      %1398 = vmatprep.subr.bf16.mxu0 0
      %1399 = vmatpush2.bf16.xpose.msra.mxu0 0
      %1400 = vmatprep.mubr.bf16.mxu0 0
      %1401 = vmatmul.mubr.bf16.gmra.mxu0 %v1363
      %v1402 = vpop.f32.mrf.mxu0
      %v1403 = vadd.f32 0.0, %v1402
      %v1404 = vpop.f32.mrf.mxu0
      %v1405 = vpop.f32.mrf.mxu0
      %v1406 = vpop.f32.mrf.mxu0
      %1407 = vdwg.mxu0
      %v1408 = vmul.f32 %v1403, 0.35355338
      %v1409 = vadd.f32 %v1408, %v459
      %v1410 = vsel %vm655, %v1409, -inf
      %1411 = vmax.xlane.f32.xlu0 %v1410
      %v1412 = vpop.xlane.xlu0 %1411
      %v1413 = vsub.f32 %v1409, %v1412
      %v1414 = vmul.f32 %v1413, 1.442695
      %v1415 = vpow.pop %v1414
      %v1416 = vsel %vm655, %v1415, 0.0
      %1417 = vadd.xlane.f32.xlu0 %v1416
      %v1418 = vpop.xlane.xlu0 %1417
      %v1419 = vrcp.pop %v1418
      %v1420 = vmul.f32 %v1415, %v1419
      %v1421 = vpack.c.bf16 %v1420, %v1420
      %v1422 = vpack.c.bf16 %v1355, %v1355
      %v1424 = vsel %vm655, %v1421, 0
      %v1427 = vsel %vm720, %v1422, 0
      %1429 = vmatprep.subr.bf16.mxu0 0
      %1430 = vmatpush1.bf16.msra.mxu0 0
      %1431 = vmatprep.subr.bf16.mxu0 0
      %1432 = vmatpush1.bf16.msra.mxu0 0
      %1433 = vmatprep.subr.bf16.mxu0 0
      %1434 = vmatpush1.bf16.msra.mxu0 0
      %1435 = vmatprep.subr.bf16.mxu0 0
      %1436 = vmatpush1.bf16.msra.mxu0 0
      %1437 = vmatprep.subr.bf16.mxu0 0
      %1438 = vmatpush1.bf16.msra.mxu0 0
      %1439 = vmatprep.subr.bf16.mxu0 0
      %1440 = vmatpush1.bf16.msra.mxu0 0
      %1441 = vmatprep.subr.bf16.mxu0 0
      %1442 = vmatpush1.bf16.msra.mxu0 0
      %1443 = vmatprep.subr.bf16.mxu0 0
      %1444 = vmatpush1.bf16.msra.mxu0 %v1427
      %1445 = vmatprep.subr.bf16.mxu0 0
      %1446 = vmatpush2.bf16.msra.mxu0 0
      %1447 = vmatprep.subr.bf16.mxu0 0
      %1448 = vmatpush2.bf16.msra.mxu0 0
      %1449 = vmatprep.subr.bf16.mxu0 0
      %1450 = vmatpush2.bf16.msra.mxu0 0
      %1451 = vmatprep.subr.bf16.mxu0 0
      %1452 = vmatpush2.bf16.msra.mxu0 0
      %1453 = vmatprep.subr.bf16.mxu0 0
      %1454 = vmatpush2.bf16.msra.mxu0 0
      %1455 = vmatprep.subr.bf16.mxu0 0
      %1456 = vmatpush2.bf16.msra.mxu0 0
      %1457 = vmatprep.subr.bf16.mxu0 0
      %1458 = vmatpush2.bf16.msra.mxu0 0
      %1459 = vmatprep.subr.bf16.mxu0 0
      %1460 = vmatpush2.bf16.msra.mxu0 0
      %1461 = vmatprep.mubr.bf16.mxu0 0
      %1462 = vmatmul.mubr.bf16.gmra.mxu0 %v1424
      %v1463 = vpop.f32.mrf.mxu0
      %v1464 = vadd.f32 0.0, %v1463
      %v1465 = vpop.f32.mrf.mxu0
      %v1466 = vpop.f32.mrf.mxu0
      %v1467 = vpop.f32.mrf.mxu0
      %1468 = vdwg.mxu0
      %v1469 = vpack.c.bf16 %v1464, %v1464
      %s1470 = scalar_lea.vmem %s10, 8
      %v1471 = vld [vmem:[%s1470] sm:$0xf]
      %v1473 = vsel %vm655, %v1469, 0
      %v1476 = vsel %vm720, %v1471, 0
      %1478 = vmatprep.subr.bf16.mxu0 0
      %1479 = vmatpush1.bf16.msra.mxu0 0
      %1480 = vmatprep.subr.bf16.mxu0 0
      %1481 = vmatpush1.bf16.msra.mxu0 0
      %1482 = vmatprep.subr.bf16.mxu0 0
      %1483 = vmatpush1.bf16.msra.mxu0 0
      %1484 = vmatprep.subr.bf16.mxu0 0
      %1485 = vmatpush1.bf16.msra.mxu0 0
      %1486 = vmatprep.subr.bf16.mxu0 0
      %1487 = vmatpush1.bf16.msra.mxu0 0
      %1488 = vmatprep.subr.bf16.mxu0 0
      %1489 = vmatpush1.bf16.msra.mxu0 0
      %1490 = vmatprep.subr.bf16.mxu0 0
      %1491 = vmatpush1.bf16.msra.mxu0 0
      %1492 = vmatprep.subr.bf16.mxu0 0
      %1493 = vmatpush1.bf16.msra.mxu0 %v1476
      %1494 = vmatprep.subr.bf16.mxu0 0
      %1495 = vmatpush2.bf16.msra.mxu0 0
      %1496 = vmatprep.subr.bf16.mxu0 0
      %1497 = vmatpush2.bf16.msra.mxu0 0
      %1498 = vmatprep.subr.bf16.mxu0 0
      %1499 = vmatpush2.bf16.msra.mxu0 0
      %1500 = vmatprep.subr.bf16.mxu0 0
      %1501 = vmatpush2.bf16.msra.mxu0 0
      %1502 = vmatprep.subr.bf16.mxu0 0
      %1503 = vmatpush2.bf16.msra.mxu0 0
      %1504 = vmatprep.subr.bf16.mxu0 0
      %1505 = vmatpush2.bf16.msra.mxu0 0
      %1506 = vmatprep.subr.bf16.mxu0 0
      %1507 = vmatpush2.bf16.msra.mxu0 0
      %1508 = vmatprep.subr.bf16.mxu0 0
      %1509 = vmatpush2.bf16.msra.mxu0 0
      %1510 = vmatprep.mubr.bf16.mxu0 0
      %1511 = vmatmul.mubr.bf16.gmra.mxu0 %v1473
      %v1512 = vpop.f32.mrf.mxu0
      %v1513 = vadd.f32 0.0, %v1512
      %v1514 = vpop.f32.mrf.mxu0
      %v1515 = vpop.f32.mrf.mxu0
      %v1516 = vpop.f32.mrf.mxu0
      %1517 = vdwg.mxu0
      %v1518 = vadd.f32 %v1160, %v1513
      %s1519 = scalar_lea.vmem %s4, 48
      %v1520 = vld [vmem:[%s1519] sm:$0xf]
      %v1521 = vld [vmem:[%s1519 + $0x4] sm:$0xf]
      %v1522 = vld [vmem:[%s1519 + $0x8] sm:$0xf]
      %v1523 = vld [vmem:[%s1519 + $0xc] sm:$0xf]
      %s1524 = scalar_lea.vmem %s5, 3
      %v1525 = vld [vmem:[%s1524] sm:$0x1]
      %v1527 = vlaneseq
      %v1528 = vshrl.u32 %v1527, 7
      %v1529 = vsub.s32 0, %v1528
      %v1530 = vrot.slane %v1525, %v1529
      %v1536 = vunpack.c.l.b16 %v1520
      %v1537 = vunpack.c.l.b16 %v1521
      %v1538 = vunpack.c.l.b16 %v1522
      %v1539 = vunpack.c.l.b16 %v1523
      %v1540 = vpack.c.b16 %v1537, %v1536
      %v1541 = vpack.c.b16 %v1539, %v1538
      %1544 = vmatprep.subr.bf16.mxu0 0
      %1545 = vmatpush1.bf16.msra.mxu0 0
      %1546 = vmatprep.subr.bf16.mxu0 0
      %1547 = vmatpush1.bf16.msra.mxu0 0
      %1548 = vmatprep.subr.bf16.mxu0 0
      %1549 = vmatpush1.bf16.msra.mxu0 0
      %1550 = vmatprep.subr.bf16.mxu0 0
      %1551 = vmatpush1.bf16.msra.mxu0 0
      %1552 = vmatprep.subr.bf16.mxu0 0
      %1553 = vmatpush1.bf16.msra.mxu0 0
      %1554 = vmatprep.subr.bf16.mxu0 0
      %1555 = vmatpush1.bf16.msra.mxu0 0
      %1556 = vmatprep.subr.bf16.mxu0 0
      %1557 = vmatpush1.bf16.msra.mxu0 %v1541
      %1558 = vmatprep.subr.bf16.mxu0 0
      %1559 = vmatpush1.bf16.msra.mxu0 %v1540
      %1560 = vmatprep.subr.bf16.mxu0 0
      %1561 = vmatpush2.bf16.msra.mxu0 0
      %1562 = vmatprep.subr.bf16.mxu0 0
      %1563 = vmatpush2.bf16.msra.mxu0 0
      %1564 = vmatprep.subr.bf16.mxu0 0
      %1565 = vmatpush2.bf16.msra.mxu0 0
      %1566 = vmatprep.subr.bf16.mxu0 0
      %1567 = vmatpush2.bf16.msra.mxu0 0
      %1568 = vmatprep.subr.bf16.mxu0 0
      %1569 = vmatpush2.bf16.msra.mxu0 0
      %1570 = vmatprep.subr.bf16.mxu0 0
      %1571 = vmatpush2.bf16.msra.mxu0 0
      %1572 = vmatprep.subr.bf16.mxu0 0
      %1573 = vmatpush2.bf16.msra.mxu0 0
      %1574 = vmatprep.subr.bf16.mxu0 0
      %1575 = vmatpush2.bf16.msra.mxu0 0
      %1576 = vmatprep.mubr.bf16.mxu0 0
      %1577 = vmatmul.mubr.bf16.gmra.mxu0 %v485
      %v1578 = vpop.f32.mrf.mxu0
      %v1579 = vadd.f32 %v1530, %v1578
      %v1580 = vpop.f32.mrf.mxu0
      %v1581 = vpop.f32.mrf.mxu0
      %v1582 = vpop.f32.mrf.mxu0
      %1583 = vdwg.mxu0
      %s1584 = scalar_lea.vmem %s6, 48
      %v1585 = vld [vmem:[%s1584] sm:$0xf]
      %v1586 = vld [vmem:[%s1584 + $0x4] sm:$0xf]
      %v1587 = vld [vmem:[%s1584 + $0x8] sm:$0xf]
      %v1588 = vld [vmem:[%s1584 + $0xc] sm:$0xf]
      %s1589 = scalar_lea.vmem %s7, 3
      %v1590 = vld [vmem:[%s1589] sm:$0x1]
      %v1592 = vlaneseq
      %v1593 = vshrl.u32 %v1592, 7
      %v1594 = vsub.s32 0, %v1593
      %v1595 = vrot.slane %v1590, %v1594
      %v1601 = vunpack.c.l.b16 %v1585
      %v1602 = vunpack.c.l.b16 %v1586
      %v1603 = vunpack.c.l.b16 %v1587
      %v1604 = vunpack.c.l.b16 %v1588
      %v1605 = vpack.c.b16 %v1602, %v1601
      %v1606 = vpack.c.b16 %v1604, %v1603
      %1609 = vmatprep.subr.bf16.mxu0 0
      %1610 = vmatpush1.bf16.msra.mxu0 0
      %1611 = vmatprep.subr.bf16.mxu0 0
      %1612 = vmatpush1.bf16.msra.mxu0 0
      %1613 = vmatprep.subr.bf16.mxu0 0
      %1614 = vmatpush1.bf16.msra.mxu0 0
      %1615 = vmatprep.subr.bf16.mxu0 0
      %1616 = vmatpush1.bf16.msra.mxu0 0
      %1617 = vmatprep.subr.bf16.mxu0 0
      %1618 = vmatpush1.bf16.msra.mxu0 0
      %1619 = vmatprep.subr.bf16.mxu0 0
      %1620 = vmatpush1.bf16.msra.mxu0 0
      %1621 = vmatprep.subr.bf16.mxu0 0
      %1622 = vmatpush1.bf16.msra.mxu0 %v1606
      %1623 = vmatprep.subr.bf16.mxu0 0
      %1624 = vmatpush1.bf16.msra.mxu0 %v1605
      %1625 = vmatprep.subr.bf16.mxu0 0
      %1626 = vmatpush2.bf16.msra.mxu0 0
      %1627 = vmatprep.subr.bf16.mxu0 0
      %1628 = vmatpush2.bf16.msra.mxu0 0
      %1629 = vmatprep.subr.bf16.mxu0 0
      %1630 = vmatpush2.bf16.msra.mxu0 0
      %1631 = vmatprep.subr.bf16.mxu0 0
      %1632 = vmatpush2.bf16.msra.mxu0 0
      %1633 = vmatprep.subr.bf16.mxu0 0
      %1634 = vmatpush2.bf16.msra.mxu0 0
      %1635 = vmatprep.subr.bf16.mxu0 0
      %1636 = vmatpush2.bf16.msra.mxu0 0
      %1637 = vmatprep.subr.bf16.mxu0 0
      %1638 = vmatpush2.bf16.msra.mxu0 0
      %1639 = vmatprep.subr.bf16.mxu0 0
      %1640 = vmatpush2.bf16.msra.mxu0 0
      %1641 = vmatprep.mubr.bf16.mxu0 0
      %1642 = vmatmul.mubr.bf16.gmra.mxu0 %v485
      %v1643 = vpop.f32.mrf.mxu0
      %v1644 = vadd.f32 %v1595, %v1643
      %v1645 = vpop.f32.mrf.mxu0
      %v1646 = vpop.f32.mrf.mxu0
      %v1647 = vpop.f32.mrf.mxu0
      %1648 = vdwg.mxu0
      %s1649 = scalar_lea.vmem %s8, 48
      %v1650 = vld [vmem:[%s1649] sm:$0xf]
      %v1651 = vld [vmem:[%s1649 + $0x4] sm:$0xf]
      %v1652 = vld [vmem:[%s1649 + $0x8] sm:$0xf]
      %v1653 = vld [vmem:[%s1649 + $0xc] sm:$0xf]
      %s1654 = scalar_lea.vmem %s9, 3
      %v1655 = vld [vmem:[%s1654] sm:$0x1]
      %v1657 = vlaneseq
      %v1658 = vshrl.u32 %v1657, 7
      %v1659 = vsub.s32 0, %v1658
      %v1660 = vrot.slane %v1655, %v1659
      %v1666 = vunpack.c.l.b16 %v1650
      %v1667 = vunpack.c.l.b16 %v1651
      %v1668 = vunpack.c.l.b16 %v1652
      %v1669 = vunpack.c.l.b16 %v1653
      %v1670 = vpack.c.b16 %v1667, %v1666
      %v1671 = vpack.c.b16 %v1669, %v1668
      %1674 = vmatprep.subr.bf16.mxu0 0
      %1675 = vmatpush1.bf16.msra.mxu0 0
      %1676 = vmatprep.subr.bf16.mxu0 0
      %1677 = vmatpush1.bf16.msra.mxu0 0
      %1678 = vmatprep.subr.bf16.mxu0 0
      %1679 = vmatpush1.bf16.msra.mxu0 0
      %1680 = vmatprep.subr.bf16.mxu0 0
      %1681 = vmatpush1.bf16.msra.mxu0 0
      %1682 = vmatprep.subr.bf16.mxu0 0
      %1683 = vmatpush1.bf16.msra.mxu0 0
      %1684 = vmatprep.subr.bf16.mxu0 0
      %1685 = vmatpush1.bf16.msra.mxu0 0
      %1686 = vmatprep.subr.bf16.mxu0 0
      %1687 = vmatpush1.bf16.msra.mxu0 %v1671
      %1688 = vmatprep.subr.bf16.mxu0 0
      %1689 = vmatpush1.bf16.msra.mxu0 %v1670
      %1690 = vmatprep.subr.bf16.mxu0 0
      %1691 = vmatpush2.bf16.msra.mxu0 0
      %1692 = vmatprep.subr.bf16.mxu0 0
      %1693 = vmatpush2.bf16.msra.mxu0 0
      %1694 = vmatprep.subr.bf16.mxu0 0
      %1695 = vmatpush2.bf16.msra.mxu0 0
      %1696 = vmatprep.subr.bf16.mxu0 0
      %1697 = vmatpush2.bf16.msra.mxu0 0
      %1698 = vmatprep.subr.bf16.mxu0 0
      %1699 = vmatpush2.bf16.msra.mxu0 0
      %1700 = vmatprep.subr.bf16.mxu0 0
      %1701 = vmatpush2.bf16.msra.mxu0 0
      %1702 = vmatprep.subr.bf16.mxu0 0
      %1703 = vmatpush2.bf16.msra.mxu0 0
      %1704 = vmatprep.subr.bf16.mxu0 0
      %1705 = vmatpush2.bf16.msra.mxu0 0
      %1706 = vmatprep.mubr.bf16.mxu0 0
      %1707 = vmatmul.mubr.bf16.gmra.mxu0 %v485
      %v1708 = vpop.f32.mrf.mxu0
      %v1709 = vadd.f32 %v1660, %v1708
      %v1710 = vpop.f32.mrf.mxu0
      %v1711 = vpop.f32.mrf.mxu0
      %v1712 = vpop.f32.mrf.mxu0
      %1713 = vdwg.mxu0
      %v1714 = vpack.c.bf16 %v1579, %v1579
      %v1715 = vpack.c.bf16 %v1644, %v1644
      %v1717 = vsel %vm655, %v1714, 0
      %v1720 = vsel %vm655, %v1715, 0
      %1722 = vmatprep.subr.bf16.mxu0 0
      %1723 = vmatpush1.bf16.xpose.msra.mxu0 0
      %1724 = vmatprep.subr.bf16.mxu0 0
      %1725 = vmatpush1.bf16.xpose.msra.mxu0 0
      %1726 = vmatprep.subr.bf16.mxu0 0
      %1727 = vmatpush1.bf16.xpose.msra.mxu0 0
      %1728 = vmatprep.subr.bf16.mxu0 0
      %1729 = vmatpush1.bf16.xpose.msra.mxu0 0
      %1730 = vmatprep.subr.bf16.mxu0 0
      %1731 = vmatpush1.bf16.xpose.msra.mxu0 0
      %1732 = vmatprep.subr.bf16.mxu0 0
      %1733 = vmatpush1.bf16.xpose.msra.mxu0 0
      %1734 = vmatprep.subr.bf16.mxu0 0
      %1735 = vmatpush1.bf16.xpose.msra.mxu0 0
      %1736 = vmatprep.subr.bf16.mxu0 0
      %1737 = vmatpush1.bf16.xpose.msra.mxu0 %v1720
      %1738 = vmatprep.subr.bf16.mxu0 0
      %1739 = vmatpush2.bf16.xpose.msra.mxu0 0
      %1740 = vmatprep.subr.bf16.mxu0 0
      %1741 = vmatpush2.bf16.xpose.msra.mxu0 0
      %1742 = vmatprep.subr.bf16.mxu0 0
      %1743 = vmatpush2.bf16.xpose.msra.mxu0 0
      %1744 = vmatprep.subr.bf16.mxu0 0
      %1745 = vmatpush2.bf16.xpose.msra.mxu0 0
      %1746 = vmatprep.subr.bf16.mxu0 0
      %1747 = vmatpush2.bf16.xpose.msra.mxu0 0
      %1748 = vmatprep.subr.bf16.mxu0 0
      %1749 = vmatpush2.bf16.xpose.msra.mxu0 0
      %1750 = vmatprep.subr.bf16.mxu0 0
      %1751 = vmatpush2.bf16.xpose.msra.mxu0 0
      %1752 = vmatprep.subr.bf16.mxu0 0
      %1753 = vmatpush2.bf16.xpose.msra.mxu0 0
      %1754 = vmatprep.mubr.bf16.mxu0 0
      %1755 = vmatmul.mubr.bf16.gmra.mxu0 %v1717
      %v1756 = vpop.f32.mrf.mxu0
      %v1757 = vadd.f32 0.0, %v1756
      %v1758 = vpop.f32.mrf.mxu0
      %v1759 = vpop.f32.mrf.mxu0
      %v1760 = vpop.f32.mrf.mxu0
      %1761 = vdwg.mxu0
      %v1762 = vmul.f32 %v1757, 0.35355338
      %v1763 = vadd.f32 %v1762, %v459
      %v1764 = vsel %vm655, %v1763, -inf
      %1765 = vmax.xlane.f32.xlu0 %v1764
      %v1766 = vpop.xlane.xlu0 %1765
      %v1767 = vsub.f32 %v1763, %v1766
      %v1768 = vmul.f32 %v1767, 1.442695
      %v1769 = vpow.pop %v1768
      %v1770 = vsel %vm655, %v1769, 0.0
      %1771 = vadd.xlane.f32.xlu0 %v1770
      %v1772 = vpop.xlane.xlu0 %1771
      %v1773 = vrcp.pop %v1772
      %v1774 = vmul.f32 %v1769, %v1773
      %v1775 = vpack.c.bf16 %v1774, %v1774
      %v1776 = vpack.c.bf16 %v1709, %v1709
      %v1778 = vsel %vm655, %v1775, 0
      %v1781 = vsel %vm720, %v1776, 0
      %1783 = vmatprep.subr.bf16.mxu0 0
      %1784 = vmatpush1.bf16.msra.mxu0 0
      %1785 = vmatprep.subr.bf16.mxu0 0
      %1786 = vmatpush1.bf16.msra.mxu0 0
      %1787 = vmatprep.subr.bf16.mxu0 0
      %1788 = vmatpush1.bf16.msra.mxu0 0
      %1789 = vmatprep.subr.bf16.mxu0 0
      %1790 = vmatpush1.bf16.msra.mxu0 0
      %1791 = vmatprep.subr.bf16.mxu0 0
      %1792 = vmatpush1.bf16.msra.mxu0 0
      %1793 = vmatprep.subr.bf16.mxu0 0
      %1794 = vmatpush1.bf16.msra.mxu0 0
      %1795 = vmatprep.subr.bf16.mxu0 0
      %1796 = vmatpush1.bf16.msra.mxu0 0
      %1797 = vmatprep.subr.bf16.mxu0 0
      %1798 = vmatpush1.bf16.msra.mxu0 %v1781
      %1799 = vmatprep.subr.bf16.mxu0 0
      %1800 = vmatpush2.bf16.msra.mxu0 0
      %1801 = vmatprep.subr.bf16.mxu0 0
      %1802 = vmatpush2.bf16.msra.mxu0 0
      %1803 = vmatprep.subr.bf16.mxu0 0
      %1804 = vmatpush2.bf16.msra.mxu0 0
      %1805 = vmatprep.subr.bf16.mxu0 0
      %1806 = vmatpush2.bf16.msra.mxu0 0
      %1807 = vmatprep.subr.bf16.mxu0 0
      %1808 = vmatpush2.bf16.msra.mxu0 0
      %1809 = vmatprep.subr.bf16.mxu0 0
      %1810 = vmatpush2.bf16.msra.mxu0 0
      %1811 = vmatprep.subr.bf16.mxu0 0
      %1812 = vmatpush2.bf16.msra.mxu0 0
      %1813 = vmatprep.subr.bf16.mxu0 0
      %1814 = vmatpush2.bf16.msra.mxu0 0
      %1815 = vmatprep.mubr.bf16.mxu0 0
      %1816 = vmatmul.mubr.bf16.gmra.mxu0 %v1778
      %v1817 = vpop.f32.mrf.mxu0
      %v1818 = vadd.f32 0.0, %v1817
      %v1819 = vpop.f32.mrf.mxu0
      %v1820 = vpop.f32.mrf.mxu0
      %v1821 = vpop.f32.mrf.mxu0
      %1822 = vdwg.mxu0
      %v1823 = vpack.c.bf16 %v1818, %v1818
      %s1824 = scalar_lea.vmem %s10, 12
      %v1825 = vld [vmem:[%s1824] sm:$0xf]
      %v1827 = vsel %vm655, %v1823, 0
      %v1830 = vsel %vm720, %v1825, 0
      %1832 = vmatprep.subr.bf16.mxu0 0
      %1833 = vmatpush1.bf16.msra.mxu0 0
      %1834 = vmatprep.subr.bf16.mxu0 0
      %1835 = vmatpush1.bf16.msra.mxu0 0
      %1836 = vmatprep.subr.bf16.mxu0 0
      %1837 = vmatpush1.bf16.msra.mxu0 0
      %1838 = vmatprep.subr.bf16.mxu0 0
      %1839 = vmatpush1.bf16.msra.mxu0 0
      %1840 = vmatprep.subr.bf16.mxu0 0
      %1841 = vmatpush1.bf16.msra.mxu0 0
      %1842 = vmatprep.subr.bf16.mxu0 0
      %1843 = vmatpush1.bf16.msra.mxu0 0
      %1844 = vmatprep.subr.bf16.mxu0 0
      %1845 = vmatpush1.bf16.msra.mxu0 0
      %1846 = vmatprep.subr.bf16.mxu0 0
      %1847 = vmatpush1.bf16.msra.mxu0 %v1830
      %1848 = vmatprep.subr.bf16.mxu0 0
      %1849 = vmatpush2.bf16.msra.mxu0 0
      %1850 = vmatprep.subr.bf16.mxu0 0
      %1851 = vmatpush2.bf16.msra.mxu0 0
      %1852 = vmatprep.subr.bf16.mxu0 0
      %1853 = vmatpush2.bf16.msra.mxu0 0
      %1854 = vmatprep.subr.bf16.mxu0 0
      %1855 = vmatpush2.bf16.msra.mxu0 0
      %1856 = vmatprep.subr.bf16.mxu0 0
      %1857 = vmatpush2.bf16.msra.mxu0 0
      %1858 = vmatprep.subr.bf16.mxu0 0
      %1859 = vmatpush2.bf16.msra.mxu0 0
      %1860 = vmatprep.subr.bf16.mxu0 0
      %1861 = vmatpush2.bf16.msra.mxu0 0
      %1862 = vmatprep.subr.bf16.mxu0 0
      %1863 = vmatpush2.bf16.msra.mxu0 0
      %1864 = vmatprep.mubr.bf16.mxu0 0
      %1865 = vmatmul.mubr.bf16.gmra.mxu0 %v1827
      %v1866 = vpop.f32.mrf.mxu0
      %v1867 = vadd.f32 0.0, %v1866
      %v1868 = vpop.f32.mrf.mxu0
      %v1869 = vpop.f32.mrf.mxu0
      %v1870 = vpop.f32.mrf.mxu0
      %1871 = vdwg.mxu0
      %v1872 = vadd.f32 %v1518, %v1867
      %v1873 = vld [vmem:[%s11] sm:$0x1]
      %v1875 = vlaneseq
      %v1876 = vshrl.u32 %v1875, 7
      %v1877 = vsub.s32 0, %v1876
      %v1878 = vrot.slane %v1873, %v1877
      %v1880 = vadd.f32 %v1872, %v1878
      %v1881 = vadd.f32 %v427, %v1880
      %1882 = vst.msk [vmem:[%s425] sm:$0xff] %vm430, %v1881
      %p1883 = scmp.lt.s32.totalorder %s23, 1
      %s1884 = scalar_select %p1883, %s23, 1
      %s1885 = smul.addr %s1884, 8
      %s1886 = scalar_lea.vmem %s12, %s1885
      // Predicated region
      $region69: #{_lambda_.19} parent=67 // pred_check
        %p1887 = pneg %p303
      $region70: #{_lambda_.19} parent=67 // pred_check_branch
        %1889 = sbr.rel (%p1887) target = $region72
      $region71: #{_lambda_.19} parent=67 // pred_region
        _
      $region72: #{_lambda_.19} parent=67 // pred_fallthru
        _
    $region68: #{_lambda_.19} parent=5 // pred_fallthru
      _
    %p1890 = scmp.le.s32.totalorder 2, %s18
    // Predicated region
    $region73: #{_lambda_.19} parent=5 // pred_check
      %p1891 = pneg %p1890
    $region74: #{_lambda_.19} parent=5 // pred_check_branch
      %1893 = sbr.rel (%p1891) target = $region76
    $region75: #{_lambda_.19} parent=5 // pred_region
      %s1894 = ssub.s32 %s18, 2
      // Predicated region
      $region77: #{_lambda_.19} parent=75 // pred_check
        %p1895 = pneg %p309
      $region78: #{_lambda_.19} parent=75 // pred_check_branch
        %1897 = sbr.rel (%p1895) target = $region80
      $region79: #{_lambda_.19} parent=75 // pred_region
        %p1898 = scmp.lt.s32.totalorder %s24, 1
        %s1899 = scalar_select %p1898, %s24, 1
        %s1900 = smul.addr %s1899, 8
        %s1901 = scalar_lea.vmem %s12, %s1900
      $region80: #{_lambda_.19} parent=75 // pred_fallthru
        _
    $region76: #{_lambda_.19} parent=5 // pred_fallthru
      _
  $region6: #{_lambda_.19} parent=0 // loop_footer
    %s22 = sadd.s32 1, %s18
  $region7: #{_lambda_.19} parent=0 // loop_footer_branch
    %17 = sbr.rel target = $region3
  $region8: #{_lambda_.19} parent=0 // loop_exit
    _

// kernel: _lambda_.20
$region0: #{_lambda_.20}
  #allocation0 [shape = 'u32[]', space=smem, size = 0x4, offset = 0x4, fixed_abs, tag = 'smem constant byte address 0x4 - core index']
  #allocation1 [shape = 'u32[144,128]{1,0:T(1,128)}', space=vmem, size = 0x12000, scoped, tag = 'internal scratch']
  %s0 = inlined_call_operand.vmem [shape: f32[2,8,32], index: 0, kind: input, shape index: {}]
  %s1 = inlined_call_operand.vmem [shape: f32[2,16,32], index: 1, kind: input, shape index: {}]
  %s2 = inlined_call_operand.vmem [shape: f32[2,8,16], index: 2, kind: input, shape index: {}]
  %s3 = inlined_call_operand.vmem [shape: f32[1,32], index: 3, kind: input, shape index: {}]
  %s4 = inlined_call_operand.vmem [shape: f32[1,32], index: 4, kind: input, shape index: {}]
  %s5 = inlined_call_operand.vmem [shape: bf16[4,32,8], index: 5, kind: input, shape index: {}]
  %s6 = inlined_call_operand.vmem [shape: f32[4,1,8], index: 6, kind: input, shape index: {}]
  %s7 = inlined_call_operand.vmem [shape: bf16[4,32,8], index: 7, kind: input, shape index: {}]
  %s8 = inlined_call_operand.vmem [shape: f32[4,1,8], index: 8, kind: input, shape index: {}]
  %s9 = inlined_call_operand.vmem [shape: bf16[4,32,8], index: 9, kind: input, shape index: {}]
  %s10 = inlined_call_operand.vmem [shape: f32[4,1,8], index: 10, kind: input, shape index: {}]
  %s11 = inlined_call_operand.vmem [shape: bf16[4,8,32], index: 11, kind: input, shape index: {}]
  %s12 = inlined_call_operand.vmem [shape: f32[1,32], index: 12, kind: input, shape index: {}]
  %s13 = inlined_call_operand.vmem [shape: f32[2,8,32], index: 13, kind: output, shape index: {}]
  %s14 = sld [smem:[#allocation0]]
  $region85: #{_lambda_.20} parent=0
    _
  %s16 = ssub.s32 1, %s14
  %s17 = scalar_select 0, %s16, %s14
  loop: start=0, step=1, limit=4
  $region2: #{_lambda_.20} parent=0 // loop_pre_header
    _
  $region3: #{_lambda_.20} parent=0 // loop_header
    %s19 = sphi 0, %s23
    %p20 = scmp.ge.s32.totalorder %s19, 4
    %s29 = sphi 0, %s31
    %s32 = sphi 0, %s29
    %s33 = sphi 0, %s32
    %s49 = sphi 0, %s33
    %s55 = sphi 0, %s57
    %s58 = sphi 0, %s55
    %s59 = sphi 0, %s58
    %s75 = sphi 0, %s59
    %s81 = sphi 0, %s83
    %s84 = sphi 0, %s81
    %s85 = sphi 0, %s84
    %s101 = sphi 0, %s85
    %s105 = sphi 0, %s105
    %s107 = sphi 0, %s105
    %s108 = sphi 0, %s107
    %s122 = sphi 0, %s108
    %s126 = sphi 0, %s126
    %s128 = sphi 0, %s126
    %s129 = sphi 0, %s128
    %s143 = sphi 0, %s129
    %s147 = sphi 0, %s147
    %s149 = sphi 0, %s147
    %s150 = sphi 0, %s149
    %s164 = sphi 0, %s150
    %s168 = sphi 0, %s168
    %s170 = sphi 0, %s168
    %s171 = sphi 0, %s170
    %s185 = sphi 0, %s171
    %s189 = sphi 0, %s189
    %s191 = sphi 0, %s189
    %s192 = sphi 0, %s191
    %s206 = sphi 0, %s192
    %s210 = sphi 0, %s210
    %s212 = sphi 0, %s210
    %s213 = sphi 0, %s212
    %s227 = sphi 0, %s213
    %s231 = sphi 0, %s231
    %s233 = sphi 0, %s231
    %s234 = sphi 0, %s233
    %s248 = sphi 0, %s234
    %s252 = sphi 0, %s252
    %s254 = sphi 0, %s252
    %s255 = sphi 0, %s254
    %s269 = sphi 0, %s255
    %s273 = sphi 0, %s273
    %s275 = sphi 0, %s273
    %s276 = sphi 0, %s275
    %s290 = sphi 0, %s276
    %s294 = sphi 0, %s294
    %s296 = sphi 0, %s294
    %s297 = sphi 0, %s296
    %s311 = sphi 0, %s297
    %s317 = sphi 0, %s319
    %s320 = sphi 0, %s317
    %s321 = sphi 0, %s320
    %s337 = sphi 0, %s321
  $region4: #{_lambda_.20} parent=0 // loop_header_branch
    %22 = sbr.rel (%p20) target = $region8
  $region5: #{_lambda_.20} parent=0 // loop_body
    %s24 = ssub.s32 %s19, 1
    %s25 = ssub.s32 %s19, 2
    %s26 = sadd.s32 %s19, 1
    %s27 = ssub.s32 %s19, %s26
    %p28 = scmp.eq.s32.totalorder %s27, 0
    %s30 = sadd.s32 %s29, 1
    %s31 = scalar_select %p28, %s29, %s30
    %p34 = pneg %p28
    %p35 = scmp.eq.s32.totalorder %s19, 1
    %p36 = por %p34, %p35
    %p37 = scmp.ne.s32.totalorder %s29, %s32
    %p38 = scmp.eq.s32.totalorder %s19, 0
    %p39 = por %p37, %p38
    %p40 = scmp.ne.s32.totalorder %s29, %s32
    %p41 = scmp.eq.s32.totalorder %s24, 1
    %p42 = por %p40, %p41
    %p43 = scmp.ne.s32.totalorder %s32, %s33
    %p44 = scmp.eq.s32.totalorder %s24, 0
    %p45 = por %p43, %p44
    %p46 = scmp.ne.s32.totalorder %s32, %s33
    %p47 = scmp.eq.s32.totalorder %s25, 1
    %p48 = por %p46, %p47
    %p50 = scmp.ne.s32.totalorder %s33, %s49
    %p51 = scmp.eq.s32.totalorder %s25, 0
    %p52 = por %p50, %p51
    %s53 = ssub.s32 %s19, %s26
    %p54 = scmp.eq.s32.totalorder %s53, 0
    %s56 = sadd.s32 %s55, 1
    %s57 = scalar_select %p54, %s55, %s56
    %p60 = pneg %p54
    %p61 = scmp.eq.s32.totalorder %s19, 1
    %p62 = por %p60, %p61
    %p63 = scmp.ne.s32.totalorder %s55, %s58
    %p64 = scmp.eq.s32.totalorder %s19, 0
    %p65 = por %p63, %p64
    %p66 = scmp.ne.s32.totalorder %s55, %s58
    %p67 = scmp.eq.s32.totalorder %s24, 1
    %p68 = por %p66, %p67
    %p69 = scmp.ne.s32.totalorder %s58, %s59
    %p70 = scmp.eq.s32.totalorder %s24, 0
    %p71 = por %p69, %p70
    %p72 = scmp.ne.s32.totalorder %s58, %s59
    %p73 = scmp.eq.s32.totalorder %s25, 1
    %p74 = por %p72, %p73
    %p76 = scmp.ne.s32.totalorder %s59, %s75
    %p77 = scmp.eq.s32.totalorder %s25, 0
    %p78 = por %p76, %p77
    %s79 = ssub.s32 %s19, %s26
    %p80 = scmp.eq.s32.totalorder %s79, 0
    %s82 = sadd.s32 %s81, 1
    %s83 = scalar_select %p80, %s81, %s82
    %p86 = pneg %p80
    %p87 = scmp.eq.s32.totalorder %s19, 1
    %p88 = por %p86, %p87
    %p89 = scmp.ne.s32.totalorder %s81, %s84
    %p90 = scmp.eq.s32.totalorder %s19, 0
    %p91 = por %p89, %p90
    %p92 = scmp.ne.s32.totalorder %s81, %s84
    %p93 = scmp.eq.s32.totalorder %s24, 1
    %p94 = por %p92, %p93
    %p95 = scmp.ne.s32.totalorder %s84, %s85
    %p96 = scmp.eq.s32.totalorder %s24, 0
    %p97 = por %p95, %p96
    %p98 = scmp.ne.s32.totalorder %s84, %s85
    %p99 = scmp.eq.s32.totalorder %s25, 1
    %p100 = por %p98, %p99
    %p102 = scmp.ne.s32.totalorder %s85, %s101
    %p103 = scmp.eq.s32.totalorder %s25, 0
    %p104 = por %p102, %p103
    %s106 = sadd.s32 %s105, 1
    %p109 = scmp.eq.s32.totalorder %s19, 1
    %p110 = scmp.ne.s32.totalorder %s105, %s107
    %p111 = scmp.eq.s32.totalorder %s19, 0
    %p112 = por %p110, %p111
    %p113 = scmp.ne.s32.totalorder %s105, %s107
    %p114 = scmp.eq.s32.totalorder %s24, 1
    %p115 = por %p113, %p114
    %p116 = scmp.ne.s32.totalorder %s107, %s108
    %p117 = scmp.eq.s32.totalorder %s24, 0
    %p118 = por %p116, %p117
    %p119 = scmp.ne.s32.totalorder %s107, %s108
    %p120 = scmp.eq.s32.totalorder %s25, 1
    %p121 = por %p119, %p120
    %p123 = scmp.ne.s32.totalorder %s108, %s122
    %p124 = scmp.eq.s32.totalorder %s25, 0
    %p125 = por %p123, %p124
    %s127 = sadd.s32 %s126, 1
    %p130 = scmp.eq.s32.totalorder %s19, 1
    %p131 = scmp.ne.s32.totalorder %s126, %s128
    %p132 = scmp.eq.s32.totalorder %s19, 0
    %p133 = por %p131, %p132
    %p134 = scmp.ne.s32.totalorder %s126, %s128
    %p135 = scmp.eq.s32.totalorder %s24, 1
    %p136 = por %p134, %p135
    %p137 = scmp.ne.s32.totalorder %s128, %s129
    %p138 = scmp.eq.s32.totalorder %s24, 0
    %p139 = por %p137, %p138
    %p140 = scmp.ne.s32.totalorder %s128, %s129
    %p141 = scmp.eq.s32.totalorder %s25, 1
    %p142 = por %p140, %p141
    %p144 = scmp.ne.s32.totalorder %s129, %s143
    %p145 = scmp.eq.s32.totalorder %s25, 0
    %p146 = por %p144, %p145
    %s148 = sadd.s32 %s147, 1
    %p151 = scmp.eq.s32.totalorder %s19, 1
    %p152 = scmp.ne.s32.totalorder %s147, %s149
    %p153 = scmp.eq.s32.totalorder %s19, 0
    %p154 = por %p152, %p153
    %p155 = scmp.ne.s32.totalorder %s147, %s149
    %p156 = scmp.eq.s32.totalorder %s24, 1
    %p157 = por %p155, %p156
    %p158 = scmp.ne.s32.totalorder %s149, %s150
    %p159 = scmp.eq.s32.totalorder %s24, 0
    %p160 = por %p158, %p159
    %p161 = scmp.ne.s32.totalorder %s149, %s150
    %p162 = scmp.eq.s32.totalorder %s25, 1
    %p163 = por %p161, %p162
    %p165 = scmp.ne.s32.totalorder %s150, %s164
    %p166 = scmp.eq.s32.totalorder %s25, 0
    %p167 = por %p165, %p166
    %s169 = sadd.s32 %s168, 1
    %p172 = scmp.eq.s32.totalorder %s19, 1
    %p173 = scmp.ne.s32.totalorder %s168, %s170
    %p174 = scmp.eq.s32.totalorder %s19, 0
    %p175 = por %p173, %p174
    %p176 = scmp.ne.s32.totalorder %s168, %s170
    %p177 = scmp.eq.s32.totalorder %s24, 1
    %p178 = por %p176, %p177
    %p179 = scmp.ne.s32.totalorder %s170, %s171
    %p180 = scmp.eq.s32.totalorder %s24, 0
    %p181 = por %p179, %p180
    %p182 = scmp.ne.s32.totalorder %s170, %s171
    %p183 = scmp.eq.s32.totalorder %s25, 1
    %p184 = por %p182, %p183
    %p186 = scmp.ne.s32.totalorder %s171, %s185
    %p187 = scmp.eq.s32.totalorder %s25, 0
    %p188 = por %p186, %p187
    %s190 = sadd.s32 %s189, 1
    %p193 = scmp.eq.s32.totalorder %s19, 1
    %p194 = scmp.ne.s32.totalorder %s189, %s191
    %p195 = scmp.eq.s32.totalorder %s19, 0
    %p196 = por %p194, %p195
    %p197 = scmp.ne.s32.totalorder %s189, %s191
    %p198 = scmp.eq.s32.totalorder %s24, 1
    %p199 = por %p197, %p198
    %p200 = scmp.ne.s32.totalorder %s191, %s192
    %p201 = scmp.eq.s32.totalorder %s24, 0
    %p202 = por %p200, %p201
    %p203 = scmp.ne.s32.totalorder %s191, %s192
    %p204 = scmp.eq.s32.totalorder %s25, 1
    %p205 = por %p203, %p204
    %p207 = scmp.ne.s32.totalorder %s192, %s206
    %p208 = scmp.eq.s32.totalorder %s25, 0
    %p209 = por %p207, %p208
    %s211 = sadd.s32 %s210, 1
    %p214 = scmp.eq.s32.totalorder %s19, 1
    %p215 = scmp.ne.s32.totalorder %s210, %s212
    %p216 = scmp.eq.s32.totalorder %s19, 0
    %p217 = por %p215, %p216
    %p218 = scmp.ne.s32.totalorder %s210, %s212
    %p219 = scmp.eq.s32.totalorder %s24, 1
    %p220 = por %p218, %p219
    %p221 = scmp.ne.s32.totalorder %s212, %s213
    %p222 = scmp.eq.s32.totalorder %s24, 0
    %p223 = por %p221, %p222
    %p224 = scmp.ne.s32.totalorder %s212, %s213
    %p225 = scmp.eq.s32.totalorder %s25, 1
    %p226 = por %p224, %p225
    %p228 = scmp.ne.s32.totalorder %s213, %s227
    %p229 = scmp.eq.s32.totalorder %s25, 0
    %p230 = por %p228, %p229
    %s232 = sadd.s32 %s231, 1
    %p235 = scmp.eq.s32.totalorder %s19, 1
    %p236 = scmp.ne.s32.totalorder %s231, %s233
    %p237 = scmp.eq.s32.totalorder %s19, 0
    %p238 = por %p236, %p237
    %p239 = scmp.ne.s32.totalorder %s231, %s233
    %p240 = scmp.eq.s32.totalorder %s24, 1
    %p241 = por %p239, %p240
    %p242 = scmp.ne.s32.totalorder %s233, %s234
    %p243 = scmp.eq.s32.totalorder %s24, 0
    %p244 = por %p242, %p243
    %p245 = scmp.ne.s32.totalorder %s233, %s234
    %p246 = scmp.eq.s32.totalorder %s25, 1
    %p247 = por %p245, %p246
    %p249 = scmp.ne.s32.totalorder %s234, %s248
    %p250 = scmp.eq.s32.totalorder %s25, 0
    %p251 = por %p249, %p250
    %s253 = sadd.s32 %s252, 1
    %p256 = scmp.eq.s32.totalorder %s19, 1
    %p257 = scmp.ne.s32.totalorder %s252, %s254
    %p258 = scmp.eq.s32.totalorder %s19, 0
    %p259 = por %p257, %p258
    %p260 = scmp.ne.s32.totalorder %s252, %s254
    %p261 = scmp.eq.s32.totalorder %s24, 1
    %p262 = por %p260, %p261
    %p263 = scmp.ne.s32.totalorder %s254, %s255
    %p264 = scmp.eq.s32.totalorder %s24, 0
    %p265 = por %p263, %p264
    %p266 = scmp.ne.s32.totalorder %s254, %s255
    %p267 = scmp.eq.s32.totalorder %s25, 1
    %p268 = por %p266, %p267
    %p270 = scmp.ne.s32.totalorder %s255, %s269
    %p271 = scmp.eq.s32.totalorder %s25, 0
    %p272 = por %p270, %p271
    %s274 = sadd.s32 %s273, 1
    %p277 = scmp.eq.s32.totalorder %s19, 1
    %p278 = scmp.ne.s32.totalorder %s273, %s275
    %p279 = scmp.eq.s32.totalorder %s19, 0
    %p280 = por %p278, %p279
    %p281 = scmp.ne.s32.totalorder %s273, %s275
    %p282 = scmp.eq.s32.totalorder %s24, 1
    %p283 = por %p281, %p282
    %p284 = scmp.ne.s32.totalorder %s275, %s276
    %p285 = scmp.eq.s32.totalorder %s24, 0
    %p286 = por %p284, %p285
    %p287 = scmp.ne.s32.totalorder %s275, %s276
    %p288 = scmp.eq.s32.totalorder %s25, 1
    %p289 = por %p287, %p288
    %p291 = scmp.ne.s32.totalorder %s276, %s290
    %p292 = scmp.eq.s32.totalorder %s25, 0
    %p293 = por %p291, %p292
    %s295 = sadd.s32 %s294, 1
    %p298 = scmp.eq.s32.totalorder %s19, 1
    %p299 = scmp.ne.s32.totalorder %s294, %s296
    %p300 = scmp.eq.s32.totalorder %s19, 0
    %p301 = por %p299, %p300
    %p302 = scmp.ne.s32.totalorder %s294, %s296
    %p303 = scmp.eq.s32.totalorder %s24, 1
    %p304 = por %p302, %p303
    %p305 = scmp.ne.s32.totalorder %s296, %s297
    %p306 = scmp.eq.s32.totalorder %s24, 0
    %p307 = por %p305, %p306
    %p308 = scmp.ne.s32.totalorder %s296, %s297
    %p309 = scmp.eq.s32.totalorder %s25, 1
    %p310 = por %p308, %p309
    %p312 = scmp.ne.s32.totalorder %s297, %s311
    %p313 = scmp.eq.s32.totalorder %s25, 0
    %p314 = por %p312, %p313
    %s315 = ssub.s32 %s19, %s26
    %p316 = scmp.eq.s32.totalorder %s315, 0
    %s318 = sadd.s32 %s317, 1
    %s319 = scalar_select %p316, %s317, %s318
    %p322 = pneg %p316
    %p323 = scmp.eq.s32.totalorder %s19, 1
    %p324 = por %p322, %p323
    %p325 = scmp.ne.s32.totalorder %s317, %s320
    %p326 = scmp.eq.s32.totalorder %s19, 0
    %p327 = por %p325, %p326
    %p328 = scmp.ne.s32.totalorder %s317, %s320
    %p329 = scmp.eq.s32.totalorder %s24, 1
    %p330 = por %p328, %p329
    %p331 = scmp.ne.s32.totalorder %s320, %s321
    %p332 = scmp.eq.s32.totalorder %s24, 0
    %p333 = por %p331, %p332
    %p334 = scmp.ne.s32.totalorder %s320, %s321
    %p335 = scmp.eq.s32.totalorder %s25, 1
    %p336 = por %p334, %p335
    %p338 = scmp.ne.s32.totalorder %s321, %s337
    %p339 = scmp.eq.s32.totalorder %s25, 0
    %p340 = por %p338, %p339
    %p341 = scmp.le.s32.totalorder 1, %s19
    %p342 = scmp.lt.s32.totalorder %s19, 3
    %p343 = pnand %p341, %p342
    %p344 = pneg %p343
    // Predicated region
    $region9: #{_lambda_.20} parent=5 // pred_check
      _
    $region10: #{_lambda_.20} parent=5 // pred_check_branch
      %346 = sbr.rel (%p343) target = $region12
    $region11: #{_lambda_.20} parent=5 // pred_region
      %s347 = ssub.s32 %s19, 1
      // Predicated region
      $region13: #{_lambda_.20} parent=11 // pred_check
        %p348 = pneg %p118
      $region14: #{_lambda_.20} parent=11 // pred_check_branch
        %350 = sbr.rel (%p348) target = $region16
      $region15: #{_lambda_.20} parent=11 // pred_region
        _
      $region16: #{_lambda_.20} parent=11 // pred_fallthru
        _
      // Predicated region
      $region17: #{_lambda_.20} parent=11 // pred_check
        %p351 = pneg %p139
      $region18: #{_lambda_.20} parent=11 // pred_check_branch
        %353 = sbr.rel (%p351) target = $region20
      $region19: #{_lambda_.20} parent=11 // pred_region
        _
      $region20: #{_lambda_.20} parent=11 // pred_fallthru
        _
      // Predicated region
      $region21: #{_lambda_.20} parent=11 // pred_check
        %p354 = pneg %p160
      $region22: #{_lambda_.20} parent=11 // pred_check_branch
        %356 = sbr.rel (%p354) target = $region24
      $region23: #{_lambda_.20} parent=11 // pred_region
        _
      $region24: #{_lambda_.20} parent=11 // pred_fallthru
        _
      // Predicated region
      $region25: #{_lambda_.20} parent=11 // pred_check
        %p357 = pneg %p181
      $region26: #{_lambda_.20} parent=11 // pred_check_branch
        %359 = sbr.rel (%p357) target = $region28
      $region27: #{_lambda_.20} parent=11 // pred_region
        _
      $region28: #{_lambda_.20} parent=11 // pred_fallthru
        _
      // Predicated region
      $region29: #{_lambda_.20} parent=11 // pred_check
        %p360 = pneg %p202
      $region30: #{_lambda_.20} parent=11 // pred_check_branch
        %362 = sbr.rel (%p360) target = $region32
      $region31: #{_lambda_.20} parent=11 // pred_region
        _
      $region32: #{_lambda_.20} parent=11 // pred_fallthru
        _
      // Predicated region
      $region33: #{_lambda_.20} parent=11 // pred_check
        %p363 = pneg %p223
      $region34: #{_lambda_.20} parent=11 // pred_check_branch
        %365 = sbr.rel (%p363) target = $region36
      $region35: #{_lambda_.20} parent=11 // pred_region
        _
      $region36: #{_lambda_.20} parent=11 // pred_fallthru
        _
      // Predicated region
      $region37: #{_lambda_.20} parent=11 // pred_check
        %p366 = pneg %p244
      $region38: #{_lambda_.20} parent=11 // pred_check_branch
        %368 = sbr.rel (%p366) target = $region40
      $region39: #{_lambda_.20} parent=11 // pred_region
        _
      $region40: #{_lambda_.20} parent=11 // pred_fallthru
        _
      // Predicated region
      $region41: #{_lambda_.20} parent=11 // pred_check
        %p369 = pneg %p265
      $region42: #{_lambda_.20} parent=11 // pred_check_branch
        %371 = sbr.rel (%p369) target = $region44
      $region43: #{_lambda_.20} parent=11 // pred_region
        _
      $region44: #{_lambda_.20} parent=11 // pred_fallthru
        _
      // Predicated region
      $region45: #{_lambda_.20} parent=11 // pred_check
        %p372 = pneg %p286
      $region46: #{_lambda_.20} parent=11 // pred_check_branch
        %374 = sbr.rel (%p372) target = $region48
      $region47: #{_lambda_.20} parent=11 // pred_region
        _
      $region48: #{_lambda_.20} parent=11 // pred_fallthru
        _
      // Predicated region
      $region49: #{_lambda_.20} parent=11 // pred_check
        %p375 = pneg %p307
      $region50: #{_lambda_.20} parent=11 // pred_check_branch
        %377 = sbr.rel (%p375) target = $region52
      $region51: #{_lambda_.20} parent=11 // pred_region
        _
      $region52: #{_lambda_.20} parent=11 // pred_fallthru
        _
    $region12: #{_lambda_.20} parent=5 // pred_fallthru
      _
    %p378 = scmp.lt.s32.totalorder %s19, 2
    // Predicated region
    $region53: #{_lambda_.20} parent=5 // pred_check
      %p379 = pneg %p378
    $region54: #{_lambda_.20} parent=5 // pred_check_branch
      %381 = sbr.rel (%p379) target = $region56
    $region55: #{_lambda_.20} parent=5 // pred_region
      // Predicated region
      $region57: #{_lambda_.20} parent=55 // pred_check
        %p382 = pneg %p39
      $region58: #{_lambda_.20} parent=55 // pred_check_branch
        %384 = sbr.rel (%p382) target = $region60
      $region59: #{_lambda_.20} parent=55 // pred_region
        %p385 = scmp.lt.s32.totalorder %s19, 1
        %s386 = scalar_select %p385, %s19, 1
        %s387 = smul.addr %s386, 8
        %s388 = scalar_lea.vmem %s0, %s387
      $region60: #{_lambda_.20} parent=55 // pred_fallthru
        _
      // Predicated region
      $region61: #{_lambda_.20} parent=55 // pred_check
        %p389 = pneg %p65
      $region62: #{_lambda_.20} parent=55 // pred_check_branch
        %391 = sbr.rel (%p389) target = $region64
      $region63: #{_lambda_.20} parent=55 // pred_region
        %p392 = scmp.lt.s32.totalorder %s19, 1
        %s393 = scalar_select %p392, %s19, 1
        %s394 = smul.addr %s393, 2
        %s395 = smul.addr %s394, 8
        %s396 = scalar_lea.vmem %s1, %s395
      $region64: #{_lambda_.20} parent=55 // pred_fallthru
        _
      // Predicated region
      $region65: #{_lambda_.20} parent=55 // pred_check
        %p397 = pneg %p91
      $region66: #{_lambda_.20} parent=55 // pred_check_branch
        %399 = sbr.rel (%p397) target = $region68
      $region67: #{_lambda_.20} parent=55 // pred_region
        %p400 = scmp.lt.s32.totalorder %s19, 1
        %s401 = scalar_select %p400, %s19, 1
        %s402 = smul.addr %s401, 8
        %s403 = scalar_lea.vmem %s2, %s402
      $region68: #{_lambda_.20} parent=55 // pred_fallthru
        _
    $region56: #{_lambda_.20} parent=5 // pred_fallthru
      _
    %p404 = scmp.le.s32.totalorder 1, %s19
    %p405 = scmp.lt.s32.totalorder %s19, 3
    %p406 = pnand %p404, %p405
    %p407 = pneg %p406
    // Predicated region
    $region69: #{_lambda_.20} parent=5 // pred_check
      _
    $region70: #{_lambda_.20} parent=5 // pred_check_branch
      %409 = sbr.rel (%p406) target = $region72
    $region71: #{_lambda_.20} parent=5 // pred_region
      %s410 = ssub.s32 %s19, 1
      %p411 = scmp.lt.s32.totalorder %s24, 1
      %s412 = scalar_select %p411, %s24, 1
      %s413 = smul.addr %s412, 8
      %s414 = scalar_lea.vmem %s0, %s413
      %p415 = pneg %p45
      %p416 = pneg %p42
      %p417 = scmp.lt.s32.totalorder %s24, 1
      %s418 = scalar_select %p417, %s24, 1
      %s419 = smul.addr %s418, 2
      %s420 = smul.addr %s419, 8
      %s421 = scalar_lea.vmem %s1, %s420
      %p422 = pneg %p71
      %p423 = pneg %p68
      %p424 = scmp.lt.s32.totalorder %s24, 1
      %s425 = scalar_select %p424, %s24, 1
      %s426 = smul.addr %s425, 8
      %s427 = scalar_lea.vmem %s2, %s426
      %p428 = pneg %p97
      %p429 = pneg %p94
      %p430 = pneg %p118
      %p431 = pneg %p115
      %p432 = pneg %p139
      %p433 = pneg %p136
      %p434 = pneg %p160
      %p435 = pneg %p157
      %p436 = pneg %p181
      %p437 = pneg %p178
      %p438 = pneg %p202
      %p439 = pneg %p199
      %p440 = pneg %p223
      %p441 = pneg %p220
      %p442 = pneg %p244
      %p443 = pneg %p241
      %p444 = pneg %p265
      %p445 = pneg %p262
      %p446 = pneg %p286
      %p447 = pneg %p283
      %p448 = pneg %p307
      %p449 = pneg %p304
      %p450 = pneg %p333
      %p451 = pneg %p330
      %p452 = scmp.lt.s32.totalorder %s24, 1
      %s453 = scalar_select %p452, %s24, 1
      %s454 = smul.addr %s453, 8
      %s455 = scalar_lea.vmem %s13, %s454
      %p456 = scmp.lt.s32.totalorder %s24, 1
      %s457 = scalar_select %p456, %s24, 1
      %s458 = smul.addr %s457, 8
      %s459 = scalar_lea.vmem %s0, %s458
      %p460 = scmp.lt.s32.totalorder %s24, 1
      %s461 = scalar_select %p460, %s24, 1
      %s462 = smul.addr %s461, 2
      %s463 = smul.addr %s462, 8
      %s464 = scalar_lea.vmem %s1, %s463
      %p465 = scmp.lt.s32.totalorder %s24, 1
      %s466 = scalar_select %p465, %s24, 1
      %s467 = smul.addr %s466, 8
      %s468 = scalar_lea.vmem %s2, %s467
      %p469 = scmp.lt.s32.totalorder %s24, 1
      %s470 = scalar_select %p469, %s24, 1
      %s471 = smul.addr %s470, 8
      %s472 = scalar_lea.vmem %s13, %s471
      %v474 = vld [vmem:[%s459] sm:$0xff]
      %v475 = vld [vmem:[%s464] sm:$0xff]
      %v476 = vld [vmem:[%s464 + $0x8] sm:$0xff]
      %v477 = vld [vmem:[%s3] sm:$0x1]
      %v478 = vld [vmem:[%s4] sm:$0x1]
      %vm479 = vcmask 261120
      %v480 = vsel %vm479, %v474, 0.0
      %481 = vadd.xlane.f32.xlu0 %v480
      %v482 = vpop.xlane.xlu0 %481
      %v483 = vrcp.pop 32.0
      %v484 = vmul.f32 %v482, %v483
      %v485 = vsub.f32 %v474, %v484
      %v486 = vmul.f32 %v485, %v485
      %v487 = vsel %vm479, %v486, 0.0
      %488 = vadd.xlane.f32.xlu0 %v487
      %v489 = vpop.xlane.xlu0 %488
      %v490 = vmul.f32 %v489, %v483
      %v491 = vadd.f32 %v490, 1e-06
      %v492 = vrsqrt.pop %v491
      %v493 = vmul.f32 %v485, %v492
      %v495 = vlaneseq
      %v496 = vshrl.u32 %v495, 7
      %v497 = vsub.s32 0, %v496
      %v498 = vrot.slane %v477, %v497
      %v500 = vmul.f32 %v493, %v498
      %v502 = vlaneseq
      %v503 = vshrl.u32 %v502, 7
      %v504 = vsub.s32 0, %v503
      %v505 = vrot.slane %v478, %v504
      %v507 = vadd.f32 %v500, %v505
      %v508 = vld [vmem:[%s468] sm:$0xff]
      %v509 = vpack.c.bf16 %v507, %v507
      %v510 = vpack.c.bf16 %v476, %v475
      %v511 = vld [vmem:[%s5] sm:$0xf]
      %v512 = vld [vmem:[%s5 + $0x4] sm:$0xf]
      %v513 = vld [vmem:[%s5 + $0x8] sm:$0xf]
      %v514 = vld [vmem:[%s5 + $0xc] sm:$0xf]
      %v515 = vld [vmem:[%s6] sm:$0x1]
      %v517 = vlaneseq
      %v518 = vshrl.u32 %v517, 7
      %v519 = vsub.s32 0, %v518
      %v520 = vrot.slane %v515, %v519
      %v526 = vunpack.c.l.b16 %v511
      %v527 = vunpack.c.l.b16 %v512
      %v528 = vunpack.c.l.b16 %v513
      %v529 = vunpack.c.l.b16 %v514
      %v530 = vpack.c.b16 %v527, %v526
      %v531 = vpack.c.b16 %v529, %v528
      %v535 = vsel %vm479, %v509, 0
      %537 = vmatprep.subr.bf16.mxu0 0
      %538 = vmatpush1.bf16.msra.mxu0 0
      %539 = vmatprep.subr.bf16.mxu0 0
      %540 = vmatpush1.bf16.msra.mxu0 0
      %541 = vmatprep.subr.bf16.mxu0 0
      %542 = vmatpush1.bf16.msra.mxu0 0
      %543 = vmatprep.subr.bf16.mxu0 0
      %544 = vmatpush1.bf16.msra.mxu0 0
      %545 = vmatprep.subr.bf16.mxu0 0
      %546 = vmatpush1.bf16.msra.mxu0 0
      %547 = vmatprep.subr.bf16.mxu0 0
      %548 = vmatpush1.bf16.msra.mxu0 0
      %549 = vmatprep.subr.bf16.mxu0 0
      %550 = vmatpush1.bf16.msra.mxu0 %v531
      %551 = vmatprep.subr.bf16.mxu0 0
      %552 = vmatpush1.bf16.msra.mxu0 %v530
      %553 = vmatprep.subr.bf16.mxu0 0
      %554 = vmatpush2.bf16.msra.mxu0 0
      %555 = vmatprep.subr.bf16.mxu0 0
      %556 = vmatpush2.bf16.msra.mxu0 0
      %557 = vmatprep.subr.bf16.mxu0 0
      %558 = vmatpush2.bf16.msra.mxu0 0
      %559 = vmatprep.subr.bf16.mxu0 0
      %560 = vmatpush2.bf16.msra.mxu0 0
      %561 = vmatprep.subr.bf16.mxu0 0
      %562 = vmatpush2.bf16.msra.mxu0 0
      %563 = vmatprep.subr.bf16.mxu0 0
      %564 = vmatpush2.bf16.msra.mxu0 0
      %565 = vmatprep.subr.bf16.mxu0 0
      %566 = vmatpush2.bf16.msra.mxu0 0
      %567 = vmatprep.subr.bf16.mxu0 0
      %568 = vmatpush2.bf16.msra.mxu0 0
      %569 = vmatprep.mubr.bf16.mxu0 0
      %570 = vmatmul.mubr.bf16.gmra.mxu0 %v535
      %v571 = vpop.f32.mrf.mxu0
      %v572 = vadd.f32 %v520, %v571
      %v573 = vpop.f32.mrf.mxu0
      %v574 = vpop.f32.mrf.mxu0
      %v575 = vpop.f32.mrf.mxu0
      %576 = vdwg.mxu0
      %v577 = vld [vmem:[%s7] sm:$0xf]
      %v578 = vld [vmem:[%s7 + $0x4] sm:$0xf]
      %v579 = vld [vmem:[%s7 + $0x8] sm:$0xf]
      %v580 = vld [vmem:[%s7 + $0xc] sm:$0xf]
      %v581 = vld [vmem:[%s8] sm:$0x1]
      %v583 = vlaneseq
      %v584 = vshrl.u32 %v583, 7
      %v585 = vsub.s32 0, %v584
      %v586 = vrot.slane %v581, %v585
      %v592 = vunpack.c.l.b16 %v577
      %v593 = vunpack.c.l.b16 %v578
      %v594 = vunpack.c.l.b16 %v579
      %v595 = vunpack.c.l.b16 %v580
      %v596 = vpack.c.b16 %v593, %v592
      %v597 = vpack.c.b16 %v595, %v594
      %v601 = vsel %vm479, %v510, 0
      %603 = vmatprep.subr.bf16.mxu0 0
      %604 = vmatpush1.bf16.msra.mxu0 0
      %605 = vmatprep.subr.bf16.mxu0 0
      %606 = vmatpush1.bf16.msra.mxu0 0
      %607 = vmatprep.subr.bf16.mxu0 0
      %608 = vmatpush1.bf16.msra.mxu0 0
      %609 = vmatprep.subr.bf16.mxu0 0
      %610 = vmatpush1.bf16.msra.mxu0 0
      %611 = vmatprep.subr.bf16.mxu0 0
      %612 = vmatpush1.bf16.msra.mxu0 0
      %613 = vmatprep.subr.bf16.mxu0 0
      %614 = vmatpush1.bf16.msra.mxu0 0
      %615 = vmatprep.subr.bf16.mxu0 0
      %616 = vmatpush1.bf16.msra.mxu0 %v597
      %617 = vmatprep.subr.bf16.mxu0 0
      %618 = vmatpush1.bf16.msra.mxu0 %v596
      %619 = vmatprep.subr.bf16.mxu0 0
      %620 = vmatpush2.bf16.msra.mxu0 0
      %621 = vmatprep.subr.bf16.mxu0 0
      %622 = vmatpush2.bf16.msra.mxu0 0
      %623 = vmatprep.subr.bf16.mxu0 0
      %624 = vmatpush2.bf16.msra.mxu0 0
      %625 = vmatprep.subr.bf16.mxu0 0
      %626 = vmatpush2.bf16.msra.mxu0 0
      %627 = vmatprep.subr.bf16.mxu0 0
      %628 = vmatpush2.bf16.msra.mxu0 0
      %629 = vmatprep.subr.bf16.mxu0 0
      %630 = vmatpush2.bf16.msra.mxu0 0
      %631 = vmatprep.subr.bf16.mxu0 0
      %632 = vmatpush2.bf16.msra.mxu0 0
      %633 = vmatprep.subr.bf16.mxu0 0
      %634 = vmatpush2.bf16.msra.mxu0 0
      %635 = vmatprep.mubr.bf16.mxu0 0
      %636 = vmatmul.mubr.bf16.gmra.mxu0 %v601
      %v637 = vpop.f32.mrf.mxu0
      %v638 = vadd.f32 %v586, %v637
      %v639 = vpop.f32.mrf.mxu0
      %v640 = vpop.f32.mrf.mxu0
      %v641 = vadd.f32 %v586, %v640
      %v642 = vpop.f32.mrf.mxu0
      %643 = vdwg.mxu0
      %v644 = vld [vmem:[%s9] sm:$0xf]
      %v645 = vld [vmem:[%s9 + $0x4] sm:$0xf]
      %v646 = vld [vmem:[%s9 + $0x8] sm:$0xf]
      %v647 = vld [vmem:[%s9 + $0xc] sm:$0xf]
      %v648 = vld [vmem:[%s10] sm:$0x1]
      %v650 = vlaneseq
      %v651 = vshrl.u32 %v650, 7
      %v652 = vsub.s32 0, %v651
      %v653 = vrot.slane %v648, %v652
      %v659 = vunpack.c.l.b16 %v644
      %v660 = vunpack.c.l.b16 %v645
      %v661 = vunpack.c.l.b16 %v646
      %v662 = vunpack.c.l.b16 %v647
      %v663 = vpack.c.b16 %v660, %v659
      %v664 = vpack.c.b16 %v662, %v661
      %667 = vmatprep.subr.bf16.mxu0 0
      %668 = vmatpush1.bf16.msra.mxu0 0
      %669 = vmatprep.subr.bf16.mxu0 0
      %670 = vmatpush1.bf16.msra.mxu0 0
      %671 = vmatprep.subr.bf16.mxu0 0
      %672 = vmatpush1.bf16.msra.mxu0 0
      %673 = vmatprep.subr.bf16.mxu0 0
      %674 = vmatpush1.bf16.msra.mxu0 0
      %675 = vmatprep.subr.bf16.mxu0 0
      %676 = vmatpush1.bf16.msra.mxu0 0
      %677 = vmatprep.subr.bf16.mxu0 0
      %678 = vmatpush1.bf16.msra.mxu0 0
      %679 = vmatprep.subr.bf16.mxu0 0
      %680 = vmatpush1.bf16.msra.mxu0 %v664
      %681 = vmatprep.subr.bf16.mxu0 0
      %682 = vmatpush1.bf16.msra.mxu0 %v663
      %683 = vmatprep.subr.bf16.mxu0 0
      %684 = vmatpush2.bf16.msra.mxu0 0
      %685 = vmatprep.subr.bf16.mxu0 0
      %686 = vmatpush2.bf16.msra.mxu0 0
      %687 = vmatprep.subr.bf16.mxu0 0
      %688 = vmatpush2.bf16.msra.mxu0 0
      %689 = vmatprep.subr.bf16.mxu0 0
      %690 = vmatpush2.bf16.msra.mxu0 0
      %691 = vmatprep.subr.bf16.mxu0 0
      %692 = vmatpush2.bf16.msra.mxu0 0
      %693 = vmatprep.subr.bf16.mxu0 0
      %694 = vmatpush2.bf16.msra.mxu0 0
      %695 = vmatprep.subr.bf16.mxu0 0
      %696 = vmatpush2.bf16.msra.mxu0 0
      %697 = vmatprep.subr.bf16.mxu0 0
      %698 = vmatpush2.bf16.msra.mxu0 0
      %699 = vmatprep.mubr.bf16.mxu0 0
      %700 = vmatmul.mubr.bf16.gmra.mxu0 %v601
      %v701 = vpop.f32.mrf.mxu0
      %v702 = vadd.f32 %v653, %v701
      %v703 = vpop.f32.mrf.mxu0
      %v704 = vpop.f32.mrf.mxu0
      %v705 = vadd.f32 %v653, %v704
      %v706 = vpop.f32.mrf.mxu0
      %707 = vdwg.mxu0
      %v708 = vpack.c.bf16 %v572, %v572
      %v709 = vpack.c.bf16 %v641, %v638
      %vm710 = vcmask 64512
      %v712 = vsel %vm710, %v708, 0
      %v715 = vsel %vm710, %v709, 0
      %717 = vmatprep.subr.bf16.mxu0 0
      %718 = vmatpush1.bf16.xpose.msra.mxu0 0
      %719 = vmatprep.subr.bf16.mxu0 0
      %720 = vmatpush1.bf16.xpose.msra.mxu0 0
      %721 = vmatprep.subr.bf16.mxu0 0
      %722 = vmatpush1.bf16.xpose.msra.mxu0 0
      %723 = vmatprep.subr.bf16.mxu0 0
      %724 = vmatpush1.bf16.xpose.msra.mxu0 0
      %725 = vmatprep.subr.bf16.mxu0 0
      %726 = vmatpush1.bf16.xpose.msra.mxu0 0
      %727 = vmatprep.subr.bf16.mxu0 0
      %728 = vmatpush1.bf16.xpose.msra.mxu0 0
      %729 = vmatprep.subr.bf16.mxu0 0
      %730 = vmatpush1.bf16.xpose.msra.mxu0 0
      %731 = vmatprep.subr.bf16.mxu0 0
      %732 = vmatpush1.bf16.xpose.msra.mxu0 %v715
      %733 = vmatprep.subr.bf16.mxu0 0
      %734 = vmatpush2.bf16.xpose.msra.mxu0 0
      %735 = vmatprep.subr.bf16.mxu0 0
      %736 = vmatpush2.bf16.xpose.msra.mxu0 0
      %737 = vmatprep.subr.bf16.mxu0 0
      %738 = vmatpush2.bf16.xpose.msra.mxu0 0
      %739 = vmatprep.subr.bf16.mxu0 0
      %740 = vmatpush2.bf16.xpose.msra.mxu0 0
      %741 = vmatprep.subr.bf16.mxu0 0
      %742 = vmatpush2.bf16.xpose.msra.mxu0 0
      %743 = vmatprep.subr.bf16.mxu0 0
      %744 = vmatpush2.bf16.xpose.msra.mxu0 0
      %745 = vmatprep.subr.bf16.mxu0 0
      %746 = vmatpush2.bf16.xpose.msra.mxu0 0
      %747 = vmatprep.subr.bf16.mxu0 0
      %748 = vmatpush2.bf16.xpose.msra.mxu0 0
      %749 = vmatprep.mubr.bf16.mxu0 0
      %750 = vmatmul.mubr.bf16.gmra.mxu0 %v712
      %v751 = vpop.f32.mrf.mxu0
      %v752 = vadd.f32 0.0, %v751
      %v753 = vpop.f32.mrf.mxu0
      %v754 = vpop.f32.mrf.mxu0
      %v755 = vpop.f32.mrf.mxu0
      %756 = vdwg.mxu0
      %v757 = vmul.f32 %v752, 0.35355338
      %v758 = vadd.f32 %v757, %v508
      %vm759 = vcmask 130048
      %v760 = vsel %vm759, %v758, -inf
      %761 = vmax.xlane.f32.xlu0 %v760
      %v762 = vpop.xlane.xlu0 %761
      %v763 = vsub.f32 %v758, %v762
      %v764 = vmul.f32 %v763, 1.442695
      %v765 = vpow.pop %v764
      %v766 = vsel %vm759, %v765, 0.0
      %767 = vadd.xlane.f32.xlu0 %v766
      %v768 = vpop.xlane.xlu0 %767
      %v769 = vrcp.pop %v768
      %v770 = vmul.f32 %v765, %v769
      %v771 = vpack.c.bf16 %v770, %v770
      %v772 = vpack.c.bf16 %v705, %v702
      %v774 = vsel %vm759, %v771, 0
      %776 = vmatprep.subr.bf16.mxu0 0
      %777 = vmatpush1.bf16.msra.mxu0 0
      %778 = vmatprep.subr.bf16.mxu0 0
      %779 = vmatpush1.bf16.msra.mxu0 0
      %780 = vmatprep.subr.bf16.mxu0 0
      %781 = vmatpush1.bf16.msra.mxu0 0
      %782 = vmatprep.subr.bf16.mxu0 0
      %783 = vmatpush1.bf16.msra.mxu0 0
      %784 = vmatprep.subr.bf16.mxu0 0
      %785 = vmatpush1.bf16.msra.mxu0 0
      %786 = vmatprep.subr.bf16.mxu0 0
      %787 = vmatpush1.bf16.msra.mxu0 0
      %788 = vmatprep.subr.bf16.mxu0 0
      %789 = vmatpush1.bf16.msra.mxu0 0
      %790 = vmatprep.subr.bf16.mxu0 0
      %791 = vmatpush1.bf16.msra.mxu0 %v772
      %792 = vmatprep.subr.bf16.mxu0 0
      %793 = vmatpush2.bf16.msra.mxu0 0
      %794 = vmatprep.subr.bf16.mxu0 0
      %795 = vmatpush2.bf16.msra.mxu0 0
      %796 = vmatprep.subr.bf16.mxu0 0
      %797 = vmatpush2.bf16.msra.mxu0 0
      %798 = vmatprep.subr.bf16.mxu0 0
      %799 = vmatpush2.bf16.msra.mxu0 0
      %800 = vmatprep.subr.bf16.mxu0 0
      %801 = vmatpush2.bf16.msra.mxu0 0
      %802 = vmatprep.subr.bf16.mxu0 0
      %803 = vmatpush2.bf16.msra.mxu0 0
      %804 = vmatprep.subr.bf16.mxu0 0
      %805 = vmatpush2.bf16.msra.mxu0 0
      %806 = vmatprep.subr.bf16.mxu0 0
      %807 = vmatpush2.bf16.msra.mxu0 0
      %808 = vmatprep.mubr.bf16.mxu0 0
      %809 = vmatmul.mubr.bf16.gmra.mxu0 %v774
      %v810 = vpop.f32.mrf.mxu0
      %v811 = vadd.f32 0.0, %v810
      %v812 = vpop.f32.mrf.mxu0
      %v813 = vpop.f32.mrf.mxu0
      %v814 = vpop.f32.mrf.mxu0
      %815 = vdwg.mxu0
      %v816 = vpack.c.bf16 %v811, %v811
      %v817 = vld [vmem:[%s11] sm:$0xf]
      %s818 = scalar_lea.vmem %s5, 16
      %v819 = vld [vmem:[%s818] sm:$0xf]
      %v820 = vld [vmem:[%s818 + $0x4] sm:$0xf]
      %v821 = vld [vmem:[%s818 + $0x8] sm:$0xf]
      %v822 = vld [vmem:[%s818 + $0xc] sm:$0xf]
      %s823 = scalar_lea.vmem %s6, 1
      %v824 = vld [vmem:[%s823] sm:$0x1]
      %v826 = vlaneseq
      %v827 = vshrl.u32 %v826, 7
      %v828 = vsub.s32 0, %v827
      %v829 = vrot.slane %v824, %v828
      %v835 = vunpack.c.l.b16 %v819
      %v836 = vunpack.c.l.b16 %v820
      %v837 = vunpack.c.l.b16 %v821
      %v838 = vunpack.c.l.b16 %v822
      %v839 = vpack.c.b16 %v836, %v835
      %v840 = vpack.c.b16 %v838, %v837
      %843 = vmatprep.subr.bf16.mxu0 0
      %844 = vmatpush1.bf16.msra.mxu0 0
      %845 = vmatprep.subr.bf16.mxu0 0
      %846 = vmatpush1.bf16.msra.mxu0 0
      %847 = vmatprep.subr.bf16.mxu0 0
      %848 = vmatpush1.bf16.msra.mxu0 0
      %849 = vmatprep.subr.bf16.mxu0 0
      %850 = vmatpush1.bf16.msra.mxu0 0
      %851 = vmatprep.subr.bf16.mxu0 0
      %852 = vmatpush1.bf16.msra.mxu0 0
      %853 = vmatprep.subr.bf16.mxu0 0
      %854 = vmatpush1.bf16.msra.mxu0 0
      %855 = vmatprep.subr.bf16.mxu0 0
      %856 = vmatpush1.bf16.msra.mxu0 %v840
      %857 = vmatprep.subr.bf16.mxu0 0
      %858 = vmatpush1.bf16.msra.mxu0 %v839
      %859 = vmatprep.subr.bf16.mxu0 0
      %860 = vmatpush2.bf16.msra.mxu0 0
      %861 = vmatprep.subr.bf16.mxu0 0
      %862 = vmatpush2.bf16.msra.mxu0 0
      %863 = vmatprep.subr.bf16.mxu0 0
      %864 = vmatpush2.bf16.msra.mxu0 0
      %865 = vmatprep.subr.bf16.mxu0 0
      %866 = vmatpush2.bf16.msra.mxu0 0
      %867 = vmatprep.subr.bf16.mxu0 0
      %868 = vmatpush2.bf16.msra.mxu0 0
      %869 = vmatprep.subr.bf16.mxu0 0
      %870 = vmatpush2.bf16.msra.mxu0 0
      %871 = vmatprep.subr.bf16.mxu0 0
      %872 = vmatpush2.bf16.msra.mxu0 0
      %873 = vmatprep.subr.bf16.mxu0 0
      %874 = vmatpush2.bf16.msra.mxu0 0
      %875 = vmatprep.mubr.bf16.mxu0 0
      %876 = vmatmul.mubr.bf16.gmra.mxu0 %v535
      %v877 = vpop.f32.mrf.mxu0
      %v878 = vadd.f32 %v829, %v877
      %v879 = vpop.f32.mrf.mxu0
      %v880 = vpop.f32.mrf.mxu0
      %v881 = vpop.f32.mrf.mxu0
      %882 = vdwg.mxu0
      %s883 = scalar_lea.vmem %s7, 16
      %v884 = vld [vmem:[%s883] sm:$0xf]
      %v885 = vld [vmem:[%s883 + $0x4] sm:$0xf]
      %v886 = vld [vmem:[%s883 + $0x8] sm:$0xf]
      %v887 = vld [vmem:[%s883 + $0xc] sm:$0xf]
      %s888 = scalar_lea.vmem %s8, 1
      %v889 = vld [vmem:[%s888] sm:$0x1]
      %v891 = vlaneseq
      %v892 = vshrl.u32 %v891, 7
      %v893 = vsub.s32 0, %v892
      %v894 = vrot.slane %v889, %v893
      %v900 = vunpack.c.l.b16 %v884
      %v901 = vunpack.c.l.b16 %v885
      %v902 = vunpack.c.l.b16 %v886
      %v903 = vunpack.c.l.b16 %v887
      %v904 = vpack.c.b16 %v901, %v900
      %v905 = vpack.c.b16 %v903, %v902
      %908 = vmatprep.subr.bf16.mxu0 0
      %909 = vmatpush1.bf16.msra.mxu0 0
      %910 = vmatprep.subr.bf16.mxu0 0
      %911 = vmatpush1.bf16.msra.mxu0 0
      %912 = vmatprep.subr.bf16.mxu0 0
      %913 = vmatpush1.bf16.msra.mxu0 0
      %914 = vmatprep.subr.bf16.mxu0 0
      %915 = vmatpush1.bf16.msra.mxu0 0
      %916 = vmatprep.subr.bf16.mxu0 0
      %917 = vmatpush1.bf16.msra.mxu0 0
      %918 = vmatprep.subr.bf16.mxu0 0
      %919 = vmatpush1.bf16.msra.mxu0 0
      %920 = vmatprep.subr.bf16.mxu0 0
      %921 = vmatpush1.bf16.msra.mxu0 %v905
      %922 = vmatprep.subr.bf16.mxu0 0
      %923 = vmatpush1.bf16.msra.mxu0 %v904
      %924 = vmatprep.subr.bf16.mxu0 0
      %925 = vmatpush2.bf16.msra.mxu0 0
      %926 = vmatprep.subr.bf16.mxu0 0
      %927 = vmatpush2.bf16.msra.mxu0 0
      %928 = vmatprep.subr.bf16.mxu0 0
      %929 = vmatpush2.bf16.msra.mxu0 0
      %930 = vmatprep.subr.bf16.mxu0 0
      %931 = vmatpush2.bf16.msra.mxu0 0
      %932 = vmatprep.subr.bf16.mxu0 0
      %933 = vmatpush2.bf16.msra.mxu0 0
      %934 = vmatprep.subr.bf16.mxu0 0
      %935 = vmatpush2.bf16.msra.mxu0 0
      %936 = vmatprep.subr.bf16.mxu0 0
      %937 = vmatpush2.bf16.msra.mxu0 0
      %938 = vmatprep.subr.bf16.mxu0 0
      %939 = vmatpush2.bf16.msra.mxu0 0
      %940 = vmatprep.mubr.bf16.mxu0 0
      %941 = vmatmul.mubr.bf16.gmra.mxu0 %v601
      %v942 = vpop.f32.mrf.mxu0
      %v943 = vadd.f32 %v894, %v942
      %v944 = vpop.f32.mrf.mxu0
      %v945 = vpop.f32.mrf.mxu0
      %v946 = vadd.f32 %v894, %v945
      %v947 = vpop.f32.mrf.mxu0
      %948 = vdwg.mxu0
      %s949 = scalar_lea.vmem %s9, 16
      %v950 = vld [vmem:[%s949] sm:$0xf]
      %v951 = vld [vmem:[%s949 + $0x4] sm:$0xf]
      %v952 = vld [vmem:[%s949 + $0x8] sm:$0xf]
      %v953 = vld [vmem:[%s949 + $0xc] sm:$0xf]
      %s954 = scalar_lea.vmem %s10, 1
      %v955 = vld [vmem:[%s954] sm:$0x1]
      %v957 = vlaneseq
      %v958 = vshrl.u32 %v957, 7
      %v959 = vsub.s32 0, %v958
      %v960 = vrot.slane %v955, %v959
      %v966 = vunpack.c.l.b16 %v950
      %v967 = vunpack.c.l.b16 %v951
      %v968 = vunpack.c.l.b16 %v952
      %v969 = vunpack.c.l.b16 %v953
      %v970 = vpack.c.b16 %v967, %v966
      %v971 = vpack.c.b16 %v969, %v968
      %974 = vmatprep.subr.bf16.mxu0 0
      %975 = vmatpush1.bf16.msra.mxu0 0
      %976 = vmatprep.subr.bf16.mxu0 0
      %977 = vmatpush1.bf16.msra.mxu0 0
      %978 = vmatprep.subr.bf16.mxu0 0
      %979 = vmatpush1.bf16.msra.mxu0 0
      %980 = vmatprep.subr.bf16.mxu0 0
      %981 = vmatpush1.bf16.msra.mxu0 0
      %982 = vmatprep.subr.bf16.mxu0 0
      %983 = vmatpush1.bf16.msra.mxu0 0
      %984 = vmatprep.subr.bf16.mxu0 0
      %985 = vmatpush1.bf16.msra.mxu0 0
      %986 = vmatprep.subr.bf16.mxu0 0
      %987 = vmatpush1.bf16.msra.mxu0 %v971
      %988 = vmatprep.subr.bf16.mxu0 0
      %989 = vmatpush1.bf16.msra.mxu0 %v970
      %990 = vmatprep.subr.bf16.mxu0 0
      %991 = vmatpush2.bf16.msra.mxu0 0
      %992 = vmatprep.subr.bf16.mxu0 0
      %993 = vmatpush2.bf16.msra.mxu0 0
      %994 = vmatprep.subr.bf16.mxu0 0
      %995 = vmatpush2.bf16.msra.mxu0 0
      %996 = vmatprep.subr.bf16.mxu0 0
      %997 = vmatpush2.bf16.msra.mxu0 0
      %998 = vmatprep.subr.bf16.mxu0 0
      %999 = vmatpush2.bf16.msra.mxu0 0
      %1000 = vmatprep.subr.bf16.mxu0 0
      %1001 = vmatpush2.bf16.msra.mxu0 0
      %1002 = vmatprep.subr.bf16.mxu0 0
      %1003 = vmatpush2.bf16.msra.mxu0 0
      %1004 = vmatprep.subr.bf16.mxu0 0
      %1005 = vmatpush2.bf16.msra.mxu0 0
      %1006 = vmatprep.mubr.bf16.mxu0 0
      %1007 = vmatmul.mubr.bf16.gmra.mxu0 %v601
      %v1008 = vpop.f32.mrf.mxu0
      %v1009 = vadd.f32 %v960, %v1008
      %v1010 = vpop.f32.mrf.mxu0
      %v1011 = vpop.f32.mrf.mxu0
      %v1012 = vadd.f32 %v960, %v1011
      %v1013 = vpop.f32.mrf.mxu0
      %1014 = vdwg.mxu0
      %v1015 = vpack.c.bf16 %v878, %v878
      %v1016 = vpack.c.bf16 %v946, %v943
      %v1018 = vsel %vm710, %v1015, 0
      %v1021 = vsel %vm710, %v1016, 0
      %1023 = vmatprep.subr.bf16.mxu0 0
      %1024 = vmatpush1.bf16.xpose.msra.mxu0 0
      %1025 = vmatprep.subr.bf16.mxu0 0
      %1026 = vmatpush1.bf16.xpose.msra.mxu0 0
      %1027 = vmatprep.subr.bf16.mxu0 0
      %1028 = vmatpush1.bf16.xpose.msra.mxu0 0
      %1029 = vmatprep.subr.bf16.mxu0 0
      %1030 = vmatpush1.bf16.xpose.msra.mxu0 0
      %1031 = vmatprep.subr.bf16.mxu0 0
      %1032 = vmatpush1.bf16.xpose.msra.mxu0 0
      %1033 = vmatprep.subr.bf16.mxu0 0
      %1034 = vmatpush1.bf16.xpose.msra.mxu0 0
      %1035 = vmatprep.subr.bf16.mxu0 0
      %1036 = vmatpush1.bf16.xpose.msra.mxu0 0
      %1037 = vmatprep.subr.bf16.mxu0 0
      %1038 = vmatpush1.bf16.xpose.msra.mxu0 %v1021
      %1039 = vmatprep.subr.bf16.mxu0 0
      %1040 = vmatpush2.bf16.xpose.msra.mxu0 0
      %1041 = vmatprep.subr.bf16.mxu0 0
      %1042 = vmatpush2.bf16.xpose.msra.mxu0 0
      %1043 = vmatprep.subr.bf16.mxu0 0
      %1044 = vmatpush2.bf16.xpose.msra.mxu0 0
      %1045 = vmatprep.subr.bf16.mxu0 0
      %1046 = vmatpush2.bf16.xpose.msra.mxu0 0
      %1047 = vmatprep.subr.bf16.mxu0 0
      %1048 = vmatpush2.bf16.xpose.msra.mxu0 0
      %1049 = vmatprep.subr.bf16.mxu0 0
      %1050 = vmatpush2.bf16.xpose.msra.mxu0 0
      %1051 = vmatprep.subr.bf16.mxu0 0
      %1052 = vmatpush2.bf16.xpose.msra.mxu0 0
      %1053 = vmatprep.subr.bf16.mxu0 0
      %1054 = vmatpush2.bf16.xpose.msra.mxu0 0
      %1055 = vmatprep.mubr.bf16.mxu0 0
      %1056 = vmatmul.mubr.bf16.gmra.mxu0 %v1018
      %v1057 = vpop.f32.mrf.mxu0
      %v1058 = vadd.f32 0.0, %v1057
      %v1059 = vpop.f32.mrf.mxu0
      %v1060 = vpop.f32.mrf.mxu0
      %v1061 = vpop.f32.mrf.mxu0
      %1062 = vdwg.mxu0
      %v1063 = vmul.f32 %v1058, 0.35355338
      %v1064 = vadd.f32 %v1063, %v508
      %v1065 = vsel %vm759, %v1064, -inf
      %1066 = vmax.xlane.f32.xlu0 %v1065
      %v1067 = vpop.xlane.xlu0 %1066
      %v1068 = vsub.f32 %v1064, %v1067
      %v1069 = vmul.f32 %v1068, 1.442695
      %v1070 = vpow.pop %v1069
      %v1071 = vsel %vm759, %v1070, 0.0
      %1072 = vadd.xlane.f32.xlu0 %v1071
      %v1073 = vpop.xlane.xlu0 %1072
      %v1074 = vrcp.pop %v1073
      %v1075 = vmul.f32 %v1070, %v1074
      %v1076 = vpack.c.bf16 %v1075, %v1075
      %v1077 = vpack.c.bf16 %v1012, %v1009
      %v1079 = vsel %vm759, %v1076, 0
      %1081 = vmatprep.subr.bf16.mxu0 0
      %1082 = vmatpush1.bf16.msra.mxu0 0
      %1083 = vmatprep.subr.bf16.mxu0 0
      %1084 = vmatpush1.bf16.msra.mxu0 0
      %1085 = vmatprep.subr.bf16.mxu0 0
      %1086 = vmatpush1.bf16.msra.mxu0 0
      %1087 = vmatprep.subr.bf16.mxu0 0
      %1088 = vmatpush1.bf16.msra.mxu0 0
      %1089 = vmatprep.subr.bf16.mxu0 0
      %1090 = vmatpush1.bf16.msra.mxu0 0
      %1091 = vmatprep.subr.bf16.mxu0 0
      %1092 = vmatpush1.bf16.msra.mxu0 0
      %1093 = vmatprep.subr.bf16.mxu0 0
      %1094 = vmatpush1.bf16.msra.mxu0 0
      %1095 = vmatprep.subr.bf16.mxu0 0
      %1096 = vmatpush1.bf16.msra.mxu0 %v1077
      %1097 = vmatprep.subr.bf16.mxu0 0
      %1098 = vmatpush2.bf16.msra.mxu0 0
      %1099 = vmatprep.subr.bf16.mxu0 0
      %1100 = vmatpush2.bf16.msra.mxu0 0
      %1101 = vmatprep.subr.bf16.mxu0 0
      %1102 = vmatpush2.bf16.msra.mxu0 0
      %1103 = vmatprep.subr.bf16.mxu0 0
      %1104 = vmatpush2.bf16.msra.mxu0 0
      %1105 = vmatprep.subr.bf16.mxu0 0
      %1106 = vmatpush2.bf16.msra.mxu0 0
      %1107 = vmatprep.subr.bf16.mxu0 0
      %1108 = vmatpush2.bf16.msra.mxu0 0
      %1109 = vmatprep.subr.bf16.mxu0 0
      %1110 = vmatpush2.bf16.msra.mxu0 0
      %1111 = vmatprep.subr.bf16.mxu0 0
      %1112 = vmatpush2.bf16.msra.mxu0 0
      %1113 = vmatprep.mubr.bf16.mxu0 0
      %1114 = vmatmul.mubr.bf16.gmra.mxu0 %v1079
      %v1115 = vpop.f32.mrf.mxu0
      %v1116 = vadd.f32 0.0, %v1115
      %v1117 = vpop.f32.mrf.mxu0
      %v1118 = vpop.f32.mrf.mxu0
      %v1119 = vpop.f32.mrf.mxu0
      %1120 = vdwg.mxu0
      %v1121 = vpack.c.bf16 %v1116, %v1116
      %s1122 = scalar_lea.vmem %s11, 4
      %v1123 = vld [vmem:[%s1122] sm:$0xf]
      %v1125 = vsel %vm710, %v1121, 0
      %vm1127 = vcmask 1043456
      %v1129 = vsel %vm1127, %v1123, 0
      %1131 = vmatprep.subr.bf16.mxu0 0
      %1132 = vmatpush1.bf16.msra.mxu0 0
      %1133 = vmatprep.subr.bf16.mxu0 0
      %1134 = vmatpush1.bf16.msra.mxu0 0
      %1135 = vmatprep.subr.bf16.mxu0 0
      %1136 = vmatpush1.bf16.msra.mxu0 0
      %1137 = vmatprep.subr.bf16.mxu0 0
      %1138 = vmatpush1.bf16.msra.mxu0 0
      %1139 = vmatprep.subr.bf16.mxu0 0
      %1140 = vmatpush1.bf16.msra.mxu0 0
      %1141 = vmatprep.subr.bf16.mxu0 0
      %1142 = vmatpush1.bf16.msra.mxu0 0
      %1143 = vmatprep.subr.bf16.mxu0 0
      %1144 = vmatpush1.bf16.msra.mxu0 0
      %1145 = vmatprep.subr.bf16.mxu0 0
      %1146 = vmatpush1.bf16.msra.mxu0 %v1129
      %1147 = vmatprep.subr.bf16.mxu0 0
      %1148 = vmatpush2.bf16.msra.mxu0 0
      %1149 = vmatprep.subr.bf16.mxu0 0
      %1150 = vmatpush2.bf16.msra.mxu0 0
      %1151 = vmatprep.subr.bf16.mxu0 0
      %1152 = vmatpush2.bf16.msra.mxu0 0
      %1153 = vmatprep.subr.bf16.mxu0 0
      %1154 = vmatpush2.bf16.msra.mxu0 0
      %1155 = vmatprep.subr.bf16.mxu0 0
      %1156 = vmatpush2.bf16.msra.mxu0 0
      %1157 = vmatprep.subr.bf16.mxu0 0
      %1158 = vmatpush2.bf16.msra.mxu0 0
      %1159 = vmatprep.subr.bf16.mxu0 0
      %1160 = vmatpush2.bf16.msra.mxu0 0
      %1161 = vmatprep.subr.bf16.mxu0 0
      %1162 = vmatpush2.bf16.msra.mxu0 0
      %1163 = vmatprep.mubr.bf16.mxu0 0
      %1164 = vmatmul.mubr.bf16.gmra.mxu0 %v1125
      %v1165 = vpop.f32.mrf.mxu0
      %v1166 = vadd.f32 0.0, %v1165
      %v1167 = vpop.f32.mrf.mxu0
      %v1168 = vpop.f32.mrf.mxu0
      %v1169 = vpop.f32.mrf.mxu0
      %1170 = vdwg.mxu0
      %v1172 = vsel %vm710, %v816, 0
      %v1175 = vsel %vm1127, %v817, 0
      %1177 = vmatprep.subr.bf16.mxu0 0
      %1178 = vmatpush1.bf16.msra.mxu0 0
      %1179 = vmatprep.subr.bf16.mxu0 0
      %1180 = vmatpush1.bf16.msra.mxu0 0
      %1181 = vmatprep.subr.bf16.mxu0 0
      %1182 = vmatpush1.bf16.msra.mxu0 0
      %1183 = vmatprep.subr.bf16.mxu0 0
      %1184 = vmatpush1.bf16.msra.mxu0 0
      %1185 = vmatprep.subr.bf16.mxu0 0
      %1186 = vmatpush1.bf16.msra.mxu0 0
      %1187 = vmatprep.subr.bf16.mxu0 0
      %1188 = vmatpush1.bf16.msra.mxu0 0
      %1189 = vmatprep.subr.bf16.mxu0 0
      %1190 = vmatpush1.bf16.msra.mxu0 0
      %1191 = vmatprep.subr.bf16.mxu0 0
      %1192 = vmatpush1.bf16.msra.mxu0 %v1175
      %1193 = vmatprep.subr.bf16.mxu0 0
      %1194 = vmatpush2.bf16.msra.mxu0 0
      %1195 = vmatprep.subr.bf16.mxu0 0
      %1196 = vmatpush2.bf16.msra.mxu0 0
      %1197 = vmatprep.subr.bf16.mxu0 0
      %1198 = vmatpush2.bf16.msra.mxu0 0
      %1199 = vmatprep.subr.bf16.mxu0 0
      %1200 = vmatpush2.bf16.msra.mxu0 0
      %1201 = vmatprep.subr.bf16.mxu0 0
      %1202 = vmatpush2.bf16.msra.mxu0 0
      %1203 = vmatprep.subr.bf16.mxu0 0
      %1204 = vmatpush2.bf16.msra.mxu0 0
      %1205 = vmatprep.subr.bf16.mxu0 0
      %1206 = vmatpush2.bf16.msra.mxu0 0
      %1207 = vmatprep.subr.bf16.mxu0 0
      %1208 = vmatpush2.bf16.msra.mxu0 0
      %1209 = vmatprep.mubr.bf16.mxu0 0
      %1210 = vmatmul.mubr.bf16.gmra.mxu0 %v1172
      %v1211 = vpop.f32.mrf.mxu0
      %v1212 = vadd.f32 %v1166, %v1211
      %v1213 = vpop.f32.mrf.mxu0
      %v1214 = vpop.f32.mrf.mxu0
      %v1215 = vpop.f32.mrf.mxu0
      %1216 = vdwg.mxu0
      %s1217 = scalar_lea.vmem %s5, 32
      %v1218 = vld [vmem:[%s1217] sm:$0xf]
      %v1219 = vld [vmem:[%s1217 + $0x4] sm:$0xf]
      %v1220 = vld [vmem:[%s1217 + $0x8] sm:$0xf]
      %v1221 = vld [vmem:[%s1217 + $0xc] sm:$0xf]
      %s1222 = scalar_lea.vmem %s6, 2
      %v1223 = vld [vmem:[%s1222] sm:$0x1]
      %v1225 = vlaneseq
      %v1226 = vshrl.u32 %v1225, 7
      %v1227 = vsub.s32 0, %v1226
      %v1228 = vrot.slane %v1223, %v1227
      %v1234 = vunpack.c.l.b16 %v1218
      %v1235 = vunpack.c.l.b16 %v1219
      %v1236 = vunpack.c.l.b16 %v1220
      %v1237 = vunpack.c.l.b16 %v1221
      %v1238 = vpack.c.b16 %v1235, %v1234
      %v1239 = vpack.c.b16 %v1237, %v1236
      %1242 = vmatprep.subr.bf16.mxu0 0
      %1243 = vmatpush1.bf16.msra.mxu0 0
      %1244 = vmatprep.subr.bf16.mxu0 0
      %1245 = vmatpush1.bf16.msra.mxu0 0
      %1246 = vmatprep.subr.bf16.mxu0 0
      %1247 = vmatpush1.bf16.msra.mxu0 0
      %1248 = vmatprep.subr.bf16.mxu0 0
      %1249 = vmatpush1.bf16.msra.mxu0 0
      %1250 = vmatprep.subr.bf16.mxu0 0
      %1251 = vmatpush1.bf16.msra.mxu0 0
      %1252 = vmatprep.subr.bf16.mxu0 0
      %1253 = vmatpush1.bf16.msra.mxu0 0
      %1254 = vmatprep.subr.bf16.mxu0 0
      %1255 = vmatpush1.bf16.msra.mxu0 %v1239
      %1256 = vmatprep.subr.bf16.mxu0 0
      %1257 = vmatpush1.bf16.msra.mxu0 %v1238
      %1258 = vmatprep.subr.bf16.mxu0 0
      %1259 = vmatpush2.bf16.msra.mxu0 0
      %1260 = vmatprep.subr.bf16.mxu0 0
      %1261 = vmatpush2.bf16.msra.mxu0 0
      %1262 = vmatprep.subr.bf16.mxu0 0
      %1263 = vmatpush2.bf16.msra.mxu0 0
      %1264 = vmatprep.subr.bf16.mxu0 0
      %1265 = vmatpush2.bf16.msra.mxu0 0
      %1266 = vmatprep.subr.bf16.mxu0 0
      %1267 = vmatpush2.bf16.msra.mxu0 0
      %1268 = vmatprep.subr.bf16.mxu0 0
      %1269 = vmatpush2.bf16.msra.mxu0 0
      %1270 = vmatprep.subr.bf16.mxu0 0
      %1271 = vmatpush2.bf16.msra.mxu0 0
      %1272 = vmatprep.subr.bf16.mxu0 0
      %1273 = vmatpush2.bf16.msra.mxu0 0
      %1274 = vmatprep.mubr.bf16.mxu0 0
      %1275 = vmatmul.mubr.bf16.gmra.mxu0 %v535
      %v1276 = vpop.f32.mrf.mxu0
      %v1277 = vadd.f32 %v1228, %v1276
      %v1278 = vpop.f32.mrf.mxu0
      %v1279 = vpop.f32.mrf.mxu0
      %v1280 = vpop.f32.mrf.mxu0
      %1281 = vdwg.mxu0
      %s1282 = scalar_lea.vmem %s7, 32
      %v1283 = vld [vmem:[%s1282] sm:$0xf]
      %v1284 = vld [vmem:[%s1282 + $0x4] sm:$0xf]
      %v1285 = vld [vmem:[%s1282 + $0x8] sm:$0xf]
      %v1286 = vld [vmem:[%s1282 + $0xc] sm:$0xf]
      %s1287 = scalar_lea.vmem %s8, 2
      %v1288 = vld [vmem:[%s1287] sm:$0x1]
      %v1290 = vlaneseq
      %v1291 = vshrl.u32 %v1290, 7
      %v1292 = vsub.s32 0, %v1291
      %v1293 = vrot.slane %v1288, %v1292
      %v1299 = vunpack.c.l.b16 %v1283
      %v1300 = vunpack.c.l.b16 %v1284
      %v1301 = vunpack.c.l.b16 %v1285
      %v1302 = vunpack.c.l.b16 %v1286
      %v1303 = vpack.c.b16 %v1300, %v1299
      %v1304 = vpack.c.b16 %v1302, %v1301
      %1307 = vmatprep.subr.bf16.mxu0 0
      %1308 = vmatpush1.bf16.msra.mxu0 0
      %1309 = vmatprep.subr.bf16.mxu0 0
      %1310 = vmatpush1.bf16.msra.mxu0 0
      %1311 = vmatprep.subr.bf16.mxu0 0
      %1312 = vmatpush1.bf16.msra.mxu0 0
      %1313 = vmatprep.subr.bf16.mxu0 0
      %1314 = vmatpush1.bf16.msra.mxu0 0
      %1315 = vmatprep.subr.bf16.mxu0 0
      %1316 = vmatpush1.bf16.msra.mxu0 0
      %1317 = vmatprep.subr.bf16.mxu0 0
      %1318 = vmatpush1.bf16.msra.mxu0 0
      %1319 = vmatprep.subr.bf16.mxu0 0
      %1320 = vmatpush1.bf16.msra.mxu0 %v1304
      %1321 = vmatprep.subr.bf16.mxu0 0
      %1322 = vmatpush1.bf16.msra.mxu0 %v1303
      %1323 = vmatprep.subr.bf16.mxu0 0
      %1324 = vmatpush2.bf16.msra.mxu0 0
      %1325 = vmatprep.subr.bf16.mxu0 0
      %1326 = vmatpush2.bf16.msra.mxu0 0
      %1327 = vmatprep.subr.bf16.mxu0 0
      %1328 = vmatpush2.bf16.msra.mxu0 0
      %1329 = vmatprep.subr.bf16.mxu0 0
      %1330 = vmatpush2.bf16.msra.mxu0 0
      %1331 = vmatprep.subr.bf16.mxu0 0
      %1332 = vmatpush2.bf16.msra.mxu0 0
      %1333 = vmatprep.subr.bf16.mxu0 0
      %1334 = vmatpush2.bf16.msra.mxu0 0
      %1335 = vmatprep.subr.bf16.mxu0 0
      %1336 = vmatpush2.bf16.msra.mxu0 0
      %1337 = vmatprep.subr.bf16.mxu0 0
      %1338 = vmatpush2.bf16.msra.mxu0 0
      %1339 = vmatprep.mubr.bf16.mxu0 0
      %1340 = vmatmul.mubr.bf16.gmra.mxu0 %v601
      %v1341 = vpop.f32.mrf.mxu0
      %v1342 = vadd.f32 %v1293, %v1341
      %v1343 = vpop.f32.mrf.mxu0
      %v1344 = vpop.f32.mrf.mxu0
      %v1345 = vadd.f32 %v1293, %v1344
      %v1346 = vpop.f32.mrf.mxu0
      %1347 = vdwg.mxu0
      %s1348 = scalar_lea.vmem %s9, 32
      %v1349 = vld [vmem:[%s1348] sm:$0xf]
      %v1350 = vld [vmem:[%s1348 + $0x4] sm:$0xf]
      %v1351 = vld [vmem:[%s1348 + $0x8] sm:$0xf]
      %v1352 = vld [vmem:[%s1348 + $0xc] sm:$0xf]
      %s1353 = scalar_lea.vmem %s10, 2
      %v1354 = vld [vmem:[%s1353] sm:$0x1]
      %v1356 = vlaneseq
      %v1357 = vshrl.u32 %v1356, 7
      %v1358 = vsub.s32 0, %v1357
      %v1359 = vrot.slane %v1354, %v1358
      %v1365 = vunpack.c.l.b16 %v1349
      %v1366 = vunpack.c.l.b16 %v1350
      %v1367 = vunpack.c.l.b16 %v1351
      %v1368 = vunpack.c.l.b16 %v1352
      %v1369 = vpack.c.b16 %v1366, %v1365
      %v1370 = vpack.c.b16 %v1368, %v1367
      %1373 = vmatprep.subr.bf16.mxu0 0
      %1374 = vmatpush1.bf16.msra.mxu0 0
      %1375 = vmatprep.subr.bf16.mxu0 0
      %1376 = vmatpush1.bf16.msra.mxu0 0
      %1377 = vmatprep.subr.bf16.mxu0 0
      %1378 = vmatpush1.bf16.msra.mxu0 0
      %1379 = vmatprep.subr.bf16.mxu0 0
      %1380 = vmatpush1.bf16.msra.mxu0 0
      %1381 = vmatprep.subr.bf16.mxu0 0
      %1382 = vmatpush1.bf16.msra.mxu0 0
      %1383 = vmatprep.subr.bf16.mxu0 0
      %1384 = vmatpush1.bf16.msra.mxu0 0
      %1385 = vmatprep.subr.bf16.mxu0 0
      %1386 = vmatpush1.bf16.msra.mxu0 %v1370
      %1387 = vmatprep.subr.bf16.mxu0 0
      %1388 = vmatpush1.bf16.msra.mxu0 %v1369
      %1389 = vmatprep.subr.bf16.mxu0 0
      %1390 = vmatpush2.bf16.msra.mxu0 0
      %1391 = vmatprep.subr.bf16.mxu0 0
      %1392 = vmatpush2.bf16.msra.mxu0 0
      %1393 = vmatprep.subr.bf16.mxu0 0
      %1394 = vmatpush2.bf16.msra.mxu0 0
      %1395 = vmatprep.subr.bf16.mxu0 0
      %1396 = vmatpush2.bf16.msra.mxu0 0
      %1397 = vmatprep.subr.bf16.mxu0 0
      %1398 = vmatpush2.bf16.msra.mxu0 0
      %1399 = vmatprep.subr.bf16.mxu0 0
      %1400 = vmatpush2.bf16.msra.mxu0 0
      %1401 = vmatprep.subr.bf16.mxu0 0
      %1402 = vmatpush2.bf16.msra.mxu0 0
      %1403 = vmatprep.subr.bf16.mxu0 0
      %1404 = vmatpush2.bf16.msra.mxu0 0
      %1405 = vmatprep.mubr.bf16.mxu0 0
      %1406 = vmatmul.mubr.bf16.gmra.mxu0 %v601
      %v1407 = vpop.f32.mrf.mxu0
      %v1408 = vadd.f32 %v1359, %v1407
      %v1409 = vpop.f32.mrf.mxu0
      %v1410 = vpop.f32.mrf.mxu0
      %v1411 = vadd.f32 %v1359, %v1410
      %v1412 = vpop.f32.mrf.mxu0
      %1413 = vdwg.mxu0
      %v1414 = vpack.c.bf16 %v1277, %v1277
      %v1415 = vpack.c.bf16 %v1345, %v1342
      %v1417 = vsel %vm710, %v1414, 0
      %v1420 = vsel %vm710, %v1415, 0
      %1422 = vmatprep.subr.bf16.mxu0 0
      %1423 = vmatpush1.bf16.xpose.msra.mxu0 0
      %1424 = vmatprep.subr.bf16.mxu0 0
      %1425 = vmatpush1.bf16.xpose.msra.mxu0 0
      %1426 = vmatprep.subr.bf16.mxu0 0
      %1427 = vmatpush1.bf16.xpose.msra.mxu0 0
      %1428 = vmatprep.subr.bf16.mxu0 0
      %1429 = vmatpush1.bf16.xpose.msra.mxu0 0
      %1430 = vmatprep.subr.bf16.mxu0 0
      %1431 = vmatpush1.bf16.xpose.msra.mxu0 0
      %1432 = vmatprep.subr.bf16.mxu0 0
      %1433 = vmatpush1.bf16.xpose.msra.mxu0 0
      %1434 = vmatprep.subr.bf16.mxu0 0
      %1435 = vmatpush1.bf16.xpose.msra.mxu0 0
      %1436 = vmatprep.subr.bf16.mxu0 0
      %1437 = vmatpush1.bf16.xpose.msra.mxu0 %v1420
      %1438 = vmatprep.subr.bf16.mxu0 0
      %1439 = vmatpush2.bf16.xpose.msra.mxu0 0
      %1440 = vmatprep.subr.bf16.mxu0 0
      %1441 = vmatpush2.bf16.xpose.msra.mxu0 0
      %1442 = vmatprep.subr.bf16.mxu0 0
      %1443 = vmatpush2.bf16.xpose.msra.mxu0 0
      %1444 = vmatprep.subr.bf16.mxu0 0
      %1445 = vmatpush2.bf16.xpose.msra.mxu0 0
      %1446 = vmatprep.subr.bf16.mxu0 0
      %1447 = vmatpush2.bf16.xpose.msra.mxu0 0
      %1448 = vmatprep.subr.bf16.mxu0 0
      %1449 = vmatpush2.bf16.xpose.msra.mxu0 0
      %1450 = vmatprep.subr.bf16.mxu0 0
      %1451 = vmatpush2.bf16.xpose.msra.mxu0 0
      %1452 = vmatprep.subr.bf16.mxu0 0
      %1453 = vmatpush2.bf16.xpose.msra.mxu0 0
      %1454 = vmatprep.mubr.bf16.mxu0 0
      %1455 = vmatmul.mubr.bf16.gmra.mxu0 %v1417
      %v1456 = vpop.f32.mrf.mxu0
      %v1457 = vadd.f32 0.0, %v1456
      %v1458 = vpop.f32.mrf.mxu0
      %v1459 = vpop.f32.mrf.mxu0
      %v1460 = vpop.f32.mrf.mxu0
      %1461 = vdwg.mxu0
      %v1462 = vmul.f32 %v1457, 0.35355338
      %v1463 = vadd.f32 %v1462, %v508
      %v1464 = vsel %vm759, %v1463, -inf
      %1465 = vmax.xlane.f32.xlu0 %v1464
      %v1466 = vpop.xlane.xlu0 %1465
      %v1467 = vsub.f32 %v1463, %v1466
      %v1468 = vmul.f32 %v1467, 1.442695
      %v1469 = vpow.pop %v1468
      %v1470 = vsel %vm759, %v1469, 0.0
      %1471 = vadd.xlane.f32.xlu0 %v1470
      %v1472 = vpop.xlane.xlu0 %1471
      %v1473 = vrcp.pop %v1472
      %v1474 = vmul.f32 %v1469, %v1473
      %v1475 = vpack.c.bf16 %v1474, %v1474
      %v1476 = vpack.c.bf16 %v1411, %v1408
      %v1478 = vsel %vm759, %v1475, 0
      %1480 = vmatprep.subr.bf16.mxu0 0
      %1481 = vmatpush1.bf16.msra.mxu0 0
      %1482 = vmatprep.subr.bf16.mxu0 0
      %1483 = vmatpush1.bf16.msra.mxu0 0
      %1484 = vmatprep.subr.bf16.mxu0 0
      %1485 = vmatpush1.bf16.msra.mxu0 0
      %1486 = vmatprep.subr.bf16.mxu0 0
      %1487 = vmatpush1.bf16.msra.mxu0 0
      %1488 = vmatprep.subr.bf16.mxu0 0
      %1489 = vmatpush1.bf16.msra.mxu0 0
      %1490 = vmatprep.subr.bf16.mxu0 0
      %1491 = vmatpush1.bf16.msra.mxu0 0
      %1492 = vmatprep.subr.bf16.mxu0 0
      %1493 = vmatpush1.bf16.msra.mxu0 0
      %1494 = vmatprep.subr.bf16.mxu0 0
      %1495 = vmatpush1.bf16.msra.mxu0 %v1476
      %1496 = vmatprep.subr.bf16.mxu0 0
      %1497 = vmatpush2.bf16.msra.mxu0 0
      %1498 = vmatprep.subr.bf16.mxu0 0
      %1499 = vmatpush2.bf16.msra.mxu0 0
      %1500 = vmatprep.subr.bf16.mxu0 0
      %1501 = vmatpush2.bf16.msra.mxu0 0
      %1502 = vmatprep.subr.bf16.mxu0 0
      %1503 = vmatpush2.bf16.msra.mxu0 0
      %1504 = vmatprep.subr.bf16.mxu0 0
      %1505 = vmatpush2.bf16.msra.mxu0 0
      %1506 = vmatprep.subr.bf16.mxu0 0
      %1507 = vmatpush2.bf16.msra.mxu0 0
      %1508 = vmatprep.subr.bf16.mxu0 0
      %1509 = vmatpush2.bf16.msra.mxu0 0
      %1510 = vmatprep.subr.bf16.mxu0 0
      %1511 = vmatpush2.bf16.msra.mxu0 0
      %1512 = vmatprep.mubr.bf16.mxu0 0
      %1513 = vmatmul.mubr.bf16.gmra.mxu0 %v1478
      %v1514 = vpop.f32.mrf.mxu0
      %v1515 = vadd.f32 0.0, %v1514
      %v1516 = vpop.f32.mrf.mxu0
      %v1517 = vpop.f32.mrf.mxu0
      %v1518 = vpop.f32.mrf.mxu0
      %1519 = vdwg.mxu0
      %v1520 = vpack.c.bf16 %v1515, %v1515
      %s1521 = scalar_lea.vmem %s11, 8
      %v1522 = vld [vmem:[%s1521] sm:$0xf]
      %v1524 = vsel %vm710, %v1520, 0
      %v1527 = vsel %vm1127, %v1522, 0
      %1529 = vmatprep.subr.bf16.mxu0 0
      %1530 = vmatpush1.bf16.msra.mxu0 0
      %1531 = vmatprep.subr.bf16.mxu0 0
      %1532 = vmatpush1.bf16.msra.mxu0 0
      %1533 = vmatprep.subr.bf16.mxu0 0
      %1534 = vmatpush1.bf16.msra.mxu0 0
      %1535 = vmatprep.subr.bf16.mxu0 0
      %1536 = vmatpush1.bf16.msra.mxu0 0
      %1537 = vmatprep.subr.bf16.mxu0 0
      %1538 = vmatpush1.bf16.msra.mxu0 0
      %1539 = vmatprep.subr.bf16.mxu0 0
      %1540 = vmatpush1.bf16.msra.mxu0 0
      %1541 = vmatprep.subr.bf16.mxu0 0
      %1542 = vmatpush1.bf16.msra.mxu0 0
      %1543 = vmatprep.subr.bf16.mxu0 0
      %1544 = vmatpush1.bf16.msra.mxu0 %v1527
      %1545 = vmatprep.subr.bf16.mxu0 0
      %1546 = vmatpush2.bf16.msra.mxu0 0
      %1547 = vmatprep.subr.bf16.mxu0 0
      %1548 = vmatpush2.bf16.msra.mxu0 0
      %1549 = vmatprep.subr.bf16.mxu0 0
      %1550 = vmatpush2.bf16.msra.mxu0 0
      %1551 = vmatprep.subr.bf16.mxu0 0
      %1552 = vmatpush2.bf16.msra.mxu0 0
      %1553 = vmatprep.subr.bf16.mxu0 0
      %1554 = vmatpush2.bf16.msra.mxu0 0
      %1555 = vmatprep.subr.bf16.mxu0 0
      %1556 = vmatpush2.bf16.msra.mxu0 0
      %1557 = vmatprep.subr.bf16.mxu0 0
      %1558 = vmatpush2.bf16.msra.mxu0 0
      %1559 = vmatprep.subr.bf16.mxu0 0
      %1560 = vmatpush2.bf16.msra.mxu0 0
      %1561 = vmatprep.mubr.bf16.mxu0 0
      %1562 = vmatmul.mubr.bf16.gmra.mxu0 %v1524
      %v1563 = vpop.f32.mrf.mxu0
      %v1564 = vadd.f32 0.0, %v1563
      %v1565 = vpop.f32.mrf.mxu0
      %v1566 = vpop.f32.mrf.mxu0
      %v1567 = vpop.f32.mrf.mxu0
      %1568 = vdwg.mxu0
      %v1569 = vadd.f32 %v1212, %v1564
      %s1570 = scalar_lea.vmem %s5, 48
      %v1571 = vld [vmem:[%s1570] sm:$0xf]
      %v1572 = vld [vmem:[%s1570 + $0x4] sm:$0xf]
      %v1573 = vld [vmem:[%s1570 + $0x8] sm:$0xf]
      %v1574 = vld [vmem:[%s1570 + $0xc] sm:$0xf]
      %s1575 = scalar_lea.vmem %s6, 3
      %v1576 = vld [vmem:[%s1575] sm:$0x1]
      %v1578 = vlaneseq
      %v1579 = vshrl.u32 %v1578, 7
      %v1580 = vsub.s32 0, %v1579
      %v1581 = vrot.slane %v1576, %v1580
      %v1587 = vunpack.c.l.b16 %v1571
      %v1588 = vunpack.c.l.b16 %v1572
      %v1589 = vunpack.c.l.b16 %v1573
      %v1590 = vunpack.c.l.b16 %v1574
      %v1591 = vpack.c.b16 %v1588, %v1587
      %v1592 = vpack.c.b16 %v1590, %v1589
      %1595 = vmatprep.subr.bf16.mxu0 0
      %1596 = vmatpush1.bf16.msra.mxu0 0
      %1597 = vmatprep.subr.bf16.mxu0 0
      %1598 = vmatpush1.bf16.msra.mxu0 0
      %1599 = vmatprep.subr.bf16.mxu0 0
      %1600 = vmatpush1.bf16.msra.mxu0 0
      %1601 = vmatprep.subr.bf16.mxu0 0
      %1602 = vmatpush1.bf16.msra.mxu0 0
      %1603 = vmatprep.subr.bf16.mxu0 0
      %1604 = vmatpush1.bf16.msra.mxu0 0
      %1605 = vmatprep.subr.bf16.mxu0 0
      %1606 = vmatpush1.bf16.msra.mxu0 0
      %1607 = vmatprep.subr.bf16.mxu0 0
      %1608 = vmatpush1.bf16.msra.mxu0 %v1592
      %1609 = vmatprep.subr.bf16.mxu0 0
      %1610 = vmatpush1.bf16.msra.mxu0 %v1591
      %1611 = vmatprep.subr.bf16.mxu0 0
      %1612 = vmatpush2.bf16.msra.mxu0 0
      %1613 = vmatprep.subr.bf16.mxu0 0
      %1614 = vmatpush2.bf16.msra.mxu0 0
      %1615 = vmatprep.subr.bf16.mxu0 0
      %1616 = vmatpush2.bf16.msra.mxu0 0
      %1617 = vmatprep.subr.bf16.mxu0 0
      %1618 = vmatpush2.bf16.msra.mxu0 0
      %1619 = vmatprep.subr.bf16.mxu0 0
      %1620 = vmatpush2.bf16.msra.mxu0 0
      %1621 = vmatprep.subr.bf16.mxu0 0
      %1622 = vmatpush2.bf16.msra.mxu0 0
      %1623 = vmatprep.subr.bf16.mxu0 0
      %1624 = vmatpush2.bf16.msra.mxu0 0
      %1625 = vmatprep.subr.bf16.mxu0 0
      %1626 = vmatpush2.bf16.msra.mxu0 0
      %1627 = vmatprep.mubr.bf16.mxu0 0
      %1628 = vmatmul.mubr.bf16.gmra.mxu0 %v535
      %v1629 = vpop.f32.mrf.mxu0
      %v1630 = vadd.f32 %v1581, %v1629
      %v1631 = vpop.f32.mrf.mxu0
      %v1632 = vpop.f32.mrf.mxu0
      %v1633 = vpop.f32.mrf.mxu0
      %1634 = vdwg.mxu0
      %s1635 = scalar_lea.vmem %s7, 48
      %v1636 = vld [vmem:[%s1635] sm:$0xf]
      %v1637 = vld [vmem:[%s1635 + $0x4] sm:$0xf]
      %v1638 = vld [vmem:[%s1635 + $0x8] sm:$0xf]
      %v1639 = vld [vmem:[%s1635 + $0xc] sm:$0xf]
      %s1640 = scalar_lea.vmem %s8, 3
      %v1641 = vld [vmem:[%s1640] sm:$0x1]
      %v1643 = vlaneseq
      %v1644 = vshrl.u32 %v1643, 7
      %v1645 = vsub.s32 0, %v1644
      %v1646 = vrot.slane %v1641, %v1645
      %v1652 = vunpack.c.l.b16 %v1636
      %v1653 = vunpack.c.l.b16 %v1637
      %v1654 = vunpack.c.l.b16 %v1638
      %v1655 = vunpack.c.l.b16 %v1639
      %v1656 = vpack.c.b16 %v1653, %v1652
      %v1657 = vpack.c.b16 %v1655, %v1654
      %1660 = vmatprep.subr.bf16.mxu0 0
      %1661 = vmatpush1.bf16.msra.mxu0 0
      %1662 = vmatprep.subr.bf16.mxu0 0
      %1663 = vmatpush1.bf16.msra.mxu0 0
      %1664 = vmatprep.subr.bf16.mxu0 0
      %1665 = vmatpush1.bf16.msra.mxu0 0
      %1666 = vmatprep.subr.bf16.mxu0 0
      %1667 = vmatpush1.bf16.msra.mxu0 0
      %1668 = vmatprep.subr.bf16.mxu0 0
      %1669 = vmatpush1.bf16.msra.mxu0 0
      %1670 = vmatprep.subr.bf16.mxu0 0
      %1671 = vmatpush1.bf16.msra.mxu0 0
      %1672 = vmatprep.subr.bf16.mxu0 0
      %1673 = vmatpush1.bf16.msra.mxu0 %v1657
      %1674 = vmatprep.subr.bf16.mxu0 0
      %1675 = vmatpush1.bf16.msra.mxu0 %v1656
      %1676 = vmatprep.subr.bf16.mxu0 0
      %1677 = vmatpush2.bf16.msra.mxu0 0
      %1678 = vmatprep.subr.bf16.mxu0 0
      %1679 = vmatpush2.bf16.msra.mxu0 0
      %1680 = vmatprep.subr.bf16.mxu0 0
      %1681 = vmatpush2.bf16.msra.mxu0 0
      %1682 = vmatprep.subr.bf16.mxu0 0
      %1683 = vmatpush2.bf16.msra.mxu0 0
      %1684 = vmatprep.subr.bf16.mxu0 0
      %1685 = vmatpush2.bf16.msra.mxu0 0
      %1686 = vmatprep.subr.bf16.mxu0 0
      %1687 = vmatpush2.bf16.msra.mxu0 0
      %1688 = vmatprep.subr.bf16.mxu0 0
      %1689 = vmatpush2.bf16.msra.mxu0 0
      %1690 = vmatprep.subr.bf16.mxu0 0
      %1691 = vmatpush2.bf16.msra.mxu0 0
      %1692 = vmatprep.mubr.bf16.mxu0 0
      %1693 = vmatmul.mubr.bf16.gmra.mxu0 %v601
      %v1694 = vpop.f32.mrf.mxu0
      %v1695 = vadd.f32 %v1646, %v1694
      %v1696 = vpop.f32.mrf.mxu0
      %v1697 = vpop.f32.mrf.mxu0
      %v1698 = vadd.f32 %v1646, %v1697
      %v1699 = vpop.f32.mrf.mxu0
      %1700 = vdwg.mxu0
      %s1701 = scalar_lea.vmem %s9, 48
      %v1702 = vld [vmem:[%s1701] sm:$0xf]
      %v1703 = vld [vmem:[%s1701 + $0x4] sm:$0xf]
      %v1704 = vld [vmem:[%s1701 + $0x8] sm:$0xf]
      %v1705 = vld [vmem:[%s1701 + $0xc] sm:$0xf]
      %s1706 = scalar_lea.vmem %s10, 3
      %v1707 = vld [vmem:[%s1706] sm:$0x1]
      %v1709 = vlaneseq
      %v1710 = vshrl.u32 %v1709, 7
      %v1711 = vsub.s32 0, %v1710
      %v1712 = vrot.slane %v1707, %v1711
      %v1718 = vunpack.c.l.b16 %v1702
      %v1719 = vunpack.c.l.b16 %v1703
      %v1720 = vunpack.c.l.b16 %v1704
      %v1721 = vunpack.c.l.b16 %v1705
      %v1722 = vpack.c.b16 %v1719, %v1718
      %v1723 = vpack.c.b16 %v1721, %v1720
      %1726 = vmatprep.subr.bf16.mxu0 0
      %1727 = vmatpush1.bf16.msra.mxu0 0
      %1728 = vmatprep.subr.bf16.mxu0 0
      %1729 = vmatpush1.bf16.msra.mxu0 0
      %1730 = vmatprep.subr.bf16.mxu0 0
      %1731 = vmatpush1.bf16.msra.mxu0 0
      %1732 = vmatprep.subr.bf16.mxu0 0
      %1733 = vmatpush1.bf16.msra.mxu0 0
      %1734 = vmatprep.subr.bf16.mxu0 0
      %1735 = vmatpush1.bf16.msra.mxu0 0
      %1736 = vmatprep.subr.bf16.mxu0 0
      %1737 = vmatpush1.bf16.msra.mxu0 0
      %1738 = vmatprep.subr.bf16.mxu0 0
      %1739 = vmatpush1.bf16.msra.mxu0 %v1723
      %1740 = vmatprep.subr.bf16.mxu0 0
      %1741 = vmatpush1.bf16.msra.mxu0 %v1722
      %1742 = vmatprep.subr.bf16.mxu0 0
      %1743 = vmatpush2.bf16.msra.mxu0 0
      %1744 = vmatprep.subr.bf16.mxu0 0
      %1745 = vmatpush2.bf16.msra.mxu0 0
      %1746 = vmatprep.subr.bf16.mxu0 0
      %1747 = vmatpush2.bf16.msra.mxu0 0
      %1748 = vmatprep.subr.bf16.mxu0 0
      %1749 = vmatpush2.bf16.msra.mxu0 0
      %1750 = vmatprep.subr.bf16.mxu0 0
      %1751 = vmatpush2.bf16.msra.mxu0 0
      %1752 = vmatprep.subr.bf16.mxu0 0
      %1753 = vmatpush2.bf16.msra.mxu0 0
      %1754 = vmatprep.subr.bf16.mxu0 0
      %1755 = vmatpush2.bf16.msra.mxu0 0
      %1756 = vmatprep.subr.bf16.mxu0 0
      %1757 = vmatpush2.bf16.msra.mxu0 0
      %1758 = vmatprep.mubr.bf16.mxu0 0
      %1759 = vmatmul.mubr.bf16.gmra.mxu0 %v601
      %v1760 = vpop.f32.mrf.mxu0
      %v1761 = vadd.f32 %v1712, %v1760
      %v1762 = vpop.f32.mrf.mxu0
      %v1763 = vpop.f32.mrf.mxu0
      %v1764 = vadd.f32 %v1712, %v1763
      %v1765 = vpop.f32.mrf.mxu0
      %1766 = vdwg.mxu0
      %v1767 = vpack.c.bf16 %v1630, %v1630
      %v1768 = vpack.c.bf16 %v1698, %v1695
      %v1770 = vsel %vm710, %v1767, 0
      %v1773 = vsel %vm710, %v1768, 0
      %1775 = vmatprep.subr.bf16.mxu0 0
      %1776 = vmatpush1.bf16.xpose.msra.mxu0 0
      %1777 = vmatprep.subr.bf16.mxu0 0
      %1778 = vmatpush1.bf16.xpose.msra.mxu0 0
      %1779 = vmatprep.subr.bf16.mxu0 0
      %1780 = vmatpush1.bf16.xpose.msra.mxu0 0
      %1781 = vmatprep.subr.bf16.mxu0 0
      %1782 = vmatpush1.bf16.xpose.msra.mxu0 0
      %1783 = vmatprep.subr.bf16.mxu0 0
      %1784 = vmatpush1.bf16.xpose.msra.mxu0 0
      %1785 = vmatprep.subr.bf16.mxu0 0
      %1786 = vmatpush1.bf16.xpose.msra.mxu0 0
      %1787 = vmatprep.subr.bf16.mxu0 0
      %1788 = vmatpush1.bf16.xpose.msra.mxu0 0
      %1789 = vmatprep.subr.bf16.mxu0 0
      %1790 = vmatpush1.bf16.xpose.msra.mxu0 %v1773
      %1791 = vmatprep.subr.bf16.mxu0 0
      %1792 = vmatpush2.bf16.xpose.msra.mxu0 0
      %1793 = vmatprep.subr.bf16.mxu0 0
      %1794 = vmatpush2.bf16.xpose.msra.mxu0 0
      %1795 = vmatprep.subr.bf16.mxu0 0
      %1796 = vmatpush2.bf16.xpose.msra.mxu0 0
      %1797 = vmatprep.subr.bf16.mxu0 0
      %1798 = vmatpush2.bf16.xpose.msra.mxu0 0
      %1799 = vmatprep.subr.bf16.mxu0 0
      %1800 = vmatpush2.bf16.xpose.msra.mxu0 0
      %1801 = vmatprep.subr.bf16.mxu0 0
      %1802 = vmatpush2.bf16.xpose.msra.mxu0 0
      %1803 = vmatprep.subr.bf16.mxu0 0
      %1804 = vmatpush2.bf16.xpose.msra.mxu0 0
      %1805 = vmatprep.subr.bf16.mxu0 0
      %1806 = vmatpush2.bf16.xpose.msra.mxu0 0
      %1807 = vmatprep.mubr.bf16.mxu0 0
      %1808 = vmatmul.mubr.bf16.gmra.mxu0 %v1770
      %v1809 = vpop.f32.mrf.mxu0
      %v1810 = vadd.f32 0.0, %v1809
      %v1811 = vpop.f32.mrf.mxu0
      %v1812 = vpop.f32.mrf.mxu0
      %v1813 = vpop.f32.mrf.mxu0
      %1814 = vdwg.mxu0
      %v1815 = vmul.f32 %v1810, 0.35355338
      %v1816 = vadd.f32 %v1815, %v508
      %v1817 = vsel %vm759, %v1816, -inf
      %1818 = vmax.xlane.f32.xlu0 %v1817
      %v1819 = vpop.xlane.xlu0 %1818
      %v1820 = vsub.f32 %v1816, %v1819
      %v1821 = vmul.f32 %v1820, 1.442695
      %v1822 = vpow.pop %v1821
      %v1823 = vsel %vm759, %v1822, 0.0
      %1824 = vadd.xlane.f32.xlu0 %v1823
      %v1825 = vpop.xlane.xlu0 %1824
      %v1826 = vrcp.pop %v1825
      %v1827 = vmul.f32 %v1822, %v1826
      %v1828 = vpack.c.bf16 %v1827, %v1827
      %v1829 = vpack.c.bf16 %v1764, %v1761
      %v1831 = vsel %vm759, %v1828, 0
      %1833 = vmatprep.subr.bf16.mxu0 0
      %1834 = vmatpush1.bf16.msra.mxu0 0
      %1835 = vmatprep.subr.bf16.mxu0 0
      %1836 = vmatpush1.bf16.msra.mxu0 0
      %1837 = vmatprep.subr.bf16.mxu0 0
      %1838 = vmatpush1.bf16.msra.mxu0 0
      %1839 = vmatprep.subr.bf16.mxu0 0
      %1840 = vmatpush1.bf16.msra.mxu0 0
      %1841 = vmatprep.subr.bf16.mxu0 0
      %1842 = vmatpush1.bf16.msra.mxu0 0
      %1843 = vmatprep.subr.bf16.mxu0 0
      %1844 = vmatpush1.bf16.msra.mxu0 0
      %1845 = vmatprep.subr.bf16.mxu0 0
      %1846 = vmatpush1.bf16.msra.mxu0 0
      %1847 = vmatprep.subr.bf16.mxu0 0
      %1848 = vmatpush1.bf16.msra.mxu0 %v1829
      %1849 = vmatprep.subr.bf16.mxu0 0
      %1850 = vmatpush2.bf16.msra.mxu0 0
      %1851 = vmatprep.subr.bf16.mxu0 0
      %1852 = vmatpush2.bf16.msra.mxu0 0
      %1853 = vmatprep.subr.bf16.mxu0 0
      %1854 = vmatpush2.bf16.msra.mxu0 0
      %1855 = vmatprep.subr.bf16.mxu0 0
      %1856 = vmatpush2.bf16.msra.mxu0 0
      %1857 = vmatprep.subr.bf16.mxu0 0
      %1858 = vmatpush2.bf16.msra.mxu0 0
      %1859 = vmatprep.subr.bf16.mxu0 0
      %1860 = vmatpush2.bf16.msra.mxu0 0
      %1861 = vmatprep.subr.bf16.mxu0 0
      %1862 = vmatpush2.bf16.msra.mxu0 0
      %1863 = vmatprep.subr.bf16.mxu0 0
      %1864 = vmatpush2.bf16.msra.mxu0 0
      %1865 = vmatprep.mubr.bf16.mxu0 0
      %1866 = vmatmul.mubr.bf16.gmra.mxu0 %v1831
      %v1867 = vpop.f32.mrf.mxu0
      %v1868 = vadd.f32 0.0, %v1867
      %v1869 = vpop.f32.mrf.mxu0
      %v1870 = vpop.f32.mrf.mxu0
      %v1871 = vpop.f32.mrf.mxu0
      %1872 = vdwg.mxu0
      %v1873 = vpack.c.bf16 %v1868, %v1868
      %s1874 = scalar_lea.vmem %s11, 12
      %v1875 = vld [vmem:[%s1874] sm:$0xf]
      %v1877 = vsel %vm710, %v1873, 0
      %v1880 = vsel %vm1127, %v1875, 0
      %1882 = vmatprep.subr.bf16.mxu0 0
      %1883 = vmatpush1.bf16.msra.mxu0 0
      %1884 = vmatprep.subr.bf16.mxu0 0
      %1885 = vmatpush1.bf16.msra.mxu0 0
      %1886 = vmatprep.subr.bf16.mxu0 0
      %1887 = vmatpush1.bf16.msra.mxu0 0
      %1888 = vmatprep.subr.bf16.mxu0 0
      %1889 = vmatpush1.bf16.msra.mxu0 0
      %1890 = vmatprep.subr.bf16.mxu0 0
      %1891 = vmatpush1.bf16.msra.mxu0 0
      %1892 = vmatprep.subr.bf16.mxu0 0
      %1893 = vmatpush1.bf16.msra.mxu0 0
      %1894 = vmatprep.subr.bf16.mxu0 0
      %1895 = vmatpush1.bf16.msra.mxu0 0
      %1896 = vmatprep.subr.bf16.mxu0 0
      %1897 = vmatpush1.bf16.msra.mxu0 %v1880
      %1898 = vmatprep.subr.bf16.mxu0 0
      %1899 = vmatpush2.bf16.msra.mxu0 0
      %1900 = vmatprep.subr.bf16.mxu0 0
      %1901 = vmatpush2.bf16.msra.mxu0 0
      %1902 = vmatprep.subr.bf16.mxu0 0
      %1903 = vmatpush2.bf16.msra.mxu0 0
      %1904 = vmatprep.subr.bf16.mxu0 0
      %1905 = vmatpush2.bf16.msra.mxu0 0
      %1906 = vmatprep.subr.bf16.mxu0 0
      %1907 = vmatpush2.bf16.msra.mxu0 0
      %1908 = vmatprep.subr.bf16.mxu0 0
      %1909 = vmatpush2.bf16.msra.mxu0 0
      %1910 = vmatprep.subr.bf16.mxu0 0
      %1911 = vmatpush2.bf16.msra.mxu0 0
      %1912 = vmatprep.subr.bf16.mxu0 0
      %1913 = vmatpush2.bf16.msra.mxu0 0
      %1914 = vmatprep.mubr.bf16.mxu0 0
      %1915 = vmatmul.mubr.bf16.gmra.mxu0 %v1877
      %v1916 = vpop.f32.mrf.mxu0
      %v1917 = vadd.f32 0.0, %v1916
      %v1918 = vpop.f32.mrf.mxu0
      %v1919 = vpop.f32.mrf.mxu0
      %v1920 = vpop.f32.mrf.mxu0
      %1921 = vdwg.mxu0
      %v1922 = vadd.f32 %v1569, %v1917
      %v1923 = vld [vmem:[%s12] sm:$0x1]
      %v1925 = vlaneseq
      %v1926 = vshrl.u32 %v1925, 7
      %v1927 = vsub.s32 0, %v1926
      %v1928 = vrot.slane %v1923, %v1927
      %v1930 = vadd.f32 %v1922, %v1928
      %v1931 = vadd.f32 %v474, %v1930
      %1932 = vst.msk [vmem:[%s472] sm:$0xff] %vm479, %v1931
      %p1933 = scmp.lt.s32.totalorder %s24, 1
      %s1934 = scalar_select %p1933, %s24, 1
      %s1935 = smul.addr %s1934, 8
      %s1936 = scalar_lea.vmem %s13, %s1935
      // Predicated region
      $region73: #{_lambda_.20} parent=71 // pred_check
        %p1937 = pneg %p330
      $region74: #{_lambda_.20} parent=71 // pred_check_branch
        %1939 = sbr.rel (%p1937) target = $region76
      $region75: #{_lambda_.20} parent=71 // pred_region
        _
      $region76: #{_lambda_.20} parent=71 // pred_fallthru
        _
    $region72: #{_lambda_.20} parent=5 // pred_fallthru
      _
    %p1940 = scmp.le.s32.totalorder 2, %s19
    // Predicated region
    $region77: #{_lambda_.20} parent=5 // pred_check
      %p1941 = pneg %p1940
    $region78: #{_lambda_.20} parent=5 // pred_check_branch
      %1943 = sbr.rel (%p1941) target = $region80
    $region79: #{_lambda_.20} parent=5 // pred_region
      %s1944 = ssub.s32 %s19, 2
      // Predicated region
      $region81: #{_lambda_.20} parent=79 // pred_check
        %p1945 = pneg %p336
      $region82: #{_lambda_.20} parent=79 // pred_check_branch
        %1947 = sbr.rel (%p1945) target = $region84
      $region83: #{_lambda_.20} parent=79 // pred_region
        %p1948 = scmp.lt.s32.totalorder %s25, 1
        %s1949 = scalar_select %p1948, %s25, 1
        %s1950 = smul.addr %s1949, 8
        %s1951 = scalar_lea.vmem %s13, %s1950
      $region84: #{_lambda_.20} parent=79 // pred_fallthru
        _
    $region80: #{_lambda_.20} parent=5 // pred_fallthru
      _
  $region6: #{_lambda_.20} parent=0 // loop_footer
    %s23 = sadd.s32 1, %s19
  $region7: #{_lambda_.20} parent=0 // loop_footer_branch
    %18 = sbr.rel target = $region3
  $region8: #{_lambda_.20} parent=0 // loop_exit
    _

// kernel: _lambda_.25
$region0: #{_lambda_.25}
  #allocation0 [shape = 'u32[]', space=smem, size = 0x4, offset = 0x4, fixed_abs, tag = 'smem constant byte address 0x4 - core index']
  #allocation1 [shape = 'u32[144,128]{1,0:T(1,128)}', space=vmem, size = 0x12000, scoped, tag = 'internal scratch']
  %s0 = inlined_call_operand.vmem [shape: f32[16,32], index: 0, kind: input, shape index: {}]
  %s1 = inlined_call_operand.vmem [shape: f32[1,32], index: 1, kind: input, shape index: {}]
  %s2 = inlined_call_operand.vmem [shape: f32[1,32], index: 2, kind: input, shape index: {}]
  %s3 = inlined_call_operand.vmem [shape: bf16[32,50], index: 3, kind: input, shape index: {}]
  %s4 = inlined_call_operand.hbm [shape: f32[16,32], index: 4, kind: output, shape index: {0}]
  %s5 = inlined_call_operand.hbm [shape: f32[16,50], index: 5, kind: output, shape index: {1}]
  %6 = xla_tuple %s4, %s5
  %s7 = sld [smem:[#allocation0]]
  $region34: #{_lambda_.25} parent=0
    _
  %s9 = ssub.s32 1, %s7
  %s10 = scalar_select 0, %s9, %s7
  $region1: #{_lambda_.25} parent=0
    #allocation2 [shape = 'u8[8192]{0}', space=vmem, size = 0x2000, scoped, tag = 'output window, operand 0, single buffered']
    #allocation3 [shape = 's32[1]{0}', space=sflag, size = 0x4, scoped, tag = 'scoped memory for _lambda_.25']
    #allocation4 [shape = 'u8[8192]{0}', space=vmem, size = 0x2000, scoped, tag = 'output window, operand 1, single buffered']
    #allocation5 [shape = 's32[1]{0}', space=sflag, size = 0x4, scoped, tag = 'scoped memory for _lambda_.25']
    %11 = vsyncpa [#allocation3], 0
    %12 = vsyncpa [#allocation5], 0
    // Predicated region
    $region2: #{_lambda_.25} parent=1 // pred_check
      _
    $region3: #{_lambda_.25} parent=1 // pred_check_branch
      %14 = sbr.rel (0) target = $region5
    $region4: #{_lambda_.25} parent=1 // pred_region
      _
    $region5: #{_lambda_.25} parent=1 // pred_fallthru
      _
    // Predicated region
    $region6: #{_lambda_.25} parent=1 // pred_check
      _
    $region7: #{_lambda_.25} parent=1 // pred_check_branch
      %16 = sbr.rel (0) target = $region9
    $region8: #{_lambda_.25} parent=1 // pred_region
      _
    $region9: #{_lambda_.25} parent=1 // pred_fallthru
      _
    // Predicated region
    $region10: #{_lambda_.25} parent=1 // pred_check
      _
    $region11: #{_lambda_.25} parent=1 // pred_check_branch
      %18 = sbr.rel (0) target = $region13
    $region12: #{_lambda_.25} parent=1 // pred_region
      _
    $region13: #{_lambda_.25} parent=1 // pred_fallthru
      _
    // Predicated region
    $region14: #{_lambda_.25} parent=1 // pred_check
      _
    $region15: #{_lambda_.25} parent=1 // pred_check_branch
      %20 = sbr.rel (0) target = $region17
    $region16: #{_lambda_.25} parent=1 // pred_region
      _
    $region17: #{_lambda_.25} parent=1 // pred_fallthru
      _
    %v22 = vld [vmem:[%s0] sm:$0xff]
    %v23 = vld [vmem:[%s0 + $0x8] sm:$0xff]
    %v24 = vld [vmem:[%s1] sm:$0x1]
    %v25 = vld [vmem:[%s2] sm:$0x1]
    %vm26 = vcmask 261120
    %v27 = vsel %vm26, %v22, 0.0
    %28 = vadd.xlane.f32.xlu0 %v27
    %v29 = vpop.xlane.xlu0 %28
    %v30 = vsel %vm26, %v23, 0.0
    %31 = vadd.xlane.f32.xlu0 %v30
    %v32 = vpop.xlane.xlu0 %31
    %v33 = vrcp.pop 32.0
    %v34 = vmul.f32 %v29, %v33
    %v35 = vmul.f32 %v32, %v33
    %v36 = vsub.f32 %v22, %v34
    %v37 = vsub.f32 %v23, %v35
    %v38 = vmul.f32 %v36, %v36
    %v39 = vmul.f32 %v37, %v37
    %v40 = vsel %vm26, %v38, 0.0
    %41 = vadd.xlane.f32.xlu0 %v40
    %v42 = vpop.xlane.xlu0 %41
    %v43 = vsel %vm26, %v39, 0.0
    %44 = vadd.xlane.f32.xlu0 %v43
    %v45 = vpop.xlane.xlu0 %44
    %v46 = vmul.f32 %v42, %v33
    %v47 = vmul.f32 %v45, %v33
    %v48 = vadd.f32 %v46, 1e-06
    %v49 = vadd.f32 %v47, 1e-06
    %v50 = vrsqrt.pop %v48
    %v51 = vrsqrt.pop %v49
    %v52 = vmul.f32 %v36, %v50
    %v53 = vmul.f32 %v37, %v51
    %v55 = vlaneseq
    %v56 = vshrl.u32 %v55, 7
    %v57 = vsub.s32 0, %v56
    %v58 = vrot.slane %v24, %v57
    %v60 = vmul.f32 %v52, %v58
    %v61 = vmul.f32 %v53, %v58
    %v63 = vlaneseq
    %v64 = vshrl.u32 %v63, 7
    %v65 = vsub.s32 0, %v64
    %v66 = vrot.slane %v25, %v65
    %v68 = vadd.f32 %v60, %v66
    %v69 = vadd.f32 %v61, %v66
    %70 = vst.msk [vmem:[#allocation2] sm:$0xff] %vm26, %v68
    %71 = vst.msk [vmem:[#allocation2 + $0x8] sm:$0xff] %vm26, %v69
    %v72 = vpack.c.bf16 %v69, %v68
    %v73 = vld [vmem:[%s3] sm:$0xf]
    %v74 = vld [vmem:[%s3 + $0x4] sm:$0xf]
    %v75 = vld [vmem:[%s3 + $0x8] sm:$0xf]
    %v76 = vld [vmem:[%s3 + $0xc] sm:$0xf]
    %v81 = vunpack.c.l.b16 %v73
    %v82 = vunpack.c.l.b16 %v74
    %v83 = vunpack.c.l.b16 %v75
    %v84 = vunpack.c.l.b16 %v76
    %v85 = vpack.c.b16 %v82, %v81
    %v86 = vpack.c.b16 %v84, %v83
    %v90 = vsel %vm26, %v72, 0
    %92 = vmatprep.subr.bf16.mxu0 0
    %93 = vmatpush1.bf16.msra.mxu0 0
    %94 = vmatprep.subr.bf16.mxu0 0
    %95 = vmatpush1.bf16.msra.mxu0 0
    %96 = vmatprep.subr.bf16.mxu0 0
    %97 = vmatpush1.bf16.msra.mxu0 0
    %98 = vmatprep.subr.bf16.mxu0 0
    %99 = vmatpush1.bf16.msra.mxu0 0
    %100 = vmatprep.subr.bf16.mxu0 0
    %101 = vmatpush1.bf16.msra.mxu0 0
    %102 = vmatprep.subr.bf16.mxu0 0
    %103 = vmatpush1.bf16.msra.mxu0 0
    %104 = vmatprep.subr.bf16.mxu0 0
    %105 = vmatpush1.bf16.msra.mxu0 %v86
    %106 = vmatprep.subr.bf16.mxu0 0
    %107 = vmatpush1.bf16.msra.mxu0 %v85
    %108 = vmatprep.subr.bf16.mxu0 0
    %109 = vmatpush2.bf16.msra.mxu0 0
    %110 = vmatprep.subr.bf16.mxu0 0
    %111 = vmatpush2.bf16.msra.mxu0 0
    %112 = vmatprep.subr.bf16.mxu0 0
    %113 = vmatpush2.bf16.msra.mxu0 0
    %114 = vmatprep.subr.bf16.mxu0 0
    %115 = vmatpush2.bf16.msra.mxu0 0
    %116 = vmatprep.subr.bf16.mxu0 0
    %117 = vmatpush2.bf16.msra.mxu0 0
    %118 = vmatprep.subr.bf16.mxu0 0
    %119 = vmatpush2.bf16.msra.mxu0 0
    %120 = vmatprep.subr.bf16.mxu0 0
    %121 = vmatpush2.bf16.msra.mxu0 0
    %122 = vmatprep.subr.bf16.mxu0 0
    %123 = vmatpush2.bf16.msra.mxu0 0
    %124 = vmatprep.mubr.bf16.mxu0 0
    %125 = vmatmul.mubr.bf16.gmra.mxu0 %v90
    %v126 = vpop.f32.mrf.mxu0
    %v127 = vadd.f32 0.0, %v126
    %v128 = vpop.f32.mrf.mxu0
    %v129 = vpop.f32.mrf.mxu0
    %v130 = vadd.f32 0.0, %v129
    %v131 = vpop.f32.mrf.mxu0
    %132 = vdwg.mxu0
    %vm133 = vcmask 408576
    %134 = vst.msk [vmem:[#allocation4] sm:$0xff] %vm133, %v127
    %135 = vst.msk [vmem:[#allocation4 + $0x8] sm:$0xff] %vm133, %v130
    // Predicated region
    $region18: #{_lambda_.25} parent=1 // pred_check
      _
    $region19: #{_lambda_.25} parent=1 // pred_check_branch
      %137 = sbr.rel (0) target = $region21
    $region20: #{_lambda_.25} parent=1 // pred_region
      %s139 = ssub.s32 256, 256
      %140 = vsyncadd [#allocation3], %s139
      %s141 = sshll.u32 [#allocation2], 4
      %s142 = int_to_ptr.vmem [resolvable:$true] %s141
      %147 = dma.vmem_to_hbm [thread:$0]  %s142, 256, %s4, [#allocation3], 128, 128, 8
    $region21: #{_lambda_.25} parent=1 // pred_fallthru
      _
    // Predicated region
    $region22: #{_lambda_.25} parent=1 // pred_check
      _
    $region23: #{_lambda_.25} parent=1 // pred_check_branch
      %149 = sbr.rel (0) target = $region25
    $region24: #{_lambda_.25} parent=1 // pred_region
      %s151 = ssub.s32 256, 256
      %152 = vsyncadd [#allocation5], %s151
      %s153 = sshll.u32 [#allocation4], 4
      %s154 = int_to_ptr.vmem [resolvable:$true] %s153
      %159 = dma.vmem_to_hbm [thread:$0]  %s154, 256, %s5, [#allocation5], 128, 128, 8
    $region25: #{_lambda_.25} parent=1 // pred_fallthru
      _
    // Predicated region
    $region26: #{_lambda_.25} parent=1 // pred_check
      _
    $region27: #{_lambda_.25} parent=1 // pred_check_branch
      %161 = sbr.rel (0) target = $region29
    $region28: #{_lambda_.25} parent=1 // pred_region
      %162 = dma.done [#allocation3], 256
    $region29: #{_lambda_.25} parent=1 // pred_fallthru
      _
    // Predicated region
    $region30: #{_lambda_.25} parent=1 // pred_check
      _
    $region31: #{_lambda_.25} parent=1 // pred_check_branch
      %164 = sbr.rel (0) target = $region33
    $region32: #{_lambda_.25} parent=1 // pred_region
      %165 = dma.done [#allocation5], 256
    $region33: #{_lambda_.25} parent=1 // pred_fallthru
      _
    %166 = vsyncpa [#allocation3], 1
    %167 = vsyncpa [#allocation5], 1

// kernel: _lambda_.21
$region0: #{_lambda_.21}
  #allocation0 [shape = 'u32[]', space=smem, size = 0x4, offset = 0x4, fixed_abs, tag = 'smem constant byte address 0x4 - core index']
  #allocation1 [shape = 'u32[144,128]{1,0:T(1,128)}', space=vmem, size = 0x12000, scoped, tag = 'internal scratch']
  %s0 = inlined_call_operand.vmem [shape: f32[16,32], index: 0, kind: input, shape index: {}]
  %s1 = inlined_call_operand.vmem [shape: f32[1,32], index: 1, kind: input, shape index: {}]
  %s2 = inlined_call_operand.vmem [shape: f32[1,32], index: 2, kind: input, shape index: {}]
  %s3 = inlined_call_operand.vmem [shape: bf16[32,2048], index: 3, kind: input, shape index: {}]
  %s4 = inlined_call_operand.vmem [shape: f32[1,2048], index: 4, kind: input, shape index: {}]
  %s5 = inlined_call_operand.vmem [shape: bf16[2048,32], index: 5, kind: input, shape index: {}]
  %s6 = inlined_call_operand.vmem [shape: f32[1,32], index: 6, kind: input, shape index: {}]
  %s7 = inlined_call_operand.vmem [shape: f32[16,32], index: 7, kind: output, shape index: {}]
  %s8 = sld [smem:[#allocation0]]
  $region38: #{_lambda_.21} parent=0
    _
  %s10 = ssub.s32 1, %s8
  %s11 = scalar_select 0, %s10, %s8
  // Predicated region
  $region2: #{_lambda_.21} parent=0 // pred_check
    _
  $region3: #{_lambda_.21} parent=0 // pred_check_branch
    %13 = sbr.rel (0) target = $region5
  $region4: #{_lambda_.21} parent=0 // pred_region
    _
  $region5: #{_lambda_.21} parent=0 // pred_fallthru
    _
  // Predicated region
  $region6: #{_lambda_.21} parent=0 // pred_check
    _
  $region7: #{_lambda_.21} parent=0 // pred_check_branch
    %15 = sbr.rel (0) target = $region9
  $region8: #{_lambda_.21} parent=0 // pred_region
    _
  $region9: #{_lambda_.21} parent=0 // pred_fallthru
    _
  // Predicated region
  $region10: #{_lambda_.21} parent=0 // pred_check
    _
  $region11: #{_lambda_.21} parent=0 // pred_check_branch
    %17 = sbr.rel (0) target = $region13
  $region12: #{_lambda_.21} parent=0 // pred_region
    _
  $region13: #{_lambda_.21} parent=0 // pred_fallthru
    _
  // Predicated region
  $region14: #{_lambda_.21} parent=0 // pred_check
    _
  $region15: #{_lambda_.21} parent=0 // pred_check_branch
    %19 = sbr.rel (0) target = $region17
  $region16: #{_lambda_.21} parent=0 // pred_region
    _
  $region17: #{_lambda_.21} parent=0 // pred_fallthru
    _
  // Predicated region
  $region18: #{_lambda_.21} parent=0 // pred_check
    _
  $region19: #{_lambda_.21} parent=0 // pred_check_branch
    %21 = sbr.rel (0) target = $region21
  $region20: #{_lambda_.21} parent=0 // pred_region
    _
  $region21: #{_lambda_.21} parent=0 // pred_fallthru
    _
  // Predicated region
  $region22: #{_lambda_.21} parent=0 // pred_check
    _
  $region23: #{_lambda_.21} parent=0 // pred_check_branch
    %23 = sbr.rel (0) target = $region25
  $region24: #{_lambda_.21} parent=0 // pred_region
    _
  $region25: #{_lambda_.21} parent=0 // pred_fallthru
    _
  // Predicated region
  $region26: #{_lambda_.21} parent=0 // pred_check
    _
  $region27: #{_lambda_.21} parent=0 // pred_check_branch
    %25 = sbr.rel (0) target = $region29
  $region28: #{_lambda_.21} parent=0 // pred_region
    _
  $region29: #{_lambda_.21} parent=0 // pred_fallthru
    _
  %v27 = vld [vmem:[%s0] sm:$0xff]
  %v28 = vld [vmem:[%s0 + $0x8] sm:$0xff]
  %v29 = vld [vmem:[%s1] sm:$0x1]
  %v30 = vld [vmem:[%s2] sm:$0x1]
  %vm31 = vcmask 261120
  %v32 = vsel %vm31, %v27, 0.0
  %33 = vadd.xlane.f32.xlu0 %v32
  %v34 = vpop.xlane.xlu0 %33
  %v35 = vsel %vm31, %v28, 0.0
  %36 = vadd.xlane.f32.xlu0 %v35
  %v37 = vpop.xlane.xlu0 %36
  %v38 = vrcp.pop 32.0
  %v39 = vmul.f32 %v34, %v38
  %v40 = vmul.f32 %v37, %v38
  %v41 = vsub.f32 %v27, %v39
  %v42 = vsub.f32 %v28, %v40
  %v43 = vmul.f32 %v41, %v41
  %v44 = vmul.f32 %v42, %v42
  %v45 = vsel %vm31, %v43, 0.0
  %46 = vadd.xlane.f32.xlu0 %v45
  %v47 = vpop.xlane.xlu0 %46
  %v48 = vsel %vm31, %v44, 0.0
  %49 = vadd.xlane.f32.xlu0 %v48
  %v50 = vpop.xlane.xlu0 %49
  %v51 = vmul.f32 %v47, %v38
  %v52 = vmul.f32 %v50, %v38
  %v53 = vadd.f32 %v51, 1e-06
  %v54 = vadd.f32 %v52, 1e-06
  %v55 = vrsqrt.pop %v53
  %v56 = vrsqrt.pop %v54
  %v57 = vmul.f32 %v41, %v55
  %v58 = vmul.f32 %v42, %v56
  %v60 = vlaneseq
  %v61 = vshrl.u32 %v60, 7
  %v62 = vsub.s32 0, %v61
  %v63 = vrot.slane %v29, %v62
  %v65 = vmul.f32 %v57, %v63
  %v66 = vmul.f32 %v58, %v63
  %v68 = vlaneseq
  %v69 = vshrl.u32 %v68, 7
  %v70 = vsub.s32 0, %v69
  %v71 = vrot.slane %v30, %v70
  %v73 = vadd.f32 %v65, %v71
  %v74 = vadd.f32 %v66, %v71
  %v75 = vpack.c.bf16 %v74, %v73
  %v76 = vld [vmem:[%s3] sm:$0xff]
  %v77 = vld [vmem:[%s3 + $0x8] sm:$0xff]
  %v78 = vld [vmem:[%s3 + $0x10] sm:$0xff]
  %v79 = vld [vmem:[%s3 + $0x18] sm:$0xff]
  %v80 = vld [vmem:[%s3 + $0x20] sm:$0xff]
  %v81 = vld [vmem:[%s3 + $0x28] sm:$0xff]
  %v82 = vld [vmem:[%s3 + $0x30] sm:$0xff]
  %v83 = vld [vmem:[%s3 + $0x38] sm:$0xff]
  %v84 = vld [vmem:[%s3 + $0x40] sm:$0xff]
  %v85 = vld [vmem:[%s3 + $0x48] sm:$0xff]
  %v86 = vld [vmem:[%s3 + $0x50] sm:$0xff]
  %v87 = vld [vmem:[%s3 + $0x58] sm:$0xff]
  %v88 = vld [vmem:[%s3 + $0x60] sm:$0xff]
  %v89 = vld [vmem:[%s3 + $0x68] sm:$0xff]
  %v90 = vld [vmem:[%s3 + $0x70] sm:$0xff]
  %v91 = vld [vmem:[%s3 + $0x78] sm:$0xff]
  %v92 = vld [vmem:[%s3 + $0x80] sm:$0xff]
  %v93 = vld [vmem:[%s3 + $0x88] sm:$0xff]
  %v94 = vld [vmem:[%s3 + $0x90] sm:$0xff]
  %v95 = vld [vmem:[%s3 + $0x98] sm:$0xff]
  %v96 = vld [vmem:[%s3 + $0xa0] sm:$0xff]
  %v97 = vld [vmem:[%s3 + $0xa8] sm:$0xff]
  %v98 = vld [vmem:[%s3 + $0xb0] sm:$0xff]
  %v99 = vld [vmem:[%s3 + $0xb8] sm:$0xff]
  %v100 = vld [vmem:[%s3 + $0xc0] sm:$0xff]
  %v101 = vld [vmem:[%s3 + $0xc8] sm:$0xff]
  %v102 = vld [vmem:[%s3 + $0xd0] sm:$0xff]
  %v103 = vld [vmem:[%s3 + $0xd8] sm:$0xff]
  %v104 = vld [vmem:[%s3 + $0xe0] sm:$0xff]
  %v105 = vld [vmem:[%s3 + $0xe8] sm:$0xff]
  %v106 = vld [vmem:[%s3 + $0xf0] sm:$0xff]
  %v107 = vld [vmem:[%s3 + $0xf8] sm:$0xff]
  %v108 = vld [vmem:[%s4] sm:$0xff]
  %v109 = vld [vmem:[%s4 + $0x8] sm:$0xff]
  %v112 = vlaneseq
  %v113 = vshrl.u32 %v112, 7
  %v114 = vsub.s32 0, %v113
  %v115 = vrot.slane %v108, %v114
  %v116 = vlaneseq
  %v117 = vshrl.u32 %v116, 7
  %v118 = vsub.s32 1, %v117
  %v119 = vrot.slane %v108, %v118
  %v120 = vlaneseq
  %v121 = vshrl.u32 %v120, 7
  %v122 = vsub.s32 2, %v121
  %v123 = vrot.slane %v108, %v122
  %v124 = vlaneseq
  %v125 = vshrl.u32 %v124, 7
  %v126 = vsub.s32 3, %v125
  %v127 = vrot.slane %v108, %v126
  %v128 = vlaneseq
  %v129 = vshrl.u32 %v128, 7
  %v130 = vsub.s32 4, %v129
  %v131 = vrot.slane %v108, %v130
  %v132 = vlaneseq
  %v133 = vshrl.u32 %v132, 7
  %v134 = vsub.s32 5, %v133
  %v135 = vrot.slane %v108, %v134
  %v136 = vlaneseq
  %v137 = vshrl.u32 %v136, 7
  %v138 = vsub.s32 6, %v137
  %v139 = vrot.slane %v108, %v138
  %v140 = vlaneseq
  %v141 = vshrl.u32 %v140, 7
  %v142 = vsub.s32 7, %v141
  %v143 = vrot.slane %v108, %v142
  %v144 = vlaneseq
  %v145 = vshrl.u32 %v144, 7
  %v146 = vsub.s32 0, %v145
  %v147 = vrot.slane %v109, %v146
  %v148 = vlaneseq
  %v149 = vshrl.u32 %v148, 7
  %v150 = vsub.s32 1, %v149
  %v151 = vrot.slane %v109, %v150
  %v152 = vlaneseq
  %v153 = vshrl.u32 %v152, 7
  %v154 = vsub.s32 2, %v153
  %v155 = vrot.slane %v109, %v154
  %v156 = vlaneseq
  %v157 = vshrl.u32 %v156, 7
  %v158 = vsub.s32 3, %v157
  %v159 = vrot.slane %v109, %v158
  %v160 = vlaneseq
  %v161 = vshrl.u32 %v160, 7
  %v162 = vsub.s32 4, %v161
  %v163 = vrot.slane %v109, %v162
  %v164 = vlaneseq
  %v165 = vshrl.u32 %v164, 7
  %v166 = vsub.s32 5, %v165
  %v167 = vrot.slane %v109, %v166
  %v168 = vlaneseq
  %v169 = vshrl.u32 %v168, 7
  %v170 = vsub.s32 6, %v169
  %v171 = vrot.slane %v109, %v170
  %v172 = vlaneseq
  %v173 = vshrl.u32 %v172, 7
  %v174 = vsub.s32 7, %v173
  %v175 = vrot.slane %v109, %v174
  %v224 = vunpack.c.l.b16 %v76
  %v225 = vunpack.c.h.b16 %v76
  %v226 = vunpack.c.l.b16 %v77
  %v227 = vunpack.c.h.b16 %v77
  %v228 = vunpack.c.l.b16 %v78
  %v229 = vunpack.c.h.b16 %v78
  %v230 = vunpack.c.l.b16 %v79
  %v231 = vunpack.c.h.b16 %v79
  %v232 = vunpack.c.l.b16 %v80
  %v233 = vunpack.c.h.b16 %v80
  %v234 = vunpack.c.l.b16 %v81
  %v235 = vunpack.c.h.b16 %v81
  %v236 = vunpack.c.l.b16 %v82
  %v237 = vunpack.c.h.b16 %v82
  %v238 = vunpack.c.l.b16 %v83
  %v239 = vunpack.c.h.b16 %v83
  %v240 = vunpack.c.l.b16 %v84
  %v241 = vunpack.c.h.b16 %v84
  %v242 = vunpack.c.l.b16 %v85
  %v243 = vunpack.c.h.b16 %v85
  %v244 = vunpack.c.l.b16 %v86
  %v245 = vunpack.c.h.b16 %v86
  %v246 = vunpack.c.l.b16 %v87
  %v247 = vunpack.c.h.b16 %v87
  %v248 = vunpack.c.l.b16 %v88
  %v249 = vunpack.c.h.b16 %v88
  %v250 = vunpack.c.l.b16 %v89
  %v251 = vunpack.c.h.b16 %v89
  %v252 = vunpack.c.l.b16 %v90
  %v253 = vunpack.c.h.b16 %v90
  %v254 = vunpack.c.l.b16 %v91
  %v255 = vunpack.c.h.b16 %v91
  %v256 = vunpack.c.l.b16 %v92
  %v257 = vunpack.c.h.b16 %v92
  %v258 = vunpack.c.l.b16 %v93
  %v259 = vunpack.c.h.b16 %v93
  %v260 = vunpack.c.l.b16 %v94
  %v261 = vunpack.c.h.b16 %v94
  %v262 = vunpack.c.l.b16 %v95
  %v263 = vunpack.c.h.b16 %v95
  %v264 = vunpack.c.l.b16 %v96
  %v265 = vunpack.c.h.b16 %v96
  %v266 = vunpack.c.l.b16 %v97
  %v267 = vunpack.c.h.b16 %v97
  %v268 = vunpack.c.l.b16 %v98
  %v269 = vunpack.c.h.b16 %v98
  %v270 = vunpack.c.l.b16 %v99
  %v271 = vunpack.c.h.b16 %v99
  %v272 = vunpack.c.l.b16 %v100
  %v273 = vunpack.c.h.b16 %v100
  %v274 = vunpack.c.l.b16 %v101
  %v275 = vunpack.c.h.b16 %v101
  %v276 = vunpack.c.l.b16 %v102
  %v277 = vunpack.c.h.b16 %v102
  %v278 = vunpack.c.l.b16 %v103
  %v279 = vunpack.c.h.b16 %v103
  %v280 = vunpack.c.l.b16 %v104
  %v281 = vunpack.c.h.b16 %v104
  %v282 = vunpack.c.l.b16 %v105
  %v283 = vunpack.c.h.b16 %v105
  %v284 = vunpack.c.l.b16 %v106
  %v285 = vunpack.c.h.b16 %v106
  %v286 = vunpack.c.l.b16 %v107
  %v287 = vunpack.c.h.b16 %v107
  %v288 = vpack.c.b16 %v240, %v224
  %v289 = vpack.c.b16 %v241, %v225
  %v290 = vpack.c.b16 %v242, %v226
  %v291 = vpack.c.b16 %v243, %v227
  %v292 = vpack.c.b16 %v244, %v228
  %v293 = vpack.c.b16 %v245, %v229
  %v294 = vpack.c.b16 %v246, %v230
  %v295 = vpack.c.b16 %v247, %v231
  %v296 = vpack.c.b16 %v248, %v232
  %v297 = vpack.c.b16 %v249, %v233
  %v298 = vpack.c.b16 %v250, %v234
  %v299 = vpack.c.b16 %v251, %v235
  %v300 = vpack.c.b16 %v252, %v236
  %v301 = vpack.c.b16 %v253, %v237
  %v302 = vpack.c.b16 %v254, %v238
  %v303 = vpack.c.b16 %v255, %v239
  %v304 = vpack.c.b16 %v272, %v256
  %v305 = vpack.c.b16 %v273, %v257
  %v306 = vpack.c.b16 %v274, %v258
  %v307 = vpack.c.b16 %v275, %v259
  %v308 = vpack.c.b16 %v276, %v260
  %v309 = vpack.c.b16 %v277, %v261
  %v310 = vpack.c.b16 %v278, %v262
  %v311 = vpack.c.b16 %v279, %v263
  %v312 = vpack.c.b16 %v280, %v264
  %v313 = vpack.c.b16 %v281, %v265
  %v314 = vpack.c.b16 %v282, %v266
  %v315 = vpack.c.b16 %v283, %v267
  %v316 = vpack.c.b16 %v284, %v268
  %v317 = vpack.c.b16 %v285, %v269
  %v318 = vpack.c.b16 %v286, %v270
  %v319 = vpack.c.b16 %v287, %v271
  %v353 = vsel %vm31, %v75, 0
  %355 = vmatprep.subr.bf16.mxu0 0
  %356 = vmatpush1.bf16.msra.mxu0 0
  %357 = vmatprep.subr.bf16.mxu0 0
  %358 = vmatpush1.bf16.msra.mxu0 0
  %359 = vmatprep.subr.bf16.mxu0 0
  %360 = vmatpush1.bf16.msra.mxu0 0
  %361 = vmatprep.subr.bf16.mxu0 0
  %362 = vmatpush1.bf16.msra.mxu0 0
  %363 = vmatprep.subr.bf16.mxu0 0
  %364 = vmatpush1.bf16.msra.mxu0 0
  %365 = vmatprep.subr.bf16.mxu0 0
  %366 = vmatpush1.bf16.msra.mxu0 0
  %367 = vmatprep.subr.bf16.mxu0 %v305
  %368 = vmatpush1.bf16.msra.mxu0 %v304
  %369 = vmatprep.subr.bf16.mxu0 %v289
  %370 = vmatpush1.bf16.msra.mxu0 %v288
  %371 = vmatprep.subr.bf16.mxu0 0
  %372 = vmatpush2.bf16.msra.mxu0 0
  %373 = vmatprep.subr.bf16.mxu0 0
  %374 = vmatpush2.bf16.msra.mxu0 0
  %375 = vmatprep.subr.bf16.mxu0 0
  %376 = vmatpush2.bf16.msra.mxu0 0
  %377 = vmatprep.subr.bf16.mxu0 0
  %378 = vmatpush2.bf16.msra.mxu0 0
  %379 = vmatprep.subr.bf16.mxu0 0
  %380 = vmatpush2.bf16.msra.mxu0 0
  %381 = vmatprep.subr.bf16.mxu0 0
  %382 = vmatpush2.bf16.msra.mxu0 0
  %383 = vmatprep.subr.bf16.mxu0 0
  %384 = vmatpush2.bf16.msra.mxu0 0
  %385 = vmatprep.subr.bf16.mxu0 0
  %386 = vmatpush2.bf16.msra.mxu0 0
  %387 = vmatprep.mubr.bf16.mxu0 0
  %388 = vmatmul.mubr.bf16.gmra.mxu0 %v353
  %v389 = vpop.f32.mrf.mxu0
  %v390 = vadd.f32 %v115, %v389
  %v391 = vpop.f32.mrf.mxu0
  %v392 = vadd.f32 %v119, %v391
  %v393 = vpop.f32.mrf.mxu0
  %v394 = vadd.f32 %v115, %v393
  %v395 = vpop.f32.mrf.mxu0
  %v396 = vadd.f32 %v119, %v395
  %397 = vdwg.mxu0
  %398 = vmatprep.subr.bf16.mxu0 0
  %399 = vmatpush1.bf16.msra.mxu0 0
  %400 = vmatprep.subr.bf16.mxu0 0
  %401 = vmatpush1.bf16.msra.mxu0 0
  %402 = vmatprep.subr.bf16.mxu0 0
  %403 = vmatpush1.bf16.msra.mxu0 0
  %404 = vmatprep.subr.bf16.mxu0 0
  %405 = vmatpush1.bf16.msra.mxu0 0
  %406 = vmatprep.subr.bf16.mxu0 0
  %407 = vmatpush1.bf16.msra.mxu0 0
  %408 = vmatprep.subr.bf16.mxu0 0
  %409 = vmatpush1.bf16.msra.mxu0 0
  %410 = vmatprep.subr.bf16.mxu0 %v307
  %411 = vmatpush1.bf16.msra.mxu0 %v306
  %412 = vmatprep.subr.bf16.mxu0 %v291
  %413 = vmatpush1.bf16.msra.mxu0 %v290
  %414 = vmatprep.subr.bf16.mxu0 0
  %415 = vmatpush2.bf16.msra.mxu0 0
  %416 = vmatprep.subr.bf16.mxu0 0
  %417 = vmatpush2.bf16.msra.mxu0 0
  %418 = vmatprep.subr.bf16.mxu0 0
  %419 = vmatpush2.bf16.msra.mxu0 0
  %420 = vmatprep.subr.bf16.mxu0 0
  %421 = vmatpush2.bf16.msra.mxu0 0
  %422 = vmatprep.subr.bf16.mxu0 0
  %423 = vmatpush2.bf16.msra.mxu0 0
  %424 = vmatprep.subr.bf16.mxu0 0
  %425 = vmatpush2.bf16.msra.mxu0 0
  %426 = vmatprep.subr.bf16.mxu0 0
  %427 = vmatpush2.bf16.msra.mxu0 0
  %428 = vmatprep.subr.bf16.mxu0 0
  %429 = vmatpush2.bf16.msra.mxu0 0
  %430 = vmatprep.mubr.bf16.mxu0 0
  %431 = vmatmul.mubr.bf16.gmra.mxu0 %v353
  %v432 = vpop.f32.mrf.mxu0
  %v433 = vadd.f32 %v123, %v432
  %v434 = vpop.f32.mrf.mxu0
  %v435 = vadd.f32 %v127, %v434
  %v436 = vpop.f32.mrf.mxu0
  %v437 = vadd.f32 %v123, %v436
  %v438 = vpop.f32.mrf.mxu0
  %v439 = vadd.f32 %v127, %v438
  %440 = vdwg.mxu0
  %441 = vmatprep.subr.bf16.mxu0 0
  %442 = vmatpush1.bf16.msra.mxu0 0
  %443 = vmatprep.subr.bf16.mxu0 0
  %444 = vmatpush1.bf16.msra.mxu0 0
  %445 = vmatprep.subr.bf16.mxu0 0
  %446 = vmatpush1.bf16.msra.mxu0 0
  %447 = vmatprep.subr.bf16.mxu0 0
  %448 = vmatpush1.bf16.msra.mxu0 0
  %449 = vmatprep.subr.bf16.mxu0 0
  %450 = vmatpush1.bf16.msra.mxu0 0
  %451 = vmatprep.subr.bf16.mxu0 0
  %452 = vmatpush1.bf16.msra.mxu0 0
  %453 = vmatprep.subr.bf16.mxu0 %v309
  %454 = vmatpush1.bf16.msra.mxu0 %v308
  %455 = vmatprep.subr.bf16.mxu0 %v293
  %456 = vmatpush1.bf16.msra.mxu0 %v292
  %457 = vmatprep.subr.bf16.mxu0 0
  %458 = vmatpush2.bf16.msra.mxu0 0
  %459 = vmatprep.subr.bf16.mxu0 0
  %460 = vmatpush2.bf16.msra.mxu0 0
  %461 = vmatprep.subr.bf16.mxu0 0
  %462 = vmatpush2.bf16.msra.mxu0 0
  %463 = vmatprep.subr.bf16.mxu0 0
  %464 = vmatpush2.bf16.msra.mxu0 0
  %465 = vmatprep.subr.bf16.mxu0 0
  %466 = vmatpush2.bf16.msra.mxu0 0
  %467 = vmatprep.subr.bf16.mxu0 0
  %468 = vmatpush2.bf16.msra.mxu0 0
  %469 = vmatprep.subr.bf16.mxu0 0
  %470 = vmatpush2.bf16.msra.mxu0 0
  %471 = vmatprep.subr.bf16.mxu0 0
  %472 = vmatpush2.bf16.msra.mxu0 0
  %473 = vmatprep.mubr.bf16.mxu0 0
  %474 = vmatmul.mubr.bf16.gmra.mxu0 %v353
  %v475 = vpop.f32.mrf.mxu0
  %v476 = vadd.f32 %v131, %v475
  %v477 = vpop.f32.mrf.mxu0
  %v478 = vadd.f32 %v135, %v477
  %v479 = vpop.f32.mrf.mxu0
  %v480 = vadd.f32 %v131, %v479
  %v481 = vpop.f32.mrf.mxu0
  %v482 = vadd.f32 %v135, %v481
  %483 = vdwg.mxu0
  %484 = vmatprep.subr.bf16.mxu0 0
  %485 = vmatpush1.bf16.msra.mxu0 0
  %486 = vmatprep.subr.bf16.mxu0 0
  %487 = vmatpush1.bf16.msra.mxu0 0
  %488 = vmatprep.subr.bf16.mxu0 0
  %489 = vmatpush1.bf16.msra.mxu0 0
  %490 = vmatprep.subr.bf16.mxu0 0
  %491 = vmatpush1.bf16.msra.mxu0 0
  %492 = vmatprep.subr.bf16.mxu0 0
  %493 = vmatpush1.bf16.msra.mxu0 0
  %494 = vmatprep.subr.bf16.mxu0 0
  %495 = vmatpush1.bf16.msra.mxu0 0
  %496 = vmatprep.subr.bf16.mxu0 %v311
  %497 = vmatpush1.bf16.msra.mxu0 %v310
  %498 = vmatprep.subr.bf16.mxu0 %v295
  %499 = vmatpush1.bf16.msra.mxu0 %v294
  %500 = vmatprep.subr.bf16.mxu0 0
  %501 = vmatpush2.bf16.msra.mxu0 0
  %502 = vmatprep.subr.bf16.mxu0 0
  %503 = vmatpush2.bf16.msra.mxu0 0
  %504 = vmatprep.subr.bf16.mxu0 0
  %505 = vmatpush2.bf16.msra.mxu0 0
  %506 = vmatprep.subr.bf16.mxu0 0
  %507 = vmatpush2.bf16.msra.mxu0 0
  %508 = vmatprep.subr.bf16.mxu0 0
  %509 = vmatpush2.bf16.msra.mxu0 0
  %510 = vmatprep.subr.bf16.mxu0 0
  %511 = vmatpush2.bf16.msra.mxu0 0
  %512 = vmatprep.subr.bf16.mxu0 0
  %513 = vmatpush2.bf16.msra.mxu0 0
  %514 = vmatprep.subr.bf16.mxu0 0
  %515 = vmatpush2.bf16.msra.mxu0 0
  %516 = vmatprep.mubr.bf16.mxu0 0
  %517 = vmatmul.mubr.bf16.gmra.mxu0 %v353
  %v518 = vpop.f32.mrf.mxu0
  %v519 = vadd.f32 %v139, %v518
  %v520 = vpop.f32.mrf.mxu0
  %v521 = vadd.f32 %v143, %v520
  %v522 = vpop.f32.mrf.mxu0
  %v523 = vadd.f32 %v139, %v522
  %v524 = vpop.f32.mrf.mxu0
  %v525 = vadd.f32 %v143, %v524
  %526 = vdwg.mxu0
  %527 = vmatprep.subr.bf16.mxu0 0
  %528 = vmatpush1.bf16.msra.mxu0 0
  %529 = vmatprep.subr.bf16.mxu0 0
  %530 = vmatpush1.bf16.msra.mxu0 0
  %531 = vmatprep.subr.bf16.mxu0 0
  %532 = vmatpush1.bf16.msra.mxu0 0
  %533 = vmatprep.subr.bf16.mxu0 0
  %534 = vmatpush1.bf16.msra.mxu0 0
  %535 = vmatprep.subr.bf16.mxu0 0
  %536 = vmatpush1.bf16.msra.mxu0 0
  %537 = vmatprep.subr.bf16.mxu0 0
  %538 = vmatpush1.bf16.msra.mxu0 0
  %539 = vmatprep.subr.bf16.mxu0 %v313
  %540 = vmatpush1.bf16.msra.mxu0 %v312
  %541 = vmatprep.subr.bf16.mxu0 %v297
  %542 = vmatpush1.bf16.msra.mxu0 %v296
  %543 = vmatprep.subr.bf16.mxu0 0
  %544 = vmatpush2.bf16.msra.mxu0 0
  %545 = vmatprep.subr.bf16.mxu0 0
  %546 = vmatpush2.bf16.msra.mxu0 0
  %547 = vmatprep.subr.bf16.mxu0 0
  %548 = vmatpush2.bf16.msra.mxu0 0
  %549 = vmatprep.subr.bf16.mxu0 0
  %550 = vmatpush2.bf16.msra.mxu0 0
  %551 = vmatprep.subr.bf16.mxu0 0
  %552 = vmatpush2.bf16.msra.mxu0 0
  %553 = vmatprep.subr.bf16.mxu0 0
  %554 = vmatpush2.bf16.msra.mxu0 0
  %555 = vmatprep.subr.bf16.mxu0 0
  %556 = vmatpush2.bf16.msra.mxu0 0
  %557 = vmatprep.subr.bf16.mxu0 0
  %558 = vmatpush2.bf16.msra.mxu0 0
  %559 = vmatprep.mubr.bf16.mxu0 0
  %560 = vmatmul.mubr.bf16.gmra.mxu0 %v353
  %v561 = vpop.f32.mrf.mxu0
  %v562 = vadd.f32 %v147, %v561
  %v563 = vpop.f32.mrf.mxu0
  %v564 = vadd.f32 %v151, %v563
  %v565 = vpop.f32.mrf.mxu0
  %v566 = vadd.f32 %v147, %v565
  %v567 = vpop.f32.mrf.mxu0
  %v568 = vadd.f32 %v151, %v567
  %569 = vdwg.mxu0
  %570 = vmatprep.subr.bf16.mxu0 0
  %571 = vmatpush1.bf16.msra.mxu0 0
  %572 = vmatprep.subr.bf16.mxu0 0
  %573 = vmatpush1.bf16.msra.mxu0 0
  %574 = vmatprep.subr.bf16.mxu0 0
  %575 = vmatpush1.bf16.msra.mxu0 0
  %576 = vmatprep.subr.bf16.mxu0 0
  %577 = vmatpush1.bf16.msra.mxu0 0
  %578 = vmatprep.subr.bf16.mxu0 0
  %579 = vmatpush1.bf16.msra.mxu0 0
  %580 = vmatprep.subr.bf16.mxu0 0
  %581 = vmatpush1.bf16.msra.mxu0 0
  %582 = vmatprep.subr.bf16.mxu0 %v315
  %583 = vmatpush1.bf16.msra.mxu0 %v314
  %584 = vmatprep.subr.bf16.mxu0 %v299
  %585 = vmatpush1.bf16.msra.mxu0 %v298
  %586 = vmatprep.subr.bf16.mxu0 0
  %587 = vmatpush2.bf16.msra.mxu0 0
  %588 = vmatprep.subr.bf16.mxu0 0
  %589 = vmatpush2.bf16.msra.mxu0 0
  %590 = vmatprep.subr.bf16.mxu0 0
  %591 = vmatpush2.bf16.msra.mxu0 0
  %592 = vmatprep.subr.bf16.mxu0 0
  %593 = vmatpush2.bf16.msra.mxu0 0
  %594 = vmatprep.subr.bf16.mxu0 0
  %595 = vmatpush2.bf16.msra.mxu0 0
  %596 = vmatprep.subr.bf16.mxu0 0
  %597 = vmatpush2.bf16.msra.mxu0 0
  %598 = vmatprep.subr.bf16.mxu0 0
  %599 = vmatpush2.bf16.msra.mxu0 0
  %600 = vmatprep.subr.bf16.mxu0 0
  %601 = vmatpush2.bf16.msra.mxu0 0
  %602 = vmatprep.mubr.bf16.mxu0 0
  %603 = vmatmul.mubr.bf16.gmra.mxu0 %v353
  %v604 = vpop.f32.mrf.mxu0
  %v605 = vadd.f32 %v155, %v604
  %v606 = vpop.f32.mrf.mxu0
  %v607 = vadd.f32 %v159, %v606
  %v608 = vpop.f32.mrf.mxu0
  %v609 = vadd.f32 %v155, %v608
  %v610 = vpop.f32.mrf.mxu0
  %v611 = vadd.f32 %v159, %v610
  %612 = vdwg.mxu0
  %613 = vmatprep.subr.bf16.mxu0 0
  %614 = vmatpush1.bf16.msra.mxu0 0
  %615 = vmatprep.subr.bf16.mxu0 0
  %616 = vmatpush1.bf16.msra.mxu0 0
  %617 = vmatprep.subr.bf16.mxu0 0
  %618 = vmatpush1.bf16.msra.mxu0 0
  %619 = vmatprep.subr.bf16.mxu0 0
  %620 = vmatpush1.bf16.msra.mxu0 0
  %621 = vmatprep.subr.bf16.mxu0 0
  %622 = vmatpush1.bf16.msra.mxu0 0
  %623 = vmatprep.subr.bf16.mxu0 0
  %624 = vmatpush1.bf16.msra.mxu0 0
  %625 = vmatprep.subr.bf16.mxu0 %v317
  %626 = vmatpush1.bf16.msra.mxu0 %v316
  %627 = vmatprep.subr.bf16.mxu0 %v301
  %628 = vmatpush1.bf16.msra.mxu0 %v300
  %629 = vmatprep.subr.bf16.mxu0 0
  %630 = vmatpush2.bf16.msra.mxu0 0
  %631 = vmatprep.subr.bf16.mxu0 0
  %632 = vmatpush2.bf16.msra.mxu0 0
  %633 = vmatprep.subr.bf16.mxu0 0
  %634 = vmatpush2.bf16.msra.mxu0 0
  %635 = vmatprep.subr.bf16.mxu0 0
  %636 = vmatpush2.bf16.msra.mxu0 0
  %637 = vmatprep.subr.bf16.mxu0 0
  %638 = vmatpush2.bf16.msra.mxu0 0
  %639 = vmatprep.subr.bf16.mxu0 0
  %640 = vmatpush2.bf16.msra.mxu0 0
  %641 = vmatprep.subr.bf16.mxu0 0
  %642 = vmatpush2.bf16.msra.mxu0 0
  %643 = vmatprep.subr.bf16.mxu0 0
  %644 = vmatpush2.bf16.msra.mxu0 0
  %645 = vmatprep.mubr.bf16.mxu0 0
  %646 = vmatmul.mubr.bf16.gmra.mxu0 %v353
  %v647 = vpop.f32.mrf.mxu0
  %v648 = vadd.f32 %v163, %v647
  %v649 = vpop.f32.mrf.mxu0
  %v650 = vadd.f32 %v167, %v649
  %v651 = vpop.f32.mrf.mxu0
  %v652 = vadd.f32 %v163, %v651
  %v653 = vpop.f32.mrf.mxu0
  %v654 = vadd.f32 %v167, %v653
  %655 = vdwg.mxu0
  %656 = vmatprep.subr.bf16.mxu0 0
  %657 = vmatpush1.bf16.msra.mxu0 0
  %658 = vmatprep.subr.bf16.mxu0 0
  %659 = vmatpush1.bf16.msra.mxu0 0
  %660 = vmatprep.subr.bf16.mxu0 0
  %661 = vmatpush1.bf16.msra.mxu0 0
  %662 = vmatprep.subr.bf16.mxu0 0
  %663 = vmatpush1.bf16.msra.mxu0 0
  %664 = vmatprep.subr.bf16.mxu0 0
  %665 = vmatpush1.bf16.msra.mxu0 0
  %666 = vmatprep.subr.bf16.mxu0 0
  %667 = vmatpush1.bf16.msra.mxu0 0
  %668 = vmatprep.subr.bf16.mxu0 %v319
  %669 = vmatpush1.bf16.msra.mxu0 %v318
  %670 = vmatprep.subr.bf16.mxu0 %v303
  %671 = vmatpush1.bf16.msra.mxu0 %v302
  %672 = vmatprep.subr.bf16.mxu0 0
  %673 = vmatpush2.bf16.msra.mxu0 0
  %674 = vmatprep.subr.bf16.mxu0 0
  %675 = vmatpush2.bf16.msra.mxu0 0
  %676 = vmatprep.subr.bf16.mxu0 0
  %677 = vmatpush2.bf16.msra.mxu0 0
  %678 = vmatprep.subr.bf16.mxu0 0
  %679 = vmatpush2.bf16.msra.mxu0 0
  %680 = vmatprep.subr.bf16.mxu0 0
  %681 = vmatpush2.bf16.msra.mxu0 0
  %682 = vmatprep.subr.bf16.mxu0 0
  %683 = vmatpush2.bf16.msra.mxu0 0
  %684 = vmatprep.subr.bf16.mxu0 0
  %685 = vmatpush2.bf16.msra.mxu0 0
  %686 = vmatprep.subr.bf16.mxu0 0
  %687 = vmatpush2.bf16.msra.mxu0 0
  %688 = vmatprep.mubr.bf16.mxu0 0
  %689 = vmatmul.mubr.bf16.gmra.mxu0 %v353
  %v690 = vpop.f32.mrf.mxu0
  %v691 = vadd.f32 %v171, %v690
  %v692 = vpop.f32.mrf.mxu0
  %v693 = vadd.f32 %v175, %v692
  %v694 = vpop.f32.mrf.mxu0
  %v695 = vadd.f32 %v171, %v694
  %v696 = vpop.f32.mrf.mxu0
  %v697 = vadd.f32 %v175, %v696
  %698 = vdwg.mxu0
  %v699 = vmax.f32 %v390, 0.0
  %v700 = vmax.f32 %v392, 0.0
  %v701 = vmax.f32 %v433, 0.0
  %v702 = vmax.f32 %v435, 0.0
  %v703 = vmax.f32 %v476, 0.0
  %v704 = vmax.f32 %v478, 0.0
  %v705 = vmax.f32 %v519, 0.0
  %v706 = vmax.f32 %v521, 0.0
  %v707 = vmax.f32 %v562, 0.0
  %v708 = vmax.f32 %v564, 0.0
  %v709 = vmax.f32 %v605, 0.0
  %v710 = vmax.f32 %v607, 0.0
  %v711 = vmax.f32 %v648, 0.0
  %v712 = vmax.f32 %v650, 0.0
  %v713 = vmax.f32 %v691, 0.0
  %v714 = vmax.f32 %v693, 0.0
  %v715 = vmax.f32 %v394, 0.0
  %v716 = vmax.f32 %v396, 0.0
  %v717 = vmax.f32 %v437, 0.0
  %v718 = vmax.f32 %v439, 0.0
  %v719 = vmax.f32 %v480, 0.0
  %v720 = vmax.f32 %v482, 0.0
  %v721 = vmax.f32 %v523, 0.0
  %v722 = vmax.f32 %v525, 0.0
  %v723 = vmax.f32 %v566, 0.0
  %v724 = vmax.f32 %v568, 0.0
  %v725 = vmax.f32 %v609, 0.0
  %v726 = vmax.f32 %v611, 0.0
  %v727 = vmax.f32 %v652, 0.0
  %v728 = vmax.f32 %v654, 0.0
  %v729 = vmax.f32 %v695, 0.0
  %v730 = vmax.f32 %v697, 0.0
  %v731 = vpack.c.bf16 %v715, %v699
  %v732 = vpack.c.bf16 %v716, %v700
  %v733 = vpack.c.bf16 %v717, %v701
  %v734 = vpack.c.bf16 %v718, %v702
  %v735 = vpack.c.bf16 %v719, %v703
  %v736 = vpack.c.bf16 %v720, %v704
  %v737 = vpack.c.bf16 %v721, %v705
  %v738 = vpack.c.bf16 %v722, %v706
  %v739 = vpack.c.bf16 %v723, %v707
  %v740 = vpack.c.bf16 %v724, %v708
  %v741 = vpack.c.bf16 %v725, %v709
  %v742 = vpack.c.bf16 %v726, %v710
  %v743 = vpack.c.bf16 %v727, %v711
  %v744 = vpack.c.bf16 %v728, %v712
  %v745 = vpack.c.bf16 %v729, %v713
  %v746 = vpack.c.bf16 %v730, %v714
  %v747 = vld [vmem:[%s5] sm:$0xf]
  %v748 = vld [vmem:[%s5 + $0x4] sm:$0xf]
  %v749 = vld [vmem:[%s5 + $0x8] sm:$0xf]
  %v750 = vld [vmem:[%s5 + $0xc] sm:$0xf]
  %v751 = vld [vmem:[%s5 + $0x10] sm:$0xf]
  %v752 = vld [vmem:[%s5 + $0x14] sm:$0xf]
  %v753 = vld [vmem:[%s5 + $0x18] sm:$0xf]
  %v754 = vld [vmem:[%s5 + $0x1c] sm:$0xf]
  %v755 = vld [vmem:[%s5 + $0x20] sm:$0xf]
  %v756 = vld [vmem:[%s5 + $0x24] sm:$0xf]
  %v757 = vld [vmem:[%s5 + $0x28] sm:$0xf]
  %v758 = vld [vmem:[%s5 + $0x2c] sm:$0xf]
  %v759 = vld [vmem:[%s5 + $0x30] sm:$0xf]
  %v760 = vld [vmem:[%s5 + $0x34] sm:$0xf]
  %v761 = vld [vmem:[%s5 + $0x38] sm:$0xf]
  %v762 = vld [vmem:[%s5 + $0x3c] sm:$0xf]
  %v763 = vld [vmem:[%s5 + $0x40] sm:$0xf]
  %v764 = vld [vmem:[%s5 + $0x44] sm:$0xf]
  %v765 = vld [vmem:[%s5 + $0x48] sm:$0xf]
  %v766 = vld [vmem:[%s5 + $0x4c] sm:$0xf]
  %v767 = vld [vmem:[%s5 + $0x50] sm:$0xf]
  %v768 = vld [vmem:[%s5 + $0x54] sm:$0xf]
  %v769 = vld [vmem:[%s5 + $0x58] sm:$0xf]
  %v770 = vld [vmem:[%s5 + $0x5c] sm:$0xf]
  %v771 = vld [vmem:[%s5 + $0x60] sm:$0xf]
  %v772 = vld [vmem:[%s5 + $0x64] sm:$0xf]
  %v773 = vld [vmem:[%s5 + $0x68] sm:$0xf]
  %v774 = vld [vmem:[%s5 + $0x6c] sm:$0xf]
  %v775 = vld [vmem:[%s5 + $0x70] sm:$0xf]
  %v776 = vld [vmem:[%s5 + $0x74] sm:$0xf]
  %v777 = vld [vmem:[%s5 + $0x78] sm:$0xf]
  %v778 = vld [vmem:[%s5 + $0x7c] sm:$0xf]
  %v779 = vld [vmem:[%s5 + $0x80] sm:$0xf]
  %v780 = vld [vmem:[%s5 + $0x84] sm:$0xf]
  %v781 = vld [vmem:[%s5 + $0x88] sm:$0xf]
  %v782 = vld [vmem:[%s5 + $0x8c] sm:$0xf]
  %v783 = vld [vmem:[%s5 + $0x90] sm:$0xf]
  %v784 = vld [vmem:[%s5 + $0x94] sm:$0xf]
  %v785 = vld [vmem:[%s5 + $0x98] sm:$0xf]
  %v786 = vld [vmem:[%s5 + $0x9c] sm:$0xf]
  %v787 = vld [vmem:[%s5 + $0xa0] sm:$0xf]
  %v788 = vld [vmem:[%s5 + $0xa4] sm:$0xf]
  %v789 = vld [vmem:[%s5 + $0xa8] sm:$0xf]
  %v790 = vld [vmem:[%s5 + $0xac] sm:$0xf]
  %v791 = vld [vmem:[%s5 + $0xb0] sm:$0xf]
  %v792 = vld [vmem:[%s5 + $0xb4] sm:$0xf]
  %v793 = vld [vmem:[%s5 + $0xb8] sm:$0xf]
  %v794 = vld [vmem:[%s5 + $0xbc] sm:$0xf]
  %v795 = vld [vmem:[%s5 + $0xc0] sm:$0xf]
  %v796 = vld [vmem:[%s5 + $0xc4] sm:$0xf]
  %v797 = vld [vmem:[%s5 + $0xc8] sm:$0xf]
  %v798 = vld [vmem:[%s5 + $0xcc] sm:$0xf]
  %v799 = vld [vmem:[%s5 + $0xd0] sm:$0xf]
  %v800 = vld [vmem:[%s5 + $0xd4] sm:$0xf]
  %v801 = vld [vmem:[%s5 + $0xd8] sm:$0xf]
  %v802 = vld [vmem:[%s5 + $0xdc] sm:$0xf]
  %v803 = vld [vmem:[%s5 + $0xe0] sm:$0xf]
  %v804 = vld [vmem:[%s5 + $0xe4] sm:$0xf]
  %v805 = vld [vmem:[%s5 + $0xe8] sm:$0xf]
  %v806 = vld [vmem:[%s5 + $0xec] sm:$0xf]
  %v807 = vld [vmem:[%s5 + $0xf0] sm:$0xf]
  %v808 = vld [vmem:[%s5 + $0xf4] sm:$0xf]
  %v809 = vld [vmem:[%s5 + $0xf8] sm:$0xf]
  %v810 = vld [vmem:[%s5 + $0xfc] sm:$0xf]
  %v811 = vld [vmem:[%s5 + $0x100] sm:$0xf]
  %v812 = vld [vmem:[%s5 + $0x104] sm:$0xf]
  %v813 = vld [vmem:[%s5 + $0x108] sm:$0xf]
  %v814 = vld [vmem:[%s5 + $0x10c] sm:$0xf]
  %v815 = vld [vmem:[%s5 + $0x110] sm:$0xf]
  %v816 = vld [vmem:[%s5 + $0x114] sm:$0xf]
  %v817 = vld [vmem:[%s5 + $0x118] sm:$0xf]
  %v818 = vld [vmem:[%s5 + $0x11c] sm:$0xf]
  %v819 = vld [vmem:[%s5 + $0x120] sm:$0xf]
  %v820 = vld [vmem:[%s5 + $0x124] sm:$0xf]
  %v821 = vld [vmem:[%s5 + $0x128] sm:$0xf]
  %v822 = vld [vmem:[%s5 + $0x12c] sm:$0xf]
  %v823 = vld [vmem:[%s5 + $0x130] sm:$0xf]
  %v824 = vld [vmem:[%s5 + $0x134] sm:$0xf]
  %v825 = vld [vmem:[%s5 + $0x138] sm:$0xf]
  %v826 = vld [vmem:[%s5 + $0x13c] sm:$0xf]
  %v827 = vld [vmem:[%s5 + $0x140] sm:$0xf]
  %v828 = vld [vmem:[%s5 + $0x144] sm:$0xf]
  %v829 = vld [vmem:[%s5 + $0x148] sm:$0xf]
  %v830 = vld [vmem:[%s5 + $0x14c] sm:$0xf]
  %v831 = vld [vmem:[%s5 + $0x150] sm:$0xf]
  %v832 = vld [vmem:[%s5 + $0x154] sm:$0xf]
  %v833 = vld [vmem:[%s5 + $0x158] sm:$0xf]
  %v834 = vld [vmem:[%s5 + $0x15c] sm:$0xf]
  %v835 = vld [vmem:[%s5 + $0x160] sm:$0xf]
  %v836 = vld [vmem:[%s5 + $0x164] sm:$0xf]
  %v837 = vld [vmem:[%s5 + $0x168] sm:$0xf]
  %v838 = vld [vmem:[%s5 + $0x16c] sm:$0xf]
  %v839 = vld [vmem:[%s5 + $0x170] sm:$0xf]
  %v840 = vld [vmem:[%s5 + $0x174] sm:$0xf]
  %v841 = vld [vmem:[%s5 + $0x178] sm:$0xf]
  %v842 = vld [vmem:[%s5 + $0x17c] sm:$0xf]
  %v843 = vld [vmem:[%s5 + $0x180] sm:$0xf]
  %v844 = vld [vmem:[%s5 + $0x184] sm:$0xf]
  %v845 = vld [vmem:[%s5 + $0x188] sm:$0xf]
  %v846 = vld [vmem:[%s5 + $0x18c] sm:$0xf]
  %v847 = vld [vmem:[%s5 + $0x190] sm:$0xf]
  %v848 = vld [vmem:[%s5 + $0x194] sm:$0xf]
  %v849 = vld [vmem:[%s5 + $0x198] sm:$0xf]
  %v850 = vld [vmem:[%s5 + $0x19c] sm:$0xf]
  %v851 = vld [vmem:[%s5 + $0x1a0] sm:$0xf]
  %v852 = vld [vmem:[%s5 + $0x1a4] sm:$0xf]
  %v853 = vld [vmem:[%s5 + $0x1a8] sm:$0xf]
  %v854 = vld [vmem:[%s5 + $0x1ac] sm:$0xf]
  %v855 = vld [vmem:[%s5 + $0x1b0] sm:$0xf]
  %v856 = vld [vmem:[%s5 + $0x1b4] sm:$0xf]
  %v857 = vld [vmem:[%s5 + $0x1b8] sm:$0xf]
  %v858 = vld [vmem:[%s5 + $0x1bc] sm:$0xf]
  %v859 = vld [vmem:[%s5 + $0x1c0] sm:$0xf]
  %v860 = vld [vmem:[%s5 + $0x1c4] sm:$0xf]
  %v861 = vld [vmem:[%s5 + $0x1c8] sm:$0xf]
  %v862 = vld [vmem:[%s5 + $0x1cc] sm:$0xf]
  %v863 = vld [vmem:[%s5 + $0x1d0] sm:$0xf]
  %v864 = vld [vmem:[%s5 + $0x1d4] sm:$0xf]
  %v865 = vld [vmem:[%s5 + $0x1d8] sm:$0xf]
  %v866 = vld [vmem:[%s5 + $0x1dc] sm:$0xf]
  %v867 = vld [vmem:[%s5 + $0x1e0] sm:$0xf]
  %v868 = vld [vmem:[%s5 + $0x1e4] sm:$0xf]
  %v869 = vld [vmem:[%s5 + $0x1e8] sm:$0xf]
  %v870 = vld [vmem:[%s5 + $0x1ec] sm:$0xf]
  %v871 = vld [vmem:[%s5 + $0x1f0] sm:$0xf]
  %v872 = vld [vmem:[%s5 + $0x1f4] sm:$0xf]
  %v873 = vld [vmem:[%s5 + $0x1f8] sm:$0xf]
  %v874 = vld [vmem:[%s5 + $0x1fc] sm:$0xf]
  %v875 = vld [vmem:[%s5 + $0x200] sm:$0xf]
  %v876 = vld [vmem:[%s5 + $0x204] sm:$0xf]
  %v877 = vld [vmem:[%s5 + $0x208] sm:$0xf]
  %v878 = vld [vmem:[%s5 + $0x20c] sm:$0xf]
  %v879 = vld [vmem:[%s5 + $0x210] sm:$0xf]
  %v880 = vld [vmem:[%s5 + $0x214] sm:$0xf]
  %v881 = vld [vmem:[%s5 + $0x218] sm:$0xf]
  %v882 = vld [vmem:[%s5 + $0x21c] sm:$0xf]
  %v883 = vld [vmem:[%s5 + $0x220] sm:$0xf]
  %v884 = vld [vmem:[%s5 + $0x224] sm:$0xf]
  %v885 = vld [vmem:[%s5 + $0x228] sm:$0xf]
  %v886 = vld [vmem:[%s5 + $0x22c] sm:$0xf]
  %v887 = vld [vmem:[%s5 + $0x230] sm:$0xf]
  %v888 = vld [vmem:[%s5 + $0x234] sm:$0xf]
  %v889 = vld [vmem:[%s5 + $0x238] sm:$0xf]
  %v890 = vld [vmem:[%s5 + $0x23c] sm:$0xf]
  %v891 = vld [vmem:[%s5 + $0x240] sm:$0xf]
  %v892 = vld [vmem:[%s5 + $0x244] sm:$0xf]
  %v893 = vld [vmem:[%s5 + $0x248] sm:$0xf]
  %v894 = vld [vmem:[%s5 + $0x24c] sm:$0xf]
  %v895 = vld [vmem:[%s5 + $0x250] sm:$0xf]
  %v896 = vld [vmem:[%s5 + $0x254] sm:$0xf]
  %v897 = vld [vmem:[%s5 + $0x258] sm:$0xf]
  %v898 = vld [vmem:[%s5 + $0x25c] sm:$0xf]
  %v899 = vld [vmem:[%s5 + $0x260] sm:$0xf]
  %v900 = vld [vmem:[%s5 + $0x264] sm:$0xf]
  %v901 = vld [vmem:[%s5 + $0x268] sm:$0xf]
  %v902 = vld [vmem:[%s5 + $0x26c] sm:$0xf]
  %v903 = vld [vmem:[%s5 + $0x270] sm:$0xf]
  %v904 = vld [vmem:[%s5 + $0x274] sm:$0xf]
  %v905 = vld [vmem:[%s5 + $0x278] sm:$0xf]
  %v906 = vld [vmem:[%s5 + $0x27c] sm:$0xf]
  %v907 = vld [vmem:[%s5 + $0x280] sm:$0xf]
  %v908 = vld [vmem:[%s5 + $0x284] sm:$0xf]
  %v909 = vld [vmem:[%s5 + $0x288] sm:$0xf]
  %v910 = vld [vmem:[%s5 + $0x28c] sm:$0xf]
  %v911 = vld [vmem:[%s5 + $0x290] sm:$0xf]
  %v912 = vld [vmem:[%s5 + $0x294] sm:$0xf]
  %v913 = vld [vmem:[%s5 + $0x298] sm:$0xf]
  %v914 = vld [vmem:[%s5 + $0x29c] sm:$0xf]
  %v915 = vld [vmem:[%s5 + $0x2a0] sm:$0xf]
  %v916 = vld [vmem:[%s5 + $0x2a4] sm:$0xf]
  %v917 = vld [vmem:[%s5 + $0x2a8] sm:$0xf]
  %v918 = vld [vmem:[%s5 + $0x2ac] sm:$0xf]
  %v919 = vld [vmem:[%s5 + $0x2b0] sm:$0xf]
  %v920 = vld [vmem:[%s5 + $0x2b4] sm:$0xf]
  %v921 = vld [vmem:[%s5 + $0x2b8] sm:$0xf]
  %v922 = vld [vmem:[%s5 + $0x2bc] sm:$0xf]
  %v923 = vld [vmem:[%s5 + $0x2c0] sm:$0xf]
  %v924 = vld [vmem:[%s5 + $0x2c4] sm:$0xf]
  %v925 = vld [vmem:[%s5 + $0x2c8] sm:$0xf]
  %v926 = vld [vmem:[%s5 + $0x2cc] sm:$0xf]
  %v927 = vld [vmem:[%s5 + $0x2d0] sm:$0xf]
  %v928 = vld [vmem:[%s5 + $0x2d4] sm:$0xf]
  %v929 = vld [vmem:[%s5 + $0x2d8] sm:$0xf]
  %v930 = vld [vmem:[%s5 + $0x2dc] sm:$0xf]
  %v931 = vld [vmem:[%s5 + $0x2e0] sm:$0xf]
  %v932 = vld [vmem:[%s5 + $0x2e4] sm:$0xf]
  %v933 = vld [vmem:[%s5 + $0x2e8] sm:$0xf]
  %v934 = vld [vmem:[%s5 + $0x2ec] sm:$0xf]
  %v935 = vld [vmem:[%s5 + $0x2f0] sm:$0xf]
  %v936 = vld [vmem:[%s5 + $0x2f4] sm:$0xf]
  %v937 = vld [vmem:[%s5 + $0x2f8] sm:$0xf]
  %v938 = vld [vmem:[%s5 + $0x2fc] sm:$0xf]
  %v939 = vld [vmem:[%s5 + $0x300] sm:$0xf]
  %v940 = vld [vmem:[%s5 + $0x304] sm:$0xf]
  %v941 = vld [vmem:[%s5 + $0x308] sm:$0xf]
  %v942 = vld [vmem:[%s5 + $0x30c] sm:$0xf]
  %v943 = vld [vmem:[%s5 + $0x310] sm:$0xf]
  %v944 = vld [vmem:[%s5 + $0x314] sm:$0xf]
  %v945 = vld [vmem:[%s5 + $0x318] sm:$0xf]
  %v946 = vld [vmem:[%s5 + $0x31c] sm:$0xf]
  %v947 = vld [vmem:[%s5 + $0x320] sm:$0xf]
  %v948 = vld [vmem:[%s5 + $0x324] sm:$0xf]
  %v949 = vld [vmem:[%s5 + $0x328] sm:$0xf]
  %v950 = vld [vmem:[%s5 + $0x32c] sm:$0xf]
  %v951 = vld [vmem:[%s5 + $0x330] sm:$0xf]
  %v952 = vld [vmem:[%s5 + $0x334] sm:$0xf]
  %v953 = vld [vmem:[%s5 + $0x338] sm:$0xf]
  %v954 = vld [vmem:[%s5 + $0x33c] sm:$0xf]
  %v955 = vld [vmem:[%s5 + $0x340] sm:$0xf]
  %v956 = vld [vmem:[%s5 + $0x344] sm:$0xf]
  %v957 = vld [vmem:[%s5 + $0x348] sm:$0xf]
  %v958 = vld [vmem:[%s5 + $0x34c] sm:$0xf]
  %v959 = vld [vmem:[%s5 + $0x350] sm:$0xf]
  %v960 = vld [vmem:[%s5 + $0x354] sm:$0xf]
  %v961 = vld [vmem:[%s5 + $0x358] sm:$0xf]
  %v962 = vld [vmem:[%s5 + $0x35c] sm:$0xf]
  %v963 = vld [vmem:[%s5 + $0x360] sm:$0xf]
  %v964 = vld [vmem:[%s5 + $0x364] sm:$0xf]
  %v965 = vld [vmem:[%s5 + $0x368] sm:$0xf]
  %v966 = vld [vmem:[%s5 + $0x36c] sm:$0xf]
  %v967 = vld [vmem:[%s5 + $0x370] sm:$0xf]
  %v968 = vld [vmem:[%s5 + $0x374] sm:$0xf]
  %v969 = vld [vmem:[%s5 + $0x378] sm:$0xf]
  %v970 = vld [vmem:[%s5 + $0x37c] sm:$0xf]
  %v971 = vld [vmem:[%s5 + $0x380] sm:$0xf]
  %v972 = vld [vmem:[%s5 + $0x384] sm:$0xf]
  %v973 = vld [vmem:[%s5 + $0x388] sm:$0xf]
  %v974 = vld [vmem:[%s5 + $0x38c] sm:$0xf]
  %v975 = vld [vmem:[%s5 + $0x390] sm:$0xf]
  %v976 = vld [vmem:[%s5 + $0x394] sm:$0xf]
  %v977 = vld [vmem:[%s5 + $0x398] sm:$0xf]
  %v978 = vld [vmem:[%s5 + $0x39c] sm:$0xf]
  %v979 = vld [vmem:[%s5 + $0x3a0] sm:$0xf]
  %v980 = vld [vmem:[%s5 + $0x3a4] sm:$0xf]
  %v981 = vld [vmem:[%s5 + $0x3a8] sm:$0xf]
  %v982 = vld [vmem:[%s5 + $0x3ac] sm:$0xf]
  %v983 = vld [vmem:[%s5 + $0x3b0] sm:$0xf]
  %v984 = vld [vmem:[%s5 + $0x3b4] sm:$0xf]
  %v985 = vld [vmem:[%s5 + $0x3b8] sm:$0xf]
  %v986 = vld [vmem:[%s5 + $0x3bc] sm:$0xf]
  %v987 = vld [vmem:[%s5 + $0x3c0] sm:$0xf]
  %v988 = vld [vmem:[%s5 + $0x3c4] sm:$0xf]
  %v989 = vld [vmem:[%s5 + $0x3c8] sm:$0xf]
  %v990 = vld [vmem:[%s5 + $0x3cc] sm:$0xf]
  %v991 = vld [vmem:[%s5 + $0x3d0] sm:$0xf]
  %v992 = vld [vmem:[%s5 + $0x3d4] sm:$0xf]
  %v993 = vld [vmem:[%s5 + $0x3d8] sm:$0xf]
  %v994 = vld [vmem:[%s5 + $0x3dc] sm:$0xf]
  %v995 = vld [vmem:[%s5 + $0x3e0] sm:$0xf]
  %v996 = vld [vmem:[%s5 + $0x3e4] sm:$0xf]
  %v997 = vld [vmem:[%s5 + $0x3e8] sm:$0xf]
  %v998 = vld [vmem:[%s5 + $0x3ec] sm:$0xf]
  %v999 = vld [vmem:[%s5 + $0x3f0] sm:$0xf]
  %v1000 = vld [vmem:[%s5 + $0x3f4] sm:$0xf]
  %v1001 = vld [vmem:[%s5 + $0x3f8] sm:$0xf]
  %v1002 = vld [vmem:[%s5 + $0x3fc] sm:$0xf]
  %v1003 = vld [vmem:[%s6] sm:$0x1]
  %v1005 = vlaneseq
  %v1006 = vshrl.u32 %v1005, 7
  %v1007 = vsub.s32 0, %v1006
  %v1008 = vrot.slane %v1003, %v1007
  %v1266 = vunpack.c.l.b16 %v747
  %v1267 = vunpack.c.l.b16 %v748
  %v1268 = vunpack.c.l.b16 %v749
  %v1269 = vunpack.c.l.b16 %v750
  %v1270 = vunpack.c.l.b16 %v751
  %v1271 = vunpack.c.l.b16 %v752
  %v1272 = vunpack.c.l.b16 %v753
  %v1273 = vunpack.c.l.b16 %v754
  %v1274 = vunpack.c.l.b16 %v755
  %v1275 = vunpack.c.l.b16 %v756
  %v1276 = vunpack.c.l.b16 %v757
  %v1277 = vunpack.c.l.b16 %v758
  %v1278 = vunpack.c.l.b16 %v759
  %v1279 = vunpack.c.l.b16 %v760
  %v1280 = vunpack.c.l.b16 %v761
  %v1281 = vunpack.c.l.b16 %v762
  %v1282 = vunpack.c.l.b16 %v763
  %v1283 = vunpack.c.l.b16 %v764
  %v1284 = vunpack.c.l.b16 %v765
  %v1285 = vunpack.c.l.b16 %v766
  %v1286 = vunpack.c.l.b16 %v767
  %v1287 = vunpack.c.l.b16 %v768
  %v1288 = vunpack.c.l.b16 %v769
  %v1289 = vunpack.c.l.b16 %v770
  %v1290 = vunpack.c.l.b16 %v771
  %v1291 = vunpack.c.l.b16 %v772
  %v1292 = vunpack.c.l.b16 %v773
  %v1293 = vunpack.c.l.b16 %v774
  %v1294 = vunpack.c.l.b16 %v775
  %v1295 = vunpack.c.l.b16 %v776
  %v1296 = vunpack.c.l.b16 %v777
  %v1297 = vunpack.c.l.b16 %v778
  %v1298 = vunpack.c.l.b16 %v779
  %v1299 = vunpack.c.l.b16 %v780
  %v1300 = vunpack.c.l.b16 %v781
  %v1301 = vunpack.c.l.b16 %v782
  %v1302 = vunpack.c.l.b16 %v783
  %v1303 = vunpack.c.l.b16 %v784
  %v1304 = vunpack.c.l.b16 %v785
  %v1305 = vunpack.c.l.b16 %v786
  %v1306 = vunpack.c.l.b16 %v787
  %v1307 = vunpack.c.l.b16 %v788
  %v1308 = vunpack.c.l.b16 %v789
  %v1309 = vunpack.c.l.b16 %v790
  %v1310 = vunpack.c.l.b16 %v791
  %v1311 = vunpack.c.l.b16 %v792
  %v1312 = vunpack.c.l.b16 %v793
  %v1313 = vunpack.c.l.b16 %v794
  %v1314 = vunpack.c.l.b16 %v795
  %v1315 = vunpack.c.l.b16 %v796
  %v1316 = vunpack.c.l.b16 %v797
  %v1317 = vunpack.c.l.b16 %v798
  %v1318 = vunpack.c.l.b16 %v799
  %v1319 = vunpack.c.l.b16 %v800
  %v1320 = vunpack.c.l.b16 %v801
  %v1321 = vunpack.c.l.b16 %v802
  %v1322 = vunpack.c.l.b16 %v803
  %v1323 = vunpack.c.l.b16 %v804
  %v1324 = vunpack.c.l.b16 %v805
  %v1325 = vunpack.c.l.b16 %v806
  %v1326 = vunpack.c.l.b16 %v807
  %v1327 = vunpack.c.l.b16 %v808
  %v1328 = vunpack.c.l.b16 %v809
  %v1329 = vunpack.c.l.b16 %v810
  %v1330 = vunpack.c.l.b16 %v811
  %v1331 = vunpack.c.l.b16 %v812
  %v1332 = vunpack.c.l.b16 %v813
  %v1333 = vunpack.c.l.b16 %v814
  %v1334 = vunpack.c.l.b16 %v815
  %v1335 = vunpack.c.l.b16 %v816
  %v1336 = vunpack.c.l.b16 %v817
  %v1337 = vunpack.c.l.b16 %v818
  %v1338 = vunpack.c.l.b16 %v819
  %v1339 = vunpack.c.l.b16 %v820
  %v1340 = vunpack.c.l.b16 %v821
  %v1341 = vunpack.c.l.b16 %v822
  %v1342 = vunpack.c.l.b16 %v823
  %v1343 = vunpack.c.l.b16 %v824
  %v1344 = vunpack.c.l.b16 %v825
  %v1345 = vunpack.c.l.b16 %v826
  %v1346 = vunpack.c.l.b16 %v827
  %v1347 = vunpack.c.l.b16 %v828
  %v1348 = vunpack.c.l.b16 %v829
  %v1349 = vunpack.c.l.b16 %v830
  %v1350 = vunpack.c.l.b16 %v831
  %v1351 = vunpack.c.l.b16 %v832
  %v1352 = vunpack.c.l.b16 %v833
  %v1353 = vunpack.c.l.b16 %v834
  %v1354 = vunpack.c.l.b16 %v835
  %v1355 = vunpack.c.l.b16 %v836
  %v1356 = vunpack.c.l.b16 %v837
  %v1357 = vunpack.c.l.b16 %v838
  %v1358 = vunpack.c.l.b16 %v839
  %v1359 = vunpack.c.l.b16 %v840
  %v1360 = vunpack.c.l.b16 %v841
  %v1361 = vunpack.c.l.b16 %v842
  %v1362 = vunpack.c.l.b16 %v843
  %v1363 = vunpack.c.l.b16 %v844
  %v1364 = vunpack.c.l.b16 %v845
  %v1365 = vunpack.c.l.b16 %v846
  %v1366 = vunpack.c.l.b16 %v847
  %v1367 = vunpack.c.l.b16 %v848
  %v1368 = vunpack.c.l.b16 %v849
  %v1369 = vunpack.c.l.b16 %v850
  %v1370 = vunpack.c.l.b16 %v851
  %v1371 = vunpack.c.l.b16 %v852
  %v1372 = vunpack.c.l.b16 %v853
  %v1373 = vunpack.c.l.b16 %v854
  %v1374 = vunpack.c.l.b16 %v855
  %v1375 = vunpack.c.l.b16 %v856
  %v1376 = vunpack.c.l.b16 %v857
  %v1377 = vunpack.c.l.b16 %v858
  %v1378 = vunpack.c.l.b16 %v859
  %v1379 = vunpack.c.l.b16 %v860
  %v1380 = vunpack.c.l.b16 %v861
  %v1381 = vunpack.c.l.b16 %v862
  %v1382 = vunpack.c.l.b16 %v863
  %v1383 = vunpack.c.l.b16 %v864
  %v1384 = vunpack.c.l.b16 %v865
  %v1385 = vunpack.c.l.b16 %v866
  %v1386 = vunpack.c.l.b16 %v867
  %v1387 = vunpack.c.l.b16 %v868
  %v1388 = vunpack.c.l.b16 %v869
  %v1389 = vunpack.c.l.b16 %v870
  %v1390 = vunpack.c.l.b16 %v871
  %v1391 = vunpack.c.l.b16 %v872
  %v1392 = vunpack.c.l.b16 %v873
  %v1393 = vunpack.c.l.b16 %v874
  %v1394 = vunpack.c.l.b16 %v875
  %v1395 = vunpack.c.l.b16 %v876
  %v1396 = vunpack.c.l.b16 %v877
  %v1397 = vunpack.c.l.b16 %v878
  %v1398 = vunpack.c.l.b16 %v879
  %v1399 = vunpack.c.l.b16 %v880
  %v1400 = vunpack.c.l.b16 %v881
  %v1401 = vunpack.c.l.b16 %v882
  %v1402 = vunpack.c.l.b16 %v883
  %v1403 = vunpack.c.l.b16 %v884
  %v1404 = vunpack.c.l.b16 %v885
  %v1405 = vunpack.c.l.b16 %v886
  %v1406 = vunpack.c.l.b16 %v887
  %v1407 = vunpack.c.l.b16 %v888
  %v1408 = vunpack.c.l.b16 %v889
  %v1409 = vunpack.c.l.b16 %v890
  %v1410 = vunpack.c.l.b16 %v891
  %v1411 = vunpack.c.l.b16 %v892
  %v1412 = vunpack.c.l.b16 %v893
  %v1413 = vunpack.c.l.b16 %v894
  %v1414 = vunpack.c.l.b16 %v895
  %v1415 = vunpack.c.l.b16 %v896
  %v1416 = vunpack.c.l.b16 %v897
  %v1417 = vunpack.c.l.b16 %v898
  %v1418 = vunpack.c.l.b16 %v899
  %v1419 = vunpack.c.l.b16 %v900
  %v1420 = vunpack.c.l.b16 %v901
  %v1421 = vunpack.c.l.b16 %v902
  %v1422 = vunpack.c.l.b16 %v903
  %v1423 = vunpack.c.l.b16 %v904
  %v1424 = vunpack.c.l.b16 %v905
  %v1425 = vunpack.c.l.b16 %v906
  %v1426 = vunpack.c.l.b16 %v907
  %v1427 = vunpack.c.l.b16 %v908
  %v1428 = vunpack.c.l.b16 %v909
  %v1429 = vunpack.c.l.b16 %v910
  %v1430 = vunpack.c.l.b16 %v911
  %v1431 = vunpack.c.l.b16 %v912
  %v1432 = vunpack.c.l.b16 %v913
  %v1433 = vunpack.c.l.b16 %v914
  %v1434 = vunpack.c.l.b16 %v915
  %v1435 = vunpack.c.l.b16 %v916
  %v1436 = vunpack.c.l.b16 %v917
  %v1437 = vunpack.c.l.b16 %v918
  %v1438 = vunpack.c.l.b16 %v919
  %v1439 = vunpack.c.l.b16 %v920
  %v1440 = vunpack.c.l.b16 %v921
  %v1441 = vunpack.c.l.b16 %v922
  %v1442 = vunpack.c.l.b16 %v923
  %v1443 = vunpack.c.l.b16 %v924
  %v1444 = vunpack.c.l.b16 %v925
  %v1445 = vunpack.c.l.b16 %v926
  %v1446 = vunpack.c.l.b16 %v927
  %v1447 = vunpack.c.l.b16 %v928
  %v1448 = vunpack.c.l.b16 %v929
  %v1449 = vunpack.c.l.b16 %v930
  %v1450 = vunpack.c.l.b16 %v931
  %v1451 = vunpack.c.l.b16 %v932
  %v1452 = vunpack.c.l.b16 %v933
  %v1453 = vunpack.c.l.b16 %v934
  %v1454 = vunpack.c.l.b16 %v935
  %v1455 = vunpack.c.l.b16 %v936
  %v1456 = vunpack.c.l.b16 %v937
  %v1457 = vunpack.c.l.b16 %v938
  %v1458 = vunpack.c.l.b16 %v939
  %v1459 = vunpack.c.l.b16 %v940
  %v1460 = vunpack.c.l.b16 %v941
  %v1461 = vunpack.c.l.b16 %v942
  %v1462 = vunpack.c.l.b16 %v943
  %v1463 = vunpack.c.l.b16 %v944
  %v1464 = vunpack.c.l.b16 %v945
  %v1465 = vunpack.c.l.b16 %v946
  %v1466 = vunpack.c.l.b16 %v947
  %v1467 = vunpack.c.l.b16 %v948
  %v1468 = vunpack.c.l.b16 %v949
  %v1469 = vunpack.c.l.b16 %v950
  %v1470 = vunpack.c.l.b16 %v951
  %v1471 = vunpack.c.l.b16 %v952
  %v1472 = vunpack.c.l.b16 %v953
  %v1473 = vunpack.c.l.b16 %v954
  %v1474 = vunpack.c.l.b16 %v955
  %v1475 = vunpack.c.l.b16 %v956
  %v1476 = vunpack.c.l.b16 %v957
  %v1477 = vunpack.c.l.b16 %v958
  %v1478 = vunpack.c.l.b16 %v959
  %v1479 = vunpack.c.l.b16 %v960
  %v1480 = vunpack.c.l.b16 %v961
  %v1481 = vunpack.c.l.b16 %v962
  %v1482 = vunpack.c.l.b16 %v963
  %v1483 = vunpack.c.l.b16 %v964
  %v1484 = vunpack.c.l.b16 %v965
  %v1485 = vunpack.c.l.b16 %v966
  %v1486 = vunpack.c.l.b16 %v967
  %v1487 = vunpack.c.l.b16 %v968
  %v1488 = vunpack.c.l.b16 %v969
  %v1489 = vunpack.c.l.b16 %v970
  %v1490 = vunpack.c.l.b16 %v971
  %v1491 = vunpack.c.l.b16 %v972
  %v1492 = vunpack.c.l.b16 %v973
  %v1493 = vunpack.c.l.b16 %v974
  %v1494 = vunpack.c.l.b16 %v975
  %v1495 = vunpack.c.l.b16 %v976
  %v1496 = vunpack.c.l.b16 %v977
  %v1497 = vunpack.c.l.b16 %v978
  %v1498 = vunpack.c.l.b16 %v979
  %v1499 = vunpack.c.l.b16 %v980
  %v1500 = vunpack.c.l.b16 %v981
  %v1501 = vunpack.c.l.b16 %v982
  %v1502 = vunpack.c.l.b16 %v983
  %v1503 = vunpack.c.l.b16 %v984
  %v1504 = vunpack.c.l.b16 %v985
  %v1505 = vunpack.c.l.b16 %v986
  %v1506 = vunpack.c.l.b16 %v987
  %v1507 = vunpack.c.l.b16 %v988
  %v1508 = vunpack.c.l.b16 %v989
  %v1509 = vunpack.c.l.b16 %v990
  %v1510 = vunpack.c.l.b16 %v991
  %v1511 = vunpack.c.l.b16 %v992
  %v1512 = vunpack.c.l.b16 %v993
  %v1513 = vunpack.c.l.b16 %v994
  %v1514 = vunpack.c.l.b16 %v995
  %v1515 = vunpack.c.l.b16 %v996
  %v1516 = vunpack.c.l.b16 %v997
  %v1517 = vunpack.c.l.b16 %v998
  %v1518 = vunpack.c.l.b16 %v999
  %v1519 = vunpack.c.l.b16 %v1000
  %v1520 = vunpack.c.l.b16 %v1001
  %v1521 = vunpack.c.l.b16 %v1002
  %v1522 = vpack.c.b16 %v1267, %v1266
  %v1523 = vpack.c.b16 %v1269, %v1268
  %v1524 = vpack.c.b16 %v1271, %v1270
  %v1525 = vpack.c.b16 %v1273, %v1272
  %v1526 = vpack.c.b16 %v1275, %v1274
  %v1527 = vpack.c.b16 %v1277, %v1276
  %v1528 = vpack.c.b16 %v1279, %v1278
  %v1529 = vpack.c.b16 %v1281, %v1280
  %v1530 = vpack.c.b16 %v1283, %v1282
  %v1531 = vpack.c.b16 %v1285, %v1284
  %v1532 = vpack.c.b16 %v1287, %v1286
  %v1533 = vpack.c.b16 %v1289, %v1288
  %v1534 = vpack.c.b16 %v1291, %v1290
  %v1535 = vpack.c.b16 %v1293, %v1292
  %v1536 = vpack.c.b16 %v1295, %v1294
  %v1537 = vpack.c.b16 %v1297, %v1296
  %v1538 = vpack.c.b16 %v1299, %v1298
  %v1539 = vpack.c.b16 %v1301, %v1300
  %v1540 = vpack.c.b16 %v1303, %v1302
  %v1541 = vpack.c.b16 %v1305, %v1304
  %v1542 = vpack.c.b16 %v1307, %v1306
  %v1543 = vpack.c.b16 %v1309, %v1308
  %v1544 = vpack.c.b16 %v1311, %v1310
  %v1545 = vpack.c.b16 %v1313, %v1312
  %v1546 = vpack.c.b16 %v1315, %v1314
  %v1547 = vpack.c.b16 %v1317, %v1316
  %v1548 = vpack.c.b16 %v1319, %v1318
  %v1549 = vpack.c.b16 %v1321, %v1320
  %v1550 = vpack.c.b16 %v1323, %v1322
  %v1551 = vpack.c.b16 %v1325, %v1324
  %v1552 = vpack.c.b16 %v1327, %v1326
  %v1553 = vpack.c.b16 %v1329, %v1328
  %v1554 = vpack.c.b16 %v1331, %v1330
  %v1555 = vpack.c.b16 %v1333, %v1332
  %v1556 = vpack.c.b16 %v1335, %v1334
  %v1557 = vpack.c.b16 %v1337, %v1336
  %v1558 = vpack.c.b16 %v1339, %v1338
  %v1559 = vpack.c.b16 %v1341, %v1340
  %v1560 = vpack.c.b16 %v1343, %v1342
  %v1561 = vpack.c.b16 %v1345, %v1344
  %v1562 = vpack.c.b16 %v1347, %v1346
  %v1563 = vpack.c.b16 %v1349, %v1348
  %v1564 = vpack.c.b16 %v1351, %v1350
  %v1565 = vpack.c.b16 %v1353, %v1352
  %v1566 = vpack.c.b16 %v1355, %v1354
  %v1567 = vpack.c.b16 %v1357, %v1356
  %v1568 = vpack.c.b16 %v1359, %v1358
  %v1569 = vpack.c.b16 %v1361, %v1360
  %v1570 = vpack.c.b16 %v1363, %v1362
  %v1571 = vpack.c.b16 %v1365, %v1364
  %v1572 = vpack.c.b16 %v1367, %v1366
  %v1573 = vpack.c.b16 %v1369, %v1368
  %v1574 = vpack.c.b16 %v1371, %v1370
  %v1575 = vpack.c.b16 %v1373, %v1372
  %v1576 = vpack.c.b16 %v1375, %v1374
  %v1577 = vpack.c.b16 %v1377, %v1376
  %v1578 = vpack.c.b16 %v1379, %v1378
  %v1579 = vpack.c.b16 %v1381, %v1380
  %v1580 = vpack.c.b16 %v1383, %v1382
  %v1581 = vpack.c.b16 %v1385, %v1384
  %v1582 = vpack.c.b16 %v1387, %v1386
  %v1583 = vpack.c.b16 %v1389, %v1388
  %v1584 = vpack.c.b16 %v1391, %v1390
  %v1585 = vpack.c.b16 %v1393, %v1392
  %v1586 = vpack.c.b16 %v1395, %v1394
  %v1587 = vpack.c.b16 %v1397, %v1396
  %v1588 = vpack.c.b16 %v1399, %v1398
  %v1589 = vpack.c.b16 %v1401, %v1400
  %v1590 = vpack.c.b16 %v1403, %v1402
  %v1591 = vpack.c.b16 %v1405, %v1404
  %v1592 = vpack.c.b16 %v1407, %v1406
  %v1593 = vpack.c.b16 %v1409, %v1408
  %v1594 = vpack.c.b16 %v1411, %v1410
  %v1595 = vpack.c.b16 %v1413, %v1412
  %v1596 = vpack.c.b16 %v1415, %v1414
  %v1597 = vpack.c.b16 %v1417, %v1416
  %v1598 = vpack.c.b16 %v1419, %v1418
  %v1599 = vpack.c.b16 %v1421, %v1420
  %v1600 = vpack.c.b16 %v1423, %v1422
  %v1601 = vpack.c.b16 %v1425, %v1424
  %v1602 = vpack.c.b16 %v1427, %v1426
  %v1603 = vpack.c.b16 %v1429, %v1428
  %v1604 = vpack.c.b16 %v1431, %v1430
  %v1605 = vpack.c.b16 %v1433, %v1432
  %v1606 = vpack.c.b16 %v1435, %v1434
  %v1607 = vpack.c.b16 %v1437, %v1436
  %v1608 = vpack.c.b16 %v1439, %v1438
  %v1609 = vpack.c.b16 %v1441, %v1440
  %v1610 = vpack.c.b16 %v1443, %v1442
  %v1611 = vpack.c.b16 %v1445, %v1444
  %v1612 = vpack.c.b16 %v1447, %v1446
  %v1613 = vpack.c.b16 %v1449, %v1448
  %v1614 = vpack.c.b16 %v1451, %v1450
  %v1615 = vpack.c.b16 %v1453, %v1452
  %v1616 = vpack.c.b16 %v1455, %v1454
  %v1617 = vpack.c.b16 %v1457, %v1456
  %v1618 = vpack.c.b16 %v1459, %v1458
  %v1619 = vpack.c.b16 %v1461, %v1460
  %v1620 = vpack.c.b16 %v1463, %v1462
  %v1621 = vpack.c.b16 %v1465, %v1464
  %v1622 = vpack.c.b16 %v1467, %v1466
  %v1623 = vpack.c.b16 %v1469, %v1468
  %v1624 = vpack.c.b16 %v1471, %v1470
  %v1625 = vpack.c.b16 %v1473, %v1472
  %v1626 = vpack.c.b16 %v1475, %v1474
  %v1627 = vpack.c.b16 %v1477, %v1476
  %v1628 = vpack.c.b16 %v1479, %v1478
  %v1629 = vpack.c.b16 %v1481, %v1480
  %v1630 = vpack.c.b16 %v1483, %v1482
  %v1631 = vpack.c.b16 %v1485, %v1484
  %v1632 = vpack.c.b16 %v1487, %v1486
  %v1633 = vpack.c.b16 %v1489, %v1488
  %v1634 = vpack.c.b16 %v1491, %v1490
  %v1635 = vpack.c.b16 %v1493, %v1492
  %v1636 = vpack.c.b16 %v1495, %v1494
  %v1637 = vpack.c.b16 %v1497, %v1496
  %v1638 = vpack.c.b16 %v1499, %v1498
  %v1639 = vpack.c.b16 %v1501, %v1500
  %v1640 = vpack.c.b16 %v1503, %v1502
  %v1641 = vpack.c.b16 %v1505, %v1504
  %v1642 = vpack.c.b16 %v1507, %v1506
  %v1643 = vpack.c.b16 %v1509, %v1508
  %v1644 = vpack.c.b16 %v1511, %v1510
  %v1645 = vpack.c.b16 %v1513, %v1512
  %v1646 = vpack.c.b16 %v1515, %v1514
  %v1647 = vpack.c.b16 %v1517, %v1516
  %v1648 = vpack.c.b16 %v1519, %v1518
  %v1649 = vpack.c.b16 %v1521, %v1520
  %1778 = vmatprep.subr.bf16.mxu0 0
  %1779 = vmatpush1.bf16.msra.mxu0 %v1529
  %1780 = vmatprep.subr.bf16.mxu0 0
  %1781 = vmatpush1.bf16.msra.mxu0 %v1528
  %1782 = vmatprep.subr.bf16.mxu0 0
  %1783 = vmatpush1.bf16.msra.mxu0 %v1527
  %1784 = vmatprep.subr.bf16.mxu0 0
  %1785 = vmatpush1.bf16.msra.mxu0 %v1526
  %1786 = vmatprep.subr.bf16.mxu0 0
  %1787 = vmatpush1.bf16.msra.mxu0 %v1525
  %1788 = vmatprep.subr.bf16.mxu0 0
  %1789 = vmatpush1.bf16.msra.mxu0 %v1524
  %1790 = vmatprep.subr.bf16.mxu0 0
  %1791 = vmatpush1.bf16.msra.mxu0 %v1523
  %1792 = vmatprep.subr.bf16.mxu0 0
  %1793 = vmatpush1.bf16.msra.mxu0 %v1522
  %1794 = vmatprep.subr.bf16.mxu0 0
  %1795 = vmatpush2.bf16.msra.mxu0 %v1537
  %1796 = vmatprep.subr.bf16.mxu0 0
  %1797 = vmatpush2.bf16.msra.mxu0 %v1536
  %1798 = vmatprep.subr.bf16.mxu0 0
  %1799 = vmatpush2.bf16.msra.mxu0 %v1535
  %1800 = vmatprep.subr.bf16.mxu0 0
  %1801 = vmatpush2.bf16.msra.mxu0 %v1534
  %1802 = vmatprep.subr.bf16.mxu0 0
  %1803 = vmatpush2.bf16.msra.mxu0 %v1533
  %1804 = vmatprep.subr.bf16.mxu0 0
  %1805 = vmatpush2.bf16.msra.mxu0 %v1532
  %1806 = vmatprep.subr.bf16.mxu0 0
  %1807 = vmatpush2.bf16.msra.mxu0 %v1531
  %1808 = vmatprep.subr.bf16.mxu0 0
  %1809 = vmatpush2.bf16.msra.mxu0 %v1530
  %1810 = vmatprep.mubr.bf16.mxu0 %v732
  %1811 = vmatmul.mubr.bf16.gmra.mxu0 %v731
  %v1812 = vpop.f32.mrf.mxu0
  %v1813 = vadd.f32 %v1008, %v1812
  %v1814 = vpop.f32.mrf.mxu0
  %v1815 = vpop.f32.mrf.mxu0
  %v1816 = vadd.f32 %v1008, %v1815
  %v1817 = vpop.f32.mrf.mxu0
  %1818 = vdwg.mxu0
  %1819 = vmatprep.subr.bf16.mxu0 0
  %1820 = vmatpush1.bf16.msra.mxu0 %v1545
  %1821 = vmatprep.subr.bf16.mxu0 0
  %1822 = vmatpush1.bf16.msra.mxu0 %v1544
  %1823 = vmatprep.subr.bf16.mxu0 0
  %1824 = vmatpush1.bf16.msra.mxu0 %v1543
  %1825 = vmatprep.subr.bf16.mxu0 0
  %1826 = vmatpush1.bf16.msra.mxu0 %v1542
  %1827 = vmatprep.subr.bf16.mxu0 0
  %1828 = vmatpush1.bf16.msra.mxu0 %v1541
  %1829 = vmatprep.subr.bf16.mxu0 0
  %1830 = vmatpush1.bf16.msra.mxu0 %v1540
  %1831 = vmatprep.subr.bf16.mxu0 0
  %1832 = vmatpush1.bf16.msra.mxu0 %v1539
  %1833 = vmatprep.subr.bf16.mxu0 0
  %1834 = vmatpush1.bf16.msra.mxu0 %v1538
  %1835 = vmatprep.subr.bf16.mxu0 0
  %1836 = vmatpush2.bf16.msra.mxu0 %v1553
  %1837 = vmatprep.subr.bf16.mxu0 0
  %1838 = vmatpush2.bf16.msra.mxu0 %v1552
  %1839 = vmatprep.subr.bf16.mxu0 0
  %1840 = vmatpush2.bf16.msra.mxu0 %v1551
  %1841 = vmatprep.subr.bf16.mxu0 0
  %1842 = vmatpush2.bf16.msra.mxu0 %v1550
  %1843 = vmatprep.subr.bf16.mxu0 0
  %1844 = vmatpush2.bf16.msra.mxu0 %v1549
  %1845 = vmatprep.subr.bf16.mxu0 0
  %1846 = vmatpush2.bf16.msra.mxu0 %v1548
  %1847 = vmatprep.subr.bf16.mxu0 0
  %1848 = vmatpush2.bf16.msra.mxu0 %v1547
  %1849 = vmatprep.subr.bf16.mxu0 0
  %1850 = vmatpush2.bf16.msra.mxu0 %v1546
  %1851 = vmatprep.mubr.bf16.mxu0 %v734
  %1852 = vmatmul.mubr.bf16.gmra.mxu0 %v733
  %v1853 = vpop.f32.mrf.mxu0
  %v1854 = vadd.f32 %v1813, %v1853
  %v1855 = vpop.f32.mrf.mxu0
  %v1856 = vpop.f32.mrf.mxu0
  %v1857 = vadd.f32 %v1816, %v1856
  %v1858 = vpop.f32.mrf.mxu0
  %1859 = vdwg.mxu0
  %1860 = vmatprep.subr.bf16.mxu0 0
  %1861 = vmatpush1.bf16.msra.mxu0 %v1561
  %1862 = vmatprep.subr.bf16.mxu0 0
  %1863 = vmatpush1.bf16.msra.mxu0 %v1560
  %1864 = vmatprep.subr.bf16.mxu0 0
  %1865 = vmatpush1.bf16.msra.mxu0 %v1559
  %1866 = vmatprep.subr.bf16.mxu0 0
  %1867 = vmatpush1.bf16.msra.mxu0 %v1558
  %1868 = vmatprep.subr.bf16.mxu0 0
  %1869 = vmatpush1.bf16.msra.mxu0 %v1557
  %1870 = vmatprep.subr.bf16.mxu0 0
  %1871 = vmatpush1.bf16.msra.mxu0 %v1556
  %1872 = vmatprep.subr.bf16.mxu0 0
  %1873 = vmatpush1.bf16.msra.mxu0 %v1555
  %1874 = vmatprep.subr.bf16.mxu0 0
  %1875 = vmatpush1.bf16.msra.mxu0 %v1554
  %1876 = vmatprep.subr.bf16.mxu0 0
  %1877 = vmatpush2.bf16.msra.mxu0 %v1569
  %1878 = vmatprep.subr.bf16.mxu0 0
  %1879 = vmatpush2.bf16.msra.mxu0 %v1568
  %1880 = vmatprep.subr.bf16.mxu0 0
  %1881 = vmatpush2.bf16.msra.mxu0 %v1567
  %1882 = vmatprep.subr.bf16.mxu0 0
  %1883 = vmatpush2.bf16.msra.mxu0 %v1566
  %1884 = vmatprep.subr.bf16.mxu0 0
  %1885 = vmatpush2.bf16.msra.mxu0 %v1565
  %1886 = vmatprep.subr.bf16.mxu0 0
  %1887 = vmatpush2.bf16.msra.mxu0 %v1564
  %1888 = vmatprep.subr.bf16.mxu0 0
  %1889 = vmatpush2.bf16.msra.mxu0 %v1563
  %1890 = vmatprep.subr.bf16.mxu0 0
  %1891 = vmatpush2.bf16.msra.mxu0 %v1562
  %1892 = vmatprep.mubr.bf16.mxu0 %v736
  %1893 = vmatmul.mubr.bf16.gmra.mxu0 %v735
  %v1894 = vpop.f32.mrf.mxu0
  %v1895 = vadd.f32 %v1854, %v1894
  %v1896 = vpop.f32.mrf.mxu0
  %v1897 = vpop.f32.mrf.mxu0
  %v1898 = vadd.f32 %v1857, %v1897
  %v1899 = vpop.f32.mrf.mxu0
  %1900 = vdwg.mxu0
  %1901 = vmatprep.subr.bf16.mxu0 0
  %1902 = vmatpush1.bf16.msra.mxu0 %v1577
  %1903 = vmatprep.subr.bf16.mxu0 0
  %1904 = vmatpush1.bf16.msra.mxu0 %v1576
  %1905 = vmatprep.subr.bf16.mxu0 0
  %1906 = vmatpush1.bf16.msra.mxu0 %v1575
  %1907 = vmatprep.subr.bf16.mxu0 0
  %1908 = vmatpush1.bf16.msra.mxu0 %v1574
  %1909 = vmatprep.subr.bf16.mxu0 0
  %1910 = vmatpush1.bf16.msra.mxu0 %v1573
  %1911 = vmatprep.subr.bf16.mxu0 0
  %1912 = vmatpush1.bf16.msra.mxu0 %v1572
  %1913 = vmatprep.subr.bf16.mxu0 0
  %1914 = vmatpush1.bf16.msra.mxu0 %v1571
  %1915 = vmatprep.subr.bf16.mxu0 0
  %1916 = vmatpush1.bf16.msra.mxu0 %v1570
  %1917 = vmatprep.subr.bf16.mxu0 0
  %1918 = vmatpush2.bf16.msra.mxu0 %v1585
  %1919 = vmatprep.subr.bf16.mxu0 0
  %1920 = vmatpush2.bf16.msra.mxu0 %v1584
  %1921 = vmatprep.subr.bf16.mxu0 0
  %1922 = vmatpush2.bf16.msra.mxu0 %v1583
  %1923 = vmatprep.subr.bf16.mxu0 0
  %1924 = vmatpush2.bf16.msra.mxu0 %v1582
  %1925 = vmatprep.subr.bf16.mxu0 0
  %1926 = vmatpush2.bf16.msra.mxu0 %v1581
  %1927 = vmatprep.subr.bf16.mxu0 0
  %1928 = vmatpush2.bf16.msra.mxu0 %v1580
  %1929 = vmatprep.subr.bf16.mxu0 0
  %1930 = vmatpush2.bf16.msra.mxu0 %v1579
  %1931 = vmatprep.subr.bf16.mxu0 0
  %1932 = vmatpush2.bf16.msra.mxu0 %v1578
  %1933 = vmatprep.mubr.bf16.mxu0 %v738
  %1934 = vmatmul.mubr.bf16.gmra.mxu0 %v737
  %v1935 = vpop.f32.mrf.mxu0
  %v1936 = vadd.f32 %v1895, %v1935
  %v1937 = vpop.f32.mrf.mxu0
  %v1938 = vpop.f32.mrf.mxu0
  %v1939 = vadd.f32 %v1898, %v1938
  %v1940 = vpop.f32.mrf.mxu0
  %1941 = vdwg.mxu0
  %1942 = vmatprep.subr.bf16.mxu0 0
  %1943 = vmatpush1.bf16.msra.mxu0 %v1593
  %1944 = vmatprep.subr.bf16.mxu0 0
  %1945 = vmatpush1.bf16.msra.mxu0 %v1592
  %1946 = vmatprep.subr.bf16.mxu0 0
  %1947 = vmatpush1.bf16.msra.mxu0 %v1591
  %1948 = vmatprep.subr.bf16.mxu0 0
  %1949 = vmatpush1.bf16.msra.mxu0 %v1590
  %1950 = vmatprep.subr.bf16.mxu0 0
  %1951 = vmatpush1.bf16.msra.mxu0 %v1589
  %1952 = vmatprep.subr.bf16.mxu0 0
  %1953 = vmatpush1.bf16.msra.mxu0 %v1588
  %1954 = vmatprep.subr.bf16.mxu0 0
  %1955 = vmatpush1.bf16.msra.mxu0 %v1587
  %1956 = vmatprep.subr.bf16.mxu0 0
  %1957 = vmatpush1.bf16.msra.mxu0 %v1586
  %1958 = vmatprep.subr.bf16.mxu0 0
  %1959 = vmatpush2.bf16.msra.mxu0 %v1601
  %1960 = vmatprep.subr.bf16.mxu0 0
  %1961 = vmatpush2.bf16.msra.mxu0 %v1600
  %1962 = vmatprep.subr.bf16.mxu0 0
  %1963 = vmatpush2.bf16.msra.mxu0 %v1599
  %1964 = vmatprep.subr.bf16.mxu0 0
  %1965 = vmatpush2.bf16.msra.mxu0 %v1598
  %1966 = vmatprep.subr.bf16.mxu0 0
  %1967 = vmatpush2.bf16.msra.mxu0 %v1597
  %1968 = vmatprep.subr.bf16.mxu0 0
  %1969 = vmatpush2.bf16.msra.mxu0 %v1596
  %1970 = vmatprep.subr.bf16.mxu0 0
  %1971 = vmatpush2.bf16.msra.mxu0 %v1595
  %1972 = vmatprep.subr.bf16.mxu0 0
  %1973 = vmatpush2.bf16.msra.mxu0 %v1594
  %1974 = vmatprep.mubr.bf16.mxu0 %v740
  %1975 = vmatmul.mubr.bf16.gmra.mxu0 %v739
  %v1976 = vpop.f32.mrf.mxu0
  %v1977 = vadd.f32 %v1936, %v1976
  %v1978 = vpop.f32.mrf.mxu0
  %v1979 = vpop.f32.mrf.mxu0
  %v1980 = vadd.f32 %v1939, %v1979
  %v1981 = vpop.f32.mrf.mxu0
  %1982 = vdwg.mxu0
  %1983 = vmatprep.subr.bf16.mxu0 0
  %1984 = vmatpush1.bf16.msra.mxu0 %v1609
  %1985 = vmatprep.subr.bf16.mxu0 0
  %1986 = vmatpush1.bf16.msra.mxu0 %v1608
  %1987 = vmatprep.subr.bf16.mxu0 0
  %1988 = vmatpush1.bf16.msra.mxu0 %v1607
  %1989 = vmatprep.subr.bf16.mxu0 0
  %1990 = vmatpush1.bf16.msra.mxu0 %v1606
  %1991 = vmatprep.subr.bf16.mxu0 0
  %1992 = vmatpush1.bf16.msra.mxu0 %v1605
  %1993 = vmatprep.subr.bf16.mxu0 0
  %1994 = vmatpush1.bf16.msra.mxu0 %v1604
  %1995 = vmatprep.subr.bf16.mxu0 0
  %1996 = vmatpush1.bf16.msra.mxu0 %v1603
  %1997 = vmatprep.subr.bf16.mxu0 0
  %1998 = vmatpush1.bf16.msra.mxu0 %v1602
  %1999 = vmatprep.subr.bf16.mxu0 0
  %2000 = vmatpush2.bf16.msra.mxu0 %v1617
  %2001 = vmatprep.subr.bf16.mxu0 0
  %2002 = vmatpush2.bf16.msra.mxu0 %v1616
  %2003 = vmatprep.subr.bf16.mxu0 0
  %2004 = vmatpush2.bf16.msra.mxu0 %v1615
  %2005 = vmatprep.subr.bf16.mxu0 0
  %2006 = vmatpush2.bf16.msra.mxu0 %v1614
  %2007 = vmatprep.subr.bf16.mxu0 0
  %2008 = vmatpush2.bf16.msra.mxu0 %v1613
  %2009 = vmatprep.subr.bf16.mxu0 0
  %2010 = vmatpush2.bf16.msra.mxu0 %v1612
  %2011 = vmatprep.subr.bf16.mxu0 0
  %2012 = vmatpush2.bf16.msra.mxu0 %v1611
  %2013 = vmatprep.subr.bf16.mxu0 0
  %2014 = vmatpush2.bf16.msra.mxu0 %v1610
  %2015 = vmatprep.mubr.bf16.mxu0 %v742
  %2016 = vmatmul.mubr.bf16.gmra.mxu0 %v741
  %v2017 = vpop.f32.mrf.mxu0
  %v2018 = vadd.f32 %v1977, %v2017
  %v2019 = vpop.f32.mrf.mxu0
  %v2020 = vpop.f32.mrf.mxu0
  %v2021 = vadd.f32 %v1980, %v2020
  %v2022 = vpop.f32.mrf.mxu0
  %2023 = vdwg.mxu0
  %2024 = vmatprep.subr.bf16.mxu0 0
  %2025 = vmatpush1.bf16.msra.mxu0 %v1625
  %2026 = vmatprep.subr.bf16.mxu0 0
  %2027 = vmatpush1.bf16.msra.mxu0 %v1624
  %2028 = vmatprep.subr.bf16.mxu0 0
  %2029 = vmatpush1.bf16.msra.mxu0 %v1623
  %2030 = vmatprep.subr.bf16.mxu0 0
  %2031 = vmatpush1.bf16.msra.mxu0 %v1622
  %2032 = vmatprep.subr.bf16.mxu0 0
  %2033 = vmatpush1.bf16.msra.mxu0 %v1621
  %2034 = vmatprep.subr.bf16.mxu0 0
  %2035 = vmatpush1.bf16.msra.mxu0 %v1620
  %2036 = vmatprep.subr.bf16.mxu0 0
  %2037 = vmatpush1.bf16.msra.mxu0 %v1619
  %2038 = vmatprep.subr.bf16.mxu0 0
  %2039 = vmatpush1.bf16.msra.mxu0 %v1618
  %2040 = vmatprep.subr.bf16.mxu0 0
  %2041 = vmatpush2.bf16.msra.mxu0 %v1633
  %2042 = vmatprep.subr.bf16.mxu0 0
  %2043 = vmatpush2.bf16.msra.mxu0 %v1632
  %2044 = vmatprep.subr.bf16.mxu0 0
  %2045 = vmatpush2.bf16.msra.mxu0 %v1631
  %2046 = vmatprep.subr.bf16.mxu0 0
  %2047 = vmatpush2.bf16.msra.mxu0 %v1630
  %2048 = vmatprep.subr.bf16.mxu0 0
  %2049 = vmatpush2.bf16.msra.mxu0 %v1629
  %2050 = vmatprep.subr.bf16.mxu0 0
  %2051 = vmatpush2.bf16.msra.mxu0 %v1628
  %2052 = vmatprep.subr.bf16.mxu0 0
  %2053 = vmatpush2.bf16.msra.mxu0 %v1627
  %2054 = vmatprep.subr.bf16.mxu0 0
  %2055 = vmatpush2.bf16.msra.mxu0 %v1626
  %2056 = vmatprep.mubr.bf16.mxu0 %v744
  %2057 = vmatmul.mubr.bf16.gmra.mxu0 %v743
  %v2058 = vpop.f32.mrf.mxu0
  %v2059 = vadd.f32 %v2018, %v2058
  %v2060 = vpop.f32.mrf.mxu0
  %v2061 = vpop.f32.mrf.mxu0
  %v2062 = vadd.f32 %v2021, %v2061
  %v2063 = vpop.f32.mrf.mxu0
  %2064 = vdwg.mxu0
  %2065 = vmatprep.subr.bf16.mxu0 0
  %2066 = vmatpush1.bf16.msra.mxu0 %v1641
  %2067 = vmatprep.subr.bf16.mxu0 0
  %2068 = vmatpush1.bf16.msra.mxu0 %v1640
  %2069 = vmatprep.subr.bf16.mxu0 0
  %2070 = vmatpush1.bf16.msra.mxu0 %v1639
  %2071 = vmatprep.subr.bf16.mxu0 0
  %2072 = vmatpush1.bf16.msra.mxu0 %v1638
  %2073 = vmatprep.subr.bf16.mxu0 0
  %2074 = vmatpush1.bf16.msra.mxu0 %v1637
  %2075 = vmatprep.subr.bf16.mxu0 0
  %2076 = vmatpush1.bf16.msra.mxu0 %v1636
  %2077 = vmatprep.subr.bf16.mxu0 0
  %2078 = vmatpush1.bf16.msra.mxu0 %v1635
  %2079 = vmatprep.subr.bf16.mxu0 0
  %2080 = vmatpush1.bf16.msra.mxu0 %v1634
  %2081 = vmatprep.subr.bf16.mxu0 0
  %2082 = vmatpush2.bf16.msra.mxu0 %v1649
  %2083 = vmatprep.subr.bf16.mxu0 0
  %2084 = vmatpush2.bf16.msra.mxu0 %v1648
  %2085 = vmatprep.subr.bf16.mxu0 0
  %2086 = vmatpush2.bf16.msra.mxu0 %v1647
  %2087 = vmatprep.subr.bf16.mxu0 0
  %2088 = vmatpush2.bf16.msra.mxu0 %v1646
  %2089 = vmatprep.subr.bf16.mxu0 0
  %2090 = vmatpush2.bf16.msra.mxu0 %v1645
  %2091 = vmatprep.subr.bf16.mxu0 0
  %2092 = vmatpush2.bf16.msra.mxu0 %v1644
  %2093 = vmatprep.subr.bf16.mxu0 0
  %2094 = vmatpush2.bf16.msra.mxu0 %v1643
  %2095 = vmatprep.subr.bf16.mxu0 0
  %2096 = vmatpush2.bf16.msra.mxu0 %v1642
  %2097 = vmatprep.mubr.bf16.mxu0 %v746
  %2098 = vmatmul.mubr.bf16.gmra.mxu0 %v745
  %v2099 = vpop.f32.mrf.mxu0
  %v2100 = vadd.f32 %v2059, %v2099
  %v2101 = vpop.f32.mrf.mxu0
  %v2102 = vpop.f32.mrf.mxu0
  %v2103 = vadd.f32 %v2062, %v2102
  %v2104 = vpop.f32.mrf.mxu0
  %2105 = vdwg.mxu0
  %v2106 = vadd.f32 %v27, %v2100
  %v2107 = vadd.f32 %v28, %v2103
  %2108 = vst.msk [vmem:[%s7] sm:$0xff] %vm31, %v2106
  %2109 = vst.msk [vmem:[%s7 + $0x8] sm:$0xff] %vm31, %v2107
  // Predicated region
  $region30: #{_lambda_.21} parent=0 // pred_check
    _
  $region31: #{_lambda_.21} parent=0 // pred_check_branch
    %2111 = sbr.rel (0) target = $region33
  $region32: #{_lambda_.21} parent=0 // pred_region
    _
  $region33: #{_lambda_.21} parent=0 // pred_fallthru
    _
  // Predicated region
  $region34: #{_lambda_.21} parent=0 // pred_check
    _
  $region35: #{_lambda_.21} parent=0 // pred_check_branch
    %2113 = sbr.rel (0) target = $region37
  $region36: #{_lambda_.21} parent=0 // pred_region
    _
  $region37: #{_lambda_.21} parent=0 // pred_fallthru
    _

</llo_original>
